<compile_context>
chip_gen: v7x
topology: tpu7x:2x2x1
jax: 0.10.0
libtpu: 0.0.40
codegen_flags: <defaults>
</compile_context>

<pallas_src>
import functools

import jax
import jax.numpy as jnp
from jax import lax
from jax.experimental import pallas as pl
from jax.experimental.pallas import tpu as pltpu


# ----------------------------- in-kernel helpers -----------------------------

def _ln(x, g, b, eps):
    """LayerNorm over the last axis (biased variance, like torch.nn.LayerNorm)."""
    mean = jnp.mean(x, axis=-1, keepdims=True)
    xc = x - mean
    var = jnp.mean(xc * xc, axis=-1, keepdims=True)
    return xc * lax.rsqrt(var + eps) * g + b


def _mha_core(q, k, v, out_w_t, out_b, nhead, dh, mask=None):
    """Multi-head attention core for one batch element.

    q: (Lq, D) already scaled; k, v: (Lk, D); out_w_t: (D, D); out_b: (1, D);
    mask: additive (Lq, Lk) or None.  Returns out-projected (Lq, D).
    Heads are processed with static lane slices (no reshapes/transposes inside the
    kernel); the head-concat + out-projection is expressed as a sum of per-head
    (Lq, dh) @ (dh, D) matmuls, keeping the output lane-dense.
    """
    Lq = q.shape[0]
    D = out_w_t.shape[1]
    acc = jnp.zeros((Lq, D), jnp.float32) + out_b
    for h in range(nhead):
        lo = h * dh
        qh = q[:, lo:lo + dh]
        kh = k[:, lo:lo + dh]
        vh = v[:, lo:lo + dh]
        # (Lq, dh) x (Lk, dh)^T -> (Lq, Lk), contraction on dim 1 of both (NT matmul).
        s = lax.dot_general(qh, kh, (((1,), (1,)), ((), ())),
                            preferred_element_type=jnp.float32)
        if mask is not None:
            s = s + mask
        m = jnp.max(s, axis=-1, keepdims=True)
        p = jnp.exp(s - m)
        denom = jnp.sum(p, axis=-1, keepdims=True)
        p = p * pl.reciprocal(denom, approx=True)
        oh = jnp.dot(p, vh, preferred_element_type=jnp.float32)          # (Lq, dh)
        acc = acc + jnp.dot(oh, out_w_t[lo:lo + dh, :],
                            preferred_element_type=jnp.float32)
    return acc


# ----------------------------- fused layer kernels -----------------------------

def _encoder_layer_kernel(x_ref, loc_ref,
                          n1g_ref, n1b_ref, locw_ref, locb_ref,
                          wqk_ref, bqk_ref, wv_ref, bv_ref, wo_ref, bo_ref,
                          n2g_ref, n2b_ref, w1_ref, b1_ref, w2_ref, b2_ref,
                          o_ref, *, nhead):
    x = x_ref[0]                                   # (S, D)
    D = x.shape[1]
    dh = D // nhead
    scale = dh ** -0.5

    # LN1 + location embedding
    src2 = _ln(x, n1g_ref[...], n1b_ref[...], 1e-5)
    loc = jnp.dot(loc_ref[0], locw_ref[...],
                  preferred_element_type=jnp.float32) + locb_ref[...]
    qk_in = src2 + loc                              # query = key = src2 + loc_embed

    # fused Q/K projection (query & key share the same input); V from src2
    qk = jnp.dot(qk_in, wqk_ref[...], preferred_element_type=jnp.float32) + bqk_ref[...]
    q = qk[:, :D] * scale
    k = qk[:, D:]
    v = jnp.dot(src2, wv_ref[...], preferred_element_type=jnp.float32) + bv_ref[...]

    x = x + _mha_core(q, k, v, wo_ref[...], bo_ref[...], nhead, dh)

    # LN2 + FFN + residual
    src2 = _ln(x, n2g_ref[...], n2b_ref[...], 1e-5)
    h = jnp.maximum(jnp.dot(src2, w1_ref[...],
                            preferred_element_type=jnp.float32) + b1_ref[...], 0.0)
    f = jnp.dot(h, w2_ref[...], preferred_element_type=jnp.float32) + b2_ref[...]
    o_ref[0] = x + f


def _decoder_layer_kernel(tgt_ref, mem_ref, pad_ref,
                          n1g_ref, n1b_ref, saw_ref, sab_ref, sawo_ref, sabo_ref,
                          n2g_ref, n2b_ref, cawq_ref, cabq_ref, cawkv_ref, cabkv_ref,
                          cawo_ref, cabo_ref,
                          n3g_ref, n3b_ref, w1_ref, b1_ref, w2_ref, b2_ref,
                          o_ref, *, nhead):
    x = tgt_ref[0]                                  # (T, D)
    mem = mem_ref[0]                                # (S, D)
    T, D = x.shape
    dh = D // nhead
    scale = dh ** -0.5

    # causal + key-padding mask built in-kernel (large finite negative -> no NaN
    # even if a row were fully masked).
    rows = lax.broadcasted_iota(jnp.int32, (T, T), 0)
    cols = lax.broadcasted_iota(jnp.int32, (T, T), 1)
    causal_ok = rows >= cols
    padded = pad_ref[0] > 0.5                       # (1, T), broadcasts over query rows
    allowed = jnp.logical_and(causal_ok, jnp.logical_not(padded))
    mask = jnp.where(allowed, 0.0, -1e30).astype(jnp.float32)

    # --- masked self-attention (fused QKV projection) ---
    t2 = _ln(x, n1g_ref[...], n1b_ref[...], 1e-5)
    qkv = jnp.dot(t2, saw_ref[...], preferred_element_type=jnp.float32) + sab_ref[...]
    q = qkv[:, :D] * scale
    k = qkv[:, D:2 * D]
    v = qkv[:, 2 * D:]
    x = x + _mha_core(q, k, v, sawo_ref[...], sabo_ref[...], nhead, dh, mask=mask)

    # --- cross attention over memory (fused KV projection) ---
    t2 = _ln(x, n2g_ref[...], n2b_ref[...], 1e-5)
    q = (jnp.dot(t2, cawq_ref[...], preferred_element_type=jnp.float32)
         + cabq_ref[...]) * scale
    kv = jnp.dot(mem, cawkv_ref[...], preferred_element_type=jnp.float32) + cabkv_ref[...]
    k = kv[:, :D]
    v = kv[:, D:]
    x = x + _mha_core(q, k, v, cawo_ref[...], cabo_ref[...], nhead, dh)

    # --- LN3 + FFN + residual ---
    t2 = _ln(x, n3g_ref[...], n3b_ref[...], 1e-5)
    h = jnp.maximum(jnp.dot(t2, w1_ref[...],
                            preferred_element_type=jnp.float32) + b1_ref[...], 0.0)
    f = jnp.dot(h, w2_ref[...], preferred_element_type=jnp.float32) + b2_ref[...]
    o_ref[0] = x + f


def _layernorm_kernel(x_ref, g_ref, b_ref, o_ref, *, eps):
    o_ref[...] = _ln(x_ref[...], g_ref[...], b_ref[...], eps)


# ----------------------------- pallas_call wrappers -----------------------------

def _w_spec(shape):
    """Full-block weight spec, constant across the batch grid."""
    nd = len(shape)
    return pl.BlockSpec(shape, lambda b, _nd=nd: (0,) * _nd)


def encoder_layer(feature, location, p, nhead):
    """feature: (B, S, D); location: (B, S, 4) -> (B, S, D)."""
    B, S, D = feature.shape
    F = p['w1_t'].shape[1]
    kernel = functools.partial(_encoder_layer_kernel, nhead=nhead)
    return pl.pallas_call(
        kernel,
        out_shape=jax.ShapeDtypeStruct((B, S, D), jnp.float32),
        grid=(B,),
        in_specs=[
            pl.BlockSpec((1, S, D), lambda b: (b, 0, 0)),
            pl.BlockSpec((1, S, 4), lambda b: (b, 0, 0)),
            _w_spec((1, D)), _w_spec((1, D)),            # norm1
            _w_spec((4, D)), _w_spec((1, D)),            # location embedding
            _w_spec((D, 2 * D)), _w_spec((1, 2 * D)),    # fused Q/K projection
            _w_spec((D, D)), _w_spec((1, D)),            # V projection
            _w_spec((D, D)), _w_spec((1, D)),            # out projection
            _w_spec((1, D)), _w_spec((1, D)),            # norm2
            _w_spec((D, F)), _w_spec((1, F)),            # linear1
            _w_spec((F, D)), _w_spec((1, D)),            # linear2
        ],
        out_specs=pl.BlockSpec((1, S, D), lambda b: (b, 0, 0)),
        compiler_params=pltpu.CompilerParams(dimension_semantics=("parallel",)),
    )(feature, location,
      p['norm1_g'], p['norm1_b'], p['loc_w_t'], p['loc_b'],
      p['w_qk_t'], p['b_qk'], p['w_v_t'], p['b_v'],
      p['out_w_t'], p['out_b'],
      p['norm2_g'], p['norm2_b'],
      p['w1_t'], p['b1'], p['w2_t'], p['b2'])


def decoder_layer(tgt, memory, pad_f, p, nhead):
    """tgt: (B, T, D); memory: (B, S, D); pad_f: (B, 1, T) float (1.0 = padded)."""
    B, T, D = tgt.shape
    S = memory.shape[1]
    F = p['w1_t'].shape[1]
    kernel = functools.partial(_decoder_layer_kernel, nhead=nhead)
    return pl.pallas_call(
        kernel,
        out_shape=jax.ShapeDtypeStruct((B, T, D), jnp.float32),
        grid=(B,),
        in_specs=[
            pl.BlockSpec((1, T, D), lambda b: (b, 0, 0)),
            pl.BlockSpec((1, S, D), lambda b: (b, 0, 0)),
            pl.BlockSpec((1, 1, T), lambda b: (b, 0, 0)),
            _w_spec((1, D)), _w_spec((1, D)),            # norm1
            _w_spec((D, 3 * D)), _w_spec((1, 3 * D)),    # self-attn fused QKV
            _w_spec((D, D)), _w_spec((1, D)),            # self-attn out proj
            _w_spec((1, D)), _w_spec((1, D)),            # norm2
            _w_spec((D, D)), _w_spec((1, D)),            # cross-attn Q
            _w_spec((D, 2 * D)), _w_spec((1, 2 * D)),    # cross-attn fused KV
            _w_spec((D, D)), _w_spec((1, D)),            # cross-attn out proj
            _w_spec((1, D)), _w_spec((1, D)),            # norm3
            _w_spec((D, F)), _w_spec((1, F)),            # linear1
            _w_spec((F, D)), _w_spec((1, D)),            # linear2
        ],
        out_specs=pl.BlockSpec((1, T, D), lambda b: (b, 0, 0)),
        compiler_params=pltpu.CompilerParams(dimension_semantics=("parallel",)),
    )(tgt, memory, pad_f,
      p['norm1_g'], p['norm1_b'], p['sa_w_t'], p['sa_b'], p['sa_out_w_t'], p['sa_out_b'],
      p['norm2_g'], p['norm2_b'],
      p['ca_wq_t'], p['ca_bq'], p['ca_wkv_t'], p['ca_bkv'], p['ca_out_w_t'], p['ca_out_b'],
      p['norm3_g'], p['norm3_b'],
      p['w1_t'], p['b1'], p['w2_t'], p['b2'])


def layernorm(x, gamma, beta, eps=1e-5):
    """x: (M, D); gamma/beta: (1, D)."""
    M, D = x.shape
    return pl.pallas_call(
        functools.partial(_layernorm_kernel, eps=eps),
        out_shape=jax.ShapeDtypeStruct((M, D), jnp.float32),
        grid=(1,),
        in_specs=[pl.BlockSpec((M, D), lambda i: (0, 0)),
                  pl.BlockSpec((1, D), lambda i: (0, 0)),
                  pl.BlockSpec((1, D), lambda i: (0, 0))],
        out_specs=pl.BlockSpec((M, D), lambda i: (0, 0)),
        compiler_params=pltpu.CompilerParams(dimension_semantics=("arbitrary",)),
    )(x, gamma, beta)


# --------------------------------- forward ---------------------------------

@functools.partial(jax.jit, static_argnames=("nhead",))
def transformer_forward(params, feature, location, tgt, tgt_pad_mask, *, nhead):
    """feature: (B, S, D); location: (B, S, 4); tgt: (B, T) int32; tgt_pad_mask: (B, T) bool.
    Returns hs: (T, B, D) — matches the PyTorch module's output layout."""
    B, S, D = feature.shape
    T = tgt.shape[1]

    # Encoder (internal layout (B, S, D); math per batch element matches (S, B, D) torch).
    memory = feature
    for lp in params['encoder_layers']:
        memory = encoder_layer(memory, location, lp, nhead)
    memory = layernorm(memory.reshape(B * S, D),
                       params['enc_norm_g'], params['enc_norm_b']).reshape(B, S, D)

    # Decoder embeddings: word gather (glue) + positional add, LayerNorm in Pallas.
    emb_p = params['embeddings']
    we = jnp.take(emb_p['word_emb'], tgt, axis=0)            # (B, T, D) gather = XLA glue
    pe = emb_p['pos_emb'][:T][None, :, :]
    emb = (we + pe).reshape(B * T, D)
    hs = layernorm(emb, emb_p['ln_g'], emb_p['ln_b'], eps=1e-12).reshape(B, T, D)

    # Decoder (causal + padding masks built inside the fused kernel).
    pad_f = tgt_pad_mask.astype(jnp.float32).reshape(B, 1, T)
    for lp in params['decoder_layers']:
        hs = decoder_layer(hs, memory, pad_f, lp, nhead)
    hs = layernorm(hs.reshape(B * T, D),
                   params['dec_norm_g'], params['dec_norm_b']).reshape(B, T, D)
    return jnp.transpose(hs, (1, 0, 2))                      # (T, B, D)


# ------------------------------ parameter init ------------------------------

def init_params(key, d_model, nhead, n_enc, n_dec, dim_ff, max_pos, vocab, pad_id):
    """Creates parameters in PyTorch's native layout (Linear weight = (out, in), etc.)."""
    keys = iter(jax.random.split(key, 512))

    def w(shape, scale=0.02):
        return jax.random.normal(next(keys), shape, jnp.float32) * scale

    zeros = lambda s: jnp.zeros(s, jnp.float32)
    ones = lambda s: jnp.ones(s, jnp.float32)

    def mha():
        return dict(in_w=w((3 * d_model, d_model)), in_b=zeros((3 * d_model,)),
                    out_w=w((d_model, d_model)), out_b=zeros((d_model,)))

    enc_layers = []
    for _ in range(n_enc):
        enc_layers.append(dict(
            self_attn=mha(),
            loc_w=w((d_model, 4)), loc_b=zeros((d_model,)),
            lin1_w=w((dim_ff, d_model)), lin1_b=zeros((dim_ff,)),
            lin2_w=w((d_model, dim_ff)), lin2_b=zeros((d_model,)),
            norm1_g=ones((d_model,)), norm1_b=zeros((d_model,)),
            norm2_g=ones((d_model,)), norm2_b=zeros((d_model,)),
        ))
    dec_layers = []
    for _ in range(n_dec):
        dec_layers.append(dict(
            self_attn=mha(), cross_attn=mha(),
            lin1_w=w((dim_ff, d_model)), lin1_b=zeros((dim_ff,)),
            lin2_w=w((d_model, dim_ff)), lin2_b=zeros((d_model,)),
            norm1_g=ones((d_model,)), norm1_b=zeros((d_model,)),
            norm2_g=ones((d_model,)), norm2_b=zeros((d_model,)),
            norm3_g=ones((d_model,)), norm3_b=zeros((d_model,)),
        ))
    word_emb = w((vocab, d_model)).at[pad_id].set(0.0)           # padding_idx row = 0
    emb = dict(word_emb=word_emb, pos_emb=w((max_pos, d_model)),
               ln_g=ones((d_model,)), ln_b=zeros((d_model,)))
    return dict(encoder_layers=enc_layers, decoder_layers=dec_layers,
                embeddings=emb,
                enc_norm_g=ones((d_model,)), enc_norm_b=zeros((d_model,)),
                dec_norm_g=ones((d_model,)), dec_norm_b=zeros((d_model,)))


def prepare_params(raw):
    """Pre-transpose / pre-reshape all weights once (outside jit) into kernel layout."""
    D = raw['enc_norm_g'].shape[0]
    r1 = lambda v: v.reshape(1, -1)

    enc_layers = []
    for lp in raw['encoder_layers']:
        sa = lp['self_attn']
        enc_layers.append(dict(
            norm1_g=r1(lp['norm1_g']), norm1_b=r1(lp['norm1_b']),
            loc_w_t=lp['loc_w'].T, loc_b=r1(lp['loc_b']),
            w_qk_t=sa['in_w'][:2 * D].T, b_qk=r1(sa['in_b'][:2 * D]),
            w_v_t=sa['in_w'][2 * D:].T, b_v=r1(sa['in_b'][2 * D:]),
            out_w_t=sa['out_w'].T, out_b=r1(sa['out_b']),
            norm2_g=r1(lp['norm2_g']), norm2_b=r1(lp['norm2_b']),
            w1_t=lp['lin1_w'].T, b1=r1(lp['lin1_b']),
            w2_t=lp['lin2_w'].T, b2=r1(lp['lin2_b']),
        ))
    dec_layers = []
    for lp in raw['decoder_layers']:
        sa, ca = lp['self_attn'], lp['cross_attn']
        dec_layers.append(dict(
            norm1_g=r1(lp['norm1_g']), norm1_b=r1(lp['norm1_b']),
            sa_w_t=sa['in_w'].T, sa_b=r1(sa['in_b']),
            sa_out_w_t=sa['out_w'].T, sa_out_b=r1(sa['out_b']),
            norm2_g=r1(lp['norm2_g']), norm2_b=r1(lp['norm2_b']),
            ca_wq_t=ca['in_w'][:D].T, ca_bq=r1(ca['in_b'][:D]),
            ca_wkv_t=ca['in_w'][D:].T, ca_bkv=r1(ca['in_b'][D:]),
            ca_out_w_t=ca['out_w'].T, ca_out_b=r1(ca['out_b']),
            norm3_g=r1(lp['norm3_g']), norm3_b=r1(lp['norm3_b']),
            w1_t=lp['lin1_w'].T, b1=r1(lp['lin1_b']),
            w2_t=lp['lin2_w'].T, b2=r1(lp['lin2_b']),
        ))
    emb = raw['embeddings']
    return dict(
        encoder_layers=enc_layers, decoder_layers=dec_layers,
        embeddings=dict(word_emb=emb['word_emb'], pos_emb=emb['pos_emb'],
                        ln_g=r1(emb['ln_g']), ln_b=r1(emb['ln_b'])),
        enc_norm_g=r1(raw['enc_norm_g']), enc_norm_b=r1(raw['enc_norm_b']),
        dec_norm_g=r1(raw['dec_norm_g']), dec_norm_b=r1(raw['dec_norm_b']),
    )


# ---------------------------------- main ----------------------------------

if __name__ == "__main__":
    # Small config consistent with the module's __init__ signature.
    d_model, nhead = 32, 4
    num_encoder_layers, num_decoder_layers = 2, 2
    dim_feedforward = 64
    max_position, vocab_size, pad_token_id = 16, 100, 0

    B, S_enc, T = 2, 8, 8

    root = jax.random.PRNGKey(0)
    k_par, k_feat, k_loc, k_tgt = jax.random.split(root, 4)

    raw_params = init_params(k_par, d_model, nhead, num_encoder_layers,
                             num_decoder_layers, dim_feedforward,
                             max_position, vocab_size, pad_token_id)
    params = prepare_params(raw_params)          # transposes happen once, outside jit

    feature = jax.random.normal(k_feat, (B, S_enc, d_model), jnp.float32)
    location = jax.random.uniform(k_loc, (B, S_enc, 4), jnp.float32)
    tgt = jax.random.randint(k_tgt, (B, T), 1, vocab_size, jnp.int32)
    # last two positions of batch element 1 are padding
    tgt_pad_mask = jnp.zeros((B, T), jnp.bool_).at[1, T - 2:].set(True)
    tgt = tgt.at[1, T - 2:].set(pad_token_id)

    hs = transformer_forward(params, feature, location, tgt, tgt_pad_mask, nhead=nhead)
    hs = jax.block_until_ready(hs)

    assert hs.shape == (T, B, d_model), hs.shape
    assert bool(jnp.all(jnp.isfinite(hs)))
    print("KERNEL_OK")
</pallas_src>

<mosaic_0001>
module attributes {stable_mosaic.version = 11 : i64} {
  func.func @_layernorm_kernel(%arg0: i32, %arg1: memref<16x32xf32, #tpu.memory_space<vmem>>, %arg2: memref<1x32xf32, #tpu.memory_space<vmem>>, %arg3: memref<1x32xf32, #tpu.memory_space<vmem>>, %arg4: memref<16x32xf32, #tpu.memory_space<vmem>>) attributes {dimension_semantics = [#tpu.dimension_semantics<arbitrary>], iteration_bounds = array<i64: 1>, scalar_prefetch = 0 : i64, scratch_operands = 0 : i64, tpu.core_type = #tpu.core_type<tc>, window_params = [{pipeline_mode = #tpu.pipeline_mode<synchronous>, transform_indices = @transform_0, window_bounds = array<i64: 16, 32>}, {pipeline_mode = #tpu.pipeline_mode<synchronous>, transform_indices = @transform_1, window_bounds = array<i64: 1, 32>}, {pipeline_mode = #tpu.pipeline_mode<synchronous>, transform_indices = @transform_2, window_bounds = array<i64: 1, 32>}, {pipeline_mode = #tpu.pipeline_mode<synchronous>, transform_indices = @transform_3, window_bounds = array<i64: 16, 32>}]} {
    %c0 = arith.constant 0 : index
    %c0_0 = arith.constant 0 : index
    %0 = vector.load %arg1[%c0, %c0_0] : memref<16x32xf32, #tpu.memory_space<vmem>>, vector<16x32xf32>
    %c0_1 = arith.constant 0 : index
    %c0_2 = arith.constant 0 : index
    %1 = vector.load %arg2[%c0_1, %c0_2] : memref<1x32xf32, #tpu.memory_space<vmem>>, vector<1x32xf32>
    %c0_3 = arith.constant 0 : index
    %c0_4 = arith.constant 0 : index
    %2 = vector.load %arg3[%c0_3, %c0_4] : memref<1x32xf32, #tpu.memory_space<vmem>>, vector<1x32xf32>
    %cst = arith.constant dense<0.000000e+00> : vector<16xf32>
    %3 = vector.multi_reduction <add>, %0, %cst [1] : vector<16x32xf32> to vector<16xf32>
    %4 = vector.shape_cast %3 : vector<16xf32> to vector<16x1xf32>
    %cst_5 = arith.constant 3.200000e+01 : f32
    %5 = vector.broadcast %cst_5 : f32 to vector<16x1xf32>
    %6 = arith.divf %4, %5 : vector<16x1xf32>
    %7 = vector.broadcast %6 : vector<16x1xf32> to vector<16x32xf32>
    %8 = arith.subf %0, %7 : vector<16x32xf32>
    %9 = arith.mulf %8, %8 : vector<16x32xf32>
    %cst_6 = arith.constant dense<0.000000e+00> : vector<16xf32>
    %10 = vector.multi_reduction <add>, %9, %cst_6 [1] : vector<16x32xf32> to vector<16xf32>
    %11 = vector.shape_cast %10 : vector<16xf32> to vector<16x1xf32>
    %cst_7 = arith.constant 3.200000e+01 : f32
    %12 = vector.broadcast %cst_7 : f32 to vector<16x1xf32>
    %13 = arith.divf %11, %12 : vector<16x1xf32>
    %cst_8 = arith.constant 9.99999996E-13 : f32
    %14 = vector.broadcast %cst_8 : f32 to vector<16x1xf32>
    %15 = arith.addf %13, %14 : vector<16x1xf32>
    %16 = math.rsqrt %15 : vector<16x1xf32>
    %17 = vector.broadcast %16 : vector<16x1xf32> to vector<16x32xf32>
    %18 = arith.mulf %8, %17 : vector<16x32xf32>
    %19 = vector.broadcast %1 : vector<1x32xf32> to vector<16x32xf32>
    %20 = arith.mulf %18, %19 : vector<16x32xf32>
    %21 = vector.broadcast %2 : vector<1x32xf32> to vector<16x32xf32>
    %22 = arith.addf %20, %21 : vector<16x32xf32>
    %c0_9 = arith.constant 0 : index
    %c0_10 = arith.constant 0 : index
    %23 = vector.load %arg4[%c0_9, %c0_10] : memref<16x32xf32, #tpu.memory_space<vmem>>, vector<16x32xf32>
    tpu.vector_store %arg4[%c0_9, %c0_10], %22 {strides = array<i32>} : memref<16x32xf32, #tpu.memory_space<vmem>>, vector<16x32xf32>,
    return
  }
  func.func @transform_0(%arg0: i32) -> (i32, i32) {
    %c0_i32 = arith.constant 0 : i32
    %c0_i32_0 = arith.constant 0 : i32
    %c0_i32_1 = arith.constant 0 : i32
    return %c0_i32, %c0_i32_0 : i32, i32
  }
  func.func @transform_1(%arg0: i32) -> (i32, i32) {
    %c0_i32 = arith.constant 0 : i32
    %c0_i32_0 = arith.constant 0 : i32
    %c0_i32_1 = arith.constant 0 : i32
    return %c0_i32, %c0_i32_0 : i32, i32
  }
  func.func @transform_2(%arg0: i32) -> (i32, i32) {
    %c0_i32 = arith.constant 0 : i32
    %c0_i32_0 = arith.constant 0 : i32
    %c0_i32_1 = arith.constant 0 : i32
    return %c0_i32, %c0_i32_0 : i32, i32
  }
  func.func @transform_3(%arg0: i32) -> (i32, i32) {
    %c0_i32 = arith.constant 0 : i32
    %c0_i32_0 = arith.constant 0 : i32
    %c0_i32_1 = arith.constant 0 : i32
    return %c0_i32, %c0_i32_0 : i32, i32
  }
}

module attributes {stable_mosaic.version = 11 : i64} {
  func.func @_layernorm_kernel(%arg0: i32, %arg1: memref<16x32xf32, #tpu.memory_space<vmem>>, %arg2: memref<1x32xf32, #tpu.memory_space<vmem>>, %arg3: memref<1x32xf32, #tpu.memory_space<vmem>>, %arg4: memref<16x32xf32, #tpu.memory_space<vmem>>) attributes {dimension_semantics = [#tpu.dimension_semantics<arbitrary>], iteration_bounds = array<i64: 1>, scalar_prefetch = 0 : i64, scratch_operands = 0 : i64, tpu.core_type = #tpu.core_type<tc>, window_params = [{pipeline_mode = #tpu.pipeline_mode<synchronous>, transform_indices = @transform_0, window_bounds = array<i64: 16, 32>}, {pipeline_mode = #tpu.pipeline_mode<synchronous>, transform_indices = @transform_1, window_bounds = array<i64: 1, 32>}, {pipeline_mode = #tpu.pipeline_mode<synchronous>, transform_indices = @transform_2, window_bounds = array<i64: 1, 32>}, {pipeline_mode = #tpu.pipeline_mode<synchronous>, transform_indices = @transform_3, window_bounds = array<i64: 16, 32>}]} {
    %c0 = arith.constant 0 : index
    %c0_0 = arith.constant 0 : index
    %0 = vector.load %arg1[%c0, %c0_0] : memref<16x32xf32, #tpu.memory_space<vmem>>, vector<16x32xf32>
    %c0_1 = arith.constant 0 : index
    %c0_2 = arith.constant 0 : index
    %1 = vector.load %arg2[%c0_1, %c0_2] : memref<1x32xf32, #tpu.memory_space<vmem>>, vector<1x32xf32>
    %c0_3 = arith.constant 0 : index
    %c0_4 = arith.constant 0 : index
    %2 = vector.load %arg3[%c0_3, %c0_4] : memref<1x32xf32, #tpu.memory_space<vmem>>, vector<1x32xf32>
    %cst = arith.constant dense<0.000000e+00> : vector<16xf32>
    %3 = vector.multi_reduction <add>, %0, %cst [1] : vector<16x32xf32> to vector<16xf32>
    %4 = vector.shape_cast %3 : vector<16xf32> to vector<16x1xf32>
    %cst_5 = arith.constant 3.200000e+01 : f32
    %5 = vector.broadcast %cst_5 : f32 to vector<16x1xf32>
    %6 = arith.divf %4, %5 : vector<16x1xf32>
    %7 = vector.broadcast %6 : vector<16x1xf32> to vector<16x32xf32>
    %8 = arith.subf %0, %7 : vector<16x32xf32>
    %9 = arith.mulf %8, %8 : vector<16x32xf32>
    %cst_6 = arith.constant dense<0.000000e+00> : vector<16xf32>
    %10 = vector.multi_reduction <add>, %9, %cst_6 [1] : vector<16x32xf32> to vector<16xf32>
    %11 = vector.shape_cast %10 : vector<16xf32> to vector<16x1xf32>
    %cst_7 = arith.constant 3.200000e+01 : f32
    %12 = vector.broadcast %cst_7 : f32 to vector<16x1xf32>
    %13 = arith.divf %11, %12 : vector<16x1xf32>
    %cst_8 = arith.constant 9.99999974E-6 : f32
    %14 = vector.broadcast %cst_8 : f32 to vector<16x1xf32>
    %15 = arith.addf %13, %14 : vector<16x1xf32>
    %16 = math.rsqrt %15 : vector<16x1xf32>
    %17 = vector.broadcast %16 : vector<16x1xf32> to vector<16x32xf32>
    %18 = arith.mulf %8, %17 : vector<16x32xf32>
    %19 = vector.broadcast %1 : vector<1x32xf32> to vector<16x32xf32>
    %20 = arith.mulf %18, %19 : vector<16x32xf32>
    %21 = vector.broadcast %2 : vector<1x32xf32> to vector<16x32xf32>
    %22 = arith.addf %20, %21 : vector<16x32xf32>
    %c0_9 = arith.constant 0 : index
    %c0_10 = arith.constant 0 : index
    %23 = vector.load %arg4[%c0_9, %c0_10] : memref<16x32xf32, #tpu.memory_space<vmem>>, vector<16x32xf32>
    tpu.vector_store %arg4[%c0_9, %c0_10], %22 {strides = array<i32>} : memref<16x32xf32, #tpu.memory_space<vmem>>, vector<16x32xf32>,
    return
  }
  func.func @transform_0(%arg0: i32) -> (i32, i32) {
    %c0_i32 = arith.constant 0 : i32
    %c0_i32_0 = arith.constant 0 : i32
    %c0_i32_1 = arith.constant 0 : i32
    return %c0_i32, %c0_i32_0 : i32, i32
  }
  func.func @transform_1(%arg0: i32) -> (i32, i32) {
    %c0_i32 = arith.constant 0 : i32
    %c0_i32_0 = arith.constant 0 : i32
    %c0_i32_1 = arith.constant 0 : i32
    return %c0_i32, %c0_i32_0 : i32, i32
  }
  func.func @transform_2(%arg0: i32) -> (i32, i32) {
    %c0_i32 = arith.constant 0 : i32
    %c0_i32_0 = arith.constant 0 : i32
    %c0_i32_1 = arith.constant 0 : i32
    return %c0_i32, %c0_i32_0 : i32, i32
  }
  func.func @transform_3(%arg0: i32) -> (i32, i32) {
    %c0_i32 = arith.constant 0 : i32
    %c0_i32_0 = arith.constant 0 : i32
    %c0_i32_1 = arith.constant 0 : i32
    return %c0_i32, %c0_i32_0 : i32, i32
  }
}

module attributes {stable_mosaic.version = 11 : i64} {
  func.func @_encoder_layer_kernel(%arg0: i32, %arg1: memref<1x8x32xf32, #tpu.memory_space<vmem>>, %arg2: memref<1x8x4xf32, #tpu.memory_space<vmem>>, %arg3: memref<1x32xf32, #tpu.memory_space<vmem>>, %arg4: memref<1x32xf32, #tpu.memory_space<vmem>>, %arg5: memref<4x32xf32, #tpu.memory_space<vmem>>, %arg6: memref<1x32xf32, #tpu.memory_space<vmem>>, %arg7: memref<32x64xf32, #tpu.memory_space<vmem>>, %arg8: memref<1x64xf32, #tpu.memory_space<vmem>>, %arg9: memref<32x32xf32, #tpu.memory_space<vmem>>, %arg10: memref<1x32xf32, #tpu.memory_space<vmem>>, %arg11: memref<32x32xf32, #tpu.memory_space<vmem>>, %arg12: memref<1x32xf32, #tpu.memory_space<vmem>>, %arg13: memref<1x32xf32, #tpu.memory_space<vmem>>, %arg14: memref<1x32xf32, #tpu.memory_space<vmem>>, %arg15: memref<32x64xf32, #tpu.memory_space<vmem>>, %arg16: memref<1x64xf32, #tpu.memory_space<vmem>>, %arg17: memref<64x32xf32, #tpu.memory_space<vmem>>, %arg18: memref<1x32xf32, #tpu.memory_space<vmem>>, %arg19: memref<1x8x32xf32, #tpu.memory_space<vmem>>) attributes {dimension_semantics = [#tpu.dimension_semantics<parallel>], iteration_bounds = array<i64: 2>, scalar_prefetch = 0 : i64, scratch_operands = 0 : i64, tpu.core_type = #tpu.core_type<tc>, window_params = [{transform_indices = @transform_0, window_bounds = array<i64: 1, 8, 32>}, {transform_indices = @transform_1, window_bounds = array<i64: 1, 8, 4>}, {pipeline_mode = #tpu.pipeline_mode<synchronous>, transform_indices = @transform_2, window_bounds = array<i64: 1, 32>}, {pipeline_mode = #tpu.pipeline_mode<synchronous>, transform_indices = @transform_3, window_bounds = array<i64: 1, 32>}, {pipeline_mode = #tpu.pipeline_mode<synchronous>, transform_indices = @transform_4, window_bounds = array<i64: 4, 32>}, {pipeline_mode = #tpu.pipeline_mode<synchronous>, transform_indices = @transform_5, window_bounds = array<i64: 1, 32>}, {pipeline_mode = #tpu.pipeline_mode<synchronous>, transform_indices = @transform_6, window_bounds = array<i64: 32, 64>}, {pipeline_mode = #tpu.pipeline_mode<synchronous>, transform_indices = @transform_7, window_bounds = array<i64: 1, 64>}, {pipeline_mode = #tpu.pipeline_mode<synchronous>, transform_indices = @transform_8, window_bounds = array<i64: 32, 32>}, {pipeline_mode = #tpu.pipeline_mode<synchronous>, transform_indices = @transform_9, window_bounds = array<i64: 1, 32>}, {pipeline_mode = #tpu.pipeline_mode<synchronous>, transform_indices = @transform_10, window_bounds = array<i64: 32, 32>}, {pipeline_mode = #tpu.pipeline_mode<synchronous>, transform_indices = @transform_11, window_bounds = array<i64: 1, 32>}, {pipeline_mode = #tpu.pipeline_mode<synchronous>, transform_indices = @transform_12, window_bounds = array<i64: 1, 32>}, {pipeline_mode = #tpu.pipeline_mode<synchronous>, transform_indices = @transform_13, window_bounds = array<i64: 1, 32>}, {pipeline_mode = #tpu.pipeline_mode<synchronous>, transform_indices = @transform_14, window_bounds = array<i64: 32, 64>}, {pipeline_mode = #tpu.pipeline_mode<synchronous>, transform_indices = @transform_15, window_bounds = array<i64: 1, 64>}, {pipeline_mode = #tpu.pipeline_mode<synchronous>, transform_indices = @transform_16, window_bounds = array<i64: 64, 32>}, {pipeline_mode = #tpu.pipeline_mode<synchronous>, transform_indices = @transform_17, window_bounds = array<i64: 1, 32>}, {transform_indices = @transform_18, window_bounds = array<i64: 1, 8, 32>}]} {
    %c0 = arith.constant 0 : index
    %c0_0 = arith.constant 0 : index
    %c0_1 = arith.constant 0 : index
    %0 = vector.load %arg1[%c0, %c0_0, %c0_1] : memref<1x8x32xf32, #tpu.memory_space<vmem>>, vector<1x8x32xf32>
    %1 = vector.shape_cast %0 : vector<1x8x32xf32> to vector<8x32xf32>
    %c0_2 = arith.constant 0 : index
    %c0_3 = arith.constant 0 : index
    %2 = vector.load %arg3[%c0_2, %c0_3] : memref<1x32xf32, #tpu.memory_space<vmem>>, vector<1x32xf32>
    %c0_4 = arith.constant 0 : index
    %c0_5 = arith.constant 0 : index
    %3 = vector.load %arg4[%c0_4, %c0_5] : memref<1x32xf32, #tpu.memory_space<vmem>>, vector<1x32xf32>
    %cst = arith.constant dense<0.000000e+00> : vector<8xf32>
    %4 = vector.multi_reduction <add>, %1, %cst [1] : vector<8x32xf32> to vector<8xf32>
    %5 = vector.shape_cast %4 : vector<8xf32> to vector<8x1xf32>
    %cst_6 = arith.constant 3.200000e+01 : f32
    %6 = vector.broadcast %cst_6 : f32 to vector<8x1xf32>
    %7 = arith.divf %5, %6 : vector<8x1xf32>
    %8 = vector.broadcast %7 : vector<8x1xf32> to vector<8x32xf32>
    %9 = arith.subf %1, %8 : vector<8x32xf32>
    %10 = arith.mulf %9, %9 : vector<8x32xf32>
    %cst_7 = arith.constant dense<0.000000e+00> : vector<8xf32>
    %11 = vector.multi_reduction <add>, %10, %cst_7 [1] : vector<8x32xf32> to vector<8xf32>
    %12 = vector.shape_cast %11 : vector<8xf32> to vector<8x1xf32>
    %cst_8 = arith.constant 3.200000e+01 : f32
    %13 = vector.broadcast %cst_8 : f32 to vector<8x1xf32>
    %14 = arith.divf %12, %13 : vector<8x1xf32>
    %cst_9 = arith.constant 9.99999974E-6 : f32
    %15 = vector.broadcast %cst_9 : f32 to vector<8x1xf32>
    %16 = arith.addf %14, %15 : vector<8x1xf32>
    %17 = math.rsqrt %16 : vector<8x1xf32>
    %18 = vector.broadcast %17 : vector<8x1xf32> to vector<8x32xf32>
    %19 = arith.mulf %9, %18 : vector<8x32xf32>
    %20 = vector.broadcast %2 : vector<1x32xf32> to vector<8x32xf32>
    %21 = arith.mulf %19, %20 : vector<8x32xf32>
    %22 = vector.broadcast %3 : vector<1x32xf32> to vector<8x32xf32>
    %23 = arith.addf %21, %22 : vector<8x32xf32>
    %c0_10 = arith.constant 0 : index
    %c0_11 = arith.constant 0 : index
    %c0_12 = arith.constant 0 : index
    %24 = vector.load %arg2[%c0_10, %c0_11, %c0_12] : memref<1x8x4xf32, #tpu.memory_space<vmem>>, vector<1x8x4xf32>
    %25 = vector.shape_cast %24 : vector<1x8x4xf32> to vector<8x4xf32>
    %c0_13 = arith.constant 0 : index
    %c0_14 = arith.constant 0 : index
    %26 = vector.load %arg5[%c0_13, %c0_14] : memref<4x32xf32, #tpu.memory_space<vmem>>, vector<4x32xf32>
    %cst_15 = arith.constant dense<0.000000e+00> : vector<8x32xf32>
    %27 = tpu.matmul %25, %26, %cst_15 {dimension_numbers = #tpu.dot_dimension_numbers<[1], [0], [0], [1], [0, 0, 1, 1], [], []>} : vector<8x4xf32>, vector<4x32xf32>, vector<8x32xf32> -> vector<8x32xf32>
    %c0_16 = arith.constant 0 : index
    %c0_17 = arith.constant 0 : index
    %28 = vector.load %arg6[%c0_16, %c0_17] : memref<1x32xf32, #tpu.memory_space<vmem>>, vector<1x32xf32>
    %29 = vector.broadcast %28 : vector<1x32xf32> to vector<8x32xf32>
    %30 = arith.addf %27, %29 : vector<8x32xf32>
    %31 = arith.addf %23, %30 : vector<8x32xf32>
    %c0_18 = arith.constant 0 : index
    %c0_19 = arith.constant 0 : index
    %32 = vector.load %arg7[%c0_18, %c0_19] : memref<32x64xf32, #tpu.memory_space<vmem>>, vector<32x64xf32>
    %cst_20 = arith.constant dense<0.000000e+00> : vector<8x64xf32>
    %33 = tpu.matmul %31, %32, %cst_20 {dimension_numbers = #tpu.dot_dimension_numbers<[1], [0], [0], [1], [0, 0, 1, 1], [], []>} : vector<8x32xf32>, vector<32x64xf32>, vector<8x64xf32> -> vector<8x64xf32>
    %c0_21 = arith.constant 0 : index
    %c0_22 = arith.constant 0 : index
    %34 = vector.load %arg8[%c0_21, %c0_22] : memref<1x64xf32, #tpu.memory_space<vmem>>, vector<1x64xf32>
    %35 = vector.broadcast %34 : vector<1x64xf32> to vector<8x64xf32>
    %36 = arith.addf %33, %35 : vector<8x64xf32>
    %37 = vector.extract_strided_slice %36 {offsets = [0, 0], sizes = [8, 32], strides = [1, 1]} : vector<8x64xf32> to vector<8x32xf32>
    %cst_23 = arith.constant 0.353553385 : f32
    %38 = vector.broadcast %cst_23 : f32 to vector<8x32xf32>
    %39 = arith.mulf %37, %38 : vector<8x32xf32>
    %40 = vector.extract_strided_slice %36 {offsets = [0, 32], sizes = [8, 32], strides = [1, 1]} : vector<8x64xf32> to vector<8x32xf32>
    %c0_24 = arith.constant 0 : index
    %c0_25 = arith.constant 0 : index
    %41 = vector.load %arg9[%c0_24, %c0_25] : memref<32x32xf32, #tpu.memory_space<vmem>>, vector<32x32xf32>
    %cst_26 = arith.constant dense<0.000000e+00> : vector<8x32xf32>
    %42 = tpu.matmul %23, %41, %cst_26 {dimension_numbers = #tpu.dot_dimension_numbers<[1], [0], [0], [1], [0, 0, 1, 1], [], []>} : vector<8x32xf32>, vector<32x32xf32>, vector<8x32xf32> -> vector<8x32xf32>
    %c0_27 = arith.constant 0 : index
    %c0_28 = arith.constant 0 : index
    %43 = vector.load %arg10[%c0_27, %c0_28] : memref<1x32xf32, #tpu.memory_space<vmem>>, vector<1x32xf32>
    %44 = vector.broadcast %43 : vector<1x32xf32> to vector<8x32xf32>
    %45 = arith.addf %42, %44 : vector<8x32xf32>
    %c0_29 = arith.constant 0 : index
    %c0_30 = arith.constant 0 : index
    %46 = vector.load %arg11[%c0_29, %c0_30] : memref<32x32xf32, #tpu.memory_space<vmem>>, vector<32x32xf32>
    %c0_31 = arith.constant 0 : index
    %c0_32 = arith.constant 0 : index
    %47 = vector.load %arg12[%c0_31, %c0_32] : memref<1x32xf32, #tpu.memory_space<vmem>>, vector<1x32xf32>
    %cst_33 = arith.constant 0.000000e+00 : f32
    %48 = vector.broadcast %cst_33 : f32 to vector<8x32xf32>
    %49 = vector.broadcast %47 : vector<1x32xf32> to vector<8x32xf32>
    %50 = arith.addf %48, %49 : vector<8x32xf32>
    %51 = vector.extract_strided_slice %39 {offsets = [0, 0], sizes = [8, 8], strides = [1, 1]} : vector<8x32xf32> to vector<8x8xf32>
    %52 = vector.extract_strided_slice %40 {offsets = [0, 0], sizes = [8, 8], strides = [1, 1]} : vector<8x32xf32> to vector<8x8xf32>
    %53 = vector.extract_strided_slice %45 {offsets = [0, 0], sizes = [8, 8], strides = [1, 1]} : vector<8x32xf32> to vector<8x8xf32>
    %cst_34 = arith.constant dense<0.000000e+00> : vector<8x8xf32>
    %54 = tpu.matmul %51, %52, %cst_34 {dimension_numbers = #tpu.dot_dimension_numbers<[1], [1], [0], [0], [0, 0, 1, 0], [], []>} : vector<8x8xf32>, vector<8x8xf32>, vector<8x8xf32> -> vector<8x8xf32>
    %cst_35 = arith.constant dense<0xFF800000> : vector<8xf32>
    %55 = vector.multi_reduction <maximumf>, %54, %cst_35 [1] : vector<8x8xf32> to vector<8xf32>
    %56 = vector.shape_cast %55 : vector<8xf32> to vector<8x1xf32>
    %57 = vector.broadcast %56 : vector<8x1xf32> to vector<8x8xf32>
    %58 = arith.subf %54, %57 : vector<8x8xf32>
    %59 = math.exp %58 : vector<8x8xf32>
    %cst_36 = arith.constant dense<0.000000e+00> : vector<8xf32>
    %60 = vector.multi_reduction <add>, %59, %cst_36 [1] : vector<8x8xf32> to vector<8xf32>
    %61 = vector.shape_cast %60 : vector<8xf32> to vector<8x1xf32>
    %62 = tpu.reciprocal %61 {approx = true} : vector<8x1xf32> -> vector<8x1xf32>
    %63 = vector.broadcast %62 : vector<8x1xf32> to vector<8x8xf32>
    %64 = arith.mulf %59, %63 : vector<8x8xf32>
    %cst_37 = arith.constant dense<0.000000e+00> : vector<8x8xf32>
    %65 = tpu.matmul %64, %53, %cst_37 {dimension_numbers = #tpu.dot_dimension_numbers<[1], [0], [0], [1], [0, 0, 1, 1], [], []>} : vector<8x8xf32>, vector<8x8xf32>, vector<8x8xf32> -> vector<8x8xf32>
    %66 = vector.extract_strided_slice %46 {offsets = [0, 0], sizes = [8, 32], strides = [1, 1]} : vector<32x32xf32> to vector<8x32xf32>
    %cst_38 = arith.constant dense<0.000000e+00> : vector<8x32xf32>
    %67 = tpu.matmul %65, %66, %cst_38 {dimension_numbers = #tpu.dot_dimension_numbers<[1], [0], [0], [1], [0, 0, 1, 1], [], []>} : vector<8x8xf32>, vector<8x32xf32>, vector<8x32xf32> -> vector<8x32xf32>
    %68 = arith.addf %50, %67 : vector<8x32xf32>
    %69 = vector.extract_strided_slice %39 {offsets = [0, 8], sizes = [8, 8], strides = [1, 1]} : vector<8x32xf32> to vector<8x8xf32>
    %70 = vector.extract_strided_slice %40 {offsets = [0, 8], sizes = [8, 8], strides = [1, 1]} : vector<8x32xf32> to vector<8x8xf32>
    %71 = vector.extract_strided_slice %45 {offsets = [0, 8], sizes = [8, 8], strides = [1, 1]} : vector<8x32xf32> to vector<8x8xf32>
    %cst_39 = arith.constant dense<0.000000e+00> : vector<8x8xf32>
    %72 = tpu.matmul %69, %70, %cst_39 {dimension_numbers = #tpu.dot_dimension_numbers<[1], [1], [0], [0], [0, 0, 1, 0], [], []>} : vector<8x8xf32>, vector<8x8xf32>, vector<8x8xf32> -> vector<8x8xf32>
    %cst_40 = arith.constant dense<0xFF800000> : vector<8xf32>
    %73 = vector.multi_reduction <maximumf>, %72, %cst_40 [1] : vector<8x8xf32> to vector<8xf32>
    %74 = vector.shape_cast %73 : vector<8xf32> to vector<8x1xf32>
    %75 = vector.broadcast %74 : vector<8x1xf32> to vector<8x8xf32>
    %76 = arith.subf %72, %75 : vector<8x8xf32>
    %77 = math.exp %76 : vector<8x8xf32>
    %cst_41 = arith.constant dense<0.000000e+00> : vector<8xf32>
    %78 = vector.multi_reduction <add>, %77, %cst_41 [1] : vector<8x8xf32> to vector<8xf32>
    %79 = vector.shape_cast %78 : vector<8xf32> to vector<8x1xf32>
    %80 = tpu.reciprocal %79 {approx = true} : vector<8x1xf32> -> vector<8x1xf32>
    %81 = vector.broadcast %80 : vector<8x1xf32> to vector<8x8xf32>
    %82 = arith.mulf %77, %81 : vector<8x8xf32>
    %cst_42 = arith.constant dense<0.000000e+00> : vector<8x8xf32>
    %83 = tpu.matmul %82, %71, %cst_42 {dimension_numbers = #tpu.dot_dimension_numbers<[1], [0], [0], [1], [0, 0, 1, 1], [], []>} : vector<8x8xf32>, vector<8x8xf32>, vector<8x8xf32> -> vector<8x8xf32>
    %84 = vector.extract_strided_slice %46 {offsets = [8, 0], sizes = [8, 32], strides = [1, 1]} : vector<32x32xf32> to vector<8x32xf32>
    %cst_43 = arith.constant dense<0.000000e+00> : vector<8x32xf32>
    %85 = tpu.matmul %83, %84, %cst_43 {dimension_numbers = #tpu.dot_dimension_numbers<[1], [0], [0], [1], [0, 0, 1, 1], [], []>} : vector<8x8xf32>, vector<8x32xf32>, vector<8x32xf32> -> vector<8x32xf32>
    %86 = arith.addf %68, %85 : vector<8x32xf32>
    %87 = vector.extract_strided_slice %39 {offsets = [0, 16], sizes = [8, 8], strides = [1, 1]} : vector<8x32xf32> to vector<8x8xf32>
    %88 = vector.extract_strided_slice %40 {offsets = [0, 16], sizes = [8, 8], strides = [1, 1]} : vector<8x32xf32> to vector<8x8xf32>
    %89 = vector.extract_strided_slice %45 {offsets = [0, 16], sizes = [8, 8], strides = [1, 1]} : vector<8x32xf32> to vector<8x8xf32>
    %cst_44 = arith.constant dense<0.000000e+00> : vector<8x8xf32>
    %90 = tpu.matmul %87, %88, %cst_44 {dimension_numbers = #tpu.dot_dimension_numbers<[1], [1], [0], [0], [0, 0, 1, 0], [], []>} : vector<8x8xf32>, vector<8x8xf32>, vector<8x8xf32> -> vector<8x8xf32>
    %cst_45 = arith.constant dense<0xFF800000> : vector<8xf32>
    %91 = vector.multi_reduction <maximumf>, %90, %cst_45 [1] : vector<8x8xf32> to vector<8xf32>
    %92 = vector.shape_cast %91 : vector<8xf32> to vector<8x1xf32>
    %93 = vector.broadcast %92 : vector<8x1xf32> to vector<8x8xf32>
    %94 = arith.subf %90, %93 : vector<8x8xf32>
    %95 = math.exp %94 : vector<8x8xf32>
    %cst_46 = arith.constant dense<0.000000e+00> : vector<8xf32>
    %96 = vector.multi_reduction <add>, %95, %cst_46 [1] : vector<8x8xf32> to vector<8xf32>
    %97 = vector.shape_cast %96 : vector<8xf32> to vector<8x1xf32>
    %98 = tpu.reciprocal %97 {approx = true} : vector<8x1xf32> -> vector<8x1xf32>
    %99 = vector.broadcast %98 : vector<8x1xf32> to vector<8x8xf32>
    %100 = arith.mulf %95, %99 : vector<8x8xf32>
    %cst_47 = arith.constant dense<0.000000e+00> : vector<8x8xf32>
    %101 = tpu.matmul %100, %89, %cst_47 {dimension_numbers = #tpu.dot_dimension_numbers<[1], [0], [0], [1], [0, 0, 1, 1], [], []>} : vector<8x8xf32>, vector<8x8xf32>, vector<8x8xf32> -> vector<8x8xf32>
    %102 = vector.extract_strided_slice %46 {offsets = [16, 0], sizes = [8, 32], strides = [1, 1]} : vector<32x32xf32> to vector<8x32xf32>
    %cst_48 = arith.constant dense<0.000000e+00> : vector<8x32xf32>
    %103 = tpu.matmul %101, %102, %cst_48 {dimension_numbers = #tpu.dot_dimension_numbers<[1], [0], [0], [1], [0, 0, 1, 1], [], []>} : vector<8x8xf32>, vector<8x32xf32>, vector<8x32xf32> -> vector<8x32xf32>
    %104 = arith.addf %86, %103 : vector<8x32xf32>
    %105 = vector.extract_strided_slice %39 {offsets = [0, 24], sizes = [8, 8], strides = [1, 1]} : vector<8x32xf32> to vector<8x8xf32>
    %106 = vector.extract_strided_slice %40 {offsets = [0, 24], sizes = [8, 8], strides = [1, 1]} : vector<8x32xf32> to vector<8x8xf32>
    %107 = vector.extract_strided_slice %45 {offsets = [0, 24], sizes = [8, 8], strides = [1, 1]} : vector<8x32xf32> to vector<8x8xf32>
    %cst_49 = arith.constant dense<0.000000e+00> : vector<8x8xf32>
    %108 = tpu.matmul %105, %106, %cst_49 {dimension_numbers = #tpu.dot_dimension_numbers<[1], [1], [0], [0], [0, 0, 1, 0], [], []>} : vector<8x8xf32>, vector<8x8xf32>, vector<8x8xf32> -> vector<8x8xf32>
    %cst_50 = arith.constant dense<0xFF800000> : vector<8xf32>
    %109 = vector.multi_reduction <maximumf>, %108, %cst_50 [1] : vector<8x8xf32> to vector<8xf32>
    %110 = vector.shape_cast %109 : vector<8xf32> to vector<8x1xf32>
    %111 = vector.broadcast %110 : vector<8x1xf32> to vector<8x8xf32>
    %112 = arith.subf %108, %111 : vector<8x8xf32>
    %113 = math.exp %112 : vector<8x8xf32>
    %cst_51 = arith.constant dense<0.000000e+00> : vector<8xf32>
    %114 = vector.multi_reduction <add>, %113, %cst_51 [1] : vector<8x8xf32> to vector<8xf32>
    %115 = vector.shape_cast %114 : vector<8xf32> to vector<8x1xf32>
    %116 = tpu.reciprocal %115 {approx = true} : vector<8x1xf32> -> vector<8x1xf32>
    %117 = vector.broadcast %116 : vector<8x1xf32> to vector<8x8xf32>
    %118 = arith.mulf %113, %117 : vector<8x8xf32>
    %cst_52 = arith.constant dense<0.000000e+00> : vector<8x8xf32>
    %119 = tpu.matmul %118, %107, %cst_52 {dimension_numbers = #tpu.dot_dimension_numbers<[1], [0], [0], [1], [0, 0, 1, 1], [], []>} : vector<8x8xf32>, vector<8x8xf32>, vector<8x8xf32> -> vector<8x8xf32>
    %120 = vector.extract_strided_slice %46 {offsets = [24, 0], sizes = [8, 32], strides = [1, 1]} : vector<32x32xf32> to vector<8x32xf32>
    %cst_53 = arith.constant dense<0.000000e+00> : vector<8x32xf32>
    %121 = tpu.matmul %119, %120, %cst_53 {dimension_numbers = #tpu.dot_dimension_numbers<[1], [0], [0], [1], [0, 0, 1, 1], [], []>} : vector<8x8xf32>, vector<8x32xf32>, vector<8x32xf32> -> vector<8x32xf32>
    %122 = arith.addf %104, %121 : vector<8x32xf32>
    %123 = arith.addf %1, %122 : vector<8x32xf32>
    %c0_54 = arith.constant 0 : index
    %c0_55 = arith.constant 0 : index
    %124 = vector.load %arg13[%c0_54, %c0_55] : memref<1x32xf32, #tpu.memory_space<vmem>>, vector<1x32xf32>
    %c0_56 = arith.constant 0 : index
    %c0_57 = arith.constant 0 : index
    %125 = vector.load %arg14[%c0_56, %c0_57] : memref<1x32xf32, #tpu.memory_space<vmem>>, vector<1x32xf32>
    %cst_58 = arith.constant dense<0.000000e+00> : vector<8xf32>
    %126 = vector.multi_reduction <add>, %123, %cst_58 [1] : vector<8x32xf32> to vector<8xf32>
    %127 = vector.shape_cast %126 : vector<8xf32> to vector<8x1xf32>
    %cst_59 = arith.constant 3.200000e+01 : f32
    %128 = vector.broadcast %cst_59 : f32 to vector<8x1xf32>
    %129 = arith.divf %127, %128 : vector<8x1xf32>
    %130 = vector.broadcast %129 : vector<8x1xf32> to vector<8x32xf32>
    %131 = arith.subf %123, %130 : vector<8x32xf32>
    %132 = arith.mulf %131, %131 : vector<8x32xf32>
    %cst_60 = arith.constant dense<0.000000e+00> : vector<8xf32>
    %133 = vector.multi_reduction <add>, %132, %cst_60 [1] : vector<8x32xf32> to vector<8xf32>
    %134 = vector.shape_cast %133 : vector<8xf32> to vector<8x1xf32>
    %cst_61 = arith.constant 3.200000e+01 : f32
    %135 = vector.broadcast %cst_61 : f32 to vector<8x1xf32>
    %136 = arith.divf %134, %135 : vector<8x1xf32>
    %cst_62 = arith.constant 9.99999974E-6 : f32
    %137 = vector.broadcast %cst_62 : f32 to vector<8x1xf32>
    %138 = arith.addf %136, %137 : vector<8x1xf32>
    %139 = math.rsqrt %138 : vector<8x1xf32>
    %140 = vector.broadcast %139 : vector<8x1xf32> to vector<8x32xf32>
    %141 = arith.mulf %131, %140 : vector<8x32xf32>
    %142 = vector.broadcast %124 : vector<1x32xf32> to vector<8x32xf32>
    %143 = arith.mulf %141, %142 : vector<8x32xf32>
    %144 = vector.broadcast %125 : vector<1x32xf32> to vector<8x32xf32>
    %145 = arith.addf %143, %144 : vector<8x32xf32>
    %c0_63 = arith.constant 0 : index
    %c0_64 = arith.constant 0 : index
    %146 = vector.load %arg15[%c0_63, %c0_64] : memref<32x64xf32, #tpu.memory_space<vmem>>, vector<32x64xf32>
    %cst_65 = arith.constant dense<0.000000e+00> : vector<8x64xf32>
    %147 = tpu.matmul %145, %146, %cst_65 {dimension_numbers = #tpu.dot_dimension_numbers<[1], [0], [0], [1], [0, 0, 1, 1], [], []>} : vector<8x32xf32>, vector<32x64xf32>, vector<8x64xf32> -> vector<8x64xf32>
    %c0_66 = arith.constant 0 : index
    %c0_67 = arith.constant 0 : index
    %148 = vector.load %arg16[%c0_66, %c0_67] : memref<1x64xf32, #tpu.memory_space<vmem>>, vector<1x64xf32>
    %149 = vector.broadcast %148 : vector<1x64xf32> to vector<8x64xf32>
    %150 = arith.addf %147, %149 : vector<8x64xf32>
    %cst_68 = arith.constant 0.000000e+00 : f32
    %151 = vector.broadcast %cst_68 : f32 to vector<8x64xf32>
    %152 = arith.maximumf %150, %151 : vector<8x64xf32>
    %c0_69 = arith.constant 0 : index
    %c0_70 = arith.constant 0 : index
    %153 = vector.load %arg17[%c0_69, %c0_70] : memref<64x32xf32, #tpu.memory_space<vmem>>, vector<64x32xf32>
    %cst_71 = arith.constant dense<0.000000e+00> : vector<8x32xf32>
    %154 = tpu.matmul %152, %153, %cst_71 {dimension_numbers = #tpu.dot_dimension_numbers<[1], [0], [0], [1], [0, 0, 1, 1], [], []>} : vector<8x64xf32>, vector<64x32xf32>, vector<8x32xf32> -> vector<8x32xf32>
    %c0_72 = arith.constant 0 : index
    %c0_73 = arith.constant 0 : index
    %155 = vector.load %arg18[%c0_72, %c0_73] : memref<1x32xf32, #tpu.memory_space<vmem>>, vector<1x32xf32>
    %156 = vector.broadcast %155 : vector<1x32xf32> to vector<8x32xf32>
    %157 = arith.addf %154, %156 : vector<8x32xf32>
    %158 = arith.addf %123, %157 : vector<8x32xf32>
    %c0_74 = arith.constant 0 : index
    %c0_75 = arith.constant 0 : index
    %c0_76 = arith.constant 0 : index
    %159 = vector.load %arg19[%c0_74, %c0_75, %c0_76] : memref<1x8x32xf32, #tpu.memory_space<vmem>>, vector<1x8x32xf32>
    %160 = vector.shape_cast %159 : vector<1x8x32xf32> to vector<8x32xf32>
    %161 = vector.shape_cast %158 : vector<8x32xf32> to vector<1x8x32xf32>
    tpu.vector_store %arg19[%c0_74, %c0_75, %c0_76], %161 {strides = array<i32>} : memref<1x8x32xf32, #tpu.memory_space<vmem>>, vector<1x8x32xf32>,
    return
  }
  func.func @transform_0(%arg0: i32) -> (i32, i32, i32) {
    %c0_i32 = arith.constant 0 : i32
    %c0_i32_0 = arith.constant 0 : i32
    %c0_i32_1 = arith.constant 0 : i32
    return %arg0, %c0_i32, %c0_i32_0 : i32, i32, i32
  }
  func.func @transform_1(%arg0: i32) -> (i32, i32, i32) {
    %c0_i32 = arith.constant 0 : i32
    %c0_i32_0 = arith.constant 0 : i32
    %c0_i32_1 = arith.constant 0 : i32
    return %arg0, %c0_i32, %c0_i32_0 : i32, i32, i32
  }
  func.func @transform_2(%arg0: i32) -> (i32, i32) {
    %c0_i32 = arith.constant 0 : i32
    %c0_i32_0 = arith.constant 0 : i32
    %c0_i32_1 = arith.constant 0 : i32
    return %c0_i32, %c0_i32_0 : i32, i32
  }
  func.func @transform_3(%arg0: i32) -> (i32, i32) {
    %c0_i32 = arith.constant 0 : i32
    %c0_i32_0 = arith.constant 0 : i32
    %c0_i32_1 = arith.constant 0 : i32
    return %c0_i32, %c0_i32_0 : i32, i32
  }
  func.func @transform_4(%arg0: i32) -> (i32, i32) {
    %c0_i32 = arith.constant 0 : i32
    %c0_i32_0 = arith.constant 0 : i32
    %c0_i32_1 = arith.constant 0 : i32
    return %c0_i32, %c0_i32_0 : i32, i32
  }
  func.func @transform_5(%arg0: i32) -> (i32, i32) {
    %c0_i32 = arith.constant 0 : i32
    %c0_i32_0 = arith.constant 0 : i32
    %c0_i32_1 = arith.constant 0 : i32
    return %c0_i32, %c0_i32_0 : i32, i32
  }
  func.func @transform_6(%arg0: i32) -> (i32, i32) {
    %c0_i32 = arith.constant 0 : i32
    %c0_i32_0 = arith.constant 0 : i32
    %c0_i32_1 = arith.constant 0 : i32
    return %c0_i32, %c0_i32_0 : i32, i32
  }
  func.func @transform_7(%arg0: i32) -> (i32, i32) {
    %c0_i32 = arith.constant 0 : i32
    %c0_i32_0 = arith.constant 0 : i32
    %c0_i32_1 = arith.constant 0 : i32
    return %c0_i32, %c0_i32_0 : i32, i32
  }
  func.func @transform_8(%arg0: i32) -> (i32, i32) {
    %c0_i32 = arith.constant 0 : i32
    %c0_i32_0 = arith.constant 0 : i32
    %c0_i32_1 = arith.constant 0 : i32
    return %c0_i32, %c0_i32_0 : i32, i32
  }
  func.func @transform_9(%arg0: i32) -> (i32, i32) {
    %c0_i32 = arith.constant 0 : i32
    %c0_i32_0 = arith.constant 0 : i32
    %c0_i32_1 = arith.constant 0 : i32
    return %c0_i32, %c0_i32_0 : i32, i32
  }
  func.func @transform_10(%arg0: i32) -> (i32, i32) {
    %c0_i32 = arith.constant 0 : i32
    %c0_i32_0 = arith.constant 0 : i32
    %c0_i32_1 = arith.constant 0 : i32
    return %c0_i32, %c0_i32_0 : i32, i32
  }
  func.func @transform_11(%arg0: i32) -> (i32, i32) {
    %c0_i32 = arith.constant 0 : i32
    %c0_i32_0 = arith.constant 0 : i32
    %c0_i32_1 = arith.constant 0 : i32
    return %c0_i32, %c0_i32_0 : i32, i32
  }
  func.func @transform_12(%arg0: i32) -> (i32, i32) {
    %c0_i32 = arith.constant 0 : i32
    %c0_i32_0 = arith.constant 0 : i32
    %c0_i32_1 = arith.constant 0 : i32
    return %c0_i32, %c0_i32_0 : i32, i32
  }
  func.func @transform_13(%arg0: i32) -> (i32, i32) {
    %c0_i32 = arith.constant 0 : i32
    %c0_i32_0 = arith.constant 0 : i32
    %c0_i32_1 = arith.constant 0 : i32
    return %c0_i32, %c0_i32_0 : i32, i32
  }
  func.func @transform_14(%arg0: i32) -> (i32, i32) {
    %c0_i32 = arith.constant 0 : i32
    %c0_i32_0 = arith.constant 0 : i32
    %c0_i32_1 = arith.constant 0 : i32
    return %c0_i32, %c0_i32_0 : i32, i32
  }
  func.func @transform_15(%arg0: i32) -> (i32, i32) {
    %c0_i32 = arith.constant 0 : i32
    %c0_i32_0 = arith.constant 0 : i32
    %c0_i32_1 = arith.constant 0 : i32
    return %c0_i32, %c0_i32_0 : i32, i32
  }
  func.func @transform_16(%arg0: i32) -> (i32, i32) {
    %c0_i32 = arith.constant 0 : i32
    %c0_i32_0 = arith.constant 0 : i32
    %c0_i32_1 = arith.constant 0 : i32
    return %c0_i32, %c0_i32_0 : i32, i32
  }
  func.func @transform_17(%arg0: i32) -> (i32, i32) {
    %c0_i32 = arith.constant 0 : i32
    %c0_i32_0 = arith.constant 0 : i32
    %c0_i32_1 = arith.constant 0 : i32
    return %c0_i32, %c0_i32_0 : i32, i32
  }
  func.func @transform_18(%arg0: i32) -> (i32, i32, i32) {
    %c0_i32 = arith.constant 0 : i32
    %c0_i32_0 = arith.constant 0 : i32
    %c0_i32_1 = arith.constant 0 : i32
    return %arg0, %c0_i32, %c0_i32_0 : i32, i32, i32
  }
}

module attributes {stable_mosaic.version = 11 : i64} {
  func.func @_decoder_layer_kernel(%arg0: i32, %arg1: memref<1x8x32xf32, #tpu.memory_space<vmem>>, %arg2: memref<1x8x32xf32, #tpu.memory_space<vmem>>, %arg3: memref<1x1x8xf32, #tpu.memory_space<vmem>>, %arg4: memref<1x32xf32, #tpu.memory_space<vmem>>, %arg5: memref<1x32xf32, #tpu.memory_space<vmem>>, %arg6: memref<32x96xf32, #tpu.memory_space<vmem>>, %arg7: memref<1x96xf32, #tpu.memory_space<vmem>>, %arg8: memref<32x32xf32, #tpu.memory_space<vmem>>, %arg9: memref<1x32xf32, #tpu.memory_space<vmem>>, %arg10: memref<1x32xf32, #tpu.memory_space<vmem>>, %arg11: memref<1x32xf32, #tpu.memory_space<vmem>>, %arg12: memref<32x32xf32, #tpu.memory_space<vmem>>, %arg13: memref<1x32xf32, #tpu.memory_space<vmem>>, %arg14: memref<32x64xf32, #tpu.memory_space<vmem>>, %arg15: memref<1x64xf32, #tpu.memory_space<vmem>>, %arg16: memref<32x32xf32, #tpu.memory_space<vmem>>, %arg17: memref<1x32xf32, #tpu.memory_space<vmem>>, %arg18: memref<1x32xf32, #tpu.memory_space<vmem>>, %arg19: memref<1x32xf32, #tpu.memory_space<vmem>>, %arg20: memref<32x64xf32, #tpu.memory_space<vmem>>, %arg21: memref<1x64xf32, #tpu.memory_space<vmem>>, %arg22: memref<64x32xf32, #tpu.memory_space<vmem>>, %arg23: memref<1x32xf32, #tpu.memory_space<vmem>>, %arg24: memref<1x8x32xf32, #tpu.memory_space<vmem>>) attributes {dimension_semantics = [#tpu.dimension_semantics<parallel>], iteration_bounds = array<i64: 2>, scalar_prefetch = 0 : i64, scratch_operands = 0 : i64, tpu.core_type = #tpu.core_type<tc>, window_params = [{transform_indices = @transform_0, window_bounds = array<i64: 1, 8, 32>}, {transform_indices = @transform_1, window_bounds = array<i64: 1, 8, 32>}, {transform_indices = @transform_2, window_bounds = array<i64: 1, 1, 8>}, {pipeline_mode = #tpu.pipeline_mode<synchronous>, transform_indices = @transform_3, window_bounds = array<i64: 1, 32>}, {pipeline_mode = #tpu.pipeline_mode<synchronous>, transform_indices = @transform_4, window_bounds = array<i64: 1, 32>}, {pipeline_mode = #tpu.pipeline_mode<synchronous>, transform_indices = @transform_5, window_bounds = array<i64: 32, 96>}, {pipeline_mode = #tpu.pipeline_mode<synchronous>, transform_indices = @transform_6, window_bounds = array<i64: 1, 96>}, {pipeline_mode = #tpu.pipeline_mode<synchronous>, transform_indices = @transform_7, window_bounds = array<i64: 32, 32>}, {pipeline_mode = #tpu.pipeline_mode<synchronous>, transform_indices = @transform_8, window_bounds = array<i64: 1, 32>}, {pipeline_mode = #tpu.pipeline_mode<synchronous>, transform_indices = @transform_9, window_bounds = array<i64: 1, 32>}, {pipeline_mode = #tpu.pipeline_mode<synchronous>, transform_indices = @transform_10, window_bounds = array<i64: 1, 32>}, {pipeline_mode = #tpu.pipeline_mode<synchronous>, transform_indices = @transform_11, window_bounds = array<i64: 32, 32>}, {pipeline_mode = #tpu.pipeline_mode<synchronous>, transform_indices = @transform_12, window_bounds = array<i64: 1, 32>}, {pipeline_mode = #tpu.pipeline_mode<synchronous>, transform_indices = @transform_13, window_bounds = array<i64: 32, 64>}, {pipeline_mode = #tpu.pipeline_mode<synchronous>, transform_indices = @transform_14, window_bounds = array<i64: 1, 64>}, {pipeline_mode = #tpu.pipeline_mode<synchronous>, transform_indices = @transform_15, window_bounds = array<i64: 32, 32>}, {pipeline_mode = #tpu.pipeline_mode<synchronous>, transform_indices = @transform_16, window_bounds = array<i64: 1, 32>}, {pipeline_mode = #tpu.pipeline_mode<synchronous>, transform_indices = @transform_17, window_bounds = array<i64: 1, 32>}, {pipeline_mode = #tpu.pipeline_mode<synchronous>, transform_indices = @transform_18, window_bounds = array<i64: 1, 32>}, {pipeline_mode = #tpu.pipeline_mode<synchronous>, transform_indices = @transform_19, window_bounds = array<i64: 32, 64>}, {pipeline_mode = #tpu.pipeline_mode<synchronous>, transform_indices = @transform_20, window_bounds = array<i64: 1, 64>}, {pipeline_mode = #tpu.pipeline_mode<synchronous>, transform_indices = @transform_21, window_bounds = array<i64: 64, 32>}, {pipeline_mode = #tpu.pipeline_mode<synchronous>, transform_indices = @transform_22, window_bounds = array<i64: 1, 32>}, {transform_indices = @transform_23, window_bounds = array<i64: 1, 8, 32>}]} {
    %c0 = arith.constant 0 : index
    %c0_0 = arith.constant 0 : index
    %c0_1 = arith.constant 0 : index
    %0 = vector.load %arg1[%c0, %c0_0, %c0_1] : memref<1x8x32xf32, #tpu.memory_space<vmem>>, vector<1x8x32xf32>
    %1 = vector.shape_cast %0 : vector<1x8x32xf32> to vector<8x32xf32>
    %c0_2 = arith.constant 0 : index
    %c0_3 = arith.constant 0 : index
    %c0_4 = arith.constant 0 : index
    %2 = vector.load %arg2[%c0_2, %c0_3, %c0_4] : memref<1x8x32xf32, #tpu.memory_space<vmem>>, vector<1x8x32xf32>
    %3 = vector.shape_cast %2 : vector<1x8x32xf32> to vector<8x32xf32>
    %4 = tpu.iota {dimensions = array<i32: 0>} : vector<8x8xi32>
    %5 = tpu.iota {dimensions = array<i32: 1>} : vector<8x8xi32>
    %6 = arith.cmpi sge, %4, %5 : vector<8x8xi32>
    %c0_5 = arith.constant 0 : index
    %c0_6 = arith.constant 0 : index
    %c0_7 = arith.constant 0 : index
    %7 = vector.load %arg3[%c0_5, %c0_6, %c0_7] : memref<1x1x8xf32, #tpu.memory_space<vmem>>, vector<1x1x8xf32>
    %8 = vector.shape_cast %7 : vector<1x1x8xf32> to vector<1x8xf32>
    %cst = arith.constant 5.000000e-01 : f32
    %9 = vector.broadcast %cst : f32 to vector<1x8xf32>
    %10 = arith.cmpf ogt, %8, %9 : vector<1x8xf32>
    %cst_8 = arith.constant dense<true> : vector<1x8xi1>
    %11 = arith.xori %10, %cst_8 : vector<1x8xi1>
    %12 = vector.broadcast %11 : vector<1x8xi1> to vector<8x8xi1>
    %13 = arith.andi %6, %12 : vector<8x8xi1>
    %cst_9 = arith.constant 0.000000e+00 : f32
    %cst_10 = arith.constant -1.000000e+30 : f32
    %14 = vector.broadcast %cst_9 : f32 to vector<8x8xf32>
    %15 = vector.broadcast %cst_10 : f32 to vector<8x8xf32>
    %16 = arith.select %13, %14, %15 : vector<8x8xi1>, vector<8x8xf32>
    %c0_11 = arith.constant 0 : index
    %c0_12 = arith.constant 0 : index
    %17 = vector.load %arg4[%c0_11, %c0_12] : memref<1x32xf32, #tpu.memory_space<vmem>>, vector<1x32xf32>
    %c0_13 = arith.constant 0 : index
    %c0_14 = arith.constant 0 : index
    %18 = vector.load %arg5[%c0_13, %c0_14] : memref<1x32xf32, #tpu.memory_space<vmem>>, vector<1x32xf32>
    %cst_15 = arith.constant dense<0.000000e+00> : vector<8xf32>
    %19 = vector.multi_reduction <add>, %1, %cst_15 [1] : vector<8x32xf32> to vector<8xf32>
    %20 = vector.shape_cast %19 : vector<8xf32> to vector<8x1xf32>
    %cst_16 = arith.constant 3.200000e+01 : f32
    %21 = vector.broadcast %cst_16 : f32 to vector<8x1xf32>
    %22 = arith.divf %20, %21 : vector<8x1xf32>
    %23 = vector.broadcast %22 : vector<8x1xf32> to vector<8x32xf32>
    %24 = arith.subf %1, %23 : vector<8x32xf32>
    %25 = arith.mulf %24, %24 : vector<8x32xf32>
    %cst_17 = arith.constant dense<0.000000e+00> : vector<8xf32>
    %26 = vector.multi_reduction <add>, %25, %cst_17 [1] : vector<8x32xf32> to vector<8xf32>
    %27 = vector.shape_cast %26 : vector<8xf32> to vector<8x1xf32>
    %cst_18 = arith.constant 3.200000e+01 : f32
    %28 = vector.broadcast %cst_18 : f32 to vector<8x1xf32>
    %29 = arith.divf %27, %28 : vector<8x1xf32>
    %cst_19 = arith.constant 9.99999974E-6 : f32
    %30 = vector.broadcast %cst_19 : f32 to vector<8x1xf32>
    %31 = arith.addf %29, %30 : vector<8x1xf32>
    %32 = math.rsqrt %31 : vector<8x1xf32>
    %33 = vector.broadcast %32 : vector<8x1xf32> to vector<8x32xf32>
    %34 = arith.mulf %24, %33 : vector<8x32xf32>
    %35 = vector.broadcast %17 : vector<1x32xf32> to vector<8x32xf32>
    %36 = arith.mulf %34, %35 : vector<8x32xf32>
    %37 = vector.broadcast %18 : vector<1x32xf32> to vector<8x32xf32>
    %38 = arith.addf %36, %37 : vector<8x32xf32>
    %c0_20 = arith.constant 0 : index
    %c0_21 = arith.constant 0 : index
    %39 = vector.load %arg6[%c0_20, %c0_21] : memref<32x96xf32, #tpu.memory_space<vmem>>, vector<32x96xf32>
    %cst_22 = arith.constant dense<0.000000e+00> : vector<8x96xf32>
    %40 = tpu.matmul %38, %39, %cst_22 {dimension_numbers = #tpu.dot_dimension_numbers<[1], [0], [0], [1], [0, 0, 1, 1], [], []>} : vector<8x32xf32>, vector<32x96xf32>, vector<8x96xf32> -> vector<8x96xf32>
    %c0_23 = arith.constant 0 : index
    %c0_24 = arith.constant 0 : index
    %41 = vector.load %arg7[%c0_23, %c0_24] : memref<1x96xf32, #tpu.memory_space<vmem>>, vector<1x96xf32>
    %42 = vector.broadcast %41 : vector<1x96xf32> to vector<8x96xf32>
    %43 = arith.addf %40, %42 : vector<8x96xf32>
    %44 = vector.extract_strided_slice %43 {offsets = [0, 0], sizes = [8, 32], strides = [1, 1]} : vector<8x96xf32> to vector<8x32xf32>
    %cst_25 = arith.constant 0.353553385 : f32
    %45 = vector.broadcast %cst_25 : f32 to vector<8x32xf32>
    %46 = arith.mulf %44, %45 : vector<8x32xf32>
    %47 = vector.extract_strided_slice %43 {offsets = [0, 32], sizes = [8, 32], strides = [1, 1]} : vector<8x96xf32> to vector<8x32xf32>
    %48 = vector.extract_strided_slice %43 {offsets = [0, 64], sizes = [8, 32], strides = [1, 1]} : vector<8x96xf32> to vector<8x32xf32>
    %c0_26 = arith.constant 0 : index
    %c0_27 = arith.constant 0 : index
    %49 = vector.load %arg8[%c0_26, %c0_27] : memref<32x32xf32, #tpu.memory_space<vmem>>, vector<32x32xf32>
    %c0_28 = arith.constant 0 : index
    %c0_29 = arith.constant 0 : index
    %50 = vector.load %arg9[%c0_28, %c0_29] : memref<1x32xf32, #tpu.memory_space<vmem>>, vector<1x32xf32>
    %cst_30 = arith.constant 0.000000e+00 : f32
    %51 = vector.broadcast %cst_30 : f32 to vector<8x32xf32>
    %52 = vector.broadcast %50 : vector<1x32xf32> to vector<8x32xf32>
    %53 = arith.addf %51, %52 : vector<8x32xf32>
    %54 = vector.extract_strided_slice %46 {offsets = [0, 0], sizes = [8, 8], strides = [1, 1]} : vector<8x32xf32> to vector<8x8xf32>
    %55 = vector.extract_strided_slice %47 {offsets = [0, 0], sizes = [8, 8], strides = [1, 1]} : vector<8x32xf32> to vector<8x8xf32>
    %56 = vector.extract_strided_slice %48 {offsets = [0, 0], sizes = [8, 8], strides = [1, 1]} : vector<8x32xf32> to vector<8x8xf32>
    %cst_31 = arith.constant dense<0.000000e+00> : vector<8x8xf32>
    %57 = tpu.matmul %54, %55, %cst_31 {dimension_numbers = #tpu.dot_dimension_numbers<[1], [1], [0], [0], [0, 0, 1, 0], [], []>} : vector<8x8xf32>, vector<8x8xf32>, vector<8x8xf32> -> vector<8x8xf32>
    %58 = arith.addf %57, %16 : vector<8x8xf32>
    %cst_32 = arith.constant dense<0xFF800000> : vector<8xf32>
    %59 = vector.multi_reduction <maximumf>, %58, %cst_32 [1] : vector<8x8xf32> to vector<8xf32>
    %60 = vector.shape_cast %59 : vector<8xf32> to vector<8x1xf32>
    %61 = vector.broadcast %60 : vector<8x1xf32> to vector<8x8xf32>
    %62 = arith.subf %58, %61 : vector<8x8xf32>
    %63 = math.exp %62 : vector<8x8xf32>
    %cst_33 = arith.constant dense<0.000000e+00> : vector<8xf32>
    %64 = vector.multi_reduction <add>, %63, %cst_33 [1] : vector<8x8xf32> to vector<8xf32>
    %65 = vector.shape_cast %64 : vector<8xf32> to vector<8x1xf32>
    %66 = tpu.reciprocal %65 {approx = true} : vector<8x1xf32> -> vector<8x1xf32>
    %67 = vector.broadcast %66 : vector<8x1xf32> to vector<8x8xf32>
    %68 = arith.mulf %63, %67 : vector<8x8xf32>
    %cst_34 = arith.constant dense<0.000000e+00> : vector<8x8xf32>
    %69 = tpu.matmul %68, %56, %cst_34 {dimension_numbers = #tpu.dot_dimension_numbers<[1], [0], [0], [1], [0, 0, 1, 1], [], []>} : vector<8x8xf32>, vector<8x8xf32>, vector<8x8xf32> -> vector<8x8xf32>
    %70 = vector.extract_strided_slice %49 {offsets = [0, 0], sizes = [8, 32], strides = [1, 1]} : vector<32x32xf32> to vector<8x32xf32>
    %cst_35 = arith.constant dense<0.000000e+00> : vector<8x32xf32>
    %71 = tpu.matmul %69, %70, %cst_35 {dimension_numbers = #tpu.dot_dimension_numbers<[1], [0], [0], [1], [0, 0, 1, 1], [], []>} : vector<8x8xf32>, vector<8x32xf32>, vector<8x32xf32> -> vector<8x32xf32>
    %72 = arith.addf %53, %71 : vector<8x32xf32>
    %73 = vector.extract_strided_slice %46 {offsets = [0, 8], sizes = [8, 8], strides = [1, 1]} : vector<8x32xf32> to vector<8x8xf32>
    %74 = vector.extract_strided_slice %47 {offsets = [0, 8], sizes = [8, 8], strides = [1, 1]} : vector<8x32xf32> to vector<8x8xf32>
    %75 = vector.extract_strided_slice %48 {offsets = [0, 8], sizes = [8, 8], strides = [1, 1]} : vector<8x32xf32> to vector<8x8xf32>
    %cst_36 = arith.constant dense<0.000000e+00> : vector<8x8xf32>
    %76 = tpu.matmul %73, %74, %cst_36 {dimension_numbers = #tpu.dot_dimension_numbers<[1], [1], [0], [0], [0, 0, 1, 0], [], []>} : vector<8x8xf32>, vector<8x8xf32>, vector<8x8xf32> -> vector<8x8xf32>
    %77 = arith.addf %76, %16 : vector<8x8xf32>
    %cst_37 = arith.constant dense<0xFF800000> : vector<8xf32>
    %78 = vector.multi_reduction <maximumf>, %77, %cst_37 [1] : vector<8x8xf32> to vector<8xf32>
    %79 = vector.shape_cast %78 : vector<8xf32> to vector<8x1xf32>
    %80 = vector.broadcast %79 : vector<8x1xf32> to vector<8x8xf32>
    %81 = arith.subf %77, %80 : vector<8x8xf32>
    %82 = math.exp %81 : vector<8x8xf32>
    %cst_38 = arith.constant dense<0.000000e+00> : vector<8xf32>
    %83 = vector.multi_reduction <add>, %82, %cst_38 [1] : vector<8x8xf32> to vector<8xf32>
    %84 = vector.shape_cast %83 : vector<8xf32> to vector<8x1xf32>
    %85 = tpu.reciprocal %84 {approx = true} : vector<8x1xf32> -> vector<8x1xf32>
    %86 = vector.broadcast %85 : vector<8x1xf32> to vector<8x8xf32>
    %87 = arith.mulf %82, %86 : vector<8x8xf32>
    %cst_39 = arith.constant dense<0.000000e+00> : vector<8x8xf32>
    %88 = tpu.matmul %87, %75, %cst_39 {dimension_numbers = #tpu.dot_dimension_numbers<[1], [0], [0], [1], [0, 0, 1, 1], [], []>} : vector<8x8xf32>, vector<8x8xf32>, vector<8x8xf32> -> vector<8x8xf32>
    %89 = vector.extract_strided_slice %49 {offsets = [8, 0], sizes = [8, 32], strides = [1, 1]} : vector<32x32xf32> to vector<8x32xf32>
    %cst_40 = arith.constant dense<0.000000e+00> : vector<8x32xf32>
    %90 = tpu.matmul %88, %89, %cst_40 {dimension_numbers = #tpu.dot_dimension_numbers<[1], [0], [0], [1], [0, 0, 1, 1], [], []>} : vector<8x8xf32>, vector<8x32xf32>, vector<8x32xf32> -> vector<8x32xf32>
    %91 = arith.addf %72, %90 : vector<8x32xf32>
    %92 = vector.extract_strided_slice %46 {offsets = [0, 16], sizes = [8, 8], strides = [1, 1]} : vector<8x32xf32> to vector<8x8xf32>
    %93 = vector.extract_strided_slice %47 {offsets = [0, 16], sizes = [8, 8], strides = [1, 1]} : vector<8x32xf32> to vector<8x8xf32>
    %94 = vector.extract_strided_slice %48 {offsets = [0, 16], sizes = [8, 8], strides = [1, 1]} : vector<8x32xf32> to vector<8x8xf32>
    %cst_41 = arith.constant dense<0.000000e+00> : vector<8x8xf32>
    %95 = tpu.matmul %92, %93, %cst_41 {dimension_numbers = #tpu.dot_dimension_numbers<[1], [1], [0], [0], [0, 0, 1, 0], [], []>} : vector<8x8xf32>, vector<8x8xf32>, vector<8x8xf32> -> vector<8x8xf32>
    %96 = arith.addf %95, %16 : vector<8x8xf32>
    %cst_42 = arith.constant dense<0xFF800000> : vector<8xf32>
    %97 = vector.multi_reduction <maximumf>, %96, %cst_42 [1] : vector<8x8xf32> to vector<8xf32>
    %98 = vector.shape_cast %97 : vector<8xf32> to vector<8x1xf32>
    %99 = vector.broadcast %98 : vector<8x1xf32> to vector<8x8xf32>
    %100 = arith.subf %96, %99 : vector<8x8xf32>
    %101 = math.exp %100 : vector<8x8xf32>
    %cst_43 = arith.constant dense<0.000000e+00> : vector<8xf32>
    %102 = vector.multi_reduction <add>, %101, %cst_43 [1] : vector<8x8xf32> to vector<8xf32>
    %103 = vector.shape_cast %102 : vector<8xf32> to vector<8x1xf32>
    %104 = tpu.reciprocal %103 {approx = true} : vector<8x1xf32> -> vector<8x1xf32>
    %105 = vector.broadcast %104 : vector<8x1xf32> to vector<8x8xf32>
    %106 = arith.mulf %101, %105 : vector<8x8xf32>
    %cst_44 = arith.constant dense<0.000000e+00> : vector<8x8xf32>
    %107 = tpu.matmul %106, %94, %cst_44 {dimension_numbers = #tpu.dot_dimension_numbers<[1], [0], [0], [1], [0, 0, 1, 1], [], []>} : vector<8x8xf32>, vector<8x8xf32>, vector<8x8xf32> -> vector<8x8xf32>
    %108 = vector.extract_strided_slice %49 {offsets = [16, 0], sizes = [8, 32], strides = [1, 1]} : vector<32x32xf32> to vector<8x32xf32>
    %cst_45 = arith.constant dense<0.000000e+00> : vector<8x32xf32>
    %109 = tpu.matmul %107, %108, %cst_45 {dimension_numbers = #tpu.dot_dimension_numbers<[1], [0], [0], [1], [0, 0, 1, 1], [], []>} : vector<8x8xf32>, vector<8x32xf32>, vector<8x32xf32> -> vector<8x32xf32>
    %110 = arith.addf %91, %109 : vector<8x32xf32>
    %111 = vector.extract_strided_slice %46 {offsets = [0, 24], sizes = [8, 8], strides = [1, 1]} : vector<8x32xf32> to vector<8x8xf32>
    %112 = vector.extract_strided_slice %47 {offsets = [0, 24], sizes = [8, 8], strides = [1, 1]} : vector<8x32xf32> to vector<8x8xf32>
    %113 = vector.extract_strided_slice %48 {offsets = [0, 24], sizes = [8, 8], strides = [1, 1]} : vector<8x32xf32> to vector<8x8xf32>
    %cst_46 = arith.constant dense<0.000000e+00> : vector<8x8xf32>
    %114 = tpu.matmul %111, %112, %cst_46 {dimension_numbers = #tpu.dot_dimension_numbers<[1], [1], [0], [0], [0, 0, 1, 0], [], []>} : vector<8x8xf32>, vector<8x8xf32>, vector<8x8xf32> -> vector<8x8xf32>
    %115 = arith.addf %114, %16 : vector<8x8xf32>
    %cst_47 = arith.constant dense<0xFF800000> : vector<8xf32>
    %116 = vector.multi_reduction <maximumf>, %115, %cst_47 [1] : vector<8x8xf32> to vector<8xf32>
    %117 = vector.shape_cast %116 : vector<8xf32> to vector<8x1xf32>
    %118 = vector.broadcast %117 : vector<8x1xf32> to vector<8x8xf32>
    %119 = arith.subf %115, %118 : vector<8x8xf32>
    %120 = math.exp %119 : vector<8x8xf32>
    %cst_48 = arith.constant dense<0.000000e+00> : vector<8xf32>
    %121 = vector.multi_reduction <add>, %120, %cst_48 [1] : vector<8x8xf32> to vector<8xf32>
    %122 = vector.shape_cast %121 : vector<8xf32> to vector<8x1xf32>
    %123 = tpu.reciprocal %122 {approx = true} : vector<8x1xf32> -> vector<8x1xf32>
    %124 = vector.broadcast %123 : vector<8x1xf32> to vector<8x8xf32>
    %125 = arith.mulf %120, %124 : vector<8x8xf32>
    %cst_49 = arith.constant dense<0.000000e+00> : vector<8x8xf32>
    %126 = tpu.matmul %125, %113, %cst_49 {dimension_numbers = #tpu.dot_dimension_numbers<[1], [0], [0], [1], [0, 0, 1, 1], [], []>} : vector<8x8xf32>, vector<8x8xf32>, vector<8x8xf32> -> vector<8x8xf32>
    %127 = vector.extract_strided_slice %49 {offsets = [24, 0], sizes = [8, 32], strides = [1, 1]} : vector<32x32xf32> to vector<8x32xf32>
    %cst_50 = arith.constant dense<0.000000e+00> : vector<8x32xf32>
    %128 = tpu.matmul %126, %127, %cst_50 {dimension_numbers = #tpu.dot_dimension_numbers<[1], [0], [0], [1], [0, 0, 1, 1], [], []>} : vector<8x8xf32>, vector<8x32xf32>, vector<8x32xf32> -> vector<8x32xf32>
    %129 = arith.addf %110, %128 : vector<8x32xf32>
    %130 = arith.addf %1, %129 : vector<8x32xf32>
    %c0_51 = arith.constant 0 : index
    %c0_52 = arith.constant 0 : index
    %131 = vector.load %arg10[%c0_51, %c0_52] : memref<1x32xf32, #tpu.memory_space<vmem>>, vector<1x32xf32>
    %c0_53 = arith.constant 0 : index
    %c0_54 = arith.constant 0 : index
    %132 = vector.load %arg11[%c0_53, %c0_54] : memref<1x32xf32, #tpu.memory_space<vmem>>, vector<1x32xf32>
    %cst_55 = arith.constant dense<0.000000e+00> : vector<8xf32>
    %133 = vector.multi_reduction <add>, %130, %cst_55 [1] : vector<8x32xf32> to vector<8xf32>
    %134 = vector.shape_cast %133 : vector<8xf32> to vector<8x1xf32>
    %cst_56 = arith.constant 3.200000e+01 : f32
    %135 = vector.broadcast %cst_56 : f32 to vector<8x1xf32>
    %136 = arith.divf %134, %135 : vector<8x1xf32>
    %137 = vector.broadcast %136 : vector<8x1xf32> to vector<8x32xf32>
    %138 = arith.subf %130, %137 : vector<8x32xf32>
    %139 = arith.mulf %138, %138 : vector<8x32xf32>
    %cst_57 = arith.constant dense<0.000000e+00> : vector<8xf32>
    %140 = vector.multi_reduction <add>, %139, %cst_57 [1] : vector<8x32xf32> to vector<8xf32>
    %141 = vector.shape_cast %140 : vector<8xf32> to vector<8x1xf32>
    %cst_58 = arith.constant 3.200000e+01 : f32
    %142 = vector.broadcast %cst_58 : f32 to vector<8x1xf32>
    %143 = arith.divf %141, %142 : vector<8x1xf32>
    %cst_59 = arith.constant 9.99999974E-6 : f32
    %144 = vector.broadcast %cst_59 : f32 to vector<8x1xf32>
    %145 = arith.addf %143, %144 : vector<8x1xf32>
    %146 = math.rsqrt %145 : vector<8x1xf32>
    %147 = vector.broadcast %146 : vector<8x1xf32> to vector<8x32xf32>
    %148 = arith.mulf %138, %147 : vector<8x32xf32>
    %149 = vector.broadcast %131 : vector<1x32xf32> to vector<8x32xf32>
    %150 = arith.mulf %148, %149 : vector<8x32xf32>
    %151 = vector.broadcast %132 : vector<1x32xf32> to vector<8x32xf32>
    %152 = arith.addf %150, %151 : vector<8x32xf32>
    %c0_60 = arith.constant 0 : index
    %c0_61 = arith.constant 0 : index
    %153 = vector.load %arg12[%c0_60, %c0_61] : memref<32x32xf32, #tpu.memory_space<vmem>>, vector<32x32xf32>
    %cst_62 = arith.constant dense<0.000000e+00> : vector<8x32xf32>
    %154 = tpu.matmul %152, %153, %cst_62 {dimension_numbers = #tpu.dot_dimension_numbers<[1], [0], [0], [1], [0, 0, 1, 1], [], []>} : vector<8x32xf32>, vector<32x32xf32>, vector<8x32xf32> -> vector<8x32xf32>
    %c0_63 = arith.constant 0 : index
    %c0_64 = arith.constant 0 : index
    %155 = vector.load %arg13[%c0_63, %c0_64] : memref<1x32xf32, #tpu.memory_space<vmem>>, vector<1x32xf32>
    %156 = vector.broadcast %155 : vector<1x32xf32> to vector<8x32xf32>
    %157 = arith.addf %154, %156 : vector<8x32xf32>
    %cst_65 = arith.constant 0.353553385 : f32
    %158 = vector.broadcast %cst_65 : f32 to vector<8x32xf32>
    %159 = arith.mulf %157, %158 : vector<8x32xf32>
    %c0_66 = arith.constant 0 : index
    %c0_67 = arith.constant 0 : index
    %160 = vector.load %arg14[%c0_66, %c0_67] : memref<32x64xf32, #tpu.memory_space<vmem>>, vector<32x64xf32>
    %cst_68 = arith.constant dense<0.000000e+00> : vector<8x64xf32>
    %161 = tpu.matmul %3, %160, %cst_68 {dimension_numbers = #tpu.dot_dimension_numbers<[1], [0], [0], [1], [0, 0, 1, 1], [], []>} : vector<8x32xf32>, vector<32x64xf32>, vector<8x64xf32> -> vector<8x64xf32>
    %c0_69 = arith.constant 0 : index
    %c0_70 = arith.constant 0 : index
    %162 = vector.load %arg15[%c0_69, %c0_70] : memref<1x64xf32, #tpu.memory_space<vmem>>, vector<1x64xf32>
    %163 = vector.broadcast %162 : vector<1x64xf32> to vector<8x64xf32>
    %164 = arith.addf %161, %163 : vector<8x64xf32>
    %165 = vector.extract_strided_slice %164 {offsets = [0, 0], sizes = [8, 32], strides = [1, 1]} : vector<8x64xf32> to vector<8x32xf32>
    %166 = vector.extract_strided_slice %164 {offsets = [0, 32], sizes = [8, 32], strides = [1, 1]} : vector<8x64xf32> to vector<8x32xf32>
    %c0_71 = arith.constant 0 : index
    %c0_72 = arith.constant 0 : index
    %167 = vector.load %arg16[%c0_71, %c0_72] : memref<32x32xf32, #tpu.memory_space<vmem>>, vector<32x32xf32>
    %c0_73 = arith.constant 0 : index
    %c0_74 = arith.constant 0 : index
    %168 = vector.load %arg17[%c0_73, %c0_74] : memref<1x32xf32, #tpu.memory_space<vmem>>, vector<1x32xf32>
    %cst_75 = arith.constant 0.000000e+00 : f32
    %169 = vector.broadcast %cst_75 : f32 to vector<8x32xf32>
    %170 = vector.broadcast %168 : vector<1x32xf32> to vector<8x32xf32>
    %171 = arith.addf %169, %170 : vector<8x32xf32>
    %172 = vector.extract_strided_slice %159 {offsets = [0, 0], sizes = [8, 8], strides = [1, 1]} : vector<8x32xf32> to vector<8x8xf32>
    %173 = vector.extract_strided_slice %165 {offsets = [0, 0], sizes = [8, 8], strides = [1, 1]} : vector<8x32xf32> to vector<8x8xf32>
    %174 = vector.extract_strided_slice %166 {offsets = [0, 0], sizes = [8, 8], strides = [1, 1]} : vector<8x32xf32> to vector<8x8xf32>
    %cst_76 = arith.constant dense<0.000000e+00> : vector<8x8xf32>
    %175 = tpu.matmul %172, %173, %cst_76 {dimension_numbers = #tpu.dot_dimension_numbers<[1], [1], [0], [0], [0, 0, 1, 0], [], []>} : vector<8x8xf32>, vector<8x8xf32>, vector<8x8xf32> -> vector<8x8xf32>
    %cst_77 = arith.constant dense<0xFF800000> : vector<8xf32>
    %176 = vector.multi_reduction <maximumf>, %175, %cst_77 [1] : vector<8x8xf32> to vector<8xf32>
    %177 = vector.shape_cast %176 : vector<8xf32> to vector<8x1xf32>
    %178 = vector.broadcast %177 : vector<8x1xf32> to vector<8x8xf32>
    %179 = arith.subf %175, %178 : vector<8x8xf32>
    %180 = math.exp %179 : vector<8x8xf32>
    %cst_78 = arith.constant dense<0.000000e+00> : vector<8xf32>
    %181 = vector.multi_reduction <add>, %180, %cst_78 [1] : vector<8x8xf32> to vector<8xf32>
    %182 = vector.shape_cast %181 : vector<8xf32> to vector<8x1xf32>
    %183 = tpu.reciprocal %182 {approx = true} : vector<8x1xf32> -> vector<8x1xf32>
    %184 = vector.broadcast %183 : vector<8x1xf32> to vector<8x8xf32>
    %185 = arith.mulf %180, %184 : vector<8x8xf32>
    %cst_79 = arith.constant dense<0.000000e+00> : vector<8x8xf32>
    %186 = tpu.matmul %185, %174, %cst_79 {dimension_numbers = #tpu.dot_dimension_numbers<[1], [0], [0], [1], [0, 0, 1, 1], [], []>} : vector<8x8xf32>, vector<8x8xf32>, vector<8x8xf32> -> vector<8x8xf32>
    %187 = vector.extract_strided_slice %167 {offsets = [0, 0], sizes = [8, 32], strides = [1, 1]} : vector<32x32xf32> to vector<8x32xf32>
    %cst_80 = arith.constant dense<0.000000e+00> : vector<8x32xf32>
    %188 = tpu.matmul %186, %187, %cst_80 {dimension_numbers = #tpu.dot_dimension_numbers<[1], [0], [0], [1], [0, 0, 1, 1], [], []>} : vector<8x8xf32>, vector<8x32xf32>, vector<8x32xf32> -> vector<8x32xf32>
    %189 = arith.addf %171, %188 : vector<8x32xf32>
    %190 = vector.extract_strided_slice %159 {offsets = [0, 8], sizes = [8, 8], strides = [1, 1]} : vector<8x32xf32> to vector<8x8xf32>
    %191 = vector.extract_strided_slice %165 {offsets = [0, 8], sizes = [8, 8], strides = [1, 1]} : vector<8x32xf32> to vector<8x8xf32>
    %192 = vector.extract_strided_slice %166 {offsets = [0, 8], sizes = [8, 8], strides = [1, 1]} : vector<8x32xf32> to vector<8x8xf32>
    %cst_81 = arith.constant dense<0.000000e+00> : vector<8x8xf32>
    %193 = tpu.matmul %190, %191, %cst_81 {dimension_numbers = #tpu.dot_dimension_numbers<[1], [1], [0], [0], [0, 0, 1, 0], [], []>} : vector<8x8xf32>, vector<8x8xf32>, vector<8x8xf32> -> vector<8x8xf32>
    %cst_82 = arith.constant dense<0xFF800000> : vector<8xf32>
    %194 = vector.multi_reduction <maximumf>, %193, %cst_82 [1] : vector<8x8xf32> to vector<8xf32>
    %195 = vector.shape_cast %194 : vector<8xf32> to vector<8x1xf32>
    %196 = vector.broadcast %195 : vector<8x1xf32> to vector<8x8xf32>
    %197 = arith.subf %193, %196 : vector<8x8xf32>
    %198 = math.exp %197 : vector<8x8xf32>
    %cst_83 = arith.constant dense<0.000000e+00> : vector<8xf32>
    %199 = vector.multi_reduction <add>, %198, %cst_83 [1] : vector<8x8xf32> to vector<8xf32>
    %200 = vector.shape_cast %199 : vector<8xf32> to vector<8x1xf32>
    %201 = tpu.reciprocal %200 {approx = true} : vector<8x1xf32> -> vector<8x1xf32>
    %202 = vector.broadcast %201 : vector<8x1xf32> to vector<8x8xf32>
    %203 = arith.mulf %198, %202 : vector<8x8xf32>
    %cst_84 = arith.constant dense<0.000000e+00> : vector<8x8xf32>
    %204 = tpu.matmul %203, %192, %cst_84 {dimension_numbers = #tpu.dot_dimension_numbers<[1], [0], [0], [1], [0, 0, 1, 1], [], []>} : vector<8x8xf32>, vector<8x8xf32>, vector<8x8xf32> -> vector<8x8xf32>
    %205 = vector.extract_strided_slice %167 {offsets = [8, 0], sizes = [8, 32], strides = [1, 1]} : vector<32x32xf32> to vector<8x32xf32>
    %cst_85 = arith.constant dense<0.000000e+00> : vector<8x32xf32>
    %206 = tpu.matmul %204, %205, %cst_85 {dimension_numbers = #tpu.dot_dimension_numbers<[1], [0], [0], [1], [0, 0, 1, 1], [], []>} : vector<8x8xf32>, vector<8x32xf32>, vector<8x32xf32> -> vector<8x32xf32>
    %207 = arith.addf %189, %206 : vector<8x32xf32>
    %208 = vector.extract_strided_slice %159 {offsets = [0, 16], sizes = [8, 8], strides = [1, 1]} : vector<8x32xf32> to vector<8x8xf32>
    %209 = vector.extract_strided_slice %165 {offsets = [0, 16], sizes = [8, 8], strides = [1, 1]} : vector<8x32xf32> to vector<8x8xf32>
    %210 = vector.extract_strided_slice %166 {offsets = [0, 16], sizes = [8, 8], strides = [1, 1]} : vector<8x32xf32> to vector<8x8xf32>
    %cst_86 = arith.constant dense<0.000000e+00> : vector<8x8xf32>
    %211 = tpu.matmul %208, %209, %cst_86 {dimension_numbers = #tpu.dot_dimension_numbers<[1], [1], [0], [0], [0, 0, 1, 0], [], []>} : vector<8x8xf32>, vector<8x8xf32>, vector<8x8xf32> -> vector<8x8xf32>
    %cst_87 = arith.constant dense<0xFF800000> : vector<8xf32>
    %212 = vector.multi_reduction <maximumf>, %211, %cst_87 [1] : vector<8x8xf32> to vector<8xf32>
    %213 = vector.shape_cast %212 : vector<8xf32> to vector<8x1xf32>
    %214 = vector.broadcast %213 : vector<8x1xf32> to vector<8x8xf32>
    %215 = arith.subf %211, %214 : vector<8x8xf32>
    %216 = math.exp %215 : vector<8x8xf32>
    %cst_88 = arith.constant dense<0.000000e+00> : vector<8xf32>
    %217 = vector.multi_reduction <add>, %216, %cst_88 [1] : vector<8x8xf32> to vector<8xf32>
    %218 = vector.shape_cast %217 : vector<8xf32> to vector<8x1xf32>
    %219 = tpu.reciprocal %218 {approx = true} : vector<8x1xf32> -> vector<8x1xf32>
    %220 = vector.broadcast %219 : vector<8x1xf32> to vector<8x8xf32>
    %221 = arith.mulf %216, %220 : vector<8x8xf32>
    %cst_89 = arith.constant dense<0.000000e+00> : vector<8x8xf32>
    %222 = tpu.matmul %221, %210, %cst_89 {dimension_numbers = #tpu.dot_dimension_numbers<[1], [0], [0], [1], [0, 0, 1, 1], [], []>} : vector<8x8xf32>, vector<8x8xf32>, vector<8x8xf32> -> vector<8x8xf32>
    %223 = vector.extract_strided_slice %167 {offsets = [16, 0], sizes = [8, 32], strides = [1, 1]} : vector<32x32xf32> to vector<8x32xf32>
    %cst_90 = arith.constant dense<0.000000e+00> : vector<8x32xf32>
    %224 = tpu.matmul %222, %223, %cst_90 {dimension_numbers = #tpu.dot_dimension_numbers<[1], [0], [0], [1], [0, 0, 1, 1], [], []>} : vector<8x8xf32>, vector<8x32xf32>, vector<8x32xf32> -> vector<8x32xf32>
    %225 = arith.addf %207, %224 : vector<8x32xf32>
    %226 = vector.extract_strided_slice %159 {offsets = [0, 24], sizes = [8, 8], strides = [1, 1]} : vector<8x32xf32> to vector<8x8xf32>
    %227 = vector.extract_strided_slice %165 {offsets = [0, 24], sizes = [8, 8], strides = [1, 1]} : vector<8x32xf32> to vector<8x8xf32>
    %228 = vector.extract_strided_slice %166 {offsets = [0, 24], sizes = [8, 8], strides = [1, 1]} : vector<8x32xf32> to vector<8x8xf32>
    %cst_91 = arith.constant dense<0.000000e+00> : vector<8x8xf32>
    %229 = tpu.matmul %226, %227, %cst_91 {dimension_numbers = #tpu.dot_dimension_numbers<[1], [1], [0], [0], [0, 0, 1, 0], [], []>} : vector<8x8xf32>, vector<8x8xf32>, vector<8x8xf32> -> vector<8x8xf32>
    %cst_92 = arith.constant dense<0xFF800000> : vector<8xf32>
    %230 = vector.multi_reduction <maximumf>, %229, %cst_92 [1] : vector<8x8xf32> to vector<8xf32>
    %231 = vector.shape_cast %230 : vector<8xf32> to vector<8x1xf32>
    %232 = vector.broadcast %231 : vector<8x1xf32> to vector<8x8xf32>
    %233 = arith.subf %229, %232 : vector<8x8xf32>
    %234 = math.exp %233 : vector<8x8xf32>
    %cst_93 = arith.constant dense<0.000000e+00> : vector<8xf32>
    %235 = vector.multi_reduction <add>, %234, %cst_93 [1] : vector<8x8xf32> to vector<8xf32>
    %236 = vector.shape_cast %235 : vector<8xf32> to vector<8x1xf32>
    %237 = tpu.reciprocal %236 {approx = true} : vector<8x1xf32> -> vector<8x1xf32>
    %238 = vector.broadcast %237 : vector<8x1xf32> to vector<8x8xf32>
    %239 = arith.mulf %234, %238 : vector<8x8xf32>
    %cst_94 = arith.constant dense<0.000000e+00> : vector<8x8xf32>
    %240 = tpu.matmul %239, %228, %cst_94 {dimension_numbers = #tpu.dot_dimension_numbers<[1], [0], [0], [1], [0, 0, 1, 1], [], []>} : vector<8x8xf32>, vector<8x8xf32>, vector<8x8xf32> -> vector<8x8xf32>
    %241 = vector.extract_strided_slice %167 {offsets = [24, 0], sizes = [8, 32], strides = [1, 1]} : vector<32x32xf32> to vector<8x32xf32>
    %cst_95 = arith.constant dense<0.000000e+00> : vector<8x32xf32>
    %242 = tpu.matmul %240, %241, %cst_95 {dimension_numbers = #tpu.dot_dimension_numbers<[1], [0], [0], [1], [0, 0, 1, 1], [], []>} : vector<8x8xf32>, vector<8x32xf32>, vector<8x32xf32> -> vector<8x32xf32>
    %243 = arith.addf %225, %242 : vector<8x32xf32>
    %244 = arith.addf %130, %243 : vector<8x32xf32>
    %c0_96 = arith.constant 0 : index
    %c0_97 = arith.constant 0 : index
    %245 = vector.load %arg18[%c0_96, %c0_97] : memref<1x32xf32, #tpu.memory_space<vmem>>, vector<1x32xf32>
    %c0_98 = arith.constant 0 : index
    %c0_99 = arith.constant 0 : index
    %246 = vector.load %arg19[%c0_98, %c0_99] : memref<1x32xf32, #tpu.memory_space<vmem>>, vector<1x32xf32>
    %cst_100 = arith.constant dense<0.000000e+00> : vector<8xf32>
    %247 = vector.multi_reduction <add>, %244, %cst_100 [1] : vector<8x32xf32> to vector<8xf32>
    %248 = vector.shape_cast %247 : vector<8xf32> to vector<8x1xf32>
    %cst_101 = arith.constant 3.200000e+01 : f32
    %249 = vector.broadcast %cst_101 : f32 to vector<8x1xf32>
    %250 = arith.divf %248, %249 : vector<8x1xf32>
    %251 = vector.broadcast %250 : vector<8x1xf32> to vector<8x32xf32>
    %252 = arith.subf %244, %251 : vector<8x32xf32>
    %253 = arith.mulf %252, %252 : vector<8x32xf32>
    %cst_102 = arith.constant dense<0.000000e+00> : vector<8xf32>
    %254 = vector.multi_reduction <add>, %253, %cst_102 [1] : vector<8x32xf32> to vector<8xf32>
    %255 = vector.shape_cast %254 : vector<8xf32> to vector<8x1xf32>
    %cst_103 = arith.constant 3.200000e+01 : f32
    %256 = vector.broadcast %cst_103 : f32 to vector<8x1xf32>
    %257 = arith.divf %255, %256 : vector<8x1xf32>
    %cst_104 = arith.constant 9.99999974E-6 : f32
    %258 = vector.broadcast %cst_104 : f32 to vector<8x1xf32>
    %259 = arith.addf %257, %258 : vector<8x1xf32>
    %260 = math.rsqrt %259 : vector<8x1xf32>
    %261 = vector.broadcast %260 : vector<8x1xf32> to vector<8x32xf32>
    %262 = arith.mulf %252, %261 : vector<8x32xf32>
    %263 = vector.broadcast %245 : vector<1x32xf32> to vector<8x32xf32>
    %264 = arith.mulf %262, %263 : vector<8x32xf32>
    %265 = vector.broadcast %246 : vector<1x32xf32> to vector<8x32xf32>
    %266 = arith.addf %264, %265 : vector<8x32xf32>
    %c0_105 = arith.constant 0 : index
    %c0_106 = arith.constant 0 : index
    %267 = vector.load %arg20[%c0_105, %c0_106] : memref<32x64xf32, #tpu.memory_space<vmem>>, vector<32x64xf32>
    %cst_107 = arith.constant dense<0.000000e+00> : vector<8x64xf32>
    %268 = tpu.matmul %266, %267, %cst_107 {dimension_numbers = #tpu.dot_dimension_numbers<[1], [0], [0], [1], [0, 0, 1, 1], [], []>} : vector<8x32xf32>, vector<32x64xf32>, vector<8x64xf32> -> vector<8x64xf32>
    %c0_108 = arith.constant 0 : index
    %c0_109 = arith.constant 0 : index
    %269 = vector.load %arg21[%c0_108, %c0_109] : memref<1x64xf32, #tpu.memory_space<vmem>>, vector<1x64xf32>
    %270 = vector.broadcast %269 : vector<1x64xf32> to vector<8x64xf32>
    %271 = arith.addf %268, %270 : vector<8x64xf32>
    %cst_110 = arith.constant 0.000000e+00 : f32
    %272 = vector.broadcast %cst_110 : f32 to vector<8x64xf32>
    %273 = arith.maximumf %271, %272 : vector<8x64xf32>
    %c0_111 = arith.constant 0 : index
    %c0_112 = arith.constant 0 : index
    %274 = vector.load %arg22[%c0_111, %c0_112] : memref<64x32xf32, #tpu.memory_space<vmem>>, vector<64x32xf32>
    %cst_113 = arith.constant dense<0.000000e+00> : vector<8x32xf32>
    %275 = tpu.matmul %273, %274, %cst_113 {dimension_numbers = #tpu.dot_dimension_numbers<[1], [0], [0], [1], [0, 0, 1, 1], [], []>} : vector<8x64xf32>, vector<64x32xf32>, vector<8x32xf32> -> vector<8x32xf32>
    %c0_114 = arith.constant 0 : index
    %c0_115 = arith.constant 0 : index
    %276 = vector.load %arg23[%c0_114, %c0_115] : memref<1x32xf32, #tpu.memory_space<vmem>>, vector<1x32xf32>
    %277 = vector.broadcast %276 : vector<1x32xf32> to vector<8x32xf32>
    %278 = arith.addf %275, %277 : vector<8x32xf32>
    %279 = arith.addf %244, %278 : vector<8x32xf32>
    %c0_116 = arith.constant 0 : index
    %c0_117 = arith.constant 0 : index
    %c0_118 = arith.constant 0 : index
    %280 = vector.load %arg24[%c0_116, %c0_117, %c0_118] : memref<1x8x32xf32, #tpu.memory_space<vmem>>, vector<1x8x32xf32>
    %281 = vector.shape_cast %280 : vector<1x8x32xf32> to vector<8x32xf32>
    %282 = vector.shape_cast %279 : vector<8x32xf32> to vector<1x8x32xf32>
    tpu.vector_store %arg24[%c0_116, %c0_117, %c0_118], %282 {strides = array<i32>} : memref<1x8x32xf32, #tpu.memory_space<vmem>>, vector<1x8x32xf32>,
    return
  }
  func.func @transform_0(%arg0: i32) -> (i32, i32, i32) {
    %c0_i32 = arith.constant 0 : i32
    %c0_i32_0 = arith.constant 0 : i32
    %c0_i32_1 = arith.constant 0 : i32
    return %arg0, %c0_i32, %c0_i32_0 : i32, i32, i32
  }
  func.func @transform_1(%arg0: i32) -> (i32, i32, i32) {
    %c0_i32 = arith.constant 0 : i32
    %c0_i32_0 = arith.constant 0 : i32
    %c0_i32_1 = arith.constant 0 : i32
    return %arg0, %c0_i32, %c0_i32_0 : i32, i32, i32
  }
  func.func @transform_2(%arg0: i32) -> (i32, i32, i32) {
    %c0_i32 = arith.constant 0 : i32
    %c0_i32_0 = arith.constant 0 : i32
    %c0_i32_1 = arith.constant 0 : i32
    return %arg0, %c0_i32, %c0_i32_0 : i32, i32, i32
  }
  func.func @transform_3(%arg0: i32) -> (i32, i32) {
    %c0_i32 = arith.constant 0 : i32
    %c0_i32_0 = arith.constant 0 : i32
    %c0_i32_1 = arith.constant 0 : i32
    return %c0_i32, %c0_i32_0 : i32, i32
  }
  func.func @transform_4(%arg0: i32) -> (i32, i32) {
    %c0_i32 = arith.constant 0 : i32
    %c0_i32_0 = arith.constant 0 : i32
    %c0_i32_1 = arith.constant 0 : i32
    return %c0_i32, %c0_i32_0 : i32, i32
  }
  func.func @transform_5(%arg0: i32) -> (i32, i32) {
    %c0_i32 = arith.constant 0 : i32
    %c0_i32_0 = arith.constant 0 : i32
    %c0_i32_1 = arith.constant 0 : i32
    return %c0_i32, %c0_i32_0 : i32, i32
  }
  func.func @transform_6(%arg0: i32) -> (i32, i32) {
    %c0_i32 = arith.constant 0 : i32
    %c0_i32_0 = arith.constant 0 : i32
    %c0_i32_1 = arith.constant 0 : i32
    return %c0_i32, %c0_i32_0 : i32, i32
  }
  func.func @transform_7(%arg0: i32) -> (i32, i32) {
    %c0_i32 = arith.constant 0 : i32
    %c0_i32_0 = arith.constant 0 : i32
    %c0_i32_1 = arith.constant 0 : i32
    return %c0_i32, %c0_i32_0 : i32, i32
  }
  func.func @transform_8(%arg0: i32) -> (i32, i32) {
    %c0_i32 = arith.constant 0 : i32
    %c0_i32_0 = arith.constant 0 : i32
    %c0_i32_1 = arith.constant 0 : i32
    return %c0_i32, %c0_i32_0 : i32, i32
  }
  func.func @transform_9(%arg0: i32) -> (i32, i32) {
    %c0_i32 = arith.constant 0 : i32
    %c0_i32_0 = arith.constant 0 : i32
    %c0_i32_1 = arith.constant 0 : i32
    return %c0_i32, %c0_i32_0 : i32, i32
  }
  func.func @transform_10(%arg0: i32) -> (i32, i32) {
    %c0_i32 = arith.constant 0 : i32
    %c0_i32_0 = arith.constant 0 : i32
    %c0_i32_1 = arith.constant 0 : i32
    return %c0_i32, %c0_i32_0 : i32, i32
  }
  func.func @transform_11(%arg0: i32) -> (i32, i32) {
    %c0_i32 = arith.constant 0 : i32
    %c0_i32_0 = arith.constant 0 : i32
    %c0_i32_1 = arith.constant 0 : i32
    return %c0_i32, %c0_i32_0 : i32, i32
  }
  func.func @transform_12(%arg0: i32) -> (i32, i32) {
    %c0_i32 = arith.constant 0 : i32
    %c0_i32_0 = arith.constant 0 : i32
    %c0_i32_1 = arith.constant 0 : i32
    return %c0_i32, %c0_i32_0 : i32, i32
  }
  func.func @transform_13(%arg0: i32) -> (i32, i32) {
    %c0_i32 = arith.constant 0 : i32
    %c0_i32_0 = arith.constant 0 : i32
    %c0_i32_1 = arith.constant 0 : i32
    return %c0_i32, %c0_i32_0 : i32, i32
  }
  func.func @transform_14(%arg0: i32) -> (i32, i32) {
    %c0_i32 = arith.constant 0 : i32
    %c0_i32_0 = arith.constant 0 : i32
    %c0_i32_1 = arith.constant 0 : i32
    return %c0_i32, %c0_i32_0 : i32, i32
  }
  func.func @transform_15(%arg0: i32) -> (i32, i32) {
    %c0_i32 = arith.constant 0 : i32
    %c0_i32_0 = arith.constant 0 : i32
    %c0_i32_1 = arith.constant 0 : i32
    return %c0_i32, %c0_i32_0 : i32, i32
  }
  func.func @transform_16(%arg0: i32) -> (i32, i32) {
    %c0_i32 = arith.constant 0 : i32
    %c0_i32_0 = arith.constant 0 : i32
    %c0_i32_1 = arith.constant 0 : i32
    return %c0_i32, %c0_i32_0 : i32, i32
  }
  func.func @transform_17(%arg0: i32) -> (i32, i32) {
    %c0_i32 = arith.constant 0 : i32
    %c0_i32_0 = arith.constant 0 : i32
    %c0_i32_1 = arith.constant 0 : i32
    return %c0_i32, %c0_i32_0 : i32, i32
  }
  func.func @transform_18(%arg0: i32) -> (i32, i32) {
    %c0_i32 = arith.constant 0 : i32
    %c0_i32_0 = arith.constant 0 : i32
    %c0_i32_1 = arith.constant 0 : i32
    return %c0_i32, %c0_i32_0 : i32, i32
  }
  func.func @transform_19(%arg0: i32) -> (i32, i32) {
    %c0_i32 = arith.constant 0 : i32
    %c0_i32_0 = arith.constant 0 : i32
    %c0_i32_1 = arith.constant 0 : i32
    return %c0_i32, %c0_i32_0 : i32, i32
  }
  func.func @transform_20(%arg0: i32) -> (i32, i32) {
    %c0_i32 = arith.constant 0 : i32
    %c0_i32_0 = arith.constant 0 : i32
    %c0_i32_1 = arith.constant 0 : i32
    return %c0_i32, %c0_i32_0 : i32, i32
  }
  func.func @transform_21(%arg0: i32) -> (i32, i32) {
    %c0_i32 = arith.constant 0 : i32
    %c0_i32_0 = arith.constant 0 : i32
    %c0_i32_1 = arith.constant 0 : i32
    return %c0_i32, %c0_i32_0 : i32, i32
  }
  func.func @transform_22(%arg0: i32) -> (i32, i32) {
    %c0_i32 = arith.constant 0 : i32
    %c0_i32_0 = arith.constant 0 : i32
    %c0_i32_1 = arith.constant 0 : i32
    return %c0_i32, %c0_i32_0 : i32, i32
  }
  func.func @transform_23(%arg0: i32) -> (i32, i32, i32) {
    %c0_i32 = arith.constant 0 : i32
    %c0_i32_0 = arith.constant 0 : i32
    %c0_i32_1 = arith.constant 0 : i32
    return %arg0, %c0_i32, %c0_i32_0 : i32, i32, i32
  }
}

</mosaic_0001>

<llo_original>
// kernel: transformer_forward.9
$region0: #{transformer_forward.9}
  #allocation0 [shape = 'u32[]', space=smem, size = 0x4, offset = 0x4, fixed_abs, tag = 'smem constant byte address 0x4 - core index']
  #allocation1 [shape = 'u32[144,128]{1,0:T(1,128)}', space=vmem, size = 0x12000, scoped, tag = 'internal scratch']
  %s0 = inlined_call_operand.vmem [shape: f32[16,32], index: 0, kind: input, shape index: {}]
  %s1 = inlined_call_operand.vmem [shape: f32[1,32], index: 1, kind: input, shape index: {}]
  %s2 = inlined_call_operand.vmem [shape: f32[1,32], index: 2, kind: input, shape index: {}]
  %s3 = inlined_call_operand.vmem [shape: f32[16,32], index: 3, kind: output, shape index: {}]
  %s4 = sld [smem:[#allocation0]]
  $region22: #{transformer_forward.9} parent=0
    _
  %s6 = ssub.s32 1, %s4
  %s7 = scalar_select 0, %s6, %s4
  // Predicated region
  $region2: #{transformer_forward.9} parent=0 // pred_check
    _
  $region3: #{transformer_forward.9} parent=0 // pred_check_branch
    %9 = sbr.rel (0) target = $region5
  $region4: #{transformer_forward.9} parent=0 // pred_region
    _
  $region5: #{transformer_forward.9} parent=0 // pred_fallthru
    _
  // Predicated region
  $region6: #{transformer_forward.9} parent=0 // pred_check
    _
  $region7: #{transformer_forward.9} parent=0 // pred_check_branch
    %11 = sbr.rel (0) target = $region9
  $region8: #{transformer_forward.9} parent=0 // pred_region
    _
  $region9: #{transformer_forward.9} parent=0 // pred_fallthru
    _
  // Predicated region
  $region10: #{transformer_forward.9} parent=0 // pred_check
    _
  $region11: #{transformer_forward.9} parent=0 // pred_check_branch
    %13 = sbr.rel (0) target = $region13
  $region12: #{transformer_forward.9} parent=0 // pred_region
    _
  $region13: #{transformer_forward.9} parent=0 // pred_fallthru
    _
  %v14 = vld [vmem:[%s0] sm:$0xff]
  %v15 = vld [vmem:[%s0 + $0x8] sm:$0xff]
  %v16 = vld [vmem:[%s1] sm:$0x1]
  %v17 = vld [vmem:[%s2] sm:$0x1]
  %vm18 = vcmask 261120
  %v19 = vsel %vm18, %v14, 0.0
  %20 = vadd.xlane.f32.xlu0 %v19
  %v21 = vpop.xlane.xlu0 %20
  %v22 = vsel %vm18, %v15, 0.0
  %23 = vadd.xlane.f32.xlu0 %v22
  %v24 = vpop.xlane.xlu0 %23
  %v25 = vrcp.pop 32.0
  %v26 = vmul.f32 %v21, %v25
  %v27 = vmul.f32 %v24, %v25
  %v28 = vsub.f32 %v14, %v26
  %v29 = vsub.f32 %v15, %v27
  %v30 = vmul.f32 %v28, %v28
  %v31 = vmul.f32 %v29, %v29
  %v32 = vsel %vm18, %v30, 0.0
  %33 = vadd.xlane.f32.xlu0 %v32
  %v34 = vpop.xlane.xlu0 %33
  %v35 = vsel %vm18, %v31, 0.0
  %36 = vadd.xlane.f32.xlu0 %v35
  %v37 = vpop.xlane.xlu0 %36
  %v38 = vmul.f32 %v34, %v25
  %v39 = vmul.f32 %v37, %v25
  %v40 = vadd.f32 %v38, 1e-05
  %v41 = vadd.f32 %v39, 1e-05
  %v42 = vrsqrt.pop %v40
  %v43 = vrsqrt.pop %v41
  %v44 = vmul.f32 %v28, %v42
  %v45 = vmul.f32 %v29, %v43
  %v47 = vlaneseq
  %v48 = vshrl.u32 %v47, 7
  %v49 = vsub.s32 0, %v48
  %v50 = vrot.slane %v16, %v49
  %v52 = vmul.f32 %v44, %v50
  %v53 = vmul.f32 %v45, %v50
  %v55 = vlaneseq
  %v56 = vshrl.u32 %v55, 7
  %v57 = vsub.s32 0, %v56
  %v58 = vrot.slane %v17, %v57
  %v60 = vadd.f32 %v52, %v58
  %v61 = vadd.f32 %v53, %v58
  %62 = vst.msk [vmem:[%s3] sm:$0xff] %vm18, %v60
  %63 = vst.msk [vmem:[%s3 + $0x8] sm:$0xff] %vm18, %v61
  // Predicated region
  $region14: #{transformer_forward.9} parent=0 // pred_check
    _
  $region15: #{transformer_forward.9} parent=0 // pred_check_branch
    %65 = sbr.rel (0) target = $region17
  $region16: #{transformer_forward.9} parent=0 // pred_region
    _
  $region17: #{transformer_forward.9} parent=0 // pred_fallthru
    _
  // Predicated region
  $region18: #{transformer_forward.9} parent=0 // pred_check
    _
  $region19: #{transformer_forward.9} parent=0 // pred_check_branch
    %67 = sbr.rel (0) target = $region21
  $region20: #{transformer_forward.9} parent=0 // pred_region
    _
  $region21: #{transformer_forward.9} parent=0 // pred_fallthru
    _

// kernel: transformer_forward.10
$region0: #{transformer_forward.10}
  #allocation0 [shape = 'u32[]', space=smem, size = 0x4, offset = 0x4, fixed_abs, tag = 'smem constant byte address 0x4 - core index']
  #allocation1 [shape = 'u32[144,128]{1,0:T(1,128)}', space=vmem, size = 0x12000, scoped, tag = 'internal scratch']
  %s0 = inlined_call_operand.vmem [shape: f32[16,32], index: 0, kind: input, shape index: {}]
  %s1 = inlined_call_operand.vmem [shape: f32[1,32], index: 1, kind: input, shape index: {}]
  %s2 = inlined_call_operand.vmem [shape: f32[1,32], index: 2, kind: input, shape index: {}]
  %s3 = inlined_call_operand.vmem [shape: f32[16,32], index: 3, kind: output, shape index: {}]
  %s4 = sld [smem:[#allocation0]]
  $region22: #{transformer_forward.10} parent=0
    _
  %s6 = ssub.s32 1, %s4
  %s7 = scalar_select 0, %s6, %s4
  // Predicated region
  $region2: #{transformer_forward.10} parent=0 // pred_check
    _
  $region3: #{transformer_forward.10} parent=0 // pred_check_branch
    %9 = sbr.rel (0) target = $region5
  $region4: #{transformer_forward.10} parent=0 // pred_region
    _
  $region5: #{transformer_forward.10} parent=0 // pred_fallthru
    _
  // Predicated region
  $region6: #{transformer_forward.10} parent=0 // pred_check
    _
  $region7: #{transformer_forward.10} parent=0 // pred_check_branch
    %11 = sbr.rel (0) target = $region9
  $region8: #{transformer_forward.10} parent=0 // pred_region
    _
  $region9: #{transformer_forward.10} parent=0 // pred_fallthru
    _
  // Predicated region
  $region10: #{transformer_forward.10} parent=0 // pred_check
    _
  $region11: #{transformer_forward.10} parent=0 // pred_check_branch
    %13 = sbr.rel (0) target = $region13
  $region12: #{transformer_forward.10} parent=0 // pred_region
    _
  $region13: #{transformer_forward.10} parent=0 // pred_fallthru
    _
  %v14 = vld [vmem:[%s0] sm:$0xff]
  %v15 = vld [vmem:[%s0 + $0x8] sm:$0xff]
  %v16 = vld [vmem:[%s1] sm:$0x1]
  %v17 = vld [vmem:[%s2] sm:$0x1]
  %vm18 = vcmask 261120
  %v19 = vsel %vm18, %v14, 0.0
  %20 = vadd.xlane.f32.xlu0 %v19
  %v21 = vpop.xlane.xlu0 %20
  %v22 = vsel %vm18, %v15, 0.0
  %23 = vadd.xlane.f32.xlu0 %v22
  %v24 = vpop.xlane.xlu0 %23
  %v25 = vrcp.pop 32.0
  %v26 = vmul.f32 %v21, %v25
  %v27 = vmul.f32 %v24, %v25
  %v28 = vsub.f32 %v14, %v26
  %v29 = vsub.f32 %v15, %v27
  %v30 = vmul.f32 %v28, %v28
  %v31 = vmul.f32 %v29, %v29
  %v32 = vsel %vm18, %v30, 0.0
  %33 = vadd.xlane.f32.xlu0 %v32
  %v34 = vpop.xlane.xlu0 %33
  %v35 = vsel %vm18, %v31, 0.0
  %36 = vadd.xlane.f32.xlu0 %v35
  %v37 = vpop.xlane.xlu0 %36
  %v38 = vmul.f32 %v34, %v25
  %v39 = vmul.f32 %v37, %v25
  %v40 = vadd.f32 %v38, 1e-12
  %v41 = vadd.f32 %v39, 1e-12
  %v42 = vrsqrt.pop %v40
  %v43 = vrsqrt.pop %v41
  %v44 = vmul.f32 %v28, %v42
  %v45 = vmul.f32 %v29, %v43
  %v47 = vlaneseq
  %v48 = vshrl.u32 %v47, 7
  %v49 = vsub.s32 0, %v48
  %v50 = vrot.slane %v16, %v49
  %v52 = vmul.f32 %v44, %v50
  %v53 = vmul.f32 %v45, %v50
  %v55 = vlaneseq
  %v56 = vshrl.u32 %v55, 7
  %v57 = vsub.s32 0, %v56
  %v58 = vrot.slane %v17, %v57
  %v60 = vadd.f32 %v52, %v58
  %v61 = vadd.f32 %v53, %v58
  %62 = vst.msk [vmem:[%s3] sm:$0xff] %vm18, %v60
  %63 = vst.msk [vmem:[%s3 + $0x8] sm:$0xff] %vm18, %v61
  // Predicated region
  $region14: #{transformer_forward.10} parent=0 // pred_check
    _
  $region15: #{transformer_forward.10} parent=0 // pred_check_branch
    %65 = sbr.rel (0) target = $region17
  $region16: #{transformer_forward.10} parent=0 // pred_region
    _
  $region17: #{transformer_forward.10} parent=0 // pred_fallthru
    _
  // Predicated region
  $region18: #{transformer_forward.10} parent=0 // pred_check
    _
  $region19: #{transformer_forward.10} parent=0 // pred_check_branch
    %67 = sbr.rel (0) target = $region21
  $region20: #{transformer_forward.10} parent=0 // pred_region
    _
  $region21: #{transformer_forward.10} parent=0 // pred_fallthru
    _

// kernel: transformer_forward.7
$region0: #{transformer_forward.7}
  #allocation0 [shape = 'u32[]', space=smem, size = 0x4, offset = 0x4, fixed_abs, tag = 'smem constant byte address 0x4 - core index']
  #allocation1 [shape = 'u32[144,128]{1,0:T(1,128)}', space=vmem, size = 0x12000, scoped, tag = 'internal scratch']
  %s0 = inlined_call_operand.vmem [shape: f32[2,8,32], index: 0, kind: input, shape index: {}]
  %s1 = inlined_call_operand.vmem [shape: f32[2,8,4], index: 1, kind: input, shape index: {}]
  %s2 = inlined_call_operand.vmem [shape: f32[1,32], index: 2, kind: input, shape index: {}]
  %s3 = inlined_call_operand.vmem [shape: f32[1,32], index: 3, kind: input, shape index: {}]
  %s4 = inlined_call_operand.vmem [shape: f32[4,32], index: 4, kind: input, shape index: {}]
  %s5 = inlined_call_operand.vmem [shape: f32[1,32], index: 5, kind: input, shape index: {}]
  %s6 = inlined_call_operand.vmem [shape: f32[32,64], index: 6, kind: input, shape index: {}]
  %s7 = inlined_call_operand.vmem [shape: f32[1,64], index: 7, kind: input, shape index: {}]
  %s8 = inlined_call_operand.vmem [shape: f32[32,32], index: 8, kind: input, shape index: {}]
  %s9 = inlined_call_operand.vmem [shape: f32[1,32], index: 9, kind: input, shape index: {}]
  %s10 = inlined_call_operand.vmem [shape: f32[32,32], index: 10, kind: input, shape index: {}]
  %s11 = inlined_call_operand.vmem [shape: f32[1,32], index: 11, kind: input, shape index: {}]
  %s12 = inlined_call_operand.vmem [shape: f32[1,32], index: 12, kind: input, shape index: {}]
  %s13 = inlined_call_operand.vmem [shape: f32[1,32], index: 13, kind: input, shape index: {}]
  %s14 = inlined_call_operand.vmem [shape: f32[32,64], index: 14, kind: input, shape index: {}]
  %s15 = inlined_call_operand.vmem [shape: f32[1,64], index: 15, kind: input, shape index: {}]
  %s16 = inlined_call_operand.vmem [shape: f32[64,32], index: 16, kind: input, shape index: {}]
  %s17 = inlined_call_operand.vmem [shape: f32[1,32], index: 17, kind: input, shape index: {}]
  %s18 = inlined_call_operand.vmem [shape: f32[2,8,32], index: 18, kind: output, shape index: {}]
  %s19 = sld [smem:[#allocation0]]
  $region105: #{transformer_forward.7} parent=0
    _
  %s21 = ssub.s32 1, %s19
  %s22 = scalar_select 0, %s21, %s19
  loop: start=0, step=1, limit=4
  $region2: #{transformer_forward.7} parent=0 // loop_pre_header
    _
  $region3: #{transformer_forward.7} parent=0 // loop_header
    %s24 = sphi 0, %s28
    %p25 = scmp.ge.s32.totalorder %s24, 4
    %s34 = sphi 0, %s36
    %s37 = sphi 0, %s34
    %s38 = sphi 0, %s37
    %s54 = sphi 0, %s38
    %s60 = sphi 0, %s62
    %s63 = sphi 0, %s60
    %s64 = sphi 0, %s63
    %s80 = sphi 0, %s64
    %s84 = sphi 0, %s84
    %s86 = sphi 0, %s84
    %s87 = sphi 0, %s86
    %s101 = sphi 0, %s87
    %s105 = sphi 0, %s105
    %s107 = sphi 0, %s105
    %s108 = sphi 0, %s107
    %s122 = sphi 0, %s108
    %s126 = sphi 0, %s126
    %s128 = sphi 0, %s126
    %s129 = sphi 0, %s128
    %s143 = sphi 0, %s129
    %s147 = sphi 0, %s147
    %s149 = sphi 0, %s147
    %s150 = sphi 0, %s149
    %s164 = sphi 0, %s150
    %s168 = sphi 0, %s168
    %s170 = sphi 0, %s168
    %s171 = sphi 0, %s170
    %s185 = sphi 0, %s171
    %s189 = sphi 0, %s189
    %s191 = sphi 0, %s189
    %s192 = sphi 0, %s191
    %s206 = sphi 0, %s192
    %s210 = sphi 0, %s210
    %s212 = sphi 0, %s210
    %s213 = sphi 0, %s212
    %s227 = sphi 0, %s213
    %s231 = sphi 0, %s231
    %s233 = sphi 0, %s231
    %s234 = sphi 0, %s233
    %s248 = sphi 0, %s234
    %s252 = sphi 0, %s252
    %s254 = sphi 0, %s252
    %s255 = sphi 0, %s254
    %s269 = sphi 0, %s255
    %s273 = sphi 0, %s273
    %s275 = sphi 0, %s273
    %s276 = sphi 0, %s275
    %s290 = sphi 0, %s276
    %s294 = sphi 0, %s294
    %s296 = sphi 0, %s294
    %s297 = sphi 0, %s296
    %s311 = sphi 0, %s297
    %s315 = sphi 0, %s315
    %s317 = sphi 0, %s315
    %s318 = sphi 0, %s317
    %s332 = sphi 0, %s318
    %s336 = sphi 0, %s336
    %s338 = sphi 0, %s336
    %s339 = sphi 0, %s338
    %s353 = sphi 0, %s339
    %s357 = sphi 0, %s357
    %s359 = sphi 0, %s357
    %s360 = sphi 0, %s359
    %s374 = sphi 0, %s360
    %s378 = sphi 0, %s378
    %s380 = sphi 0, %s378
    %s381 = sphi 0, %s380
    %s395 = sphi 0, %s381
    %s399 = sphi 0, %s399
    %s401 = sphi 0, %s399
    %s402 = sphi 0, %s401
    %s416 = sphi 0, %s402
    %s422 = sphi 0, %s424
    %s425 = sphi 0, %s422
    %s426 = sphi 0, %s425
    %s442 = sphi 0, %s426
  $region4: #{transformer_forward.7} parent=0 // loop_header_branch
    %27 = sbr.rel (%p25) target = $region8
  $region5: #{transformer_forward.7} parent=0 // loop_body
    %s29 = ssub.s32 %s24, 1
    %s30 = ssub.s32 %s24, 2
    %s31 = sadd.s32 %s24, 1
    %s32 = ssub.s32 %s24, %s31
    %p33 = scmp.eq.s32.totalorder %s32, 0
    %s35 = sadd.s32 %s34, 1
    %s36 = scalar_select %p33, %s34, %s35
    %p39 = pneg %p33
    %p40 = scmp.eq.s32.totalorder %s24, 1
    %p41 = por %p39, %p40
    %p42 = scmp.ne.s32.totalorder %s34, %s37
    %p43 = scmp.eq.s32.totalorder %s24, 0
    %p44 = por %p42, %p43
    %p45 = scmp.ne.s32.totalorder %s34, %s37
    %p46 = scmp.eq.s32.totalorder %s29, 1
    %p47 = por %p45, %p46
    %p48 = scmp.ne.s32.totalorder %s37, %s38
    %p49 = scmp.eq.s32.totalorder %s29, 0
    %p50 = por %p48, %p49
    %p51 = scmp.ne.s32.totalorder %s37, %s38
    %p52 = scmp.eq.s32.totalorder %s30, 1
    %p53 = por %p51, %p52
    %p55 = scmp.ne.s32.totalorder %s38, %s54
    %p56 = scmp.eq.s32.totalorder %s30, 0
    %p57 = por %p55, %p56
    %s58 = ssub.s32 %s24, %s31
    %p59 = scmp.eq.s32.totalorder %s58, 0
    %s61 = sadd.s32 %s60, 1
    %s62 = scalar_select %p59, %s60, %s61
    %p65 = pneg %p59
    %p66 = scmp.eq.s32.totalorder %s24, 1
    %p67 = por %p65, %p66
    %p68 = scmp.ne.s32.totalorder %s60, %s63
    %p69 = scmp.eq.s32.totalorder %s24, 0
    %p70 = por %p68, %p69
    %p71 = scmp.ne.s32.totalorder %s60, %s63
    %p72 = scmp.eq.s32.totalorder %s29, 1
    %p73 = por %p71, %p72
    %p74 = scmp.ne.s32.totalorder %s63, %s64
    %p75 = scmp.eq.s32.totalorder %s29, 0
    %p76 = por %p74, %p75
    %p77 = scmp.ne.s32.totalorder %s63, %s64
    %p78 = scmp.eq.s32.totalorder %s30, 1
    %p79 = por %p77, %p78
    %p81 = scmp.ne.s32.totalorder %s64, %s80
    %p82 = scmp.eq.s32.totalorder %s30, 0
    %p83 = por %p81, %p82
    %s85 = sadd.s32 %s84, 1
    %p88 = scmp.eq.s32.totalorder %s24, 1
    %p89 = scmp.ne.s32.totalorder %s84, %s86
    %p90 = scmp.eq.s32.totalorder %s24, 0
    %p91 = por %p89, %p90
    %p92 = scmp.ne.s32.totalorder %s84, %s86
    %p93 = scmp.eq.s32.totalorder %s29, 1
    %p94 = por %p92, %p93
    %p95 = scmp.ne.s32.totalorder %s86, %s87
    %p96 = scmp.eq.s32.totalorder %s29, 0
    %p97 = por %p95, %p96
    %p98 = scmp.ne.s32.totalorder %s86, %s87
    %p99 = scmp.eq.s32.totalorder %s30, 1
    %p100 = por %p98, %p99
    %p102 = scmp.ne.s32.totalorder %s87, %s101
    %p103 = scmp.eq.s32.totalorder %s30, 0
    %p104 = por %p102, %p103
    %s106 = sadd.s32 %s105, 1
    %p109 = scmp.eq.s32.totalorder %s24, 1
    %p110 = scmp.ne.s32.totalorder %s105, %s107
    %p111 = scmp.eq.s32.totalorder %s24, 0
    %p112 = por %p110, %p111
    %p113 = scmp.ne.s32.totalorder %s105, %s107
    %p114 = scmp.eq.s32.totalorder %s29, 1
    %p115 = por %p113, %p114
    %p116 = scmp.ne.s32.totalorder %s107, %s108
    %p117 = scmp.eq.s32.totalorder %s29, 0
    %p118 = por %p116, %p117
    %p119 = scmp.ne.s32.totalorder %s107, %s108
    %p120 = scmp.eq.s32.totalorder %s30, 1
    %p121 = por %p119, %p120
    %p123 = scmp.ne.s32.totalorder %s108, %s122
    %p124 = scmp.eq.s32.totalorder %s30, 0
    %p125 = por %p123, %p124
    %s127 = sadd.s32 %s126, 1
    %p130 = scmp.eq.s32.totalorder %s24, 1
    %p131 = scmp.ne.s32.totalorder %s126, %s128
    %p132 = scmp.eq.s32.totalorder %s24, 0
    %p133 = por %p131, %p132
    %p134 = scmp.ne.s32.totalorder %s126, %s128
    %p135 = scmp.eq.s32.totalorder %s29, 1
    %p136 = por %p134, %p135
    %p137 = scmp.ne.s32.totalorder %s128, %s129
    %p138 = scmp.eq.s32.totalorder %s29, 0
    %p139 = por %p137, %p138
    %p140 = scmp.ne.s32.totalorder %s128, %s129
    %p141 = scmp.eq.s32.totalorder %s30, 1
    %p142 = por %p140, %p141
    %p144 = scmp.ne.s32.totalorder %s129, %s143
    %p145 = scmp.eq.s32.totalorder %s30, 0
    %p146 = por %p144, %p145
    %s148 = sadd.s32 %s147, 1
    %p151 = scmp.eq.s32.totalorder %s24, 1
    %p152 = scmp.ne.s32.totalorder %s147, %s149
    %p153 = scmp.eq.s32.totalorder %s24, 0
    %p154 = por %p152, %p153
    %p155 = scmp.ne.s32.totalorder %s147, %s149
    %p156 = scmp.eq.s32.totalorder %s29, 1
    %p157 = por %p155, %p156
    %p158 = scmp.ne.s32.totalorder %s149, %s150
    %p159 = scmp.eq.s32.totalorder %s29, 0
    %p160 = por %p158, %p159
    %p161 = scmp.ne.s32.totalorder %s149, %s150
    %p162 = scmp.eq.s32.totalorder %s30, 1
    %p163 = por %p161, %p162
    %p165 = scmp.ne.s32.totalorder %s150, %s164
    %p166 = scmp.eq.s32.totalorder %s30, 0
    %p167 = por %p165, %p166
    %s169 = sadd.s32 %s168, 1
    %p172 = scmp.eq.s32.totalorder %s24, 1
    %p173 = scmp.ne.s32.totalorder %s168, %s170
    %p174 = scmp.eq.s32.totalorder %s24, 0
    %p175 = por %p173, %p174
    %p176 = scmp.ne.s32.totalorder %s168, %s170
    %p177 = scmp.eq.s32.totalorder %s29, 1
    %p178 = por %p176, %p177
    %p179 = scmp.ne.s32.totalorder %s170, %s171
    %p180 = scmp.eq.s32.totalorder %s29, 0
    %p181 = por %p179, %p180
    %p182 = scmp.ne.s32.totalorder %s170, %s171
    %p183 = scmp.eq.s32.totalorder %s30, 1
    %p184 = por %p182, %p183
    %p186 = scmp.ne.s32.totalorder %s171, %s185
    %p187 = scmp.eq.s32.totalorder %s30, 0
    %p188 = por %p186, %p187
    %s190 = sadd.s32 %s189, 1
    %p193 = scmp.eq.s32.totalorder %s24, 1
    %p194 = scmp.ne.s32.totalorder %s189, %s191
    %p195 = scmp.eq.s32.totalorder %s24, 0
    %p196 = por %p194, %p195
    %p197 = scmp.ne.s32.totalorder %s189, %s191
    %p198 = scmp.eq.s32.totalorder %s29, 1
    %p199 = por %p197, %p198
    %p200 = scmp.ne.s32.totalorder %s191, %s192
    %p201 = scmp.eq.s32.totalorder %s29, 0
    %p202 = por %p200, %p201
    %p203 = scmp.ne.s32.totalorder %s191, %s192
    %p204 = scmp.eq.s32.totalorder %s30, 1
    %p205 = por %p203, %p204
    %p207 = scmp.ne.s32.totalorder %s192, %s206
    %p208 = scmp.eq.s32.totalorder %s30, 0
    %p209 = por %p207, %p208
    %s211 = sadd.s32 %s210, 1
    %p214 = scmp.eq.s32.totalorder %s24, 1
    %p215 = scmp.ne.s32.totalorder %s210, %s212
    %p216 = scmp.eq.s32.totalorder %s24, 0
    %p217 = por %p215, %p216
    %p218 = scmp.ne.s32.totalorder %s210, %s212
    %p219 = scmp.eq.s32.totalorder %s29, 1
    %p220 = por %p218, %p219
    %p221 = scmp.ne.s32.totalorder %s212, %s213
    %p222 = scmp.eq.s32.totalorder %s29, 0
    %p223 = por %p221, %p222
    %p224 = scmp.ne.s32.totalorder %s212, %s213
    %p225 = scmp.eq.s32.totalorder %s30, 1
    %p226 = por %p224, %p225
    %p228 = scmp.ne.s32.totalorder %s213, %s227
    %p229 = scmp.eq.s32.totalorder %s30, 0
    %p230 = por %p228, %p229
    %s232 = sadd.s32 %s231, 1
    %p235 = scmp.eq.s32.totalorder %s24, 1
    %p236 = scmp.ne.s32.totalorder %s231, %s233
    %p237 = scmp.eq.s32.totalorder %s24, 0
    %p238 = por %p236, %p237
    %p239 = scmp.ne.s32.totalorder %s231, %s233
    %p240 = scmp.eq.s32.totalorder %s29, 1
    %p241 = por %p239, %p240
    %p242 = scmp.ne.s32.totalorder %s233, %s234
    %p243 = scmp.eq.s32.totalorder %s29, 0
    %p244 = por %p242, %p243
    %p245 = scmp.ne.s32.totalorder %s233, %s234
    %p246 = scmp.eq.s32.totalorder %s30, 1
    %p247 = por %p245, %p246
    %p249 = scmp.ne.s32.totalorder %s234, %s248
    %p250 = scmp.eq.s32.totalorder %s30, 0
    %p251 = por %p249, %p250
    %s253 = sadd.s32 %s252, 1
    %p256 = scmp.eq.s32.totalorder %s24, 1
    %p257 = scmp.ne.s32.totalorder %s252, %s254
    %p258 = scmp.eq.s32.totalorder %s24, 0
    %p259 = por %p257, %p258
    %p260 = scmp.ne.s32.totalorder %s252, %s254
    %p261 = scmp.eq.s32.totalorder %s29, 1
    %p262 = por %p260, %p261
    %p263 = scmp.ne.s32.totalorder %s254, %s255
    %p264 = scmp.eq.s32.totalorder %s29, 0
    %p265 = por %p263, %p264
    %p266 = scmp.ne.s32.totalorder %s254, %s255
    %p267 = scmp.eq.s32.totalorder %s30, 1
    %p268 = por %p266, %p267
    %p270 = scmp.ne.s32.totalorder %s255, %s269
    %p271 = scmp.eq.s32.totalorder %s30, 0
    %p272 = por %p270, %p271
    %s274 = sadd.s32 %s273, 1
    %p277 = scmp.eq.s32.totalorder %s24, 1
    %p278 = scmp.ne.s32.totalorder %s273, %s275
    %p279 = scmp.eq.s32.totalorder %s24, 0
    %p280 = por %p278, %p279
    %p281 = scmp.ne.s32.totalorder %s273, %s275
    %p282 = scmp.eq.s32.totalorder %s29, 1
    %p283 = por %p281, %p282
    %p284 = scmp.ne.s32.totalorder %s275, %s276
    %p285 = scmp.eq.s32.totalorder %s29, 0
    %p286 = por %p284, %p285
    %p287 = scmp.ne.s32.totalorder %s275, %s276
    %p288 = scmp.eq.s32.totalorder %s30, 1
    %p289 = por %p287, %p288
    %p291 = scmp.ne.s32.totalorder %s276, %s290
    %p292 = scmp.eq.s32.totalorder %s30, 0
    %p293 = por %p291, %p292
    %s295 = sadd.s32 %s294, 1
    %p298 = scmp.eq.s32.totalorder %s24, 1
    %p299 = scmp.ne.s32.totalorder %s294, %s296
    %p300 = scmp.eq.s32.totalorder %s24, 0
    %p301 = por %p299, %p300
    %p302 = scmp.ne.s32.totalorder %s294, %s296
    %p303 = scmp.eq.s32.totalorder %s29, 1
    %p304 = por %p302, %p303
    %p305 = scmp.ne.s32.totalorder %s296, %s297
    %p306 = scmp.eq.s32.totalorder %s29, 0
    %p307 = por %p305, %p306
    %p308 = scmp.ne.s32.totalorder %s296, %s297
    %p309 = scmp.eq.s32.totalorder %s30, 1
    %p310 = por %p308, %p309
    %p312 = scmp.ne.s32.totalorder %s297, %s311
    %p313 = scmp.eq.s32.totalorder %s30, 0
    %p314 = por %p312, %p313
    %s316 = sadd.s32 %s315, 1
    %p319 = scmp.eq.s32.totalorder %s24, 1
    %p320 = scmp.ne.s32.totalorder %s315, %s317
    %p321 = scmp.eq.s32.totalorder %s24, 0
    %p322 = por %p320, %p321
    %p323 = scmp.ne.s32.totalorder %s315, %s317
    %p324 = scmp.eq.s32.totalorder %s29, 1
    %p325 = por %p323, %p324
    %p326 = scmp.ne.s32.totalorder %s317, %s318
    %p327 = scmp.eq.s32.totalorder %s29, 0
    %p328 = por %p326, %p327
    %p329 = scmp.ne.s32.totalorder %s317, %s318
    %p330 = scmp.eq.s32.totalorder %s30, 1
    %p331 = por %p329, %p330
    %p333 = scmp.ne.s32.totalorder %s318, %s332
    %p334 = scmp.eq.s32.totalorder %s30, 0
    %p335 = por %p333, %p334
    %s337 = sadd.s32 %s336, 1
    %p340 = scmp.eq.s32.totalorder %s24, 1
    %p341 = scmp.ne.s32.totalorder %s336, %s338
    %p342 = scmp.eq.s32.totalorder %s24, 0
    %p343 = por %p341, %p342
    %p344 = scmp.ne.s32.totalorder %s336, %s338
    %p345 = scmp.eq.s32.totalorder %s29, 1
    %p346 = por %p344, %p345
    %p347 = scmp.ne.s32.totalorder %s338, %s339
    %p348 = scmp.eq.s32.totalorder %s29, 0
    %p349 = por %p347, %p348
    %p350 = scmp.ne.s32.totalorder %s338, %s339
    %p351 = scmp.eq.s32.totalorder %s30, 1
    %p352 = por %p350, %p351
    %p354 = scmp.ne.s32.totalorder %s339, %s353
    %p355 = scmp.eq.s32.totalorder %s30, 0
    %p356 = por %p354, %p355
    %s358 = sadd.s32 %s357, 1
    %p361 = scmp.eq.s32.totalorder %s24, 1
    %p362 = scmp.ne.s32.totalorder %s357, %s359
    %p363 = scmp.eq.s32.totalorder %s24, 0
    %p364 = por %p362, %p363
    %p365 = scmp.ne.s32.totalorder %s357, %s359
    %p366 = scmp.eq.s32.totalorder %s29, 1
    %p367 = por %p365, %p366
    %p368 = scmp.ne.s32.totalorder %s359, %s360
    %p369 = scmp.eq.s32.totalorder %s29, 0
    %p370 = por %p368, %p369
    %p371 = scmp.ne.s32.totalorder %s359, %s360
    %p372 = scmp.eq.s32.totalorder %s30, 1
    %p373 = por %p371, %p372
    %p375 = scmp.ne.s32.totalorder %s360, %s374
    %p376 = scmp.eq.s32.totalorder %s30, 0
    %p377 = por %p375, %p376
    %s379 = sadd.s32 %s378, 1
    %p382 = scmp.eq.s32.totalorder %s24, 1
    %p383 = scmp.ne.s32.totalorder %s378, %s380
    %p384 = scmp.eq.s32.totalorder %s24, 0
    %p385 = por %p383, %p384
    %p386 = scmp.ne.s32.totalorder %s378, %s380
    %p387 = scmp.eq.s32.totalorder %s29, 1
    %p388 = por %p386, %p387
    %p389 = scmp.ne.s32.totalorder %s380, %s381
    %p390 = scmp.eq.s32.totalorder %s29, 0
    %p391 = por %p389, %p390
    %p392 = scmp.ne.s32.totalorder %s380, %s381
    %p393 = scmp.eq.s32.totalorder %s30, 1
    %p394 = por %p392, %p393
    %p396 = scmp.ne.s32.totalorder %s381, %s395
    %p397 = scmp.eq.s32.totalorder %s30, 0
    %p398 = por %p396, %p397
    %s400 = sadd.s32 %s399, 1
    %p403 = scmp.eq.s32.totalorder %s24, 1
    %p404 = scmp.ne.s32.totalorder %s399, %s401
    %p405 = scmp.eq.s32.totalorder %s24, 0
    %p406 = por %p404, %p405
    %p407 = scmp.ne.s32.totalorder %s399, %s401
    %p408 = scmp.eq.s32.totalorder %s29, 1
    %p409 = por %p407, %p408
    %p410 = scmp.ne.s32.totalorder %s401, %s402
    %p411 = scmp.eq.s32.totalorder %s29, 0
    %p412 = por %p410, %p411
    %p413 = scmp.ne.s32.totalorder %s401, %s402
    %p414 = scmp.eq.s32.totalorder %s30, 1
    %p415 = por %p413, %p414
    %p417 = scmp.ne.s32.totalorder %s402, %s416
    %p418 = scmp.eq.s32.totalorder %s30, 0
    %p419 = por %p417, %p418
    %s420 = ssub.s32 %s24, %s31
    %p421 = scmp.eq.s32.totalorder %s420, 0
    %s423 = sadd.s32 %s422, 1
    %s424 = scalar_select %p421, %s422, %s423
    %p427 = pneg %p421
    %p428 = scmp.eq.s32.totalorder %s24, 1
    %p429 = por %p427, %p428
    %p430 = scmp.ne.s32.totalorder %s422, %s425
    %p431 = scmp.eq.s32.totalorder %s24, 0
    %p432 = por %p430, %p431
    %p433 = scmp.ne.s32.totalorder %s422, %s425
    %p434 = scmp.eq.s32.totalorder %s29, 1
    %p435 = por %p433, %p434
    %p436 = scmp.ne.s32.totalorder %s425, %s426
    %p437 = scmp.eq.s32.totalorder %s29, 0
    %p438 = por %p436, %p437
    %p439 = scmp.ne.s32.totalorder %s425, %s426
    %p440 = scmp.eq.s32.totalorder %s30, 1
    %p441 = por %p439, %p440
    %p443 = scmp.ne.s32.totalorder %s426, %s442
    %p444 = scmp.eq.s32.totalorder %s30, 0
    %p445 = por %p443, %p444
    %p446 = scmp.le.s32.totalorder 1, %s24
    %p447 = scmp.lt.s32.totalorder %s24, 3
    %p448 = pnand %p446, %p447
    %p449 = pneg %p448
    // Predicated region
    $region9: #{transformer_forward.7} parent=5 // pred_check
      _
    $region10: #{transformer_forward.7} parent=5 // pred_check_branch
      %451 = sbr.rel (%p448) target = $region12
    $region11: #{transformer_forward.7} parent=5 // pred_region
      %s452 = ssub.s32 %s24, 1
      // Predicated region
      $region13: #{transformer_forward.7} parent=11 // pred_check
        %p453 = pneg %p97
      $region14: #{transformer_forward.7} parent=11 // pred_check_branch
        %455 = sbr.rel (%p453) target = $region16
      $region15: #{transformer_forward.7} parent=11 // pred_region
        _
      $region16: #{transformer_forward.7} parent=11 // pred_fallthru
        _
      // Predicated region
      $region17: #{transformer_forward.7} parent=11 // pred_check
        %p456 = pneg %p118
      $region18: #{transformer_forward.7} parent=11 // pred_check_branch
        %458 = sbr.rel (%p456) target = $region20
      $region19: #{transformer_forward.7} parent=11 // pred_region
        _
      $region20: #{transformer_forward.7} parent=11 // pred_fallthru
        _
      // Predicated region
      $region21: #{transformer_forward.7} parent=11 // pred_check
        %p459 = pneg %p139
      $region22: #{transformer_forward.7} parent=11 // pred_check_branch
        %461 = sbr.rel (%p459) target = $region24
      $region23: #{transformer_forward.7} parent=11 // pred_region
        _
      $region24: #{transformer_forward.7} parent=11 // pred_fallthru
        _
      // Predicated region
      $region25: #{transformer_forward.7} parent=11 // pred_check
        %p462 = pneg %p160
      $region26: #{transformer_forward.7} parent=11 // pred_check_branch
        %464 = sbr.rel (%p462) target = $region28
      $region27: #{transformer_forward.7} parent=11 // pred_region
        _
      $region28: #{transformer_forward.7} parent=11 // pred_fallthru
        _
      // Predicated region
      $region29: #{transformer_forward.7} parent=11 // pred_check
        %p465 = pneg %p181
      $region30: #{transformer_forward.7} parent=11 // pred_check_branch
        %467 = sbr.rel (%p465) target = $region32
      $region31: #{transformer_forward.7} parent=11 // pred_region
        _
      $region32: #{transformer_forward.7} parent=11 // pred_fallthru
        _
      // Predicated region
      $region33: #{transformer_forward.7} parent=11 // pred_check
        %p468 = pneg %p202
      $region34: #{transformer_forward.7} parent=11 // pred_check_branch
        %470 = sbr.rel (%p468) target = $region36
      $region35: #{transformer_forward.7} parent=11 // pred_region
        _
      $region36: #{transformer_forward.7} parent=11 // pred_fallthru
        _
      // Predicated region
      $region37: #{transformer_forward.7} parent=11 // pred_check
        %p471 = pneg %p223
      $region38: #{transformer_forward.7} parent=11 // pred_check_branch
        %473 = sbr.rel (%p471) target = $region40
      $region39: #{transformer_forward.7} parent=11 // pred_region
        _
      $region40: #{transformer_forward.7} parent=11 // pred_fallthru
        _
      // Predicated region
      $region41: #{transformer_forward.7} parent=11 // pred_check
        %p474 = pneg %p244
      $region42: #{transformer_forward.7} parent=11 // pred_check_branch
        %476 = sbr.rel (%p474) target = $region44
      $region43: #{transformer_forward.7} parent=11 // pred_region
        _
      $region44: #{transformer_forward.7} parent=11 // pred_fallthru
        _
      // Predicated region
      $region45: #{transformer_forward.7} parent=11 // pred_check
        %p477 = pneg %p265
      $region46: #{transformer_forward.7} parent=11 // pred_check_branch
        %479 = sbr.rel (%p477) target = $region48
      $region47: #{transformer_forward.7} parent=11 // pred_region
        _
      $region48: #{transformer_forward.7} parent=11 // pred_fallthru
        _
      // Predicated region
      $region49: #{transformer_forward.7} parent=11 // pred_check
        %p480 = pneg %p286
      $region50: #{transformer_forward.7} parent=11 // pred_check_branch
        %482 = sbr.rel (%p480) target = $region52
      $region51: #{transformer_forward.7} parent=11 // pred_region
        _
      $region52: #{transformer_forward.7} parent=11 // pred_fallthru
        _
      // Predicated region
      $region53: #{transformer_forward.7} parent=11 // pred_check
        %p483 = pneg %p307
      $region54: #{transformer_forward.7} parent=11 // pred_check_branch
        %485 = sbr.rel (%p483) target = $region56
      $region55: #{transformer_forward.7} parent=11 // pred_region
        _
      $region56: #{transformer_forward.7} parent=11 // pred_fallthru
        _
      // Predicated region
      $region57: #{transformer_forward.7} parent=11 // pred_check
        %p486 = pneg %p328
      $region58: #{transformer_forward.7} parent=11 // pred_check_branch
        %488 = sbr.rel (%p486) target = $region60
      $region59: #{transformer_forward.7} parent=11 // pred_region
        _
      $region60: #{transformer_forward.7} parent=11 // pred_fallthru
        _
      // Predicated region
      $region61: #{transformer_forward.7} parent=11 // pred_check
        %p489 = pneg %p349
      $region62: #{transformer_forward.7} parent=11 // pred_check_branch
        %491 = sbr.rel (%p489) target = $region64
      $region63: #{transformer_forward.7} parent=11 // pred_region
        _
      $region64: #{transformer_forward.7} parent=11 // pred_fallthru
        _
      // Predicated region
      $region65: #{transformer_forward.7} parent=11 // pred_check
        %p492 = pneg %p370
      $region66: #{transformer_forward.7} parent=11 // pred_check_branch
        %494 = sbr.rel (%p492) target = $region68
      $region67: #{transformer_forward.7} parent=11 // pred_region
        _
      $region68: #{transformer_forward.7} parent=11 // pred_fallthru
        _
      // Predicated region
      $region69: #{transformer_forward.7} parent=11 // pred_check
        %p495 = pneg %p391
      $region70: #{transformer_forward.7} parent=11 // pred_check_branch
        %497 = sbr.rel (%p495) target = $region72
      $region71: #{transformer_forward.7} parent=11 // pred_region
        _
      $region72: #{transformer_forward.7} parent=11 // pred_fallthru
        _
      // Predicated region
      $region73: #{transformer_forward.7} parent=11 // pred_check
        %p498 = pneg %p412
      $region74: #{transformer_forward.7} parent=11 // pred_check_branch
        %500 = sbr.rel (%p498) target = $region76
      $region75: #{transformer_forward.7} parent=11 // pred_region
        _
      $region76: #{transformer_forward.7} parent=11 // pred_fallthru
        _
    $region12: #{transformer_forward.7} parent=5 // pred_fallthru
      _
    %p501 = scmp.lt.s32.totalorder %s24, 2
    // Predicated region
    $region77: #{transformer_forward.7} parent=5 // pred_check
      %p502 = pneg %p501
    $region78: #{transformer_forward.7} parent=5 // pred_check_branch
      %504 = sbr.rel (%p502) target = $region80
    $region79: #{transformer_forward.7} parent=5 // pred_region
      // Predicated region
      $region81: #{transformer_forward.7} parent=79 // pred_check
        %p505 = pneg %p44
      $region82: #{transformer_forward.7} parent=79 // pred_check_branch
        %507 = sbr.rel (%p505) target = $region84
      $region83: #{transformer_forward.7} parent=79 // pred_region
        %p508 = scmp.lt.s32.totalorder %s24, 1
        %s509 = scalar_select %p508, %s24, 1
        %s510 = smul.addr %s509, 8
        %s511 = scalar_lea.vmem %s0, %s510
      $region84: #{transformer_forward.7} parent=79 // pred_fallthru
        _
      // Predicated region
      $region85: #{transformer_forward.7} parent=79 // pred_check
        %p512 = pneg %p70
      $region86: #{transformer_forward.7} parent=79 // pred_check_branch
        %514 = sbr.rel (%p512) target = $region88
      $region87: #{transformer_forward.7} parent=79 // pred_region
        %p515 = scmp.lt.s32.totalorder %s24, 1
        %s516 = scalar_select %p515, %s24, 1
        %s517 = smul.addr %s516, 8
        %s518 = scalar_lea.vmem %s1, %s517
      $region88: #{transformer_forward.7} parent=79 // pred_fallthru
        _
    $region80: #{transformer_forward.7} parent=5 // pred_fallthru
      _
    %p519 = scmp.le.s32.totalorder 1, %s24
    %p520 = scmp.lt.s32.totalorder %s24, 3
    %p521 = pnand %p519, %p520
    %p522 = pneg %p521
    // Predicated region
    $region89: #{transformer_forward.7} parent=5 // pred_check
      _
    $region90: #{transformer_forward.7} parent=5 // pred_check_branch
      %524 = sbr.rel (%p521) target = $region92
    $region91: #{transformer_forward.7} parent=5 // pred_region
      %s525 = ssub.s32 %s24, 1
      %p526 = scmp.lt.s32.totalorder %s29, 1
      %s527 = scalar_select %p526, %s29, 1
      %s528 = smul.addr %s527, 8
      %s529 = scalar_lea.vmem %s0, %s528
      %p530 = pneg %p50
      %p531 = pneg %p47
      %p532 = scmp.lt.s32.totalorder %s29, 1
      %s533 = scalar_select %p532, %s29, 1
      %s534 = smul.addr %s533, 8
      %s535 = scalar_lea.vmem %s1, %s534
      %p536 = pneg %p76
      %p537 = pneg %p73
      %p538 = pneg %p97
      %p539 = pneg %p94
      %p540 = pneg %p118
      %p541 = pneg %p115
      %p542 = pneg %p139
      %p543 = pneg %p136
      %p544 = pneg %p160
      %p545 = pneg %p157
      %p546 = pneg %p181
      %p547 = pneg %p178
      %p548 = pneg %p202
      %p549 = pneg %p199
      %p550 = pneg %p223
      %p551 = pneg %p220
      %p552 = pneg %p244
      %p553 = pneg %p241
      %p554 = pneg %p265
      %p555 = pneg %p262
      %p556 = pneg %p286
      %p557 = pneg %p283
      %p558 = pneg %p307
      %p559 = pneg %p304
      %p560 = pneg %p328
      %p561 = pneg %p325
      %p562 = pneg %p349
      %p563 = pneg %p346
      %p564 = pneg %p370
      %p565 = pneg %p367
      %p566 = pneg %p391
      %p567 = pneg %p388
      %p568 = pneg %p412
      %p569 = pneg %p409
      %p570 = pneg %p438
      %p571 = pneg %p435
      %p572 = scmp.lt.s32.totalorder %s29, 1
      %s573 = scalar_select %p572, %s29, 1
      %s574 = smul.addr %s573, 8
      %s575 = scalar_lea.vmem %s18, %s574
      %p576 = scmp.lt.s32.totalorder %s29, 1
      %s577 = scalar_select %p576, %s29, 1
      %s578 = smul.addr %s577, 8
      %s579 = scalar_lea.vmem %s0, %s578
      %p580 = scmp.lt.s32.totalorder %s29, 1
      %s581 = scalar_select %p580, %s29, 1
      %s582 = smul.addr %s581, 8
      %s583 = scalar_lea.vmem %s1, %s582
      %p584 = scmp.lt.s32.totalorder %s29, 1
      %s585 = scalar_select %p584, %s29, 1
      %s586 = smul.addr %s585, 8
      %s587 = scalar_lea.vmem %s18, %s586
      %v588 = vld [vmem:[%s579] sm:$0xff]
      %v589 = vld [vmem:[%s2] sm:$0x1]
      %v590 = vld [vmem:[%s3] sm:$0x1]
      %vm591 = vcmask 261120
      %v592 = vsel %vm591, %v588, 0.0
      %593 = vadd.xlane.f32.xlu0 %v592
      %v594 = vpop.xlane.xlu0 %593
      %v595 = vrcp.pop 32.0
      %v596 = vmul.f32 %v594, %v595
      %v597 = vsub.f32 %v588, %v596
      %v598 = vmul.f32 %v597, %v597
      %v599 = vsel %vm591, %v598, 0.0
      %600 = vadd.xlane.f32.xlu0 %v599
      %v601 = vpop.xlane.xlu0 %600
      %v602 = vmul.f32 %v601, %v595
      %v603 = vadd.f32 %v602, 1e-05
      %v604 = vrsqrt.pop %v603
      %v605 = vmul.f32 %v597, %v604
      %v607 = vlaneseq
      %v608 = vshrl.u32 %v607, 7
      %v609 = vsub.s32 0, %v608
      %v610 = vrot.slane %v589, %v609
      %v612 = vmul.f32 %v605, %v610
      %v614 = vlaneseq
      %v615 = vshrl.u32 %v614, 7
      %v616 = vsub.s32 0, %v615
      %v617 = vrot.slane %v590, %v616
      %v619 = vadd.f32 %v612, %v617
      %v620 = vld [vmem:[%s583] sm:$0xff]
      %v621 = vld [vmem:[%s4] sm:$0xf]
      %v622 = vld [vmem:[%s5] sm:$0x1]
      %v624 = vlaneseq
      %v625 = vshrl.u32 %v624, 7
      %v626 = vsub.s32 0, %v625
      %v627 = vrot.slane %v622, %v626
      %vm629 = vcmask 31744
      %v631 = vsel %vm629, %v620, 0
      %vm633 = vcmask 1043456
      %v635 = vsel %vm633, %v621, 0
      %637 = vmatprep.subr.mxu0 0.0
      %638 = vmatpush1.msra.mxu0 %v635
      %639 = vmatprep.subr.mxu0 0.0
      %640 = vmatpush1.msra.mxu0 0.0
      %641 = vmatprep.subr.mxu0 0.0
      %642 = vmatpush1.msra.mxu0 0.0
      %643 = vmatprep.subr.mxu0 0.0
      %644 = vmatpush1.msra.mxu0 0.0
      %645 = vmatprep.subr.mxu0 0.0
      %646 = vmatpush1.msra.mxu0 0.0
      %647 = vmatprep.subr.mxu0 0.0
      %648 = vmatpush1.msra.mxu0 0.0
      %649 = vmatprep.subr.mxu0 0.0
      %650 = vmatpush1.msra.mxu0 0.0
      %651 = vmatprep.subr.mxu0 0.0
      %652 = vmatpush1.msra.mxu0 0.0
      %653 = vmatprep.subr.mxu0 0.0
      %654 = vmatpush1.msra.mxu0 0.0
      %655 = vmatprep.subr.mxu0 0.0
      %656 = vmatpush1.msra.mxu0 0.0
      %657 = vmatprep.subr.mxu0 0.0
      %658 = vmatpush1.msra.mxu0 0.0
      %659 = vmatprep.subr.mxu0 0.0
      %660 = vmatpush1.msra.mxu0 0.0
      %661 = vmatprep.subr.mxu0 0.0
      %662 = vmatpush1.msra.mxu0 0.0
      %663 = vmatprep.subr.mxu0 0.0
      %664 = vmatpush1.msra.mxu0 0.0
      %665 = vmatprep.subr.mxu0 0.0
      %666 = vmatpush1.msra.mxu0 0.0
      %667 = vmatprep.subr.mxu0 0.0
      %668 = vmatpush1.msra.mxu0 0.0
      %669 = vmatprep.subr.mxu0 0.0
      %670 = vmatpush1.msra.mxu0 0.0
      %671 = vmatprep.subr.mxu0 0.0
      %672 = vmatpush1.msra.mxu0 0.0
      %673 = vmatprep.subr.mxu0 0.0
      %674 = vmatpush1.msra.mxu0 0.0
      %675 = vmatprep.subr.mxu0 0.0
      %676 = vmatpush1.msra.mxu0 0.0
      %677 = vmatprep.subr.mxu0 0.0
      %678 = vmatpush1.msra.mxu0 0.0
      %679 = vmatprep.subr.mxu0 0.0
      %680 = vmatpush1.msra.mxu0 0.0
      %681 = vmatprep.subr.mxu0 0.0
      %682 = vmatpush1.msra.mxu0 0.0
      %683 = vmatprep.subr.mxu0 0.0
      %684 = vmatpush1.msra.mxu0 0.0
      %685 = vmatprep.subr.mxu0 0.0
      %686 = vmatpush1.msra.mxu0 0.0
      %687 = vmatprep.subr.mxu0 0.0
      %688 = vmatpush1.msra.mxu0 0.0
      %689 = vmatprep.subr.mxu0 0.0
      %690 = vmatpush1.msra.mxu0 0.0
      %691 = vmatprep.subr.mxu0 0.0
      %692 = vmatpush1.msra.mxu0 0.0
      %693 = vmatprep.subr.mxu0 0.0
      %694 = vmatpush1.msra.mxu0 0.0
      %695 = vmatprep.subr.mxu0 0.0
      %696 = vmatpush1.msra.mxu0 0.0
      %697 = vmatprep.subr.mxu0 0.0
      %698 = vmatpush1.msra.mxu0 0.0
      %699 = vmatprep.subr.mxu0 0.0
      %700 = vmatpush1.msra.mxu0 0.0
      %701 = vmatprep.mubr.f32.mxu0 0.0
      %702 = vmatmul.mubr.f32.gmra.mrb[0].mxu0 %v631
      %v703 = vpop.f32.mrb[0].mxu0
      %v704 = vadd.f32 %v627, %v703
      %v705 = vpop.f32.mrb[0].mxu0
      %706 = vdwg.mxu0
      %v707 = vadd.f32 %v619, %v704
      %v708 = vld [vmem:[%s6] sm:$0xff]
      %v709 = vld [vmem:[%s6 + $0x8] sm:$0xff]
      %v710 = vld [vmem:[%s6 + $0x10] sm:$0xff]
      %v711 = vld [vmem:[%s6 + $0x18] sm:$0xff]
      %v712 = vld [vmem:[%s7] sm:$0x1]
      %v714 = vlaneseq
      %v715 = vshrl.u32 %v714, 7
      %v716 = vsub.s32 0, %v715
      %v717 = vrot.slane %v712, %v716
      %v720 = vsel %vm591, %v707, 0
      %722 = vmatprep.subr.mxu0 0.0
      %723 = vmatpush1.msra.mxu0 %v708
      %724 = vmatprep.subr.mxu0 0.0
      %725 = vmatpush1.msra.mxu0 %v709
      %726 = vmatprep.subr.mxu0 0.0
      %727 = vmatpush1.msra.mxu0 %v710
      %728 = vmatprep.subr.mxu0 0.0
      %729 = vmatpush1.msra.mxu0 %v711
      %730 = vmatprep.subr.mxu0 0.0
      %731 = vmatpush1.msra.mxu0 0.0
      %732 = vmatprep.subr.mxu0 0.0
      %733 = vmatpush1.msra.mxu0 0.0
      %734 = vmatprep.subr.mxu0 0.0
      %735 = vmatpush1.msra.mxu0 0.0
      %736 = vmatprep.subr.mxu0 0.0
      %737 = vmatpush1.msra.mxu0 0.0
      %738 = vmatprep.subr.mxu0 0.0
      %739 = vmatpush1.msra.mxu0 0.0
      %740 = vmatprep.subr.mxu0 0.0
      %741 = vmatpush1.msra.mxu0 0.0
      %742 = vmatprep.subr.mxu0 0.0
      %743 = vmatpush1.msra.mxu0 0.0
      %744 = vmatprep.subr.mxu0 0.0
      %745 = vmatpush1.msra.mxu0 0.0
      %746 = vmatprep.subr.mxu0 0.0
      %747 = vmatpush1.msra.mxu0 0.0
      %748 = vmatprep.subr.mxu0 0.0
      %749 = vmatpush1.msra.mxu0 0.0
      %750 = vmatprep.subr.mxu0 0.0
      %751 = vmatpush1.msra.mxu0 0.0
      %752 = vmatprep.subr.mxu0 0.0
      %753 = vmatpush1.msra.mxu0 0.0
      %754 = vmatprep.subr.mxu0 0.0
      %755 = vmatpush1.msra.mxu0 0.0
      %756 = vmatprep.subr.mxu0 0.0
      %757 = vmatpush1.msra.mxu0 0.0
      %758 = vmatprep.subr.mxu0 0.0
      %759 = vmatpush1.msra.mxu0 0.0
      %760 = vmatprep.subr.mxu0 0.0
      %761 = vmatpush1.msra.mxu0 0.0
      %762 = vmatprep.subr.mxu0 0.0
      %763 = vmatpush1.msra.mxu0 0.0
      %764 = vmatprep.subr.mxu0 0.0
      %765 = vmatpush1.msra.mxu0 0.0
      %766 = vmatprep.subr.mxu0 0.0
      %767 = vmatpush1.msra.mxu0 0.0
      %768 = vmatprep.subr.mxu0 0.0
      %769 = vmatpush1.msra.mxu0 0.0
      %770 = vmatprep.subr.mxu0 0.0
      %771 = vmatpush1.msra.mxu0 0.0
      %772 = vmatprep.subr.mxu0 0.0
      %773 = vmatpush1.msra.mxu0 0.0
      %774 = vmatprep.subr.mxu0 0.0
      %775 = vmatpush1.msra.mxu0 0.0
      %776 = vmatprep.subr.mxu0 0.0
      %777 = vmatpush1.msra.mxu0 0.0
      %778 = vmatprep.subr.mxu0 0.0
      %779 = vmatpush1.msra.mxu0 0.0
      %780 = vmatprep.subr.mxu0 0.0
      %781 = vmatpush1.msra.mxu0 0.0
      %782 = vmatprep.subr.mxu0 0.0
      %783 = vmatpush1.msra.mxu0 0.0
      %784 = vmatprep.subr.mxu0 0.0
      %785 = vmatpush1.msra.mxu0 0.0
      %786 = vmatprep.mubr.f32.mxu0 0.0
      %787 = vmatmul.mubr.f32.gmra.mrb[0].mxu0 %v720
      %v788 = vpop.f32.mrb[0].mxu0
      %v789 = vadd.f32 %v717, %v788
      %v790 = vpop.f32.mrb[0].mxu0
      %791 = vdwg.mxu0
      %v792 = vmul.f32 %v789, 0.35355338
      %v793 = vld [vmem:[%s8] sm:$0xff]
      %v794 = vld [vmem:[%s8 + $0x8] sm:$0xff]
      %v795 = vld [vmem:[%s8 + $0x10] sm:$0xff]
      %v796 = vld [vmem:[%s8 + $0x18] sm:$0xff]
      %v797 = vld [vmem:[%s9] sm:$0x1]
      %v799 = vlaneseq
      %v800 = vshrl.u32 %v799, 7
      %v801 = vsub.s32 0, %v800
      %v802 = vrot.slane %v797, %v801
      %v805 = vsel %vm591, %v619, 0
      %807 = vmatprep.subr.mxu0 0.0
      %808 = vmatpush1.msra.mxu0 %v793
      %809 = vmatprep.subr.mxu0 0.0
      %810 = vmatpush1.msra.mxu0 %v794
      %811 = vmatprep.subr.mxu0 0.0
      %812 = vmatpush1.msra.mxu0 %v795
      %813 = vmatprep.subr.mxu0 0.0
      %814 = vmatpush1.msra.mxu0 %v796
      %815 = vmatprep.subr.mxu0 0.0
      %816 = vmatpush1.msra.mxu0 0.0
      %817 = vmatprep.subr.mxu0 0.0
      %818 = vmatpush1.msra.mxu0 0.0
      %819 = vmatprep.subr.mxu0 0.0
      %820 = vmatpush1.msra.mxu0 0.0
      %821 = vmatprep.subr.mxu0 0.0
      %822 = vmatpush1.msra.mxu0 0.0
      %823 = vmatprep.subr.mxu0 0.0
      %824 = vmatpush1.msra.mxu0 0.0
      %825 = vmatprep.subr.mxu0 0.0
      %826 = vmatpush1.msra.mxu0 0.0
      %827 = vmatprep.subr.mxu0 0.0
      %828 = vmatpush1.msra.mxu0 0.0
      %829 = vmatprep.subr.mxu0 0.0
      %830 = vmatpush1.msra.mxu0 0.0
      %831 = vmatprep.subr.mxu0 0.0
      %832 = vmatpush1.msra.mxu0 0.0
      %833 = vmatprep.subr.mxu0 0.0
      %834 = vmatpush1.msra.mxu0 0.0
      %835 = vmatprep.subr.mxu0 0.0
      %836 = vmatpush1.msra.mxu0 0.0
      %837 = vmatprep.subr.mxu0 0.0
      %838 = vmatpush1.msra.mxu0 0.0
      %839 = vmatprep.subr.mxu0 0.0
      %840 = vmatpush1.msra.mxu0 0.0
      %841 = vmatprep.subr.mxu0 0.0
      %842 = vmatpush1.msra.mxu0 0.0
      %843 = vmatprep.subr.mxu0 0.0
      %844 = vmatpush1.msra.mxu0 0.0
      %845 = vmatprep.subr.mxu0 0.0
      %846 = vmatpush1.msra.mxu0 0.0
      %847 = vmatprep.subr.mxu0 0.0
      %848 = vmatpush1.msra.mxu0 0.0
      %849 = vmatprep.subr.mxu0 0.0
      %850 = vmatpush1.msra.mxu0 0.0
      %851 = vmatprep.subr.mxu0 0.0
      %852 = vmatpush1.msra.mxu0 0.0
      %853 = vmatprep.subr.mxu0 0.0
      %854 = vmatpush1.msra.mxu0 0.0
      %855 = vmatprep.subr.mxu0 0.0
      %856 = vmatpush1.msra.mxu0 0.0
      %857 = vmatprep.subr.mxu0 0.0
      %858 = vmatpush1.msra.mxu0 0.0
      %859 = vmatprep.subr.mxu0 0.0
      %860 = vmatpush1.msra.mxu0 0.0
      %861 = vmatprep.subr.mxu0 0.0
      %862 = vmatpush1.msra.mxu0 0.0
      %863 = vmatprep.subr.mxu0 0.0
      %864 = vmatpush1.msra.mxu0 0.0
      %865 = vmatprep.subr.mxu0 0.0
      %866 = vmatpush1.msra.mxu0 0.0
      %867 = vmatprep.subr.mxu0 0.0
      %868 = vmatpush1.msra.mxu0 0.0
      %869 = vmatprep.subr.mxu0 0.0
      %870 = vmatpush1.msra.mxu0 0.0
      %871 = vmatprep.mubr.f32.mxu0 0.0
      %872 = vmatmul.mubr.f32.gmra.mrb[0].mxu0 %v805
      %v873 = vpop.f32.mrb[0].mxu0
      %v874 = vadd.f32 %v802, %v873
      %v875 = vpop.f32.mrb[0].mxu0
      %876 = vdwg.mxu0
      %v877 = vld [vmem:[%s10] sm:$0xff]
      %v878 = vld [vmem:[%s10 + $0x8] sm:$0xff]
      %v879 = vld [vmem:[%s10 + $0x10] sm:$0xff]
      %v880 = vld [vmem:[%s10 + $0x18] sm:$0xff]
      %v881 = vld [vmem:[%s11] sm:$0x1]
      %v883 = vlaneseq
      %v884 = vshrl.u32 %v883, 7
      %v885 = vsub.s32 0, %v884
      %v886 = vrot.slane %v881, %v885
      %v888 = vadd.f32 %v886, 0.0
      %890 = vrot.lane.b32.xlu0 %v789, 96
      %v891 = vpop.permute.xlu0 %890
      %vm892 = vcmask 64512
      %v894 = vsel %vm892, %v792, 0
      %v896 = vsel %vm892, %v891, 0
      %898 = vmatprep.subr.mxu0 0.0
      %899 = vmatpush1.xpose.msra.mxu0 %v896
      %900 = vmatprep.subr.mxu0 0.0
      %901 = vmatpush1.xpose.msra.mxu0 0.0
      %902 = vmatprep.subr.mxu0 0.0
      %903 = vmatpush1.xpose.msra.mxu0 0.0
      %904 = vmatprep.subr.mxu0 0.0
      %905 = vmatpush1.xpose.msra.mxu0 0.0
      %906 = vmatprep.subr.mxu0 0.0
      %907 = vmatpush1.xpose.msra.mxu0 0.0
      %908 = vmatprep.subr.mxu0 0.0
      %909 = vmatpush1.xpose.msra.mxu0 0.0
      %910 = vmatprep.subr.mxu0 0.0
      %911 = vmatpush1.xpose.msra.mxu0 0.0
      %912 = vmatprep.subr.mxu0 0.0
      %913 = vmatpush1.xpose.msra.mxu0 0.0
      %914 = vmatprep.subr.mxu0 0.0
      %915 = vmatpush1.xpose.msra.mxu0 0.0
      %916 = vmatprep.subr.mxu0 0.0
      %917 = vmatpush1.xpose.msra.mxu0 0.0
      %918 = vmatprep.subr.mxu0 0.0
      %919 = vmatpush1.xpose.msra.mxu0 0.0
      %920 = vmatprep.subr.mxu0 0.0
      %921 = vmatpush1.xpose.msra.mxu0 0.0
      %922 = vmatprep.subr.mxu0 0.0
      %923 = vmatpush1.xpose.msra.mxu0 0.0
      %924 = vmatprep.subr.mxu0 0.0
      %925 = vmatpush1.xpose.msra.mxu0 0.0
      %926 = vmatprep.subr.mxu0 0.0
      %927 = vmatpush1.xpose.msra.mxu0 0.0
      %928 = vmatprep.subr.mxu0 0.0
      %929 = vmatpush1.xpose.msra.mxu0 0.0
      %930 = vmatprep.subr.mxu0 0.0
      %931 = vmatpush1.xpose.msra.mxu0 0.0
      %932 = vmatprep.subr.mxu0 0.0
      %933 = vmatpush1.xpose.msra.mxu0 0.0
      %934 = vmatprep.subr.mxu0 0.0
      %935 = vmatpush1.xpose.msra.mxu0 0.0
      %936 = vmatprep.subr.mxu0 0.0
      %937 = vmatpush1.xpose.msra.mxu0 0.0
      %938 = vmatprep.subr.mxu0 0.0
      %939 = vmatpush1.xpose.msra.mxu0 0.0
      %940 = vmatprep.subr.mxu0 0.0
      %941 = vmatpush1.xpose.msra.mxu0 0.0
      %942 = vmatprep.subr.mxu0 0.0
      %943 = vmatpush1.xpose.msra.mxu0 0.0
      %944 = vmatprep.subr.mxu0 0.0
      %945 = vmatpush1.xpose.msra.mxu0 0.0
      %946 = vmatprep.subr.mxu0 0.0
      %947 = vmatpush1.xpose.msra.mxu0 0.0
      %948 = vmatprep.subr.mxu0 0.0
      %949 = vmatpush1.xpose.msra.mxu0 0.0
      %950 = vmatprep.subr.mxu0 0.0
      %951 = vmatpush1.xpose.msra.mxu0 0.0
      %952 = vmatprep.subr.mxu0 0.0
      %953 = vmatpush1.xpose.msra.mxu0 0.0
      %954 = vmatprep.subr.mxu0 0.0
      %955 = vmatpush1.xpose.msra.mxu0 0.0
      %956 = vmatprep.subr.mxu0 0.0
      %957 = vmatpush1.xpose.msra.mxu0 0.0
      %958 = vmatprep.subr.mxu0 0.0
      %959 = vmatpush1.xpose.msra.mxu0 0.0
      %960 = vmatprep.subr.mxu0 0.0
      %961 = vmatpush1.xpose.msra.mxu0 0.0
      %962 = vmatprep.mubr.f32.mxu0 0.0
      %963 = vmatmul.mubr.f32.gmra.mrb[0].mxu0 %v894
      %v964 = vpop.f32.mrb[0].mxu0
      %v965 = vadd.f32 0.0, %v964
      %v966 = vpop.f32.mrb[0].mxu0
      %967 = vdwg.mxu0
      %v968 = vsel %vm892, %v965, -inf
      %969 = vmax.xlane.f32.xlu0 %v968
      %v970 = vpop.xlane.xlu0 %969
      %v971 = vsub.f32 %v965, %v970
      %v972 = vmul.f32 %v971, 1.442695
      %v973 = vpow.pop %v972
      %v974 = vsel %vm892, %v973, 0.0
      %975 = vadd.xlane.f32.xlu0 %v974
      %v976 = vpop.xlane.xlu0 %975
      %v977 = vrcp.pop %v976
      %v978 = vmul.f32 %v973, %v977
      %v980 = vsel %vm892, %v978, 0
      %982 = vmatprep.subr.mxu0 0.0
      %983 = vmatpush1.msra.mxu0 %v874
      %984 = vmatprep.subr.mxu0 0.0
      %985 = vmatpush1.msra.mxu0 0.0
      %986 = vmatprep.subr.mxu0 0.0
      %987 = vmatpush1.msra.mxu0 0.0
      %988 = vmatprep.subr.mxu0 0.0
      %989 = vmatpush1.msra.mxu0 0.0
      %990 = vmatprep.subr.mxu0 0.0
      %991 = vmatpush1.msra.mxu0 0.0
      %992 = vmatprep.subr.mxu0 0.0
      %993 = vmatpush1.msra.mxu0 0.0
      %994 = vmatprep.subr.mxu0 0.0
      %995 = vmatpush1.msra.mxu0 0.0
      %996 = vmatprep.subr.mxu0 0.0
      %997 = vmatpush1.msra.mxu0 0.0
      %998 = vmatprep.subr.mxu0 0.0
      %999 = vmatpush1.msra.mxu0 0.0
      %1000 = vmatprep.subr.mxu0 0.0
      %1001 = vmatpush1.msra.mxu0 0.0
      %1002 = vmatprep.subr.mxu0 0.0
      %1003 = vmatpush1.msra.mxu0 0.0
      %1004 = vmatprep.subr.mxu0 0.0
      %1005 = vmatpush1.msra.mxu0 0.0
      %1006 = vmatprep.subr.mxu0 0.0
      %1007 = vmatpush1.msra.mxu0 0.0
      %1008 = vmatprep.subr.mxu0 0.0
      %1009 = vmatpush1.msra.mxu0 0.0
      %1010 = vmatprep.subr.mxu0 0.0
      %1011 = vmatpush1.msra.mxu0 0.0
      %1012 = vmatprep.subr.mxu0 0.0
      %1013 = vmatpush1.msra.mxu0 0.0
      %1014 = vmatprep.subr.mxu0 0.0
      %1015 = vmatpush1.msra.mxu0 0.0
      %1016 = vmatprep.subr.mxu0 0.0
      %1017 = vmatpush1.msra.mxu0 0.0
      %1018 = vmatprep.subr.mxu0 0.0
      %1019 = vmatpush1.msra.mxu0 0.0
      %1020 = vmatprep.subr.mxu0 0.0
      %1021 = vmatpush1.msra.mxu0 0.0
      %1022 = vmatprep.subr.mxu0 0.0
      %1023 = vmatpush1.msra.mxu0 0.0
      %1024 = vmatprep.subr.mxu0 0.0
      %1025 = vmatpush1.msra.mxu0 0.0
      %1026 = vmatprep.subr.mxu0 0.0
      %1027 = vmatpush1.msra.mxu0 0.0
      %1028 = vmatprep.subr.mxu0 0.0
      %1029 = vmatpush1.msra.mxu0 0.0
      %1030 = vmatprep.subr.mxu0 0.0
      %1031 = vmatpush1.msra.mxu0 0.0
      %1032 = vmatprep.subr.mxu0 0.0
      %1033 = vmatpush1.msra.mxu0 0.0
      %1034 = vmatprep.subr.mxu0 0.0
      %1035 = vmatpush1.msra.mxu0 0.0
      %1036 = vmatprep.subr.mxu0 0.0
      %1037 = vmatpush1.msra.mxu0 0.0
      %1038 = vmatprep.subr.mxu0 0.0
      %1039 = vmatpush1.msra.mxu0 0.0
      %1040 = vmatprep.subr.mxu0 0.0
      %1041 = vmatpush1.msra.mxu0 0.0
      %1042 = vmatprep.subr.mxu0 0.0
      %1043 = vmatpush1.msra.mxu0 0.0
      %1044 = vmatprep.subr.mxu0 0.0
      %1045 = vmatpush1.msra.mxu0 0.0
      %1046 = vmatprep.mubr.f32.mxu0 0.0
      %1047 = vmatmul.mubr.f32.gmra.mrb[0].mxu0 %v980
      %v1048 = vpop.f32.mrb[0].mxu0
      %v1049 = vadd.f32 0.0, %v1048
      %v1050 = vpop.f32.mrb[0].mxu0
      %1051 = vdwg.mxu0
      %v1053 = vsel %vm892, %v1049, 0
      %1055 = vmatprep.subr.mxu0 0.0
      %1056 = vmatpush1.msra.mxu0 %v877
      %1057 = vmatprep.subr.mxu0 0.0
      %1058 = vmatpush1.msra.mxu0 0.0
      %1059 = vmatprep.subr.mxu0 0.0
      %1060 = vmatpush1.msra.mxu0 0.0
      %1061 = vmatprep.subr.mxu0 0.0
      %1062 = vmatpush1.msra.mxu0 0.0
      %1063 = vmatprep.subr.mxu0 0.0
      %1064 = vmatpush1.msra.mxu0 0.0
      %1065 = vmatprep.subr.mxu0 0.0
      %1066 = vmatpush1.msra.mxu0 0.0
      %1067 = vmatprep.subr.mxu0 0.0
      %1068 = vmatpush1.msra.mxu0 0.0
      %1069 = vmatprep.subr.mxu0 0.0
      %1070 = vmatpush1.msra.mxu0 0.0
      %1071 = vmatprep.subr.mxu0 0.0
      %1072 = vmatpush1.msra.mxu0 0.0
      %1073 = vmatprep.subr.mxu0 0.0
      %1074 = vmatpush1.msra.mxu0 0.0
      %1075 = vmatprep.subr.mxu0 0.0
      %1076 = vmatpush1.msra.mxu0 0.0
      %1077 = vmatprep.subr.mxu0 0.0
      %1078 = vmatpush1.msra.mxu0 0.0
      %1079 = vmatprep.subr.mxu0 0.0
      %1080 = vmatpush1.msra.mxu0 0.0
      %1081 = vmatprep.subr.mxu0 0.0
      %1082 = vmatpush1.msra.mxu0 0.0
      %1083 = vmatprep.subr.mxu0 0.0
      %1084 = vmatpush1.msra.mxu0 0.0
      %1085 = vmatprep.subr.mxu0 0.0
      %1086 = vmatpush1.msra.mxu0 0.0
      %1087 = vmatprep.subr.mxu0 0.0
      %1088 = vmatpush1.msra.mxu0 0.0
      %1089 = vmatprep.subr.mxu0 0.0
      %1090 = vmatpush1.msra.mxu0 0.0
      %1091 = vmatprep.subr.mxu0 0.0
      %1092 = vmatpush1.msra.mxu0 0.0
      %1093 = vmatprep.subr.mxu0 0.0
      %1094 = vmatpush1.msra.mxu0 0.0
      %1095 = vmatprep.subr.mxu0 0.0
      %1096 = vmatpush1.msra.mxu0 0.0
      %1097 = vmatprep.subr.mxu0 0.0
      %1098 = vmatpush1.msra.mxu0 0.0
      %1099 = vmatprep.subr.mxu0 0.0
      %1100 = vmatpush1.msra.mxu0 0.0
      %1101 = vmatprep.subr.mxu0 0.0
      %1102 = vmatpush1.msra.mxu0 0.0
      %1103 = vmatprep.subr.mxu0 0.0
      %1104 = vmatpush1.msra.mxu0 0.0
      %1105 = vmatprep.subr.mxu0 0.0
      %1106 = vmatpush1.msra.mxu0 0.0
      %1107 = vmatprep.subr.mxu0 0.0
      %1108 = vmatpush1.msra.mxu0 0.0
      %1109 = vmatprep.subr.mxu0 0.0
      %1110 = vmatpush1.msra.mxu0 0.0
      %1111 = vmatprep.subr.mxu0 0.0
      %1112 = vmatpush1.msra.mxu0 0.0
      %1113 = vmatprep.subr.mxu0 0.0
      %1114 = vmatpush1.msra.mxu0 0.0
      %1115 = vmatprep.subr.mxu0 0.0
      %1116 = vmatpush1.msra.mxu0 0.0
      %1117 = vmatprep.subr.mxu0 0.0
      %1118 = vmatpush1.msra.mxu0 0.0
      %1119 = vmatprep.mubr.f32.mxu0 0.0
      %1120 = vmatmul.mubr.f32.gmra.mrb[0].mxu0 %v1053
      %v1121 = vpop.f32.mrb[0].mxu0
      %v1122 = vadd.f32 0.0, %v1121
      %v1123 = vpop.f32.mrb[0].mxu0
      %1124 = vdwg.mxu0
      %v1125 = vadd.f32 %v888, %v1122
      %1126 = vrot.lane.b32.xlu0 %v792, 120
      %v1127 = vpop.permute.xlu0 %1126
      %1128 = vrot.lane.b32.xlu0 %v789, 88
      %v1129 = vpop.permute.xlu0 %1128
      %v1130 = vsel %vm892, %v1127, 0
      %v1132 = vsel %vm892, %v1129, 0
      %1134 = vmatprep.subr.mxu0 0.0
      %1135 = vmatpush1.xpose.msra.mxu0 %v1132
      %1136 = vmatprep.subr.mxu0 0.0
      %1137 = vmatpush1.xpose.msra.mxu0 0.0
      %1138 = vmatprep.subr.mxu0 0.0
      %1139 = vmatpush1.xpose.msra.mxu0 0.0
      %1140 = vmatprep.subr.mxu0 0.0
      %1141 = vmatpush1.xpose.msra.mxu0 0.0
      %1142 = vmatprep.subr.mxu0 0.0
      %1143 = vmatpush1.xpose.msra.mxu0 0.0
      %1144 = vmatprep.subr.mxu0 0.0
      %1145 = vmatpush1.xpose.msra.mxu0 0.0
      %1146 = vmatprep.subr.mxu0 0.0
      %1147 = vmatpush1.xpose.msra.mxu0 0.0
      %1148 = vmatprep.subr.mxu0 0.0
      %1149 = vmatpush1.xpose.msra.mxu0 0.0
      %1150 = vmatprep.subr.mxu0 0.0
      %1151 = vmatpush1.xpose.msra.mxu0 0.0
      %1152 = vmatprep.subr.mxu0 0.0
      %1153 = vmatpush1.xpose.msra.mxu0 0.0
      %1154 = vmatprep.subr.mxu0 0.0
      %1155 = vmatpush1.xpose.msra.mxu0 0.0
      %1156 = vmatprep.subr.mxu0 0.0
      %1157 = vmatpush1.xpose.msra.mxu0 0.0
      %1158 = vmatprep.subr.mxu0 0.0
      %1159 = vmatpush1.xpose.msra.mxu0 0.0
      %1160 = vmatprep.subr.mxu0 0.0
      %1161 = vmatpush1.xpose.msra.mxu0 0.0
      %1162 = vmatprep.subr.mxu0 0.0
      %1163 = vmatpush1.xpose.msra.mxu0 0.0
      %1164 = vmatprep.subr.mxu0 0.0
      %1165 = vmatpush1.xpose.msra.mxu0 0.0
      %1166 = vmatprep.subr.mxu0 0.0
      %1167 = vmatpush1.xpose.msra.mxu0 0.0
      %1168 = vmatprep.subr.mxu0 0.0
      %1169 = vmatpush1.xpose.msra.mxu0 0.0
      %1170 = vmatprep.subr.mxu0 0.0
      %1171 = vmatpush1.xpose.msra.mxu0 0.0
      %1172 = vmatprep.subr.mxu0 0.0
      %1173 = vmatpush1.xpose.msra.mxu0 0.0
      %1174 = vmatprep.subr.mxu0 0.0
      %1175 = vmatpush1.xpose.msra.mxu0 0.0
      %1176 = vmatprep.subr.mxu0 0.0
      %1177 = vmatpush1.xpose.msra.mxu0 0.0
      %1178 = vmatprep.subr.mxu0 0.0
      %1179 = vmatpush1.xpose.msra.mxu0 0.0
      %1180 = vmatprep.subr.mxu0 0.0
      %1181 = vmatpush1.xpose.msra.mxu0 0.0
      %1182 = vmatprep.subr.mxu0 0.0
      %1183 = vmatpush1.xpose.msra.mxu0 0.0
      %1184 = vmatprep.subr.mxu0 0.0
      %1185 = vmatpush1.xpose.msra.mxu0 0.0
      %1186 = vmatprep.subr.mxu0 0.0
      %1187 = vmatpush1.xpose.msra.mxu0 0.0
      %1188 = vmatprep.subr.mxu0 0.0
      %1189 = vmatpush1.xpose.msra.mxu0 0.0
      %1190 = vmatprep.subr.mxu0 0.0
      %1191 = vmatpush1.xpose.msra.mxu0 0.0
      %1192 = vmatprep.subr.mxu0 0.0
      %1193 = vmatpush1.xpose.msra.mxu0 0.0
      %1194 = vmatprep.subr.mxu0 0.0
      %1195 = vmatpush1.xpose.msra.mxu0 0.0
      %1196 = vmatprep.subr.mxu0 0.0
      %1197 = vmatpush1.xpose.msra.mxu0 0.0
      %1198 = vmatprep.mubr.f32.mxu0 0.0
      %1199 = vmatmul.mubr.f32.gmra.mrb[0].mxu0 %v1130
      %v1200 = vpop.f32.mrb[0].mxu0
      %v1201 = vadd.f32 0.0, %v1200
      %v1202 = vpop.f32.mrb[0].mxu0
      %1203 = vdwg.mxu0
      %v1204 = vsel %vm892, %v1201, -inf
      %1205 = vmax.xlane.f32.xlu0 %v1204
      %v1206 = vpop.xlane.xlu0 %1205
      %v1207 = vsub.f32 %v1201, %v1206
      %v1208 = vmul.f32 %v1207, 1.442695
      %v1209 = vpow.pop %v1208
      %v1210 = vsel %vm892, %v1209, 0.0
      %1211 = vadd.xlane.f32.xlu0 %v1210
      %v1212 = vpop.xlane.xlu0 %1211
      %v1213 = vrcp.pop %v1212
      %v1214 = vmul.f32 %v1209, %v1213
      %1216 = vrot.lane.b32.xlu0 %v874, 120
      %v1217 = vpop.permute.xlu0 %1216
      %v1220 = vsel %vm892, %v1214, 0
      %1222 = vmatprep.subr.mxu0 0.0
      %1223 = vmatpush1.msra.mxu0 %v1217
      %1224 = vmatprep.subr.mxu0 0.0
      %1225 = vmatpush1.msra.mxu0 0.0
      %1226 = vmatprep.subr.mxu0 0.0
      %1227 = vmatpush1.msra.mxu0 0.0
      %1228 = vmatprep.subr.mxu0 0.0
      %1229 = vmatpush1.msra.mxu0 0.0
      %1230 = vmatprep.subr.mxu0 0.0
      %1231 = vmatpush1.msra.mxu0 0.0
      %1232 = vmatprep.subr.mxu0 0.0
      %1233 = vmatpush1.msra.mxu0 0.0
      %1234 = vmatprep.subr.mxu0 0.0
      %1235 = vmatpush1.msra.mxu0 0.0
      %1236 = vmatprep.subr.mxu0 0.0
      %1237 = vmatpush1.msra.mxu0 0.0
      %1238 = vmatprep.subr.mxu0 0.0
      %1239 = vmatpush1.msra.mxu0 0.0
      %1240 = vmatprep.subr.mxu0 0.0
      %1241 = vmatpush1.msra.mxu0 0.0
      %1242 = vmatprep.subr.mxu0 0.0
      %1243 = vmatpush1.msra.mxu0 0.0
      %1244 = vmatprep.subr.mxu0 0.0
      %1245 = vmatpush1.msra.mxu0 0.0
      %1246 = vmatprep.subr.mxu0 0.0
      %1247 = vmatpush1.msra.mxu0 0.0
      %1248 = vmatprep.subr.mxu0 0.0
      %1249 = vmatpush1.msra.mxu0 0.0
      %1250 = vmatprep.subr.mxu0 0.0
      %1251 = vmatpush1.msra.mxu0 0.0
      %1252 = vmatprep.subr.mxu0 0.0
      %1253 = vmatpush1.msra.mxu0 0.0
      %1254 = vmatprep.subr.mxu0 0.0
      %1255 = vmatpush1.msra.mxu0 0.0
      %1256 = vmatprep.subr.mxu0 0.0
      %1257 = vmatpush1.msra.mxu0 0.0
      %1258 = vmatprep.subr.mxu0 0.0
      %1259 = vmatpush1.msra.mxu0 0.0
      %1260 = vmatprep.subr.mxu0 0.0
      %1261 = vmatpush1.msra.mxu0 0.0
      %1262 = vmatprep.subr.mxu0 0.0
      %1263 = vmatpush1.msra.mxu0 0.0
      %1264 = vmatprep.subr.mxu0 0.0
      %1265 = vmatpush1.msra.mxu0 0.0
      %1266 = vmatprep.subr.mxu0 0.0
      %1267 = vmatpush1.msra.mxu0 0.0
      %1268 = vmatprep.subr.mxu0 0.0
      %1269 = vmatpush1.msra.mxu0 0.0
      %1270 = vmatprep.subr.mxu0 0.0
      %1271 = vmatpush1.msra.mxu0 0.0
      %1272 = vmatprep.subr.mxu0 0.0
      %1273 = vmatpush1.msra.mxu0 0.0
      %1274 = vmatprep.subr.mxu0 0.0
      %1275 = vmatpush1.msra.mxu0 0.0
      %1276 = vmatprep.subr.mxu0 0.0
      %1277 = vmatpush1.msra.mxu0 0.0
      %1278 = vmatprep.subr.mxu0 0.0
      %1279 = vmatpush1.msra.mxu0 0.0
      %1280 = vmatprep.subr.mxu0 0.0
      %1281 = vmatpush1.msra.mxu0 0.0
      %1282 = vmatprep.subr.mxu0 0.0
      %1283 = vmatpush1.msra.mxu0 0.0
      %1284 = vmatprep.subr.mxu0 0.0
      %1285 = vmatpush1.msra.mxu0 0.0
      %1286 = vmatprep.mubr.f32.mxu0 0.0
      %1287 = vmatmul.mubr.f32.gmra.mrb[0].mxu0 %v1220
      %v1288 = vpop.f32.mrb[0].mxu0
      %v1289 = vadd.f32 0.0, %v1288
      %v1290 = vpop.f32.mrb[0].mxu0
      %1291 = vdwg.mxu0
      %v1293 = vsel %vm892, %v1289, 0
      %1295 = vmatprep.subr.mxu0 0.0
      %1296 = vmatpush1.msra.mxu0 %v878
      %1297 = vmatprep.subr.mxu0 0.0
      %1298 = vmatpush1.msra.mxu0 0.0
      %1299 = vmatprep.subr.mxu0 0.0
      %1300 = vmatpush1.msra.mxu0 0.0
      %1301 = vmatprep.subr.mxu0 0.0
      %1302 = vmatpush1.msra.mxu0 0.0
      %1303 = vmatprep.subr.mxu0 0.0
      %1304 = vmatpush1.msra.mxu0 0.0
      %1305 = vmatprep.subr.mxu0 0.0
      %1306 = vmatpush1.msra.mxu0 0.0
      %1307 = vmatprep.subr.mxu0 0.0
      %1308 = vmatpush1.msra.mxu0 0.0
      %1309 = vmatprep.subr.mxu0 0.0
      %1310 = vmatpush1.msra.mxu0 0.0
      %1311 = vmatprep.subr.mxu0 0.0
      %1312 = vmatpush1.msra.mxu0 0.0
      %1313 = vmatprep.subr.mxu0 0.0
      %1314 = vmatpush1.msra.mxu0 0.0
      %1315 = vmatprep.subr.mxu0 0.0
      %1316 = vmatpush1.msra.mxu0 0.0
      %1317 = vmatprep.subr.mxu0 0.0
      %1318 = vmatpush1.msra.mxu0 0.0
      %1319 = vmatprep.subr.mxu0 0.0
      %1320 = vmatpush1.msra.mxu0 0.0
      %1321 = vmatprep.subr.mxu0 0.0
      %1322 = vmatpush1.msra.mxu0 0.0
      %1323 = vmatprep.subr.mxu0 0.0
      %1324 = vmatpush1.msra.mxu0 0.0
      %1325 = vmatprep.subr.mxu0 0.0
      %1326 = vmatpush1.msra.mxu0 0.0
      %1327 = vmatprep.subr.mxu0 0.0
      %1328 = vmatpush1.msra.mxu0 0.0
      %1329 = vmatprep.subr.mxu0 0.0
      %1330 = vmatpush1.msra.mxu0 0.0
      %1331 = vmatprep.subr.mxu0 0.0
      %1332 = vmatpush1.msra.mxu0 0.0
      %1333 = vmatprep.subr.mxu0 0.0
      %1334 = vmatpush1.msra.mxu0 0.0
      %1335 = vmatprep.subr.mxu0 0.0
      %1336 = vmatpush1.msra.mxu0 0.0
      %1337 = vmatprep.subr.mxu0 0.0
      %1338 = vmatpush1.msra.mxu0 0.0
      %1339 = vmatprep.subr.mxu0 0.0
      %1340 = vmatpush1.msra.mxu0 0.0
      %1341 = vmatprep.subr.mxu0 0.0
      %1342 = vmatpush1.msra.mxu0 0.0
      %1343 = vmatprep.subr.mxu0 0.0
      %1344 = vmatpush1.msra.mxu0 0.0
      %1345 = vmatprep.subr.mxu0 0.0
      %1346 = vmatpush1.msra.mxu0 0.0
      %1347 = vmatprep.subr.mxu0 0.0
      %1348 = vmatpush1.msra.mxu0 0.0
      %1349 = vmatprep.subr.mxu0 0.0
      %1350 = vmatpush1.msra.mxu0 0.0
      %1351 = vmatprep.subr.mxu0 0.0
      %1352 = vmatpush1.msra.mxu0 0.0
      %1353 = vmatprep.subr.mxu0 0.0
      %1354 = vmatpush1.msra.mxu0 0.0
      %1355 = vmatprep.subr.mxu0 0.0
      %1356 = vmatpush1.msra.mxu0 0.0
      %1357 = vmatprep.subr.mxu0 0.0
      %1358 = vmatpush1.msra.mxu0 0.0
      %1359 = vmatprep.mubr.f32.mxu0 0.0
      %1360 = vmatmul.mubr.f32.gmra.mrb[0].mxu0 %v1293
      %v1361 = vpop.f32.mrb[0].mxu0
      %v1362 = vadd.f32 0.0, %v1361
      %v1363 = vpop.f32.mrb[0].mxu0
      %1364 = vdwg.mxu0
      %v1365 = vadd.f32 %v1125, %v1362
      %1366 = vrot.lane.b32.xlu0 %v792, 112
      %v1367 = vpop.permute.xlu0 %1366
      %1368 = vrot.lane.b32.xlu0 %v789, 80
      %v1369 = vpop.permute.xlu0 %1368
      %v1370 = vsel %vm892, %v1367, 0
      %v1372 = vsel %vm892, %v1369, 0
      %1374 = vmatprep.subr.mxu0 0.0
      %1375 = vmatpush1.xpose.msra.mxu0 %v1372
      %1376 = vmatprep.subr.mxu0 0.0
      %1377 = vmatpush1.xpose.msra.mxu0 0.0
      %1378 = vmatprep.subr.mxu0 0.0
      %1379 = vmatpush1.xpose.msra.mxu0 0.0
      %1380 = vmatprep.subr.mxu0 0.0
      %1381 = vmatpush1.xpose.msra.mxu0 0.0
      %1382 = vmatprep.subr.mxu0 0.0
      %1383 = vmatpush1.xpose.msra.mxu0 0.0
      %1384 = vmatprep.subr.mxu0 0.0
      %1385 = vmatpush1.xpose.msra.mxu0 0.0
      %1386 = vmatprep.subr.mxu0 0.0
      %1387 = vmatpush1.xpose.msra.mxu0 0.0
      %1388 = vmatprep.subr.mxu0 0.0
      %1389 = vmatpush1.xpose.msra.mxu0 0.0
      %1390 = vmatprep.subr.mxu0 0.0
      %1391 = vmatpush1.xpose.msra.mxu0 0.0
      %1392 = vmatprep.subr.mxu0 0.0
      %1393 = vmatpush1.xpose.msra.mxu0 0.0
      %1394 = vmatprep.subr.mxu0 0.0
      %1395 = vmatpush1.xpose.msra.mxu0 0.0
      %1396 = vmatprep.subr.mxu0 0.0
      %1397 = vmatpush1.xpose.msra.mxu0 0.0
      %1398 = vmatprep.subr.mxu0 0.0
      %1399 = vmatpush1.xpose.msra.mxu0 0.0
      %1400 = vmatprep.subr.mxu0 0.0
      %1401 = vmatpush1.xpose.msra.mxu0 0.0
      %1402 = vmatprep.subr.mxu0 0.0
      %1403 = vmatpush1.xpose.msra.mxu0 0.0
      %1404 = vmatprep.subr.mxu0 0.0
      %1405 = vmatpush1.xpose.msra.mxu0 0.0
      %1406 = vmatprep.subr.mxu0 0.0
      %1407 = vmatpush1.xpose.msra.mxu0 0.0
      %1408 = vmatprep.subr.mxu0 0.0
      %1409 = vmatpush1.xpose.msra.mxu0 0.0
      %1410 = vmatprep.subr.mxu0 0.0
      %1411 = vmatpush1.xpose.msra.mxu0 0.0
      %1412 = vmatprep.subr.mxu0 0.0
      %1413 = vmatpush1.xpose.msra.mxu0 0.0
      %1414 = vmatprep.subr.mxu0 0.0
      %1415 = vmatpush1.xpose.msra.mxu0 0.0
      %1416 = vmatprep.subr.mxu0 0.0
      %1417 = vmatpush1.xpose.msra.mxu0 0.0
      %1418 = vmatprep.subr.mxu0 0.0
      %1419 = vmatpush1.xpose.msra.mxu0 0.0
      %1420 = vmatprep.subr.mxu0 0.0
      %1421 = vmatpush1.xpose.msra.mxu0 0.0
      %1422 = vmatprep.subr.mxu0 0.0
      %1423 = vmatpush1.xpose.msra.mxu0 0.0
      %1424 = vmatprep.subr.mxu0 0.0
      %1425 = vmatpush1.xpose.msra.mxu0 0.0
      %1426 = vmatprep.subr.mxu0 0.0
      %1427 = vmatpush1.xpose.msra.mxu0 0.0
      %1428 = vmatprep.subr.mxu0 0.0
      %1429 = vmatpush1.xpose.msra.mxu0 0.0
      %1430 = vmatprep.subr.mxu0 0.0
      %1431 = vmatpush1.xpose.msra.mxu0 0.0
      %1432 = vmatprep.subr.mxu0 0.0
      %1433 = vmatpush1.xpose.msra.mxu0 0.0
      %1434 = vmatprep.subr.mxu0 0.0
      %1435 = vmatpush1.xpose.msra.mxu0 0.0
      %1436 = vmatprep.subr.mxu0 0.0
      %1437 = vmatpush1.xpose.msra.mxu0 0.0
      %1438 = vmatprep.mubr.f32.mxu0 0.0
      %1439 = vmatmul.mubr.f32.gmra.mrb[0].mxu0 %v1370
      %v1440 = vpop.f32.mrb[0].mxu0
      %v1441 = vadd.f32 0.0, %v1440
      %v1442 = vpop.f32.mrb[0].mxu0
      %1443 = vdwg.mxu0
      %v1444 = vsel %vm892, %v1441, -inf
      %1445 = vmax.xlane.f32.xlu0 %v1444
      %v1446 = vpop.xlane.xlu0 %1445
      %v1447 = vsub.f32 %v1441, %v1446
      %v1448 = vmul.f32 %v1447, 1.442695
      %v1449 = vpow.pop %v1448
      %v1450 = vsel %vm892, %v1449, 0.0
      %1451 = vadd.xlane.f32.xlu0 %v1450
      %v1452 = vpop.xlane.xlu0 %1451
      %v1453 = vrcp.pop %v1452
      %v1454 = vmul.f32 %v1449, %v1453
      %1455 = vrot.lane.b32.xlu0 %v874, 112
      %v1456 = vpop.permute.xlu0 %1455
      %v1459 = vsel %vm892, %v1454, 0
      %1461 = vmatprep.subr.mxu0 0.0
      %1462 = vmatpush1.msra.mxu0 %v1456
      %1463 = vmatprep.subr.mxu0 0.0
      %1464 = vmatpush1.msra.mxu0 0.0
      %1465 = vmatprep.subr.mxu0 0.0
      %1466 = vmatpush1.msra.mxu0 0.0
      %1467 = vmatprep.subr.mxu0 0.0
      %1468 = vmatpush1.msra.mxu0 0.0
      %1469 = vmatprep.subr.mxu0 0.0
      %1470 = vmatpush1.msra.mxu0 0.0
      %1471 = vmatprep.subr.mxu0 0.0
      %1472 = vmatpush1.msra.mxu0 0.0
      %1473 = vmatprep.subr.mxu0 0.0
      %1474 = vmatpush1.msra.mxu0 0.0
      %1475 = vmatprep.subr.mxu0 0.0
      %1476 = vmatpush1.msra.mxu0 0.0
      %1477 = vmatprep.subr.mxu0 0.0
      %1478 = vmatpush1.msra.mxu0 0.0
      %1479 = vmatprep.subr.mxu0 0.0
      %1480 = vmatpush1.msra.mxu0 0.0
      %1481 = vmatprep.subr.mxu0 0.0
      %1482 = vmatpush1.msra.mxu0 0.0
      %1483 = vmatprep.subr.mxu0 0.0
      %1484 = vmatpush1.msra.mxu0 0.0
      %1485 = vmatprep.subr.mxu0 0.0
      %1486 = vmatpush1.msra.mxu0 0.0
      %1487 = vmatprep.subr.mxu0 0.0
      %1488 = vmatpush1.msra.mxu0 0.0
      %1489 = vmatprep.subr.mxu0 0.0
      %1490 = vmatpush1.msra.mxu0 0.0
      %1491 = vmatprep.subr.mxu0 0.0
      %1492 = vmatpush1.msra.mxu0 0.0
      %1493 = vmatprep.subr.mxu0 0.0
      %1494 = vmatpush1.msra.mxu0 0.0
      %1495 = vmatprep.subr.mxu0 0.0
      %1496 = vmatpush1.msra.mxu0 0.0
      %1497 = vmatprep.subr.mxu0 0.0
      %1498 = vmatpush1.msra.mxu0 0.0
      %1499 = vmatprep.subr.mxu0 0.0
      %1500 = vmatpush1.msra.mxu0 0.0
      %1501 = vmatprep.subr.mxu0 0.0
      %1502 = vmatpush1.msra.mxu0 0.0
      %1503 = vmatprep.subr.mxu0 0.0
      %1504 = vmatpush1.msra.mxu0 0.0
      %1505 = vmatprep.subr.mxu0 0.0
      %1506 = vmatpush1.msra.mxu0 0.0
      %1507 = vmatprep.subr.mxu0 0.0
      %1508 = vmatpush1.msra.mxu0 0.0
      %1509 = vmatprep.subr.mxu0 0.0
      %1510 = vmatpush1.msra.mxu0 0.0
      %1511 = vmatprep.subr.mxu0 0.0
      %1512 = vmatpush1.msra.mxu0 0.0
      %1513 = vmatprep.subr.mxu0 0.0
      %1514 = vmatpush1.msra.mxu0 0.0
      %1515 = vmatprep.subr.mxu0 0.0
      %1516 = vmatpush1.msra.mxu0 0.0
      %1517 = vmatprep.subr.mxu0 0.0
      %1518 = vmatpush1.msra.mxu0 0.0
      %1519 = vmatprep.subr.mxu0 0.0
      %1520 = vmatpush1.msra.mxu0 0.0
      %1521 = vmatprep.subr.mxu0 0.0
      %1522 = vmatpush1.msra.mxu0 0.0
      %1523 = vmatprep.subr.mxu0 0.0
      %1524 = vmatpush1.msra.mxu0 0.0
      %1525 = vmatprep.mubr.f32.mxu0 0.0
      %1526 = vmatmul.mubr.f32.gmra.mrb[0].mxu0 %v1459
      %v1527 = vpop.f32.mrb[0].mxu0
      %v1528 = vadd.f32 0.0, %v1527
      %v1529 = vpop.f32.mrb[0].mxu0
      %1530 = vdwg.mxu0
      %v1532 = vsel %vm892, %v1528, 0
      %1534 = vmatprep.subr.mxu0 0.0
      %1535 = vmatpush1.msra.mxu0 %v879
      %1536 = vmatprep.subr.mxu0 0.0
      %1537 = vmatpush1.msra.mxu0 0.0
      %1538 = vmatprep.subr.mxu0 0.0
      %1539 = vmatpush1.msra.mxu0 0.0
      %1540 = vmatprep.subr.mxu0 0.0
      %1541 = vmatpush1.msra.mxu0 0.0
      %1542 = vmatprep.subr.mxu0 0.0
      %1543 = vmatpush1.msra.mxu0 0.0
      %1544 = vmatprep.subr.mxu0 0.0
      %1545 = vmatpush1.msra.mxu0 0.0
      %1546 = vmatprep.subr.mxu0 0.0
      %1547 = vmatpush1.msra.mxu0 0.0
      %1548 = vmatprep.subr.mxu0 0.0
      %1549 = vmatpush1.msra.mxu0 0.0
      %1550 = vmatprep.subr.mxu0 0.0
      %1551 = vmatpush1.msra.mxu0 0.0
      %1552 = vmatprep.subr.mxu0 0.0
      %1553 = vmatpush1.msra.mxu0 0.0
      %1554 = vmatprep.subr.mxu0 0.0
      %1555 = vmatpush1.msra.mxu0 0.0
      %1556 = vmatprep.subr.mxu0 0.0
      %1557 = vmatpush1.msra.mxu0 0.0
      %1558 = vmatprep.subr.mxu0 0.0
      %1559 = vmatpush1.msra.mxu0 0.0
      %1560 = vmatprep.subr.mxu0 0.0
      %1561 = vmatpush1.msra.mxu0 0.0
      %1562 = vmatprep.subr.mxu0 0.0
      %1563 = vmatpush1.msra.mxu0 0.0
      %1564 = vmatprep.subr.mxu0 0.0
      %1565 = vmatpush1.msra.mxu0 0.0
      %1566 = vmatprep.subr.mxu0 0.0
      %1567 = vmatpush1.msra.mxu0 0.0
      %1568 = vmatprep.subr.mxu0 0.0
      %1569 = vmatpush1.msra.mxu0 0.0
      %1570 = vmatprep.subr.mxu0 0.0
      %1571 = vmatpush1.msra.mxu0 0.0
      %1572 = vmatprep.subr.mxu0 0.0
      %1573 = vmatpush1.msra.mxu0 0.0
      %1574 = vmatprep.subr.mxu0 0.0
      %1575 = vmatpush1.msra.mxu0 0.0
      %1576 = vmatprep.subr.mxu0 0.0
      %1577 = vmatpush1.msra.mxu0 0.0
      %1578 = vmatprep.subr.mxu0 0.0
      %1579 = vmatpush1.msra.mxu0 0.0
      %1580 = vmatprep.subr.mxu0 0.0
      %1581 = vmatpush1.msra.mxu0 0.0
      %1582 = vmatprep.subr.mxu0 0.0
      %1583 = vmatpush1.msra.mxu0 0.0
      %1584 = vmatprep.subr.mxu0 0.0
      %1585 = vmatpush1.msra.mxu0 0.0
      %1586 = vmatprep.subr.mxu0 0.0
      %1587 = vmatpush1.msra.mxu0 0.0
      %1588 = vmatprep.subr.mxu0 0.0
      %1589 = vmatpush1.msra.mxu0 0.0
      %1590 = vmatprep.subr.mxu0 0.0
      %1591 = vmatpush1.msra.mxu0 0.0
      %1592 = vmatprep.subr.mxu0 0.0
      %1593 = vmatpush1.msra.mxu0 0.0
      %1594 = vmatprep.subr.mxu0 0.0
      %1595 = vmatpush1.msra.mxu0 0.0
      %1596 = vmatprep.subr.mxu0 0.0
      %1597 = vmatpush1.msra.mxu0 0.0
      %1598 = vmatprep.mubr.f32.mxu0 0.0
      %1599 = vmatmul.mubr.f32.gmra.mrb[0].mxu0 %v1532
      %v1600 = vpop.f32.mrb[0].mxu0
      %v1601 = vadd.f32 0.0, %v1600
      %v1602 = vpop.f32.mrb[0].mxu0
      %1603 = vdwg.mxu0
      %v1604 = vadd.f32 %v1365, %v1601
      %1605 = vrot.lane.b32.xlu0 %v792, 104
      %v1606 = vpop.permute.xlu0 %1605
      %1607 = vrot.lane.b32.xlu0 %v789, 72
      %v1608 = vpop.permute.xlu0 %1607
      %v1609 = vsel %vm892, %v1606, 0
      %v1611 = vsel %vm892, %v1608, 0
      %1613 = vmatprep.subr.mxu0 0.0
      %1614 = vmatpush1.xpose.msra.mxu0 %v1611
      %1615 = vmatprep.subr.mxu0 0.0
      %1616 = vmatpush1.xpose.msra.mxu0 0.0
      %1617 = vmatprep.subr.mxu0 0.0
      %1618 = vmatpush1.xpose.msra.mxu0 0.0
      %1619 = vmatprep.subr.mxu0 0.0
      %1620 = vmatpush1.xpose.msra.mxu0 0.0
      %1621 = vmatprep.subr.mxu0 0.0
      %1622 = vmatpush1.xpose.msra.mxu0 0.0
      %1623 = vmatprep.subr.mxu0 0.0
      %1624 = vmatpush1.xpose.msra.mxu0 0.0
      %1625 = vmatprep.subr.mxu0 0.0
      %1626 = vmatpush1.xpose.msra.mxu0 0.0
      %1627 = vmatprep.subr.mxu0 0.0
      %1628 = vmatpush1.xpose.msra.mxu0 0.0
      %1629 = vmatprep.subr.mxu0 0.0
      %1630 = vmatpush1.xpose.msra.mxu0 0.0
      %1631 = vmatprep.subr.mxu0 0.0
      %1632 = vmatpush1.xpose.msra.mxu0 0.0
      %1633 = vmatprep.subr.mxu0 0.0
      %1634 = vmatpush1.xpose.msra.mxu0 0.0
      %1635 = vmatprep.subr.mxu0 0.0
      %1636 = vmatpush1.xpose.msra.mxu0 0.0
      %1637 = vmatprep.subr.mxu0 0.0
      %1638 = vmatpush1.xpose.msra.mxu0 0.0
      %1639 = vmatprep.subr.mxu0 0.0
      %1640 = vmatpush1.xpose.msra.mxu0 0.0
      %1641 = vmatprep.subr.mxu0 0.0
      %1642 = vmatpush1.xpose.msra.mxu0 0.0
      %1643 = vmatprep.subr.mxu0 0.0
      %1644 = vmatpush1.xpose.msra.mxu0 0.0
      %1645 = vmatprep.subr.mxu0 0.0
      %1646 = vmatpush1.xpose.msra.mxu0 0.0
      %1647 = vmatprep.subr.mxu0 0.0
      %1648 = vmatpush1.xpose.msra.mxu0 0.0
      %1649 = vmatprep.subr.mxu0 0.0
      %1650 = vmatpush1.xpose.msra.mxu0 0.0
      %1651 = vmatprep.subr.mxu0 0.0
      %1652 = vmatpush1.xpose.msra.mxu0 0.0
      %1653 = vmatprep.subr.mxu0 0.0
      %1654 = vmatpush1.xpose.msra.mxu0 0.0
      %1655 = vmatprep.subr.mxu0 0.0
      %1656 = vmatpush1.xpose.msra.mxu0 0.0
      %1657 = vmatprep.subr.mxu0 0.0
      %1658 = vmatpush1.xpose.msra.mxu0 0.0
      %1659 = vmatprep.subr.mxu0 0.0
      %1660 = vmatpush1.xpose.msra.mxu0 0.0
      %1661 = vmatprep.subr.mxu0 0.0
      %1662 = vmatpush1.xpose.msra.mxu0 0.0
      %1663 = vmatprep.subr.mxu0 0.0
      %1664 = vmatpush1.xpose.msra.mxu0 0.0
      %1665 = vmatprep.subr.mxu0 0.0
      %1666 = vmatpush1.xpose.msra.mxu0 0.0
      %1667 = vmatprep.subr.mxu0 0.0
      %1668 = vmatpush1.xpose.msra.mxu0 0.0
      %1669 = vmatprep.subr.mxu0 0.0
      %1670 = vmatpush1.xpose.msra.mxu0 0.0
      %1671 = vmatprep.subr.mxu0 0.0
      %1672 = vmatpush1.xpose.msra.mxu0 0.0
      %1673 = vmatprep.subr.mxu0 0.0
      %1674 = vmatpush1.xpose.msra.mxu0 0.0
      %1675 = vmatprep.subr.mxu0 0.0
      %1676 = vmatpush1.xpose.msra.mxu0 0.0
      %1677 = vmatprep.mubr.f32.mxu0 0.0
      %1678 = vmatmul.mubr.f32.gmra.mrb[0].mxu0 %v1609
      %v1679 = vpop.f32.mrb[0].mxu0
      %v1680 = vadd.f32 0.0, %v1679
      %v1681 = vpop.f32.mrb[0].mxu0
      %1682 = vdwg.mxu0
      %v1683 = vsel %vm892, %v1680, -inf
      %1684 = vmax.xlane.f32.xlu0 %v1683
      %v1685 = vpop.xlane.xlu0 %1684
      %v1686 = vsub.f32 %v1680, %v1685
      %v1687 = vmul.f32 %v1686, 1.442695
      %v1688 = vpow.pop %v1687
      %v1689 = vsel %vm892, %v1688, 0.0
      %1690 = vadd.xlane.f32.xlu0 %v1689
      %v1691 = vpop.xlane.xlu0 %1690
      %v1692 = vrcp.pop %v1691
      %v1693 = vmul.f32 %v1688, %v1692
      %1694 = vrot.lane.b32.xlu0 %v874, 104
      %v1695 = vpop.permute.xlu0 %1694
      %v1698 = vsel %vm892, %v1693, 0
      %1700 = vmatprep.subr.mxu0 0.0
      %1701 = vmatpush1.msra.mxu0 %v1695
      %1702 = vmatprep.subr.mxu0 0.0
      %1703 = vmatpush1.msra.mxu0 0.0
      %1704 = vmatprep.subr.mxu0 0.0
      %1705 = vmatpush1.msra.mxu0 0.0
      %1706 = vmatprep.subr.mxu0 0.0
      %1707 = vmatpush1.msra.mxu0 0.0
      %1708 = vmatprep.subr.mxu0 0.0
      %1709 = vmatpush1.msra.mxu0 0.0
      %1710 = vmatprep.subr.mxu0 0.0
      %1711 = vmatpush1.msra.mxu0 0.0
      %1712 = vmatprep.subr.mxu0 0.0
      %1713 = vmatpush1.msra.mxu0 0.0
      %1714 = vmatprep.subr.mxu0 0.0
      %1715 = vmatpush1.msra.mxu0 0.0
      %1716 = vmatprep.subr.mxu0 0.0
      %1717 = vmatpush1.msra.mxu0 0.0
      %1718 = vmatprep.subr.mxu0 0.0
      %1719 = vmatpush1.msra.mxu0 0.0
      %1720 = vmatprep.subr.mxu0 0.0
      %1721 = vmatpush1.msra.mxu0 0.0
      %1722 = vmatprep.subr.mxu0 0.0
      %1723 = vmatpush1.msra.mxu0 0.0
      %1724 = vmatprep.subr.mxu0 0.0
      %1725 = vmatpush1.msra.mxu0 0.0
      %1726 = vmatprep.subr.mxu0 0.0
      %1727 = vmatpush1.msra.mxu0 0.0
      %1728 = vmatprep.subr.mxu0 0.0
      %1729 = vmatpush1.msra.mxu0 0.0
      %1730 = vmatprep.subr.mxu0 0.0
      %1731 = vmatpush1.msra.mxu0 0.0
      %1732 = vmatprep.subr.mxu0 0.0
      %1733 = vmatpush1.msra.mxu0 0.0
      %1734 = vmatprep.subr.mxu0 0.0
      %1735 = vmatpush1.msra.mxu0 0.0
      %1736 = vmatprep.subr.mxu0 0.0
      %1737 = vmatpush1.msra.mxu0 0.0
      %1738 = vmatprep.subr.mxu0 0.0
      %1739 = vmatpush1.msra.mxu0 0.0
      %1740 = vmatprep.subr.mxu0 0.0
      %1741 = vmatpush1.msra.mxu0 0.0
      %1742 = vmatprep.subr.mxu0 0.0
      %1743 = vmatpush1.msra.mxu0 0.0
      %1744 = vmatprep.subr.mxu0 0.0
      %1745 = vmatpush1.msra.mxu0 0.0
      %1746 = vmatprep.subr.mxu0 0.0
      %1747 = vmatpush1.msra.mxu0 0.0
      %1748 = vmatprep.subr.mxu0 0.0
      %1749 = vmatpush1.msra.mxu0 0.0
      %1750 = vmatprep.subr.mxu0 0.0
      %1751 = vmatpush1.msra.mxu0 0.0
      %1752 = vmatprep.subr.mxu0 0.0
      %1753 = vmatpush1.msra.mxu0 0.0
      %1754 = vmatprep.subr.mxu0 0.0
      %1755 = vmatpush1.msra.mxu0 0.0
      %1756 = vmatprep.subr.mxu0 0.0
      %1757 = vmatpush1.msra.mxu0 0.0
      %1758 = vmatprep.subr.mxu0 0.0
      %1759 = vmatpush1.msra.mxu0 0.0
      %1760 = vmatprep.subr.mxu0 0.0
      %1761 = vmatpush1.msra.mxu0 0.0
      %1762 = vmatprep.subr.mxu0 0.0
      %1763 = vmatpush1.msra.mxu0 0.0
      %1764 = vmatprep.mubr.f32.mxu0 0.0
      %1765 = vmatmul.mubr.f32.gmra.mrb[0].mxu0 %v1698
      %v1766 = vpop.f32.mrb[0].mxu0
      %v1767 = vadd.f32 0.0, %v1766
      %v1768 = vpop.f32.mrb[0].mxu0
      %1769 = vdwg.mxu0
      %v1771 = vsel %vm892, %v1767, 0
      %1773 = vmatprep.subr.mxu0 0.0
      %1774 = vmatpush1.msra.mxu0 %v880
      %1775 = vmatprep.subr.mxu0 0.0
      %1776 = vmatpush1.msra.mxu0 0.0
      %1777 = vmatprep.subr.mxu0 0.0
      %1778 = vmatpush1.msra.mxu0 0.0
      %1779 = vmatprep.subr.mxu0 0.0
      %1780 = vmatpush1.msra.mxu0 0.0
      %1781 = vmatprep.subr.mxu0 0.0
      %1782 = vmatpush1.msra.mxu0 0.0
      %1783 = vmatprep.subr.mxu0 0.0
      %1784 = vmatpush1.msra.mxu0 0.0
      %1785 = vmatprep.subr.mxu0 0.0
      %1786 = vmatpush1.msra.mxu0 0.0
      %1787 = vmatprep.subr.mxu0 0.0
      %1788 = vmatpush1.msra.mxu0 0.0
      %1789 = vmatprep.subr.mxu0 0.0
      %1790 = vmatpush1.msra.mxu0 0.0
      %1791 = vmatprep.subr.mxu0 0.0
      %1792 = vmatpush1.msra.mxu0 0.0
      %1793 = vmatprep.subr.mxu0 0.0
      %1794 = vmatpush1.msra.mxu0 0.0
      %1795 = vmatprep.subr.mxu0 0.0
      %1796 = vmatpush1.msra.mxu0 0.0
      %1797 = vmatprep.subr.mxu0 0.0
      %1798 = vmatpush1.msra.mxu0 0.0
      %1799 = vmatprep.subr.mxu0 0.0
      %1800 = vmatpush1.msra.mxu0 0.0
      %1801 = vmatprep.subr.mxu0 0.0
      %1802 = vmatpush1.msra.mxu0 0.0
      %1803 = vmatprep.subr.mxu0 0.0
      %1804 = vmatpush1.msra.mxu0 0.0
      %1805 = vmatprep.subr.mxu0 0.0
      %1806 = vmatpush1.msra.mxu0 0.0
      %1807 = vmatprep.subr.mxu0 0.0
      %1808 = vmatpush1.msra.mxu0 0.0
      %1809 = vmatprep.subr.mxu0 0.0
      %1810 = vmatpush1.msra.mxu0 0.0
      %1811 = vmatprep.subr.mxu0 0.0
      %1812 = vmatpush1.msra.mxu0 0.0
      %1813 = vmatprep.subr.mxu0 0.0
      %1814 = vmatpush1.msra.mxu0 0.0
      %1815 = vmatprep.subr.mxu0 0.0
      %1816 = vmatpush1.msra.mxu0 0.0
      %1817 = vmatprep.subr.mxu0 0.0
      %1818 = vmatpush1.msra.mxu0 0.0
      %1819 = vmatprep.subr.mxu0 0.0
      %1820 = vmatpush1.msra.mxu0 0.0
      %1821 = vmatprep.subr.mxu0 0.0
      %1822 = vmatpush1.msra.mxu0 0.0
      %1823 = vmatprep.subr.mxu0 0.0
      %1824 = vmatpush1.msra.mxu0 0.0
      %1825 = vmatprep.subr.mxu0 0.0
      %1826 = vmatpush1.msra.mxu0 0.0
      %1827 = vmatprep.subr.mxu0 0.0
      %1828 = vmatpush1.msra.mxu0 0.0
      %1829 = vmatprep.subr.mxu0 0.0
      %1830 = vmatpush1.msra.mxu0 0.0
      %1831 = vmatprep.subr.mxu0 0.0
      %1832 = vmatpush1.msra.mxu0 0.0
      %1833 = vmatprep.subr.mxu0 0.0
      %1834 = vmatpush1.msra.mxu0 0.0
      %1835 = vmatprep.subr.mxu0 0.0
      %1836 = vmatpush1.msra.mxu0 0.0
      %1837 = vmatprep.mubr.f32.mxu0 0.0
      %1838 = vmatmul.mubr.f32.gmra.mrb[0].mxu0 %v1771
      %v1839 = vpop.f32.mrb[0].mxu0
      %v1840 = vadd.f32 0.0, %v1839
      %v1841 = vpop.f32.mrb[0].mxu0
      %1842 = vdwg.mxu0
      %v1843 = vadd.f32 %v1604, %v1840
      %v1844 = vadd.f32 %v588, %v1843
      %v1845 = vld [vmem:[%s12] sm:$0x1]
      %v1846 = vld [vmem:[%s13] sm:$0x1]
      %v1847 = vsel %vm591, %v1844, 0.0
      %1848 = vadd.xlane.f32.xlu0 %v1847
      %v1849 = vpop.xlane.xlu0 %1848
      %v1850 = vmul.f32 %v1849, %v595
      %v1851 = vsub.f32 %v1844, %v1850
      %v1852 = vmul.f32 %v1851, %v1851
      %v1853 = vsel %vm591, %v1852, 0.0
      %1854 = vadd.xlane.f32.xlu0 %v1853
      %v1855 = vpop.xlane.xlu0 %1854
      %v1856 = vmul.f32 %v1855, %v595
      %v1857 = vadd.f32 %v1856, 1e-05
      %v1858 = vrsqrt.pop %v1857
      %v1859 = vmul.f32 %v1851, %v1858
      %v1861 = vlaneseq
      %v1862 = vshrl.u32 %v1861, 7
      %v1863 = vsub.s32 0, %v1862
      %v1864 = vrot.slane %v1845, %v1863
      %v1866 = vmul.f32 %v1859, %v1864
      %v1868 = vlaneseq
      %v1869 = vshrl.u32 %v1868, 7
      %v1870 = vsub.s32 0, %v1869
      %v1871 = vrot.slane %v1846, %v1870
      %v1873 = vadd.f32 %v1866, %v1871
      %v1874 = vld [vmem:[%s14] sm:$0xff]
      %v1875 = vld [vmem:[%s14 + $0x8] sm:$0xff]
      %v1876 = vld [vmem:[%s14 + $0x10] sm:$0xff]
      %v1877 = vld [vmem:[%s14 + $0x18] sm:$0xff]
      %v1878 = vld [vmem:[%s15] sm:$0x1]
      %v1880 = vlaneseq
      %v1881 = vshrl.u32 %v1880, 7
      %v1882 = vsub.s32 0, %v1881
      %v1883 = vrot.slane %v1878, %v1882
      %v1886 = vsel %vm591, %v1873, 0
      %1888 = vmatprep.subr.mxu0 0.0
      %1889 = vmatpush1.msra.mxu0 %v1874
      %1890 = vmatprep.subr.mxu0 0.0
      %1891 = vmatpush1.msra.mxu0 %v1875
      %1892 = vmatprep.subr.mxu0 0.0
      %1893 = vmatpush1.msra.mxu0 %v1876
      %1894 = vmatprep.subr.mxu0 0.0
      %1895 = vmatpush1.msra.mxu0 %v1877
      %1896 = vmatprep.subr.mxu0 0.0
      %1897 = vmatpush1.msra.mxu0 0.0
      %1898 = vmatprep.subr.mxu0 0.0
      %1899 = vmatpush1.msra.mxu0 0.0
      %1900 = vmatprep.subr.mxu0 0.0
      %1901 = vmatpush1.msra.mxu0 0.0
      %1902 = vmatprep.subr.mxu0 0.0
      %1903 = vmatpush1.msra.mxu0 0.0
      %1904 = vmatprep.subr.mxu0 0.0
      %1905 = vmatpush1.msra.mxu0 0.0
      %1906 = vmatprep.subr.mxu0 0.0
      %1907 = vmatpush1.msra.mxu0 0.0
      %1908 = vmatprep.subr.mxu0 0.0
      %1909 = vmatpush1.msra.mxu0 0.0
      %1910 = vmatprep.subr.mxu0 0.0
      %1911 = vmatpush1.msra.mxu0 0.0
      %1912 = vmatprep.subr.mxu0 0.0
      %1913 = vmatpush1.msra.mxu0 0.0
      %1914 = vmatprep.subr.mxu0 0.0
      %1915 = vmatpush1.msra.mxu0 0.0
      %1916 = vmatprep.subr.mxu0 0.0
      %1917 = vmatpush1.msra.mxu0 0.0
      %1918 = vmatprep.subr.mxu0 0.0
      %1919 = vmatpush1.msra.mxu0 0.0
      %1920 = vmatprep.subr.mxu0 0.0
      %1921 = vmatpush1.msra.mxu0 0.0
      %1922 = vmatprep.subr.mxu0 0.0
      %1923 = vmatpush1.msra.mxu0 0.0
      %1924 = vmatprep.subr.mxu0 0.0
      %1925 = vmatpush1.msra.mxu0 0.0
      %1926 = vmatprep.subr.mxu0 0.0
      %1927 = vmatpush1.msra.mxu0 0.0
      %1928 = vmatprep.subr.mxu0 0.0
      %1929 = vmatpush1.msra.mxu0 0.0
      %1930 = vmatprep.subr.mxu0 0.0
      %1931 = vmatpush1.msra.mxu0 0.0
      %1932 = vmatprep.subr.mxu0 0.0
      %1933 = vmatpush1.msra.mxu0 0.0
      %1934 = vmatprep.subr.mxu0 0.0
      %1935 = vmatpush1.msra.mxu0 0.0
      %1936 = vmatprep.subr.mxu0 0.0
      %1937 = vmatpush1.msra.mxu0 0.0
      %1938 = vmatprep.subr.mxu0 0.0
      %1939 = vmatpush1.msra.mxu0 0.0
      %1940 = vmatprep.subr.mxu0 0.0
      %1941 = vmatpush1.msra.mxu0 0.0
      %1942 = vmatprep.subr.mxu0 0.0
      %1943 = vmatpush1.msra.mxu0 0.0
      %1944 = vmatprep.subr.mxu0 0.0
      %1945 = vmatpush1.msra.mxu0 0.0
      %1946 = vmatprep.subr.mxu0 0.0
      %1947 = vmatpush1.msra.mxu0 0.0
      %1948 = vmatprep.subr.mxu0 0.0
      %1949 = vmatpush1.msra.mxu0 0.0
      %1950 = vmatprep.subr.mxu0 0.0
      %1951 = vmatpush1.msra.mxu0 0.0
      %1952 = vmatprep.mubr.f32.mxu0 0.0
      %1953 = vmatmul.mubr.f32.gmra.mrb[0].mxu0 %v1886
      %v1954 = vpop.f32.mrb[0].mxu0
      %v1955 = vadd.f32 %v1883, %v1954
      %v1956 = vpop.f32.mrb[0].mxu0
      %1957 = vdwg.mxu0
      %v1958 = vmax.f32 %v1955, 0.0
      %v1959 = vld [vmem:[%s16] sm:$0xff]
      %v1960 = vld [vmem:[%s16 + $0x8] sm:$0xff]
      %v1961 = vld [vmem:[%s16 + $0x10] sm:$0xff]
      %v1962 = vld [vmem:[%s16 + $0x18] sm:$0xff]
      %v1963 = vld [vmem:[%s16 + $0x20] sm:$0xff]
      %v1964 = vld [vmem:[%s16 + $0x28] sm:$0xff]
      %v1965 = vld [vmem:[%s16 + $0x30] sm:$0xff]
      %v1966 = vld [vmem:[%s16 + $0x38] sm:$0xff]
      %v1967 = vld [vmem:[%s17] sm:$0x1]
      %v1969 = vlaneseq
      %v1970 = vshrl.u32 %v1969, 7
      %v1971 = vsub.s32 0, %v1970
      %v1972 = vrot.slane %v1967, %v1971
      %vm1974 = vcmask 523264
      %v1976 = vsel %vm1974, %v1958, 0
      %1978 = vmatprep.subr.mxu0 0.0
      %1979 = vmatpush1.msra.mxu0 %v1959
      %1980 = vmatprep.subr.mxu0 0.0
      %1981 = vmatpush1.msra.mxu0 %v1960
      %1982 = vmatprep.subr.mxu0 0.0
      %1983 = vmatpush1.msra.mxu0 %v1961
      %1984 = vmatprep.subr.mxu0 0.0
      %1985 = vmatpush1.msra.mxu0 %v1962
      %1986 = vmatprep.subr.mxu0 0.0
      %1987 = vmatpush1.msra.mxu0 %v1963
      %1988 = vmatprep.subr.mxu0 0.0
      %1989 = vmatpush1.msra.mxu0 %v1964
      %1990 = vmatprep.subr.mxu0 0.0
      %1991 = vmatpush1.msra.mxu0 %v1965
      %1992 = vmatprep.subr.mxu0 0.0
      %1993 = vmatpush1.msra.mxu0 %v1966
      %1994 = vmatprep.subr.mxu0 0.0
      %1995 = vmatpush1.msra.mxu0 0.0
      %1996 = vmatprep.subr.mxu0 0.0
      %1997 = vmatpush1.msra.mxu0 0.0
      %1998 = vmatprep.subr.mxu0 0.0
      %1999 = vmatpush1.msra.mxu0 0.0
      %2000 = vmatprep.subr.mxu0 0.0
      %2001 = vmatpush1.msra.mxu0 0.0
      %2002 = vmatprep.subr.mxu0 0.0
      %2003 = vmatpush1.msra.mxu0 0.0
      %2004 = vmatprep.subr.mxu0 0.0
      %2005 = vmatpush1.msra.mxu0 0.0
      %2006 = vmatprep.subr.mxu0 0.0
      %2007 = vmatpush1.msra.mxu0 0.0
      %2008 = vmatprep.subr.mxu0 0.0
      %2009 = vmatpush1.msra.mxu0 0.0
      %2010 = vmatprep.subr.mxu0 0.0
      %2011 = vmatpush1.msra.mxu0 0.0
      %2012 = vmatprep.subr.mxu0 0.0
      %2013 = vmatpush1.msra.mxu0 0.0
      %2014 = vmatprep.subr.mxu0 0.0
      %2015 = vmatpush1.msra.mxu0 0.0
      %2016 = vmatprep.subr.mxu0 0.0
      %2017 = vmatpush1.msra.mxu0 0.0
      %2018 = vmatprep.subr.mxu0 0.0
      %2019 = vmatpush1.msra.mxu0 0.0
      %2020 = vmatprep.subr.mxu0 0.0
      %2021 = vmatpush1.msra.mxu0 0.0
      %2022 = vmatprep.subr.mxu0 0.0
      %2023 = vmatpush1.msra.mxu0 0.0
      %2024 = vmatprep.subr.mxu0 0.0
      %2025 = vmatpush1.msra.mxu0 0.0
      %2026 = vmatprep.subr.mxu0 0.0
      %2027 = vmatpush1.msra.mxu0 0.0
      %2028 = vmatprep.subr.mxu0 0.0
      %2029 = vmatpush1.msra.mxu0 0.0
      %2030 = vmatprep.subr.mxu0 0.0
      %2031 = vmatpush1.msra.mxu0 0.0
      %2032 = vmatprep.subr.mxu0 0.0
      %2033 = vmatpush1.msra.mxu0 0.0
      %2034 = vmatprep.subr.mxu0 0.0
      %2035 = vmatpush1.msra.mxu0 0.0
      %2036 = vmatprep.subr.mxu0 0.0
      %2037 = vmatpush1.msra.mxu0 0.0
      %2038 = vmatprep.subr.mxu0 0.0
      %2039 = vmatpush1.msra.mxu0 0.0
      %2040 = vmatprep.subr.mxu0 0.0
      %2041 = vmatpush1.msra.mxu0 0.0
      %2042 = vmatprep.mubr.f32.mxu0 0.0
      %2043 = vmatmul.mubr.f32.gmra.mrb[0].mxu0 %v1976
      %v2044 = vpop.f32.mrb[0].mxu0
      %v2045 = vadd.f32 %v1972, %v2044
      %v2046 = vpop.f32.mrb[0].mxu0
      %2047 = vdwg.mxu0
      %v2048 = vadd.f32 %v1844, %v2045
      %2049 = vst.msk [vmem:[%s587] sm:$0xff] %vm591, %v2048
      %p2050 = scmp.lt.s32.totalorder %s29, 1
      %s2051 = scalar_select %p2050, %s29, 1
      %s2052 = smul.addr %s2051, 8
      %s2053 = scalar_lea.vmem %s18, %s2052
      // Predicated region
      $region93: #{transformer_forward.7} parent=91 // pred_check
        %p2054 = pneg %p435
      $region94: #{transformer_forward.7} parent=91 // pred_check_branch
        %2056 = sbr.rel (%p2054) target = $region96
      $region95: #{transformer_forward.7} parent=91 // pred_region
        _
      $region96: #{transformer_forward.7} parent=91 // pred_fallthru
        _
    $region92: #{transformer_forward.7} parent=5 // pred_fallthru
      _
    %p2057 = scmp.le.s32.totalorder 2, %s24
    // Predicated region
    $region97: #{transformer_forward.7} parent=5 // pred_check
      %p2058 = pneg %p2057
    $region98: #{transformer_forward.7} parent=5 // pred_check_branch
      %2060 = sbr.rel (%p2058) target = $region100
    $region99: #{transformer_forward.7} parent=5 // pred_region
      %s2061 = ssub.s32 %s24, 2
      // Predicated region
      $region101: #{transformer_forward.7} parent=99 // pred_check
        %p2062 = pneg %p441
      $region102: #{transformer_forward.7} parent=99 // pred_check_branch
        %2064 = sbr.rel (%p2062) target = $region104
      $region103: #{transformer_forward.7} parent=99 // pred_region
        %p2065 = scmp.lt.s32.totalorder %s30, 1
        %s2066 = scalar_select %p2065, %s30, 1
        %s2067 = smul.addr %s2066, 8
        %s2068 = scalar_lea.vmem %s18, %s2067
      $region104: #{transformer_forward.7} parent=99 // pred_fallthru
        _
    $region100: #{transformer_forward.7} parent=5 // pred_fallthru
      _
  $region6: #{transformer_forward.7} parent=0 // loop_footer
    %s28 = sadd.s32 1, %s24
  $region7: #{transformer_forward.7} parent=0 // loop_footer_branch
    %23 = sbr.rel target = $region3
  $region8: #{transformer_forward.7} parent=0 // loop_exit
    _

// kernel: transformer_forward.11
$region0: #{transformer_forward.11}
  #allocation0 [shape = 'u32[]', space=smem, size = 0x4, offset = 0x4, fixed_abs, tag = 'smem constant byte address 0x4 - core index']
  #allocation1 [shape = 'u32[144,128]{1,0:T(1,128)}', space=vmem, size = 0x12000, scoped, tag = 'internal scratch']
  %s0 = inlined_call_operand.vmem [shape: f32[2,8,32], index: 0, kind: input, shape index: {}]
  %s1 = inlined_call_operand.vmem [shape: f32[2,8,32], index: 1, kind: input, shape index: {}]
  %s2 = inlined_call_operand.vmem [shape: f32[2,1,8], index: 2, kind: input, shape index: {}]
  %s3 = inlined_call_operand.vmem [shape: f32[1,32], index: 3, kind: input, shape index: {}]
  %s4 = inlined_call_operand.vmem [shape: f32[1,32], index: 4, kind: input, shape index: {}]
  %s5 = inlined_call_operand.vmem [shape: f32[32,96], index: 5, kind: input, shape index: {}]
  %s6 = inlined_call_operand.vmem [shape: f32[1,96], index: 6, kind: input, shape index: {}]
  %s7 = inlined_call_operand.vmem [shape: f32[32,32], index: 7, kind: input, shape index: {}]
  %s8 = inlined_call_operand.vmem [shape: f32[1,32], index: 8, kind: input, shape index: {}]
  %s9 = inlined_call_operand.vmem [shape: f32[1,32], index: 9, kind: input, shape index: {}]
  %s10 = inlined_call_operand.vmem [shape: f32[1,32], index: 10, kind: input, shape index: {}]
  %s11 = inlined_call_operand.vmem [shape: f32[32,32], index: 11, kind: input, shape index: {}]
  %s12 = inlined_call_operand.vmem [shape: f32[1,32], index: 12, kind: input, shape index: {}]
  %s13 = inlined_call_operand.vmem [shape: f32[32,64], index: 13, kind: input, shape index: {}]
  %s14 = inlined_call_operand.vmem [shape: f32[1,64], index: 14, kind: input, shape index: {}]
  %s15 = inlined_call_operand.vmem [shape: f32[32,32], index: 15, kind: input, shape index: {}]
  %s16 = inlined_call_operand.vmem [shape: f32[1,32], index: 16, kind: input, shape index: {}]
  %s17 = inlined_call_operand.vmem [shape: f32[1,32], index: 17, kind: input, shape index: {}]
  %s18 = inlined_call_operand.vmem [shape: f32[1,32], index: 18, kind: input, shape index: {}]
  %s19 = inlined_call_operand.vmem [shape: f32[32,64], index: 19, kind: input, shape index: {}]
  %s20 = inlined_call_operand.vmem [shape: f32[1,64], index: 20, kind: input, shape index: {}]
  %s21 = inlined_call_operand.vmem [shape: f32[64,32], index: 21, kind: input, shape index: {}]
  %s22 = inlined_call_operand.vmem [shape: f32[1,32], index: 22, kind: input, shape index: {}]
  %s23 = inlined_call_operand.vmem [shape: f32[2,8,32], index: 23, kind: output, shape index: {}]
  %s24 = sld [smem:[#allocation0]]
  $region125: #{transformer_forward.11} parent=0
    _
  %s26 = ssub.s32 1, %s24
  %s27 = scalar_select 0, %s26, %s24
  loop: start=0, step=1, limit=4
  $region2: #{transformer_forward.11} parent=0 // loop_pre_header
    _
  $region3: #{transformer_forward.11} parent=0 // loop_header
    %s29 = sphi 0, %s33
    %p30 = scmp.ge.s32.totalorder %s29, 4
    %s39 = sphi 0, %s41
    %s42 = sphi 0, %s39
    %s43 = sphi 0, %s42
    %s59 = sphi 0, %s43
    %s65 = sphi 0, %s67
    %s68 = sphi 0, %s65
    %s69 = sphi 0, %s68
    %s85 = sphi 0, %s69
    %s91 = sphi 0, %s93
    %s94 = sphi 0, %s91
    %s95 = sphi 0, %s94
    %s111 = sphi 0, %s95
    %s115 = sphi 0, %s115
    %s117 = sphi 0, %s115
    %s118 = sphi 0, %s117
    %s132 = sphi 0, %s118
    %s136 = sphi 0, %s136
    %s138 = sphi 0, %s136
    %s139 = sphi 0, %s138
    %s153 = sphi 0, %s139
    %s157 = sphi 0, %s157
    %s159 = sphi 0, %s157
    %s160 = sphi 0, %s159
    %s174 = sphi 0, %s160
    %s178 = sphi 0, %s178
    %s180 = sphi 0, %s178
    %s181 = sphi 0, %s180
    %s195 = sphi 0, %s181
    %s199 = sphi 0, %s199
    %s201 = sphi 0, %s199
    %s202 = sphi 0, %s201
    %s216 = sphi 0, %s202
    %s220 = sphi 0, %s220
    %s222 = sphi 0, %s220
    %s223 = sphi 0, %s222
    %s237 = sphi 0, %s223
    %s241 = sphi 0, %s241
    %s243 = sphi 0, %s241
    %s244 = sphi 0, %s243
    %s258 = sphi 0, %s244
    %s262 = sphi 0, %s262
    %s264 = sphi 0, %s262
    %s265 = sphi 0, %s264
    %s279 = sphi 0, %s265
    %s283 = sphi 0, %s283
    %s285 = sphi 0, %s283
    %s286 = sphi 0, %s285
    %s300 = sphi 0, %s286
    %s304 = sphi 0, %s304
    %s306 = sphi 0, %s304
    %s307 = sphi 0, %s306
    %s321 = sphi 0, %s307
    %s325 = sphi 0, %s325
    %s327 = sphi 0, %s325
    %s328 = sphi 0, %s327
    %s342 = sphi 0, %s328
    %s346 = sphi 0, %s346
    %s348 = sphi 0, %s346
    %s349 = sphi 0, %s348
    %s363 = sphi 0, %s349
    %s367 = sphi 0, %s367
    %s369 = sphi 0, %s367
    %s370 = sphi 0, %s369
    %s384 = sphi 0, %s370
    %s388 = sphi 0, %s388
    %s390 = sphi 0, %s388
    %s391 = sphi 0, %s390
    %s405 = sphi 0, %s391
    %s409 = sphi 0, %s409
    %s411 = sphi 0, %s409
    %s412 = sphi 0, %s411
    %s426 = sphi 0, %s412
    %s430 = sphi 0, %s430
    %s432 = sphi 0, %s430
    %s433 = sphi 0, %s432
    %s447 = sphi 0, %s433
    %s451 = sphi 0, %s451
    %s453 = sphi 0, %s451
    %s454 = sphi 0, %s453
    %s468 = sphi 0, %s454
    %s472 = sphi 0, %s472
    %s474 = sphi 0, %s472
    %s475 = sphi 0, %s474
    %s489 = sphi 0, %s475
    %s493 = sphi 0, %s493
    %s495 = sphi 0, %s493
    %s496 = sphi 0, %s495
    %s510 = sphi 0, %s496
    %s514 = sphi 0, %s514
    %s516 = sphi 0, %s514
    %s517 = sphi 0, %s516
    %s531 = sphi 0, %s517
    %s537 = sphi 0, %s539
    %s540 = sphi 0, %s537
    %s541 = sphi 0, %s540
    %s557 = sphi 0, %s541
  $region4: #{transformer_forward.11} parent=0 // loop_header_branch
    %32 = sbr.rel (%p30) target = $region8
  $region5: #{transformer_forward.11} parent=0 // loop_body
    %s34 = ssub.s32 %s29, 1
    %s35 = ssub.s32 %s29, 2
    %s36 = sadd.s32 %s29, 1
    %s37 = ssub.s32 %s29, %s36
    %p38 = scmp.eq.s32.totalorder %s37, 0
    %s40 = sadd.s32 %s39, 1
    %s41 = scalar_select %p38, %s39, %s40
    %p44 = pneg %p38
    %p45 = scmp.eq.s32.totalorder %s29, 1
    %p46 = por %p44, %p45
    %p47 = scmp.ne.s32.totalorder %s39, %s42
    %p48 = scmp.eq.s32.totalorder %s29, 0
    %p49 = por %p47, %p48
    %p50 = scmp.ne.s32.totalorder %s39, %s42
    %p51 = scmp.eq.s32.totalorder %s34, 1
    %p52 = por %p50, %p51
    %p53 = scmp.ne.s32.totalorder %s42, %s43
    %p54 = scmp.eq.s32.totalorder %s34, 0
    %p55 = por %p53, %p54
    %p56 = scmp.ne.s32.totalorder %s42, %s43
    %p57 = scmp.eq.s32.totalorder %s35, 1
    %p58 = por %p56, %p57
    %p60 = scmp.ne.s32.totalorder %s43, %s59
    %p61 = scmp.eq.s32.totalorder %s35, 0
    %p62 = por %p60, %p61
    %s63 = ssub.s32 %s29, %s36
    %p64 = scmp.eq.s32.totalorder %s63, 0
    %s66 = sadd.s32 %s65, 1
    %s67 = scalar_select %p64, %s65, %s66
    %p70 = pneg %p64
    %p71 = scmp.eq.s32.totalorder %s29, 1
    %p72 = por %p70, %p71
    %p73 = scmp.ne.s32.totalorder %s65, %s68
    %p74 = scmp.eq.s32.totalorder %s29, 0
    %p75 = por %p73, %p74
    %p76 = scmp.ne.s32.totalorder %s65, %s68
    %p77 = scmp.eq.s32.totalorder %s34, 1
    %p78 = por %p76, %p77
    %p79 = scmp.ne.s32.totalorder %s68, %s69
    %p80 = scmp.eq.s32.totalorder %s34, 0
    %p81 = por %p79, %p80
    %p82 = scmp.ne.s32.totalorder %s68, %s69
    %p83 = scmp.eq.s32.totalorder %s35, 1
    %p84 = por %p82, %p83
    %p86 = scmp.ne.s32.totalorder %s69, %s85
    %p87 = scmp.eq.s32.totalorder %s35, 0
    %p88 = por %p86, %p87
    %s89 = ssub.s32 %s29, %s36
    %p90 = scmp.eq.s32.totalorder %s89, 0
    %s92 = sadd.s32 %s91, 1
    %s93 = scalar_select %p90, %s91, %s92
    %p96 = pneg %p90
    %p97 = scmp.eq.s32.totalorder %s29, 1
    %p98 = por %p96, %p97
    %p99 = scmp.ne.s32.totalorder %s91, %s94
    %p100 = scmp.eq.s32.totalorder %s29, 0
    %p101 = por %p99, %p100
    %p102 = scmp.ne.s32.totalorder %s91, %s94
    %p103 = scmp.eq.s32.totalorder %s34, 1
    %p104 = por %p102, %p103
    %p105 = scmp.ne.s32.totalorder %s94, %s95
    %p106 = scmp.eq.s32.totalorder %s34, 0
    %p107 = por %p105, %p106
    %p108 = scmp.ne.s32.totalorder %s94, %s95
    %p109 = scmp.eq.s32.totalorder %s35, 1
    %p110 = por %p108, %p109
    %p112 = scmp.ne.s32.totalorder %s95, %s111
    %p113 = scmp.eq.s32.totalorder %s35, 0
    %p114 = por %p112, %p113
    %s116 = sadd.s32 %s115, 1
    %p119 = scmp.eq.s32.totalorder %s29, 1
    %p120 = scmp.ne.s32.totalorder %s115, %s117
    %p121 = scmp.eq.s32.totalorder %s29, 0
    %p122 = por %p120, %p121
    %p123 = scmp.ne.s32.totalorder %s115, %s117
    %p124 = scmp.eq.s32.totalorder %s34, 1
    %p125 = por %p123, %p124
    %p126 = scmp.ne.s32.totalorder %s117, %s118
    %p127 = scmp.eq.s32.totalorder %s34, 0
    %p128 = por %p126, %p127
    %p129 = scmp.ne.s32.totalorder %s117, %s118
    %p130 = scmp.eq.s32.totalorder %s35, 1
    %p131 = por %p129, %p130
    %p133 = scmp.ne.s32.totalorder %s118, %s132
    %p134 = scmp.eq.s32.totalorder %s35, 0
    %p135 = por %p133, %p134
    %s137 = sadd.s32 %s136, 1
    %p140 = scmp.eq.s32.totalorder %s29, 1
    %p141 = scmp.ne.s32.totalorder %s136, %s138
    %p142 = scmp.eq.s32.totalorder %s29, 0
    %p143 = por %p141, %p142
    %p144 = scmp.ne.s32.totalorder %s136, %s138
    %p145 = scmp.eq.s32.totalorder %s34, 1
    %p146 = por %p144, %p145
    %p147 = scmp.ne.s32.totalorder %s138, %s139
    %p148 = scmp.eq.s32.totalorder %s34, 0
    %p149 = por %p147, %p148
    %p150 = scmp.ne.s32.totalorder %s138, %s139
    %p151 = scmp.eq.s32.totalorder %s35, 1
    %p152 = por %p150, %p151
    %p154 = scmp.ne.s32.totalorder %s139, %s153
    %p155 = scmp.eq.s32.totalorder %s35, 0
    %p156 = por %p154, %p155
    %s158 = sadd.s32 %s157, 1
    %p161 = scmp.eq.s32.totalorder %s29, 1
    %p162 = scmp.ne.s32.totalorder %s157, %s159
    %p163 = scmp.eq.s32.totalorder %s29, 0
    %p164 = por %p162, %p163
    %p165 = scmp.ne.s32.totalorder %s157, %s159
    %p166 = scmp.eq.s32.totalorder %s34, 1
    %p167 = por %p165, %p166
    %p168 = scmp.ne.s32.totalorder %s159, %s160
    %p169 = scmp.eq.s32.totalorder %s34, 0
    %p170 = por %p168, %p169
    %p171 = scmp.ne.s32.totalorder %s159, %s160
    %p172 = scmp.eq.s32.totalorder %s35, 1
    %p173 = por %p171, %p172
    %p175 = scmp.ne.s32.totalorder %s160, %s174
    %p176 = scmp.eq.s32.totalorder %s35, 0
    %p177 = por %p175, %p176
    %s179 = sadd.s32 %s178, 1
    %p182 = scmp.eq.s32.totalorder %s29, 1
    %p183 = scmp.ne.s32.totalorder %s178, %s180
    %p184 = scmp.eq.s32.totalorder %s29, 0
    %p185 = por %p183, %p184
    %p186 = scmp.ne.s32.totalorder %s178, %s180
    %p187 = scmp.eq.s32.totalorder %s34, 1
    %p188 = por %p186, %p187
    %p189 = scmp.ne.s32.totalorder %s180, %s181
    %p190 = scmp.eq.s32.totalorder %s34, 0
    %p191 = por %p189, %p190
    %p192 = scmp.ne.s32.totalorder %s180, %s181
    %p193 = scmp.eq.s32.totalorder %s35, 1
    %p194 = por %p192, %p193
    %p196 = scmp.ne.s32.totalorder %s181, %s195
    %p197 = scmp.eq.s32.totalorder %s35, 0
    %p198 = por %p196, %p197
    %s200 = sadd.s32 %s199, 1
    %p203 = scmp.eq.s32.totalorder %s29, 1
    %p204 = scmp.ne.s32.totalorder %s199, %s201
    %p205 = scmp.eq.s32.totalorder %s29, 0
    %p206 = por %p204, %p205
    %p207 = scmp.ne.s32.totalorder %s199, %s201
    %p208 = scmp.eq.s32.totalorder %s34, 1
    %p209 = por %p207, %p208
    %p210 = scmp.ne.s32.totalorder %s201, %s202
    %p211 = scmp.eq.s32.totalorder %s34, 0
    %p212 = por %p210, %p211
    %p213 = scmp.ne.s32.totalorder %s201, %s202
    %p214 = scmp.eq.s32.totalorder %s35, 1
    %p215 = por %p213, %p214
    %p217 = scmp.ne.s32.totalorder %s202, %s216
    %p218 = scmp.eq.s32.totalorder %s35, 0
    %p219 = por %p217, %p218
    %s221 = sadd.s32 %s220, 1
    %p224 = scmp.eq.s32.totalorder %s29, 1
    %p225 = scmp.ne.s32.totalorder %s220, %s222
    %p226 = scmp.eq.s32.totalorder %s29, 0
    %p227 = por %p225, %p226
    %p228 = scmp.ne.s32.totalorder %s220, %s222
    %p229 = scmp.eq.s32.totalorder %s34, 1
    %p230 = por %p228, %p229
    %p231 = scmp.ne.s32.totalorder %s222, %s223
    %p232 = scmp.eq.s32.totalorder %s34, 0
    %p233 = por %p231, %p232
    %p234 = scmp.ne.s32.totalorder %s222, %s223
    %p235 = scmp.eq.s32.totalorder %s35, 1
    %p236 = por %p234, %p235
    %p238 = scmp.ne.s32.totalorder %s223, %s237
    %p239 = scmp.eq.s32.totalorder %s35, 0
    %p240 = por %p238, %p239
    %s242 = sadd.s32 %s241, 1
    %p245 = scmp.eq.s32.totalorder %s29, 1
    %p246 = scmp.ne.s32.totalorder %s241, %s243
    %p247 = scmp.eq.s32.totalorder %s29, 0
    %p248 = por %p246, %p247
    %p249 = scmp.ne.s32.totalorder %s241, %s243
    %p250 = scmp.eq.s32.totalorder %s34, 1
    %p251 = por %p249, %p250
    %p252 = scmp.ne.s32.totalorder %s243, %s244
    %p253 = scmp.eq.s32.totalorder %s34, 0
    %p254 = por %p252, %p253
    %p255 = scmp.ne.s32.totalorder %s243, %s244
    %p256 = scmp.eq.s32.totalorder %s35, 1
    %p257 = por %p255, %p256
    %p259 = scmp.ne.s32.totalorder %s244, %s258
    %p260 = scmp.eq.s32.totalorder %s35, 0
    %p261 = por %p259, %p260
    %s263 = sadd.s32 %s262, 1
    %p266 = scmp.eq.s32.totalorder %s29, 1
    %p267 = scmp.ne.s32.totalorder %s262, %s264
    %p268 = scmp.eq.s32.totalorder %s29, 0
    %p269 = por %p267, %p268
    %p270 = scmp.ne.s32.totalorder %s262, %s264
    %p271 = scmp.eq.s32.totalorder %s34, 1
    %p272 = por %p270, %p271
    %p273 = scmp.ne.s32.totalorder %s264, %s265
    %p274 = scmp.eq.s32.totalorder %s34, 0
    %p275 = por %p273, %p274
    %p276 = scmp.ne.s32.totalorder %s264, %s265
    %p277 = scmp.eq.s32.totalorder %s35, 1
    %p278 = por %p276, %p277
    %p280 = scmp.ne.s32.totalorder %s265, %s279
    %p281 = scmp.eq.s32.totalorder %s35, 0
    %p282 = por %p280, %p281
    %s284 = sadd.s32 %s283, 1
    %p287 = scmp.eq.s32.totalorder %s29, 1
    %p288 = scmp.ne.s32.totalorder %s283, %s285
    %p289 = scmp.eq.s32.totalorder %s29, 0
    %p290 = por %p288, %p289
    %p291 = scmp.ne.s32.totalorder %s283, %s285
    %p292 = scmp.eq.s32.totalorder %s34, 1
    %p293 = por %p291, %p292
    %p294 = scmp.ne.s32.totalorder %s285, %s286
    %p295 = scmp.eq.s32.totalorder %s34, 0
    %p296 = por %p294, %p295
    %p297 = scmp.ne.s32.totalorder %s285, %s286
    %p298 = scmp.eq.s32.totalorder %s35, 1
    %p299 = por %p297, %p298
    %p301 = scmp.ne.s32.totalorder %s286, %s300
    %p302 = scmp.eq.s32.totalorder %s35, 0
    %p303 = por %p301, %p302
    %s305 = sadd.s32 %s304, 1
    %p308 = scmp.eq.s32.totalorder %s29, 1
    %p309 = scmp.ne.s32.totalorder %s304, %s306
    %p310 = scmp.eq.s32.totalorder %s29, 0
    %p311 = por %p309, %p310
    %p312 = scmp.ne.s32.totalorder %s304, %s306
    %p313 = scmp.eq.s32.totalorder %s34, 1
    %p314 = por %p312, %p313
    %p315 = scmp.ne.s32.totalorder %s306, %s307
    %p316 = scmp.eq.s32.totalorder %s34, 0
    %p317 = por %p315, %p316
    %p318 = scmp.ne.s32.totalorder %s306, %s307
    %p319 = scmp.eq.s32.totalorder %s35, 1
    %p320 = por %p318, %p319
    %p322 = scmp.ne.s32.totalorder %s307, %s321
    %p323 = scmp.eq.s32.totalorder %s35, 0
    %p324 = por %p322, %p323
    %s326 = sadd.s32 %s325, 1
    %p329 = scmp.eq.s32.totalorder %s29, 1
    %p330 = scmp.ne.s32.totalorder %s325, %s327
    %p331 = scmp.eq.s32.totalorder %s29, 0
    %p332 = por %p330, %p331
    %p333 = scmp.ne.s32.totalorder %s325, %s327
    %p334 = scmp.eq.s32.totalorder %s34, 1
    %p335 = por %p333, %p334
    %p336 = scmp.ne.s32.totalorder %s327, %s328
    %p337 = scmp.eq.s32.totalorder %s34, 0
    %p338 = por %p336, %p337
    %p339 = scmp.ne.s32.totalorder %s327, %s328
    %p340 = scmp.eq.s32.totalorder %s35, 1
    %p341 = por %p339, %p340
    %p343 = scmp.ne.s32.totalorder %s328, %s342
    %p344 = scmp.eq.s32.totalorder %s35, 0
    %p345 = por %p343, %p344
    %s347 = sadd.s32 %s346, 1
    %p350 = scmp.eq.s32.totalorder %s29, 1
    %p351 = scmp.ne.s32.totalorder %s346, %s348
    %p352 = scmp.eq.s32.totalorder %s29, 0
    %p353 = por %p351, %p352
    %p354 = scmp.ne.s32.totalorder %s346, %s348
    %p355 = scmp.eq.s32.totalorder %s34, 1
    %p356 = por %p354, %p355
    %p357 = scmp.ne.s32.totalorder %s348, %s349
    %p358 = scmp.eq.s32.totalorder %s34, 0
    %p359 = por %p357, %p358
    %p360 = scmp.ne.s32.totalorder %s348, %s349
    %p361 = scmp.eq.s32.totalorder %s35, 1
    %p362 = por %p360, %p361
    %p364 = scmp.ne.s32.totalorder %s349, %s363
    %p365 = scmp.eq.s32.totalorder %s35, 0
    %p366 = por %p364, %p365
    %s368 = sadd.s32 %s367, 1
    %p371 = scmp.eq.s32.totalorder %s29, 1
    %p372 = scmp.ne.s32.totalorder %s367, %s369
    %p373 = scmp.eq.s32.totalorder %s29, 0
    %p374 = por %p372, %p373
    %p375 = scmp.ne.s32.totalorder %s367, %s369
    %p376 = scmp.eq.s32.totalorder %s34, 1
    %p377 = por %p375, %p376
    %p378 = scmp.ne.s32.totalorder %s369, %s370
    %p379 = scmp.eq.s32.totalorder %s34, 0
    %p380 = por %p378, %p379
    %p381 = scmp.ne.s32.totalorder %s369, %s370
    %p382 = scmp.eq.s32.totalorder %s35, 1
    %p383 = por %p381, %p382
    %p385 = scmp.ne.s32.totalorder %s370, %s384
    %p386 = scmp.eq.s32.totalorder %s35, 0
    %p387 = por %p385, %p386
    %s389 = sadd.s32 %s388, 1
    %p392 = scmp.eq.s32.totalorder %s29, 1
    %p393 = scmp.ne.s32.totalorder %s388, %s390
    %p394 = scmp.eq.s32.totalorder %s29, 0
    %p395 = por %p393, %p394
    %p396 = scmp.ne.s32.totalorder %s388, %s390
    %p397 = scmp.eq.s32.totalorder %s34, 1
    %p398 = por %p396, %p397
    %p399 = scmp.ne.s32.totalorder %s390, %s391
    %p400 = scmp.eq.s32.totalorder %s34, 0
    %p401 = por %p399, %p400
    %p402 = scmp.ne.s32.totalorder %s390, %s391
    %p403 = scmp.eq.s32.totalorder %s35, 1
    %p404 = por %p402, %p403
    %p406 = scmp.ne.s32.totalorder %s391, %s405
    %p407 = scmp.eq.s32.totalorder %s35, 0
    %p408 = por %p406, %p407
    %s410 = sadd.s32 %s409, 1
    %p413 = scmp.eq.s32.totalorder %s29, 1
    %p414 = scmp.ne.s32.totalorder %s409, %s411
    %p415 = scmp.eq.s32.totalorder %s29, 0
    %p416 = por %p414, %p415
    %p417 = scmp.ne.s32.totalorder %s409, %s411
    %p418 = scmp.eq.s32.totalorder %s34, 1
    %p419 = por %p417, %p418
    %p420 = scmp.ne.s32.totalorder %s411, %s412
    %p421 = scmp.eq.s32.totalorder %s34, 0
    %p422 = por %p420, %p421
    %p423 = scmp.ne.s32.totalorder %s411, %s412
    %p424 = scmp.eq.s32.totalorder %s35, 1
    %p425 = por %p423, %p424
    %p427 = scmp.ne.s32.totalorder %s412, %s426
    %p428 = scmp.eq.s32.totalorder %s35, 0
    %p429 = por %p427, %p428
    %s431 = sadd.s32 %s430, 1
    %p434 = scmp.eq.s32.totalorder %s29, 1
    %p435 = scmp.ne.s32.totalorder %s430, %s432
    %p436 = scmp.eq.s32.totalorder %s29, 0
    %p437 = por %p435, %p436
    %p438 = scmp.ne.s32.totalorder %s430, %s432
    %p439 = scmp.eq.s32.totalorder %s34, 1
    %p440 = por %p438, %p439
    %p441 = scmp.ne.s32.totalorder %s432, %s433
    %p442 = scmp.eq.s32.totalorder %s34, 0
    %p443 = por %p441, %p442
    %p444 = scmp.ne.s32.totalorder %s432, %s433
    %p445 = scmp.eq.s32.totalorder %s35, 1
    %p446 = por %p444, %p445
    %p448 = scmp.ne.s32.totalorder %s433, %s447
    %p449 = scmp.eq.s32.totalorder %s35, 0
    %p450 = por %p448, %p449
    %s452 = sadd.s32 %s451, 1
    %p455 = scmp.eq.s32.totalorder %s29, 1
    %p456 = scmp.ne.s32.totalorder %s451, %s453
    %p457 = scmp.eq.s32.totalorder %s29, 0
    %p458 = por %p456, %p457
    %p459 = scmp.ne.s32.totalorder %s451, %s453
    %p460 = scmp.eq.s32.totalorder %s34, 1
    %p461 = por %p459, %p460
    %p462 = scmp.ne.s32.totalorder %s453, %s454
    %p463 = scmp.eq.s32.totalorder %s34, 0
    %p464 = por %p462, %p463
    %p465 = scmp.ne.s32.totalorder %s453, %s454
    %p466 = scmp.eq.s32.totalorder %s35, 1
    %p467 = por %p465, %p466
    %p469 = scmp.ne.s32.totalorder %s454, %s468
    %p470 = scmp.eq.s32.totalorder %s35, 0
    %p471 = por %p469, %p470
    %s473 = sadd.s32 %s472, 1
    %p476 = scmp.eq.s32.totalorder %s29, 1
    %p477 = scmp.ne.s32.totalorder %s472, %s474
    %p478 = scmp.eq.s32.totalorder %s29, 0
    %p479 = por %p477, %p478
    %p480 = scmp.ne.s32.totalorder %s472, %s474
    %p481 = scmp.eq.s32.totalorder %s34, 1
    %p482 = por %p480, %p481
    %p483 = scmp.ne.s32.totalorder %s474, %s475
    %p484 = scmp.eq.s32.totalorder %s34, 0
    %p485 = por %p483, %p484
    %p486 = scmp.ne.s32.totalorder %s474, %s475
    %p487 = scmp.eq.s32.totalorder %s35, 1
    %p488 = por %p486, %p487
    %p490 = scmp.ne.s32.totalorder %s475, %s489
    %p491 = scmp.eq.s32.totalorder %s35, 0
    %p492 = por %p490, %p491
    %s494 = sadd.s32 %s493, 1
    %p497 = scmp.eq.s32.totalorder %s29, 1
    %p498 = scmp.ne.s32.totalorder %s493, %s495
    %p499 = scmp.eq.s32.totalorder %s29, 0
    %p500 = por %p498, %p499
    %p501 = scmp.ne.s32.totalorder %s493, %s495
    %p502 = scmp.eq.s32.totalorder %s34, 1
    %p503 = por %p501, %p502
    %p504 = scmp.ne.s32.totalorder %s495, %s496
    %p505 = scmp.eq.s32.totalorder %s34, 0
    %p506 = por %p504, %p505
    %p507 = scmp.ne.s32.totalorder %s495, %s496
    %p508 = scmp.eq.s32.totalorder %s35, 1
    %p509 = por %p507, %p508
    %p511 = scmp.ne.s32.totalorder %s496, %s510
    %p512 = scmp.eq.s32.totalorder %s35, 0
    %p513 = por %p511, %p512
    %s515 = sadd.s32 %s514, 1
    %p518 = scmp.eq.s32.totalorder %s29, 1
    %p519 = scmp.ne.s32.totalorder %s514, %s516
    %p520 = scmp.eq.s32.totalorder %s29, 0
    %p521 = por %p519, %p520
    %p522 = scmp.ne.s32.totalorder %s514, %s516
    %p523 = scmp.eq.s32.totalorder %s34, 1
    %p524 = por %p522, %p523
    %p525 = scmp.ne.s32.totalorder %s516, %s517
    %p526 = scmp.eq.s32.totalorder %s34, 0
    %p527 = por %p525, %p526
    %p528 = scmp.ne.s32.totalorder %s516, %s517
    %p529 = scmp.eq.s32.totalorder %s35, 1
    %p530 = por %p528, %p529
    %p532 = scmp.ne.s32.totalorder %s517, %s531
    %p533 = scmp.eq.s32.totalorder %s35, 0
    %p534 = por %p532, %p533
    %s535 = ssub.s32 %s29, %s36
    %p536 = scmp.eq.s32.totalorder %s535, 0
    %s538 = sadd.s32 %s537, 1
    %s539 = scalar_select %p536, %s537, %s538
    %p542 = pneg %p536
    %p543 = scmp.eq.s32.totalorder %s29, 1
    %p544 = por %p542, %p543
    %p545 = scmp.ne.s32.totalorder %s537, %s540
    %p546 = scmp.eq.s32.totalorder %s29, 0
    %p547 = por %p545, %p546
    %p548 = scmp.ne.s32.totalorder %s537, %s540
    %p549 = scmp.eq.s32.totalorder %s34, 1
    %p550 = por %p548, %p549
    %p551 = scmp.ne.s32.totalorder %s540, %s541
    %p552 = scmp.eq.s32.totalorder %s34, 0
    %p553 = por %p551, %p552
    %p554 = scmp.ne.s32.totalorder %s540, %s541
    %p555 = scmp.eq.s32.totalorder %s35, 1
    %p556 = por %p554, %p555
    %p558 = scmp.ne.s32.totalorder %s541, %s557
    %p559 = scmp.eq.s32.totalorder %s35, 0
    %p560 = por %p558, %p559
    %p561 = scmp.le.s32.totalorder 1, %s29
    %p562 = scmp.lt.s32.totalorder %s29, 3
    %p563 = pnand %p561, %p562
    %p564 = pneg %p563
    // Predicated region
    $region9: #{transformer_forward.11} parent=5 // pred_check
      _
    $region10: #{transformer_forward.11} parent=5 // pred_check_branch
      %566 = sbr.rel (%p563) target = $region12
    $region11: #{transformer_forward.11} parent=5 // pred_region
      %s567 = ssub.s32 %s29, 1
      // Predicated region
      $region13: #{transformer_forward.11} parent=11 // pred_check
        %p568 = pneg %p128
      $region14: #{transformer_forward.11} parent=11 // pred_check_branch
        %570 = sbr.rel (%p568) target = $region16
      $region15: #{transformer_forward.11} parent=11 // pred_region
        _
      $region16: #{transformer_forward.11} parent=11 // pred_fallthru
        _
      // Predicated region
      $region17: #{transformer_forward.11} parent=11 // pred_check
        %p571 = pneg %p149
      $region18: #{transformer_forward.11} parent=11 // pred_check_branch
        %573 = sbr.rel (%p571) target = $region20
      $region19: #{transformer_forward.11} parent=11 // pred_region
        _
      $region20: #{transformer_forward.11} parent=11 // pred_fallthru
        _
      // Predicated region
      $region21: #{transformer_forward.11} parent=11 // pred_check
        %p574 = pneg %p170
      $region22: #{transformer_forward.11} parent=11 // pred_check_branch
        %576 = sbr.rel (%p574) target = $region24
      $region23: #{transformer_forward.11} parent=11 // pred_region
        _
      $region24: #{transformer_forward.11} parent=11 // pred_fallthru
        _
      // Predicated region
      $region25: #{transformer_forward.11} parent=11 // pred_check
        %p577 = pneg %p191
      $region26: #{transformer_forward.11} parent=11 // pred_check_branch
        %579 = sbr.rel (%p577) target = $region28
      $region27: #{transformer_forward.11} parent=11 // pred_region
        _
      $region28: #{transformer_forward.11} parent=11 // pred_fallthru
        _
      // Predicated region
      $region29: #{transformer_forward.11} parent=11 // pred_check
        %p580 = pneg %p212
      $region30: #{transformer_forward.11} parent=11 // pred_check_branch
        %582 = sbr.rel (%p580) target = $region32
      $region31: #{transformer_forward.11} parent=11 // pred_region
        _
      $region32: #{transformer_forward.11} parent=11 // pred_fallthru
        _
      // Predicated region
      $region33: #{transformer_forward.11} parent=11 // pred_check
        %p583 = pneg %p233
      $region34: #{transformer_forward.11} parent=11 // pred_check_branch
        %585 = sbr.rel (%p583) target = $region36
      $region35: #{transformer_forward.11} parent=11 // pred_region
        _
      $region36: #{transformer_forward.11} parent=11 // pred_fallthru
        _
      // Predicated region
      $region37: #{transformer_forward.11} parent=11 // pred_check
        %p586 = pneg %p254
      $region38: #{transformer_forward.11} parent=11 // pred_check_branch
        %588 = sbr.rel (%p586) target = $region40
      $region39: #{transformer_forward.11} parent=11 // pred_region
        _
      $region40: #{transformer_forward.11} parent=11 // pred_fallthru
        _
      // Predicated region
      $region41: #{transformer_forward.11} parent=11 // pred_check
        %p589 = pneg %p275
      $region42: #{transformer_forward.11} parent=11 // pred_check_branch
        %591 = sbr.rel (%p589) target = $region44
      $region43: #{transformer_forward.11} parent=11 // pred_region
        _
      $region44: #{transformer_forward.11} parent=11 // pred_fallthru
        _
      // Predicated region
      $region45: #{transformer_forward.11} parent=11 // pred_check
        %p592 = pneg %p296
      $region46: #{transformer_forward.11} parent=11 // pred_check_branch
        %594 = sbr.rel (%p592) target = $region48
      $region47: #{transformer_forward.11} parent=11 // pred_region
        _
      $region48: #{transformer_forward.11} parent=11 // pred_fallthru
        _
      // Predicated region
      $region49: #{transformer_forward.11} parent=11 // pred_check
        %p595 = pneg %p317
      $region50: #{transformer_forward.11} parent=11 // pred_check_branch
        %597 = sbr.rel (%p595) target = $region52
      $region51: #{transformer_forward.11} parent=11 // pred_region
        _
      $region52: #{transformer_forward.11} parent=11 // pred_fallthru
        _
      // Predicated region
      $region53: #{transformer_forward.11} parent=11 // pred_check
        %p598 = pneg %p338
      $region54: #{transformer_forward.11} parent=11 // pred_check_branch
        %600 = sbr.rel (%p598) target = $region56
      $region55: #{transformer_forward.11} parent=11 // pred_region
        _
      $region56: #{transformer_forward.11} parent=11 // pred_fallthru
        _
      // Predicated region
      $region57: #{transformer_forward.11} parent=11 // pred_check
        %p601 = pneg %p359
      $region58: #{transformer_forward.11} parent=11 // pred_check_branch
        %603 = sbr.rel (%p601) target = $region60
      $region59: #{transformer_forward.11} parent=11 // pred_region
        _
      $region60: #{transformer_forward.11} parent=11 // pred_fallthru
        _
      // Predicated region
      $region61: #{transformer_forward.11} parent=11 // pred_check
        %p604 = pneg %p380
      $region62: #{transformer_forward.11} parent=11 // pred_check_branch
        %606 = sbr.rel (%p604) target = $region64
      $region63: #{transformer_forward.11} parent=11 // pred_region
        _
      $region64: #{transformer_forward.11} parent=11 // pred_fallthru
        _
      // Predicated region
      $region65: #{transformer_forward.11} parent=11 // pred_check
        %p607 = pneg %p401
      $region66: #{transformer_forward.11} parent=11 // pred_check_branch
        %609 = sbr.rel (%p607) target = $region68
      $region67: #{transformer_forward.11} parent=11 // pred_region
        _
      $region68: #{transformer_forward.11} parent=11 // pred_fallthru
        _
      // Predicated region
      $region69: #{transformer_forward.11} parent=11 // pred_check
        %p610 = pneg %p422
      $region70: #{transformer_forward.11} parent=11 // pred_check_branch
        %612 = sbr.rel (%p610) target = $region72
      $region71: #{transformer_forward.11} parent=11 // pred_region
        _
      $region72: #{transformer_forward.11} parent=11 // pred_fallthru
        _
      // Predicated region
      $region73: #{transformer_forward.11} parent=11 // pred_check
        %p613 = pneg %p443
      $region74: #{transformer_forward.11} parent=11 // pred_check_branch
        %615 = sbr.rel (%p613) target = $region76
      $region75: #{transformer_forward.11} parent=11 // pred_region
        _
      $region76: #{transformer_forward.11} parent=11 // pred_fallthru
        _
      // Predicated region
      $region77: #{transformer_forward.11} parent=11 // pred_check
        %p616 = pneg %p464
      $region78: #{transformer_forward.11} parent=11 // pred_check_branch
        %618 = sbr.rel (%p616) target = $region80
      $region79: #{transformer_forward.11} parent=11 // pred_region
        _
      $region80: #{transformer_forward.11} parent=11 // pred_fallthru
        _
      // Predicated region
      $region81: #{transformer_forward.11} parent=11 // pred_check
        %p619 = pneg %p485
      $region82: #{transformer_forward.11} parent=11 // pred_check_branch
        %621 = sbr.rel (%p619) target = $region84
      $region83: #{transformer_forward.11} parent=11 // pred_region
        _
      $region84: #{transformer_forward.11} parent=11 // pred_fallthru
        _
      // Predicated region
      $region85: #{transformer_forward.11} parent=11 // pred_check
        %p622 = pneg %p506
      $region86: #{transformer_forward.11} parent=11 // pred_check_branch
        %624 = sbr.rel (%p622) target = $region88
      $region87: #{transformer_forward.11} parent=11 // pred_region
        _
      $region88: #{transformer_forward.11} parent=11 // pred_fallthru
        _
      // Predicated region
      $region89: #{transformer_forward.11} parent=11 // pred_check
        %p625 = pneg %p527
      $region90: #{transformer_forward.11} parent=11 // pred_check_branch
        %627 = sbr.rel (%p625) target = $region92
      $region91: #{transformer_forward.11} parent=11 // pred_region
        _
      $region92: #{transformer_forward.11} parent=11 // pred_fallthru
        _
    $region12: #{transformer_forward.11} parent=5 // pred_fallthru
      _
    %p628 = scmp.lt.s32.totalorder %s29, 2
    // Predicated region
    $region93: #{transformer_forward.11} parent=5 // pred_check
      %p629 = pneg %p628
    $region94: #{transformer_forward.11} parent=5 // pred_check_branch
      %631 = sbr.rel (%p629) target = $region96
    $region95: #{transformer_forward.11} parent=5 // pred_region
      // Predicated region
      $region97: #{transformer_forward.11} parent=95 // pred_check
        %p632 = pneg %p49
      $region98: #{transformer_forward.11} parent=95 // pred_check_branch
        %634 = sbr.rel (%p632) target = $region100
      $region99: #{transformer_forward.11} parent=95 // pred_region
        %p635 = scmp.lt.s32.totalorder %s29, 1
        %s636 = scalar_select %p635, %s29, 1
        %s637 = smul.addr %s636, 8
        %s638 = scalar_lea.vmem %s0, %s637
      $region100: #{transformer_forward.11} parent=95 // pred_fallthru
        _
      // Predicated region
      $region101: #{transformer_forward.11} parent=95 // pred_check
        %p639 = pneg %p75
      $region102: #{transformer_forward.11} parent=95 // pred_check_branch
        %641 = sbr.rel (%p639) target = $region104
      $region103: #{transformer_forward.11} parent=95 // pred_region
        %p642 = scmp.lt.s32.totalorder %s29, 1
        %s643 = scalar_select %p642, %s29, 1
        %s644 = smul.addr %s643, 8
        %s645 = scalar_lea.vmem %s1, %s644
      $region104: #{transformer_forward.11} parent=95 // pred_fallthru
        _
      // Predicated region
      $region105: #{transformer_forward.11} parent=95 // pred_check
        %p646 = pneg %p101
      $region106: #{transformer_forward.11} parent=95 // pred_check_branch
        %648 = sbr.rel (%p646) target = $region108
      $region107: #{transformer_forward.11} parent=95 // pred_region
        %p649 = scmp.lt.s32.totalorder %s29, 1
        %s650 = scalar_select %p649, %s29, 1
        %s651 = scalar_lea.vmem %s2, %s650
      $region108: #{transformer_forward.11} parent=95 // pred_fallthru
        _
    $region96: #{transformer_forward.11} parent=5 // pred_fallthru
      _
    %p652 = scmp.le.s32.totalorder 1, %s29
    %p653 = scmp.lt.s32.totalorder %s29, 3
    %p654 = pnand %p652, %p653
    %p655 = pneg %p654
    // Predicated region
    $region109: #{transformer_forward.11} parent=5 // pred_check
      _
    $region110: #{transformer_forward.11} parent=5 // pred_check_branch
      %657 = sbr.rel (%p654) target = $region112
    $region111: #{transformer_forward.11} parent=5 // pred_region
      %s658 = ssub.s32 %s29, 1
      %p659 = scmp.lt.s32.totalorder %s34, 1
      %s660 = scalar_select %p659, %s34, 1
      %s661 = smul.addr %s660, 8
      %s662 = scalar_lea.vmem %s0, %s661
      %p663 = pneg %p55
      %p664 = pneg %p52
      %p665 = scmp.lt.s32.totalorder %s34, 1
      %s666 = scalar_select %p665, %s34, 1
      %s667 = smul.addr %s666, 8
      %s668 = scalar_lea.vmem %s1, %s667
      %p669 = pneg %p81
      %p670 = pneg %p78
      %p671 = scmp.lt.s32.totalorder %s34, 1
      %s672 = scalar_select %p671, %s34, 1
      %s673 = scalar_lea.vmem %s2, %s672
      %p674 = pneg %p107
      %p675 = pneg %p104
      %p676 = pneg %p128
      %p677 = pneg %p125
      %p678 = pneg %p149
      %p679 = pneg %p146
      %p680 = pneg %p170
      %p681 = pneg %p167
      %p682 = pneg %p191
      %p683 = pneg %p188
      %p684 = pneg %p212
      %p685 = pneg %p209
      %p686 = pneg %p233
      %p687 = pneg %p230
      %p688 = pneg %p254
      %p689 = pneg %p251
      %p690 = pneg %p275
      %p691 = pneg %p272
      %p692 = pneg %p296
      %p693 = pneg %p293
      %p694 = pneg %p317
      %p695 = pneg %p314
      %p696 = pneg %p338
      %p697 = pneg %p335
      %p698 = pneg %p359
      %p699 = pneg %p356
      %p700 = pneg %p380
      %p701 = pneg %p377
      %p702 = pneg %p401
      %p703 = pneg %p398
      %p704 = pneg %p422
      %p705 = pneg %p419
      %p706 = pneg %p443
      %p707 = pneg %p440
      %p708 = pneg %p464
      %p709 = pneg %p461
      %p710 = pneg %p485
      %p711 = pneg %p482
      %p712 = pneg %p506
      %p713 = pneg %p503
      %p714 = pneg %p527
      %p715 = pneg %p524
      %p716 = pneg %p553
      %p717 = pneg %p550
      %p718 = scmp.lt.s32.totalorder %s34, 1
      %s719 = scalar_select %p718, %s34, 1
      %s720 = smul.addr %s719, 8
      %s721 = scalar_lea.vmem %s23, %s720
      %p722 = scmp.lt.s32.totalorder %s34, 1
      %s723 = scalar_select %p722, %s34, 1
      %s724 = smul.addr %s723, 8
      %s725 = scalar_lea.vmem %s0, %s724
      %p726 = scmp.lt.s32.totalorder %s34, 1
      %s727 = scalar_select %p726, %s34, 1
      %s728 = smul.addr %s727, 8
      %s729 = scalar_lea.vmem %s1, %s728
      %p730 = scmp.lt.s32.totalorder %s34, 1
      %s731 = scalar_select %p730, %s34, 1
      %s732 = scalar_lea.vmem %s2, %s731
      %p733 = scmp.lt.s32.totalorder %s34, 1
      %s734 = scalar_select %p733, %s34, 1
      %s735 = smul.addr %s734, 8
      %s736 = scalar_lea.vmem %s23, %s735
      %v737 = vld [vmem:[%s725] sm:$0xff]
      %v738 = vld [vmem:[%s729] sm:$0xff]
      %v739 = vlaneseq
      %v740 = vshrl.u32 %v739, 7
      %v741 = vlaneseq
      %v742 = vand.u32 %v741, 127
      %vm743 = vcmp.ge.s32.totalorder %v740, %v742
      %v744 = vld [vmem:[%s732] sm:$0x1]
      %vm745 = vcmp.gt.f32.partialorder %v744, 0.5
      %vm746 = vmxor %vm745, 1
      %v747 = vsel %vm746, 1, 0
      %v748 = vlaneseq
      %v749 = vshrl.u32 %v748, 7
      %v750 = vsub.s32 0, %v749
      %v751 = vrot.slane %v747, %v750
      %vm752 = vcmp.eq.s32.totalorder %v751, 1
      %vm753 = vmand %vm743, %vm752
      %v754 = vsel %vm753, 0.0, -1e+30
      %v755 = vld [vmem:[%s3] sm:$0x1]
      %v756 = vld [vmem:[%s4] sm:$0x1]
      %vm757 = vcmask 261120
      %v758 = vsel %vm757, %v737, 0.0
      %759 = vadd.xlane.f32.xlu0 %v758
      %v760 = vpop.xlane.xlu0 %759
      %v761 = vrcp.pop 32.0
      %v762 = vmul.f32 %v760, %v761
      %v763 = vsub.f32 %v737, %v762
      %v764 = vmul.f32 %v763, %v763
      %v765 = vsel %vm757, %v764, 0.0
      %766 = vadd.xlane.f32.xlu0 %v765
      %v767 = vpop.xlane.xlu0 %766
      %v768 = vmul.f32 %v767, %v761
      %v769 = vadd.f32 %v768, 1e-05
      %v770 = vrsqrt.pop %v769
      %v771 = vmul.f32 %v763, %v770
      %v773 = vlaneseq
      %v774 = vshrl.u32 %v773, 7
      %v775 = vsub.s32 0, %v774
      %v776 = vrot.slane %v755, %v775
      %v778 = vmul.f32 %v771, %v776
      %v780 = vlaneseq
      %v781 = vshrl.u32 %v780, 7
      %v782 = vsub.s32 0, %v781
      %v783 = vrot.slane %v756, %v782
      %v785 = vadd.f32 %v778, %v783
      %v786 = vld [vmem:[%s5] sm:$0xff]
      %v787 = vld [vmem:[%s5 + $0x8] sm:$0xff]
      %v788 = vld [vmem:[%s5 + $0x10] sm:$0xff]
      %v789 = vld [vmem:[%s5 + $0x18] sm:$0xff]
      %v790 = vld [vmem:[%s6] sm:$0x1]
      %v792 = vlaneseq
      %v793 = vshrl.u32 %v792, 7
      %v794 = vsub.s32 0, %v793
      %v795 = vrot.slane %v790, %v794
      %v798 = vsel %vm757, %v785, 0
      %800 = vmatprep.subr.mxu0 0.0
      %801 = vmatpush1.msra.mxu0 %v786
      %802 = vmatprep.subr.mxu0 0.0
      %803 = vmatpush1.msra.mxu0 %v787
      %804 = vmatprep.subr.mxu0 0.0
      %805 = vmatpush1.msra.mxu0 %v788
      %806 = vmatprep.subr.mxu0 0.0
      %807 = vmatpush1.msra.mxu0 %v789
      %808 = vmatprep.subr.mxu0 0.0
      %809 = vmatpush1.msra.mxu0 0.0
      %810 = vmatprep.subr.mxu0 0.0
      %811 = vmatpush1.msra.mxu0 0.0
      %812 = vmatprep.subr.mxu0 0.0
      %813 = vmatpush1.msra.mxu0 0.0
      %814 = vmatprep.subr.mxu0 0.0
      %815 = vmatpush1.msra.mxu0 0.0
      %816 = vmatprep.subr.mxu0 0.0
      %817 = vmatpush1.msra.mxu0 0.0
      %818 = vmatprep.subr.mxu0 0.0
      %819 = vmatpush1.msra.mxu0 0.0
      %820 = vmatprep.subr.mxu0 0.0
      %821 = vmatpush1.msra.mxu0 0.0
      %822 = vmatprep.subr.mxu0 0.0
      %823 = vmatpush1.msra.mxu0 0.0
      %824 = vmatprep.subr.mxu0 0.0
      %825 = vmatpush1.msra.mxu0 0.0
      %826 = vmatprep.subr.mxu0 0.0
      %827 = vmatpush1.msra.mxu0 0.0
      %828 = vmatprep.subr.mxu0 0.0
      %829 = vmatpush1.msra.mxu0 0.0
      %830 = vmatprep.subr.mxu0 0.0
      %831 = vmatpush1.msra.mxu0 0.0
      %832 = vmatprep.subr.mxu0 0.0
      %833 = vmatpush1.msra.mxu0 0.0
      %834 = vmatprep.subr.mxu0 0.0
      %835 = vmatpush1.msra.mxu0 0.0
      %836 = vmatprep.subr.mxu0 0.0
      %837 = vmatpush1.msra.mxu0 0.0
      %838 = vmatprep.subr.mxu0 0.0
      %839 = vmatpush1.msra.mxu0 0.0
      %840 = vmatprep.subr.mxu0 0.0
      %841 = vmatpush1.msra.mxu0 0.0
      %842 = vmatprep.subr.mxu0 0.0
      %843 = vmatpush1.msra.mxu0 0.0
      %844 = vmatprep.subr.mxu0 0.0
      %845 = vmatpush1.msra.mxu0 0.0
      %846 = vmatprep.subr.mxu0 0.0
      %847 = vmatpush1.msra.mxu0 0.0
      %848 = vmatprep.subr.mxu0 0.0
      %849 = vmatpush1.msra.mxu0 0.0
      %850 = vmatprep.subr.mxu0 0.0
      %851 = vmatpush1.msra.mxu0 0.0
      %852 = vmatprep.subr.mxu0 0.0
      %853 = vmatpush1.msra.mxu0 0.0
      %854 = vmatprep.subr.mxu0 0.0
      %855 = vmatpush1.msra.mxu0 0.0
      %856 = vmatprep.subr.mxu0 0.0
      %857 = vmatpush1.msra.mxu0 0.0
      %858 = vmatprep.subr.mxu0 0.0
      %859 = vmatpush1.msra.mxu0 0.0
      %860 = vmatprep.subr.mxu0 0.0
      %861 = vmatpush1.msra.mxu0 0.0
      %862 = vmatprep.subr.mxu0 0.0
      %863 = vmatpush1.msra.mxu0 0.0
      %864 = vmatprep.mubr.f32.mxu0 0.0
      %865 = vmatmul.mubr.f32.gmra.mrb[0].mxu0 %v798
      %v866 = vpop.f32.mrb[0].mxu0
      %v867 = vadd.f32 %v795, %v866
      %v868 = vpop.f32.mrb[0].mxu0
      %869 = vdwg.mxu0
      %v870 = vmul.f32 %v867, 0.35355338
      %v871 = vld [vmem:[%s7] sm:$0xff]
      %v872 = vld [vmem:[%s7 + $0x8] sm:$0xff]
      %v873 = vld [vmem:[%s7 + $0x10] sm:$0xff]
      %v874 = vld [vmem:[%s7 + $0x18] sm:$0xff]
      %v875 = vld [vmem:[%s8] sm:$0x1]
      %v877 = vlaneseq
      %v878 = vshrl.u32 %v877, 7
      %v879 = vsub.s32 0, %v878
      %v880 = vrot.slane %v875, %v879
      %v882 = vadd.f32 %v880, 0.0
      %884 = vrot.lane.b32.xlu0 %v867, 96
      %v885 = vpop.permute.xlu0 %884
      %vm886 = vcmask 64512
      %v888 = vsel %vm886, %v870, 0
      %v890 = vsel %vm886, %v885, 0
      %892 = vmatprep.subr.mxu0 0.0
      %893 = vmatpush1.xpose.msra.mxu0 %v890
      %894 = vmatprep.subr.mxu0 0.0
      %895 = vmatpush1.xpose.msra.mxu0 0.0
      %896 = vmatprep.subr.mxu0 0.0
      %897 = vmatpush1.xpose.msra.mxu0 0.0
      %898 = vmatprep.subr.mxu0 0.0
      %899 = vmatpush1.xpose.msra.mxu0 0.0
      %900 = vmatprep.subr.mxu0 0.0
      %901 = vmatpush1.xpose.msra.mxu0 0.0
      %902 = vmatprep.subr.mxu0 0.0
      %903 = vmatpush1.xpose.msra.mxu0 0.0
      %904 = vmatprep.subr.mxu0 0.0
      %905 = vmatpush1.xpose.msra.mxu0 0.0
      %906 = vmatprep.subr.mxu0 0.0
      %907 = vmatpush1.xpose.msra.mxu0 0.0
      %908 = vmatprep.subr.mxu0 0.0
      %909 = vmatpush1.xpose.msra.mxu0 0.0
      %910 = vmatprep.subr.mxu0 0.0
      %911 = vmatpush1.xpose.msra.mxu0 0.0
      %912 = vmatprep.subr.mxu0 0.0
      %913 = vmatpush1.xpose.msra.mxu0 0.0
      %914 = vmatprep.subr.mxu0 0.0
      %915 = vmatpush1.xpose.msra.mxu0 0.0
      %916 = vmatprep.subr.mxu0 0.0
      %917 = vmatpush1.xpose.msra.mxu0 0.0
      %918 = vmatprep.subr.mxu0 0.0
      %919 = vmatpush1.xpose.msra.mxu0 0.0
      %920 = vmatprep.subr.mxu0 0.0
      %921 = vmatpush1.xpose.msra.mxu0 0.0
      %922 = vmatprep.subr.mxu0 0.0
      %923 = vmatpush1.xpose.msra.mxu0 0.0
      %924 = vmatprep.subr.mxu0 0.0
      %925 = vmatpush1.xpose.msra.mxu0 0.0
      %926 = vmatprep.subr.mxu0 0.0
      %927 = vmatpush1.xpose.msra.mxu0 0.0
      %928 = vmatprep.subr.mxu0 0.0
      %929 = vmatpush1.xpose.msra.mxu0 0.0
      %930 = vmatprep.subr.mxu0 0.0
      %931 = vmatpush1.xpose.msra.mxu0 0.0
      %932 = vmatprep.subr.mxu0 0.0
      %933 = vmatpush1.xpose.msra.mxu0 0.0
      %934 = vmatprep.subr.mxu0 0.0
      %935 = vmatpush1.xpose.msra.mxu0 0.0
      %936 = vmatprep.subr.mxu0 0.0
      %937 = vmatpush1.xpose.msra.mxu0 0.0
      %938 = vmatprep.subr.mxu0 0.0
      %939 = vmatpush1.xpose.msra.mxu0 0.0
      %940 = vmatprep.subr.mxu0 0.0
      %941 = vmatpush1.xpose.msra.mxu0 0.0
      %942 = vmatprep.subr.mxu0 0.0
      %943 = vmatpush1.xpose.msra.mxu0 0.0
      %944 = vmatprep.subr.mxu0 0.0
      %945 = vmatpush1.xpose.msra.mxu0 0.0
      %946 = vmatprep.subr.mxu0 0.0
      %947 = vmatpush1.xpose.msra.mxu0 0.0
      %948 = vmatprep.subr.mxu0 0.0
      %949 = vmatpush1.xpose.msra.mxu0 0.0
      %950 = vmatprep.subr.mxu0 0.0
      %951 = vmatpush1.xpose.msra.mxu0 0.0
      %952 = vmatprep.subr.mxu0 0.0
      %953 = vmatpush1.xpose.msra.mxu0 0.0
      %954 = vmatprep.subr.mxu0 0.0
      %955 = vmatpush1.xpose.msra.mxu0 0.0
      %956 = vmatprep.mubr.f32.mxu0 0.0
      %957 = vmatmul.mubr.f32.gmra.mrb[0].mxu0 %v888
      %v958 = vpop.f32.mrb[0].mxu0
      %v959 = vadd.f32 %v754, %v958
      %v960 = vpop.f32.mrb[0].mxu0
      %961 = vdwg.mxu0
      %v962 = vsel %vm886, %v959, -inf
      %963 = vmax.xlane.f32.xlu0 %v962
      %v964 = vpop.xlane.xlu0 %963
      %v965 = vsub.f32 %v959, %v964
      %v966 = vmul.f32 %v965, 1.442695
      %v967 = vpow.pop %v966
      %v968 = vsel %vm886, %v967, 0.0
      %969 = vadd.xlane.f32.xlu0 %v968
      %v970 = vpop.xlane.xlu0 %969
      %v971 = vrcp.pop %v970
      %v972 = vmul.f32 %v967, %v971
      %973 = vrot.lane.b32.xlu0 %v867, 64
      %v974 = vpop.permute.xlu0 %973
      %v977 = vsel %vm886, %v972, 0
      %979 = vmatprep.subr.mxu0 0.0
      %980 = vmatpush1.msra.mxu0 %v974
      %981 = vmatprep.subr.mxu0 0.0
      %982 = vmatpush1.msra.mxu0 0.0
      %983 = vmatprep.subr.mxu0 0.0
      %984 = vmatpush1.msra.mxu0 0.0
      %985 = vmatprep.subr.mxu0 0.0
      %986 = vmatpush1.msra.mxu0 0.0
      %987 = vmatprep.subr.mxu0 0.0
      %988 = vmatpush1.msra.mxu0 0.0
      %989 = vmatprep.subr.mxu0 0.0
      %990 = vmatpush1.msra.mxu0 0.0
      %991 = vmatprep.subr.mxu0 0.0
      %992 = vmatpush1.msra.mxu0 0.0
      %993 = vmatprep.subr.mxu0 0.0
      %994 = vmatpush1.msra.mxu0 0.0
      %995 = vmatprep.subr.mxu0 0.0
      %996 = vmatpush1.msra.mxu0 0.0
      %997 = vmatprep.subr.mxu0 0.0
      %998 = vmatpush1.msra.mxu0 0.0
      %999 = vmatprep.subr.mxu0 0.0
      %1000 = vmatpush1.msra.mxu0 0.0
      %1001 = vmatprep.subr.mxu0 0.0
      %1002 = vmatpush1.msra.mxu0 0.0
      %1003 = vmatprep.subr.mxu0 0.0
      %1004 = vmatpush1.msra.mxu0 0.0
      %1005 = vmatprep.subr.mxu0 0.0
      %1006 = vmatpush1.msra.mxu0 0.0
      %1007 = vmatprep.subr.mxu0 0.0
      %1008 = vmatpush1.msra.mxu0 0.0
      %1009 = vmatprep.subr.mxu0 0.0
      %1010 = vmatpush1.msra.mxu0 0.0
      %1011 = vmatprep.subr.mxu0 0.0
      %1012 = vmatpush1.msra.mxu0 0.0
      %1013 = vmatprep.subr.mxu0 0.0
      %1014 = vmatpush1.msra.mxu0 0.0
      %1015 = vmatprep.subr.mxu0 0.0
      %1016 = vmatpush1.msra.mxu0 0.0
      %1017 = vmatprep.subr.mxu0 0.0
      %1018 = vmatpush1.msra.mxu0 0.0
      %1019 = vmatprep.subr.mxu0 0.0
      %1020 = vmatpush1.msra.mxu0 0.0
      %1021 = vmatprep.subr.mxu0 0.0
      %1022 = vmatpush1.msra.mxu0 0.0
      %1023 = vmatprep.subr.mxu0 0.0
      %1024 = vmatpush1.msra.mxu0 0.0
      %1025 = vmatprep.subr.mxu0 0.0
      %1026 = vmatpush1.msra.mxu0 0.0
      %1027 = vmatprep.subr.mxu0 0.0
      %1028 = vmatpush1.msra.mxu0 0.0
      %1029 = vmatprep.subr.mxu0 0.0
      %1030 = vmatpush1.msra.mxu0 0.0
      %1031 = vmatprep.subr.mxu0 0.0
      %1032 = vmatpush1.msra.mxu0 0.0
      %1033 = vmatprep.subr.mxu0 0.0
      %1034 = vmatpush1.msra.mxu0 0.0
      %1035 = vmatprep.subr.mxu0 0.0
      %1036 = vmatpush1.msra.mxu0 0.0
      %1037 = vmatprep.subr.mxu0 0.0
      %1038 = vmatpush1.msra.mxu0 0.0
      %1039 = vmatprep.subr.mxu0 0.0
      %1040 = vmatpush1.msra.mxu0 0.0
      %1041 = vmatprep.subr.mxu0 0.0
      %1042 = vmatpush1.msra.mxu0 0.0
      %1043 = vmatprep.mubr.f32.mxu0 0.0
      %1044 = vmatmul.mubr.f32.gmra.mrb[0].mxu0 %v977
      %v1045 = vpop.f32.mrb[0].mxu0
      %v1046 = vadd.f32 0.0, %v1045
      %v1047 = vpop.f32.mrb[0].mxu0
      %1048 = vdwg.mxu0
      %v1050 = vsel %vm886, %v1046, 0
      %1052 = vmatprep.subr.mxu0 0.0
      %1053 = vmatpush1.msra.mxu0 %v871
      %1054 = vmatprep.subr.mxu0 0.0
      %1055 = vmatpush1.msra.mxu0 0.0
      %1056 = vmatprep.subr.mxu0 0.0
      %1057 = vmatpush1.msra.mxu0 0.0
      %1058 = vmatprep.subr.mxu0 0.0
      %1059 = vmatpush1.msra.mxu0 0.0
      %1060 = vmatprep.subr.mxu0 0.0
      %1061 = vmatpush1.msra.mxu0 0.0
      %1062 = vmatprep.subr.mxu0 0.0
      %1063 = vmatpush1.msra.mxu0 0.0
      %1064 = vmatprep.subr.mxu0 0.0
      %1065 = vmatpush1.msra.mxu0 0.0
      %1066 = vmatprep.subr.mxu0 0.0
      %1067 = vmatpush1.msra.mxu0 0.0
      %1068 = vmatprep.subr.mxu0 0.0
      %1069 = vmatpush1.msra.mxu0 0.0
      %1070 = vmatprep.subr.mxu0 0.0
      %1071 = vmatpush1.msra.mxu0 0.0
      %1072 = vmatprep.subr.mxu0 0.0
      %1073 = vmatpush1.msra.mxu0 0.0
      %1074 = vmatprep.subr.mxu0 0.0
      %1075 = vmatpush1.msra.mxu0 0.0
      %1076 = vmatprep.subr.mxu0 0.0
      %1077 = vmatpush1.msra.mxu0 0.0
      %1078 = vmatprep.subr.mxu0 0.0
      %1079 = vmatpush1.msra.mxu0 0.0
      %1080 = vmatprep.subr.mxu0 0.0
      %1081 = vmatpush1.msra.mxu0 0.0
      %1082 = vmatprep.subr.mxu0 0.0
      %1083 = vmatpush1.msra.mxu0 0.0
      %1084 = vmatprep.subr.mxu0 0.0
      %1085 = vmatpush1.msra.mxu0 0.0
      %1086 = vmatprep.subr.mxu0 0.0
      %1087 = vmatpush1.msra.mxu0 0.0
      %1088 = vmatprep.subr.mxu0 0.0
      %1089 = vmatpush1.msra.mxu0 0.0
      %1090 = vmatprep.subr.mxu0 0.0
      %1091 = vmatpush1.msra.mxu0 0.0
      %1092 = vmatprep.subr.mxu0 0.0
      %1093 = vmatpush1.msra.mxu0 0.0
      %1094 = vmatprep.subr.mxu0 0.0
      %1095 = vmatpush1.msra.mxu0 0.0
      %1096 = vmatprep.subr.mxu0 0.0
      %1097 = vmatpush1.msra.mxu0 0.0
      %1098 = vmatprep.subr.mxu0 0.0
      %1099 = vmatpush1.msra.mxu0 0.0
      %1100 = vmatprep.subr.mxu0 0.0
      %1101 = vmatpush1.msra.mxu0 0.0
      %1102 = vmatprep.subr.mxu0 0.0
      %1103 = vmatpush1.msra.mxu0 0.0
      %1104 = vmatprep.subr.mxu0 0.0
      %1105 = vmatpush1.msra.mxu0 0.0
      %1106 = vmatprep.subr.mxu0 0.0
      %1107 = vmatpush1.msra.mxu0 0.0
      %1108 = vmatprep.subr.mxu0 0.0
      %1109 = vmatpush1.msra.mxu0 0.0
      %1110 = vmatprep.subr.mxu0 0.0
      %1111 = vmatpush1.msra.mxu0 0.0
      %1112 = vmatprep.subr.mxu0 0.0
      %1113 = vmatpush1.msra.mxu0 0.0
      %1114 = vmatprep.subr.mxu0 0.0
      %1115 = vmatpush1.msra.mxu0 0.0
      %1116 = vmatprep.mubr.f32.mxu0 0.0
      %1117 = vmatmul.mubr.f32.gmra.mrb[0].mxu0 %v1050
      %v1118 = vpop.f32.mrb[0].mxu0
      %v1119 = vadd.f32 0.0, %v1118
      %v1120 = vpop.f32.mrb[0].mxu0
      %1121 = vdwg.mxu0
      %v1122 = vadd.f32 %v882, %v1119
      %1123 = vrot.lane.b32.xlu0 %v870, 120
      %v1124 = vpop.permute.xlu0 %1123
      %1125 = vrot.lane.b32.xlu0 %v867, 88
      %v1126 = vpop.permute.xlu0 %1125
      %v1127 = vsel %vm886, %v1124, 0
      %v1129 = vsel %vm886, %v1126, 0
      %1131 = vmatprep.subr.mxu0 0.0
      %1132 = vmatpush1.xpose.msra.mxu0 %v1129
      %1133 = vmatprep.subr.mxu0 0.0
      %1134 = vmatpush1.xpose.msra.mxu0 0.0
      %1135 = vmatprep.subr.mxu0 0.0
      %1136 = vmatpush1.xpose.msra.mxu0 0.0
      %1137 = vmatprep.subr.mxu0 0.0
      %1138 = vmatpush1.xpose.msra.mxu0 0.0
      %1139 = vmatprep.subr.mxu0 0.0
      %1140 = vmatpush1.xpose.msra.mxu0 0.0
      %1141 = vmatprep.subr.mxu0 0.0
      %1142 = vmatpush1.xpose.msra.mxu0 0.0
      %1143 = vmatprep.subr.mxu0 0.0
      %1144 = vmatpush1.xpose.msra.mxu0 0.0
      %1145 = vmatprep.subr.mxu0 0.0
      %1146 = vmatpush1.xpose.msra.mxu0 0.0
      %1147 = vmatprep.subr.mxu0 0.0
      %1148 = vmatpush1.xpose.msra.mxu0 0.0
      %1149 = vmatprep.subr.mxu0 0.0
      %1150 = vmatpush1.xpose.msra.mxu0 0.0
      %1151 = vmatprep.subr.mxu0 0.0
      %1152 = vmatpush1.xpose.msra.mxu0 0.0
      %1153 = vmatprep.subr.mxu0 0.0
      %1154 = vmatpush1.xpose.msra.mxu0 0.0
      %1155 = vmatprep.subr.mxu0 0.0
      %1156 = vmatpush1.xpose.msra.mxu0 0.0
      %1157 = vmatprep.subr.mxu0 0.0
      %1158 = vmatpush1.xpose.msra.mxu0 0.0
      %1159 = vmatprep.subr.mxu0 0.0
      %1160 = vmatpush1.xpose.msra.mxu0 0.0
      %1161 = vmatprep.subr.mxu0 0.0
      %1162 = vmatpush1.xpose.msra.mxu0 0.0
      %1163 = vmatprep.subr.mxu0 0.0
      %1164 = vmatpush1.xpose.msra.mxu0 0.0
      %1165 = vmatprep.subr.mxu0 0.0
      %1166 = vmatpush1.xpose.msra.mxu0 0.0
      %1167 = vmatprep.subr.mxu0 0.0
      %1168 = vmatpush1.xpose.msra.mxu0 0.0
      %1169 = vmatprep.subr.mxu0 0.0
      %1170 = vmatpush1.xpose.msra.mxu0 0.0
      %1171 = vmatprep.subr.mxu0 0.0
      %1172 = vmatpush1.xpose.msra.mxu0 0.0
      %1173 = vmatprep.subr.mxu0 0.0
      %1174 = vmatpush1.xpose.msra.mxu0 0.0
      %1175 = vmatprep.subr.mxu0 0.0
      %1176 = vmatpush1.xpose.msra.mxu0 0.0
      %1177 = vmatprep.subr.mxu0 0.0
      %1178 = vmatpush1.xpose.msra.mxu0 0.0
      %1179 = vmatprep.subr.mxu0 0.0
      %1180 = vmatpush1.xpose.msra.mxu0 0.0
      %1181 = vmatprep.subr.mxu0 0.0
      %1182 = vmatpush1.xpose.msra.mxu0 0.0
      %1183 = vmatprep.subr.mxu0 0.0
      %1184 = vmatpush1.xpose.msra.mxu0 0.0
      %1185 = vmatprep.subr.mxu0 0.0
      %1186 = vmatpush1.xpose.msra.mxu0 0.0
      %1187 = vmatprep.subr.mxu0 0.0
      %1188 = vmatpush1.xpose.msra.mxu0 0.0
      %1189 = vmatprep.subr.mxu0 0.0
      %1190 = vmatpush1.xpose.msra.mxu0 0.0
      %1191 = vmatprep.subr.mxu0 0.0
      %1192 = vmatpush1.xpose.msra.mxu0 0.0
      %1193 = vmatprep.subr.mxu0 0.0
      %1194 = vmatpush1.xpose.msra.mxu0 0.0
      %1195 = vmatprep.mubr.f32.mxu0 0.0
      %1196 = vmatmul.mubr.f32.gmra.mrb[0].mxu0 %v1127
      %v1197 = vpop.f32.mrb[0].mxu0
      %v1198 = vadd.f32 %v754, %v1197
      %v1199 = vpop.f32.mrb[0].mxu0
      %1200 = vdwg.mxu0
      %v1201 = vsel %vm886, %v1198, -inf
      %1202 = vmax.xlane.f32.xlu0 %v1201
      %v1203 = vpop.xlane.xlu0 %1202
      %v1204 = vsub.f32 %v1198, %v1203
      %v1205 = vmul.f32 %v1204, 1.442695
      %v1206 = vpow.pop %v1205
      %v1207 = vsel %vm886, %v1206, 0.0
      %1208 = vadd.xlane.f32.xlu0 %v1207
      %v1209 = vpop.xlane.xlu0 %1208
      %v1210 = vrcp.pop %v1209
      %v1211 = vmul.f32 %v1206, %v1210
      %1212 = vrot.lane.b32.xlu0 %v867, 56
      %v1213 = vpop.permute.xlu0 %1212
      %v1216 = vsel %vm886, %v1211, 0
      %1218 = vmatprep.subr.mxu0 0.0
      %1219 = vmatpush1.msra.mxu0 %v1213
      %1220 = vmatprep.subr.mxu0 0.0
      %1221 = vmatpush1.msra.mxu0 0.0
      %1222 = vmatprep.subr.mxu0 0.0
      %1223 = vmatpush1.msra.mxu0 0.0
      %1224 = vmatprep.subr.mxu0 0.0
      %1225 = vmatpush1.msra.mxu0 0.0
      %1226 = vmatprep.subr.mxu0 0.0
      %1227 = vmatpush1.msra.mxu0 0.0
      %1228 = vmatprep.subr.mxu0 0.0
      %1229 = vmatpush1.msra.mxu0 0.0
      %1230 = vmatprep.subr.mxu0 0.0
      %1231 = vmatpush1.msra.mxu0 0.0
      %1232 = vmatprep.subr.mxu0 0.0
      %1233 = vmatpush1.msra.mxu0 0.0
      %1234 = vmatprep.subr.mxu0 0.0
      %1235 = vmatpush1.msra.mxu0 0.0
      %1236 = vmatprep.subr.mxu0 0.0
      %1237 = vmatpush1.msra.mxu0 0.0
      %1238 = vmatprep.subr.mxu0 0.0
      %1239 = vmatpush1.msra.mxu0 0.0
      %1240 = vmatprep.subr.mxu0 0.0
      %1241 = vmatpush1.msra.mxu0 0.0
      %1242 = vmatprep.subr.mxu0 0.0
      %1243 = vmatpush1.msra.mxu0 0.0
      %1244 = vmatprep.subr.mxu0 0.0
      %1245 = vmatpush1.msra.mxu0 0.0
      %1246 = vmatprep.subr.mxu0 0.0
      %1247 = vmatpush1.msra.mxu0 0.0
      %1248 = vmatprep.subr.mxu0 0.0
      %1249 = vmatpush1.msra.mxu0 0.0
      %1250 = vmatprep.subr.mxu0 0.0
      %1251 = vmatpush1.msra.mxu0 0.0
      %1252 = vmatprep.subr.mxu0 0.0
      %1253 = vmatpush1.msra.mxu0 0.0
      %1254 = vmatprep.subr.mxu0 0.0
      %1255 = vmatpush1.msra.mxu0 0.0
      %1256 = vmatprep.subr.mxu0 0.0
      %1257 = vmatpush1.msra.mxu0 0.0
      %1258 = vmatprep.subr.mxu0 0.0
      %1259 = vmatpush1.msra.mxu0 0.0
      %1260 = vmatprep.subr.mxu0 0.0
      %1261 = vmatpush1.msra.mxu0 0.0
      %1262 = vmatprep.subr.mxu0 0.0
      %1263 = vmatpush1.msra.mxu0 0.0
      %1264 = vmatprep.subr.mxu0 0.0
      %1265 = vmatpush1.msra.mxu0 0.0
      %1266 = vmatprep.subr.mxu0 0.0
      %1267 = vmatpush1.msra.mxu0 0.0
      %1268 = vmatprep.subr.mxu0 0.0
      %1269 = vmatpush1.msra.mxu0 0.0
      %1270 = vmatprep.subr.mxu0 0.0
      %1271 = vmatpush1.msra.mxu0 0.0
      %1272 = vmatprep.subr.mxu0 0.0
      %1273 = vmatpush1.msra.mxu0 0.0
      %1274 = vmatprep.subr.mxu0 0.0
      %1275 = vmatpush1.msra.mxu0 0.0
      %1276 = vmatprep.subr.mxu0 0.0
      %1277 = vmatpush1.msra.mxu0 0.0
      %1278 = vmatprep.subr.mxu0 0.0
      %1279 = vmatpush1.msra.mxu0 0.0
      %1280 = vmatprep.subr.mxu0 0.0
      %1281 = vmatpush1.msra.mxu0 0.0
      %1282 = vmatprep.mubr.f32.mxu0 0.0
      %1283 = vmatmul.mubr.f32.gmra.mrb[0].mxu0 %v1216
      %v1284 = vpop.f32.mrb[0].mxu0
      %v1285 = vadd.f32 0.0, %v1284
      %v1286 = vpop.f32.mrb[0].mxu0
      %1287 = vdwg.mxu0
      %v1289 = vsel %vm886, %v1285, 0
      %1291 = vmatprep.subr.mxu0 0.0
      %1292 = vmatpush1.msra.mxu0 %v872
      %1293 = vmatprep.subr.mxu0 0.0
      %1294 = vmatpush1.msra.mxu0 0.0
      %1295 = vmatprep.subr.mxu0 0.0
      %1296 = vmatpush1.msra.mxu0 0.0
      %1297 = vmatprep.subr.mxu0 0.0
      %1298 = vmatpush1.msra.mxu0 0.0
      %1299 = vmatprep.subr.mxu0 0.0
      %1300 = vmatpush1.msra.mxu0 0.0
      %1301 = vmatprep.subr.mxu0 0.0
      %1302 = vmatpush1.msra.mxu0 0.0
      %1303 = vmatprep.subr.mxu0 0.0
      %1304 = vmatpush1.msra.mxu0 0.0
      %1305 = vmatprep.subr.mxu0 0.0
      %1306 = vmatpush1.msra.mxu0 0.0
      %1307 = vmatprep.subr.mxu0 0.0
      %1308 = vmatpush1.msra.mxu0 0.0
      %1309 = vmatprep.subr.mxu0 0.0
      %1310 = vmatpush1.msra.mxu0 0.0
      %1311 = vmatprep.subr.mxu0 0.0
      %1312 = vmatpush1.msra.mxu0 0.0
      %1313 = vmatprep.subr.mxu0 0.0
      %1314 = vmatpush1.msra.mxu0 0.0
      %1315 = vmatprep.subr.mxu0 0.0
      %1316 = vmatpush1.msra.mxu0 0.0
      %1317 = vmatprep.subr.mxu0 0.0
      %1318 = vmatpush1.msra.mxu0 0.0
      %1319 = vmatprep.subr.mxu0 0.0
      %1320 = vmatpush1.msra.mxu0 0.0
      %1321 = vmatprep.subr.mxu0 0.0
      %1322 = vmatpush1.msra.mxu0 0.0
      %1323 = vmatprep.subr.mxu0 0.0
      %1324 = vmatpush1.msra.mxu0 0.0
      %1325 = vmatprep.subr.mxu0 0.0
      %1326 = vmatpush1.msra.mxu0 0.0
      %1327 = vmatprep.subr.mxu0 0.0
      %1328 = vmatpush1.msra.mxu0 0.0
      %1329 = vmatprep.subr.mxu0 0.0
      %1330 = vmatpush1.msra.mxu0 0.0
      %1331 = vmatprep.subr.mxu0 0.0
      %1332 = vmatpush1.msra.mxu0 0.0
      %1333 = vmatprep.subr.mxu0 0.0
      %1334 = vmatpush1.msra.mxu0 0.0
      %1335 = vmatprep.subr.mxu0 0.0
      %1336 = vmatpush1.msra.mxu0 0.0
      %1337 = vmatprep.subr.mxu0 0.0
      %1338 = vmatpush1.msra.mxu0 0.0
      %1339 = vmatprep.subr.mxu0 0.0
      %1340 = vmatpush1.msra.mxu0 0.0
      %1341 = vmatprep.subr.mxu0 0.0
      %1342 = vmatpush1.msra.mxu0 0.0
      %1343 = vmatprep.subr.mxu0 0.0
      %1344 = vmatpush1.msra.mxu0 0.0
      %1345 = vmatprep.subr.mxu0 0.0
      %1346 = vmatpush1.msra.mxu0 0.0
      %1347 = vmatprep.subr.mxu0 0.0
      %1348 = vmatpush1.msra.mxu0 0.0
      %1349 = vmatprep.subr.mxu0 0.0
      %1350 = vmatpush1.msra.mxu0 0.0
      %1351 = vmatprep.subr.mxu0 0.0
      %1352 = vmatpush1.msra.mxu0 0.0
      %1353 = vmatprep.subr.mxu0 0.0
      %1354 = vmatpush1.msra.mxu0 0.0
      %1355 = vmatprep.mubr.f32.mxu0 0.0
      %1356 = vmatmul.mubr.f32.gmra.mrb[0].mxu0 %v1289
      %v1357 = vpop.f32.mrb[0].mxu0
      %v1358 = vadd.f32 0.0, %v1357
      %v1359 = vpop.f32.mrb[0].mxu0
      %1360 = vdwg.mxu0
      %v1361 = vadd.f32 %v1122, %v1358
      %1362 = vrot.lane.b32.xlu0 %v870, 112
      %v1363 = vpop.permute.xlu0 %1362
      %1364 = vrot.lane.b32.xlu0 %v867, 80
      %v1365 = vpop.permute.xlu0 %1364
      %v1366 = vsel %vm886, %v1363, 0
      %v1368 = vsel %vm886, %v1365, 0
      %1370 = vmatprep.subr.mxu0 0.0
      %1371 = vmatpush1.xpose.msra.mxu0 %v1368
      %1372 = vmatprep.subr.mxu0 0.0
      %1373 = vmatpush1.xpose.msra.mxu0 0.0
      %1374 = vmatprep.subr.mxu0 0.0
      %1375 = vmatpush1.xpose.msra.mxu0 0.0
      %1376 = vmatprep.subr.mxu0 0.0
      %1377 = vmatpush1.xpose.msra.mxu0 0.0
      %1378 = vmatprep.subr.mxu0 0.0
      %1379 = vmatpush1.xpose.msra.mxu0 0.0
      %1380 = vmatprep.subr.mxu0 0.0
      %1381 = vmatpush1.xpose.msra.mxu0 0.0
      %1382 = vmatprep.subr.mxu0 0.0
      %1383 = vmatpush1.xpose.msra.mxu0 0.0
      %1384 = vmatprep.subr.mxu0 0.0
      %1385 = vmatpush1.xpose.msra.mxu0 0.0
      %1386 = vmatprep.subr.mxu0 0.0
      %1387 = vmatpush1.xpose.msra.mxu0 0.0
      %1388 = vmatprep.subr.mxu0 0.0
      %1389 = vmatpush1.xpose.msra.mxu0 0.0
      %1390 = vmatprep.subr.mxu0 0.0
      %1391 = vmatpush1.xpose.msra.mxu0 0.0
      %1392 = vmatprep.subr.mxu0 0.0
      %1393 = vmatpush1.xpose.msra.mxu0 0.0
      %1394 = vmatprep.subr.mxu0 0.0
      %1395 = vmatpush1.xpose.msra.mxu0 0.0
      %1396 = vmatprep.subr.mxu0 0.0
      %1397 = vmatpush1.xpose.msra.mxu0 0.0
      %1398 = vmatprep.subr.mxu0 0.0
      %1399 = vmatpush1.xpose.msra.mxu0 0.0
      %1400 = vmatprep.subr.mxu0 0.0
      %1401 = vmatpush1.xpose.msra.mxu0 0.0
      %1402 = vmatprep.subr.mxu0 0.0
      %1403 = vmatpush1.xpose.msra.mxu0 0.0
      %1404 = vmatprep.subr.mxu0 0.0
      %1405 = vmatpush1.xpose.msra.mxu0 0.0
      %1406 = vmatprep.subr.mxu0 0.0
      %1407 = vmatpush1.xpose.msra.mxu0 0.0
      %1408 = vmatprep.subr.mxu0 0.0
      %1409 = vmatpush1.xpose.msra.mxu0 0.0
      %1410 = vmatprep.subr.mxu0 0.0
      %1411 = vmatpush1.xpose.msra.mxu0 0.0
      %1412 = vmatprep.subr.mxu0 0.0
      %1413 = vmatpush1.xpose.msra.mxu0 0.0
      %1414 = vmatprep.subr.mxu0 0.0
      %1415 = vmatpush1.xpose.msra.mxu0 0.0
      %1416 = vmatprep.subr.mxu0 0.0
      %1417 = vmatpush1.xpose.msra.mxu0 0.0
      %1418 = vmatprep.subr.mxu0 0.0
      %1419 = vmatpush1.xpose.msra.mxu0 0.0
      %1420 = vmatprep.subr.mxu0 0.0
      %1421 = vmatpush1.xpose.msra.mxu0 0.0
      %1422 = vmatprep.subr.mxu0 0.0
      %1423 = vmatpush1.xpose.msra.mxu0 0.0
      %1424 = vmatprep.subr.mxu0 0.0
      %1425 = vmatpush1.xpose.msra.mxu0 0.0
      %1426 = vmatprep.subr.mxu0 0.0
      %1427 = vmatpush1.xpose.msra.mxu0 0.0
      %1428 = vmatprep.subr.mxu0 0.0
      %1429 = vmatpush1.xpose.msra.mxu0 0.0
      %1430 = vmatprep.subr.mxu0 0.0
      %1431 = vmatpush1.xpose.msra.mxu0 0.0
      %1432 = vmatprep.subr.mxu0 0.0
      %1433 = vmatpush1.xpose.msra.mxu0 0.0
      %1434 = vmatprep.mubr.f32.mxu0 0.0
      %1435 = vmatmul.mubr.f32.gmra.mrb[0].mxu0 %v1366
      %v1436 = vpop.f32.mrb[0].mxu0
      %v1437 = vadd.f32 %v754, %v1436
      %v1438 = vpop.f32.mrb[0].mxu0
      %1439 = vdwg.mxu0
      %v1440 = vsel %vm886, %v1437, -inf
      %1441 = vmax.xlane.f32.xlu0 %v1440
      %v1442 = vpop.xlane.xlu0 %1441
      %v1443 = vsub.f32 %v1437, %v1442
      %v1444 = vmul.f32 %v1443, 1.442695
      %v1445 = vpow.pop %v1444
      %v1446 = vsel %vm886, %v1445, 0.0
      %1447 = vadd.xlane.f32.xlu0 %v1446
      %v1448 = vpop.xlane.xlu0 %1447
      %v1449 = vrcp.pop %v1448
      %v1450 = vmul.f32 %v1445, %v1449
      %1451 = vrot.lane.b32.xlu0 %v867, 48
      %v1452 = vpop.permute.xlu0 %1451
      %v1455 = vsel %vm886, %v1450, 0
      %1457 = vmatprep.subr.mxu0 0.0
      %1458 = vmatpush1.msra.mxu0 %v1452
      %1459 = vmatprep.subr.mxu0 0.0
      %1460 = vmatpush1.msra.mxu0 0.0
      %1461 = vmatprep.subr.mxu0 0.0
      %1462 = vmatpush1.msra.mxu0 0.0
      %1463 = vmatprep.subr.mxu0 0.0
      %1464 = vmatpush1.msra.mxu0 0.0
      %1465 = vmatprep.subr.mxu0 0.0
      %1466 = vmatpush1.msra.mxu0 0.0
      %1467 = vmatprep.subr.mxu0 0.0
      %1468 = vmatpush1.msra.mxu0 0.0
      %1469 = vmatprep.subr.mxu0 0.0
      %1470 = vmatpush1.msra.mxu0 0.0
      %1471 = vmatprep.subr.mxu0 0.0
      %1472 = vmatpush1.msra.mxu0 0.0
      %1473 = vmatprep.subr.mxu0 0.0
      %1474 = vmatpush1.msra.mxu0 0.0
      %1475 = vmatprep.subr.mxu0 0.0
      %1476 = vmatpush1.msra.mxu0 0.0
      %1477 = vmatprep.subr.mxu0 0.0
      %1478 = vmatpush1.msra.mxu0 0.0
      %1479 = vmatprep.subr.mxu0 0.0
      %1480 = vmatpush1.msra.mxu0 0.0
      %1481 = vmatprep.subr.mxu0 0.0
      %1482 = vmatpush1.msra.mxu0 0.0
      %1483 = vmatprep.subr.mxu0 0.0
      %1484 = vmatpush1.msra.mxu0 0.0
      %1485 = vmatprep.subr.mxu0 0.0
      %1486 = vmatpush1.msra.mxu0 0.0
      %1487 = vmatprep.subr.mxu0 0.0
      %1488 = vmatpush1.msra.mxu0 0.0
      %1489 = vmatprep.subr.mxu0 0.0
      %1490 = vmatpush1.msra.mxu0 0.0
      %1491 = vmatprep.subr.mxu0 0.0
      %1492 = vmatpush1.msra.mxu0 0.0
      %1493 = vmatprep.subr.mxu0 0.0
      %1494 = vmatpush1.msra.mxu0 0.0
      %1495 = vmatprep.subr.mxu0 0.0
      %1496 = vmatpush1.msra.mxu0 0.0
      %1497 = vmatprep.subr.mxu0 0.0
      %1498 = vmatpush1.msra.mxu0 0.0
      %1499 = vmatprep.subr.mxu0 0.0
      %1500 = vmatpush1.msra.mxu0 0.0
      %1501 = vmatprep.subr.mxu0 0.0
      %1502 = vmatpush1.msra.mxu0 0.0
      %1503 = vmatprep.subr.mxu0 0.0
      %1504 = vmatpush1.msra.mxu0 0.0
      %1505 = vmatprep.subr.mxu0 0.0
      %1506 = vmatpush1.msra.mxu0 0.0
      %1507 = vmatprep.subr.mxu0 0.0
      %1508 = vmatpush1.msra.mxu0 0.0
      %1509 = vmatprep.subr.mxu0 0.0
      %1510 = vmatpush1.msra.mxu0 0.0
      %1511 = vmatprep.subr.mxu0 0.0
      %1512 = vmatpush1.msra.mxu0 0.0
      %1513 = vmatprep.subr.mxu0 0.0
      %1514 = vmatpush1.msra.mxu0 0.0
      %1515 = vmatprep.subr.mxu0 0.0
      %1516 = vmatpush1.msra.mxu0 0.0
      %1517 = vmatprep.subr.mxu0 0.0
      %1518 = vmatpush1.msra.mxu0 0.0
      %1519 = vmatprep.subr.mxu0 0.0
      %1520 = vmatpush1.msra.mxu0 0.0
      %1521 = vmatprep.mubr.f32.mxu0 0.0
      %1522 = vmatmul.mubr.f32.gmra.mrb[0].mxu0 %v1455
      %v1523 = vpop.f32.mrb[0].mxu0
      %v1524 = vadd.f32 0.0, %v1523
      %v1525 = vpop.f32.mrb[0].mxu0
      %1526 = vdwg.mxu0
      %v1528 = vsel %vm886, %v1524, 0
      %1530 = vmatprep.subr.mxu0 0.0
      %1531 = vmatpush1.msra.mxu0 %v873
      %1532 = vmatprep.subr.mxu0 0.0
      %1533 = vmatpush1.msra.mxu0 0.0
      %1534 = vmatprep.subr.mxu0 0.0
      %1535 = vmatpush1.msra.mxu0 0.0
      %1536 = vmatprep.subr.mxu0 0.0
      %1537 = vmatpush1.msra.mxu0 0.0
      %1538 = vmatprep.subr.mxu0 0.0
      %1539 = vmatpush1.msra.mxu0 0.0
      %1540 = vmatprep.subr.mxu0 0.0
      %1541 = vmatpush1.msra.mxu0 0.0
      %1542 = vmatprep.subr.mxu0 0.0
      %1543 = vmatpush1.msra.mxu0 0.0
      %1544 = vmatprep.subr.mxu0 0.0
      %1545 = vmatpush1.msra.mxu0 0.0
      %1546 = vmatprep.subr.mxu0 0.0
      %1547 = vmatpush1.msra.mxu0 0.0
      %1548 = vmatprep.subr.mxu0 0.0
      %1549 = vmatpush1.msra.mxu0 0.0
      %1550 = vmatprep.subr.mxu0 0.0
      %1551 = vmatpush1.msra.mxu0 0.0
      %1552 = vmatprep.subr.mxu0 0.0
      %1553 = vmatpush1.msra.mxu0 0.0
      %1554 = vmatprep.subr.mxu0 0.0
      %1555 = vmatpush1.msra.mxu0 0.0
      %1556 = vmatprep.subr.mxu0 0.0
      %1557 = vmatpush1.msra.mxu0 0.0
      %1558 = vmatprep.subr.mxu0 0.0
      %1559 = vmatpush1.msra.mxu0 0.0
      %1560 = vmatprep.subr.mxu0 0.0
      %1561 = vmatpush1.msra.mxu0 0.0
      %1562 = vmatprep.subr.mxu0 0.0
      %1563 = vmatpush1.msra.mxu0 0.0
      %1564 = vmatprep.subr.mxu0 0.0
      %1565 = vmatpush1.msra.mxu0 0.0
      %1566 = vmatprep.subr.mxu0 0.0
      %1567 = vmatpush1.msra.mxu0 0.0
      %1568 = vmatprep.subr.mxu0 0.0
      %1569 = vmatpush1.msra.mxu0 0.0
      %1570 = vmatprep.subr.mxu0 0.0
      %1571 = vmatpush1.msra.mxu0 0.0
      %1572 = vmatprep.subr.mxu0 0.0
      %1573 = vmatpush1.msra.mxu0 0.0
      %1574 = vmatprep.subr.mxu0 0.0
      %1575 = vmatpush1.msra.mxu0 0.0
      %1576 = vmatprep.subr.mxu0 0.0
      %1577 = vmatpush1.msra.mxu0 0.0
      %1578 = vmatprep.subr.mxu0 0.0
      %1579 = vmatpush1.msra.mxu0 0.0
      %1580 = vmatprep.subr.mxu0 0.0
      %1581 = vmatpush1.msra.mxu0 0.0
      %1582 = vmatprep.subr.mxu0 0.0
      %1583 = vmatpush1.msra.mxu0 0.0
      %1584 = vmatprep.subr.mxu0 0.0
      %1585 = vmatpush1.msra.mxu0 0.0
      %1586 = vmatprep.subr.mxu0 0.0
      %1587 = vmatpush1.msra.mxu0 0.0
      %1588 = vmatprep.subr.mxu0 0.0
      %1589 = vmatpush1.msra.mxu0 0.0
      %1590 = vmatprep.subr.mxu0 0.0
      %1591 = vmatpush1.msra.mxu0 0.0
      %1592 = vmatprep.subr.mxu0 0.0
      %1593 = vmatpush1.msra.mxu0 0.0
      %1594 = vmatprep.mubr.f32.mxu0 0.0
      %1595 = vmatmul.mubr.f32.gmra.mrb[0].mxu0 %v1528
      %v1596 = vpop.f32.mrb[0].mxu0
      %v1597 = vadd.f32 0.0, %v1596
      %v1598 = vpop.f32.mrb[0].mxu0
      %1599 = vdwg.mxu0
      %v1600 = vadd.f32 %v1361, %v1597
      %1601 = vrot.lane.b32.xlu0 %v870, 104
      %v1602 = vpop.permute.xlu0 %1601
      %1603 = vrot.lane.b32.xlu0 %v867, 72
      %v1604 = vpop.permute.xlu0 %1603
      %v1605 = vsel %vm886, %v1602, 0
      %v1607 = vsel %vm886, %v1604, 0
      %1609 = vmatprep.subr.mxu0 0.0
      %1610 = vmatpush1.xpose.msra.mxu0 %v1607
      %1611 = vmatprep.subr.mxu0 0.0
      %1612 = vmatpush1.xpose.msra.mxu0 0.0
      %1613 = vmatprep.subr.mxu0 0.0
      %1614 = vmatpush1.xpose.msra.mxu0 0.0
      %1615 = vmatprep.subr.mxu0 0.0
      %1616 = vmatpush1.xpose.msra.mxu0 0.0
      %1617 = vmatprep.subr.mxu0 0.0
      %1618 = vmatpush1.xpose.msra.mxu0 0.0
      %1619 = vmatprep.subr.mxu0 0.0
      %1620 = vmatpush1.xpose.msra.mxu0 0.0
      %1621 = vmatprep.subr.mxu0 0.0
      %1622 = vmatpush1.xpose.msra.mxu0 0.0
      %1623 = vmatprep.subr.mxu0 0.0
      %1624 = vmatpush1.xpose.msra.mxu0 0.0
      %1625 = vmatprep.subr.mxu0 0.0
      %1626 = vmatpush1.xpose.msra.mxu0 0.0
      %1627 = vmatprep.subr.mxu0 0.0
      %1628 = vmatpush1.xpose.msra.mxu0 0.0
      %1629 = vmatprep.subr.mxu0 0.0
      %1630 = vmatpush1.xpose.msra.mxu0 0.0
      %1631 = vmatprep.subr.mxu0 0.0
      %1632 = vmatpush1.xpose.msra.mxu0 0.0
      %1633 = vmatprep.subr.mxu0 0.0
      %1634 = vmatpush1.xpose.msra.mxu0 0.0
      %1635 = vmatprep.subr.mxu0 0.0
      %1636 = vmatpush1.xpose.msra.mxu0 0.0
      %1637 = vmatprep.subr.mxu0 0.0
      %1638 = vmatpush1.xpose.msra.mxu0 0.0
      %1639 = vmatprep.subr.mxu0 0.0
      %1640 = vmatpush1.xpose.msra.mxu0 0.0
      %1641 = vmatprep.subr.mxu0 0.0
      %1642 = vmatpush1.xpose.msra.mxu0 0.0
      %1643 = vmatprep.subr.mxu0 0.0
      %1644 = vmatpush1.xpose.msra.mxu0 0.0
      %1645 = vmatprep.subr.mxu0 0.0
      %1646 = vmatpush1.xpose.msra.mxu0 0.0
      %1647 = vmatprep.subr.mxu0 0.0
      %1648 = vmatpush1.xpose.msra.mxu0 0.0
      %1649 = vmatprep.subr.mxu0 0.0
      %1650 = vmatpush1.xpose.msra.mxu0 0.0
      %1651 = vmatprep.subr.mxu0 0.0
      %1652 = vmatpush1.xpose.msra.mxu0 0.0
      %1653 = vmatprep.subr.mxu0 0.0
      %1654 = vmatpush1.xpose.msra.mxu0 0.0
      %1655 = vmatprep.subr.mxu0 0.0
      %1656 = vmatpush1.xpose.msra.mxu0 0.0
      %1657 = vmatprep.subr.mxu0 0.0
      %1658 = vmatpush1.xpose.msra.mxu0 0.0
      %1659 = vmatprep.subr.mxu0 0.0
      %1660 = vmatpush1.xpose.msra.mxu0 0.0
      %1661 = vmatprep.subr.mxu0 0.0
      %1662 = vmatpush1.xpose.msra.mxu0 0.0
      %1663 = vmatprep.subr.mxu0 0.0
      %1664 = vmatpush1.xpose.msra.mxu0 0.0
      %1665 = vmatprep.subr.mxu0 0.0
      %1666 = vmatpush1.xpose.msra.mxu0 0.0
      %1667 = vmatprep.subr.mxu0 0.0
      %1668 = vmatpush1.xpose.msra.mxu0 0.0
      %1669 = vmatprep.subr.mxu0 0.0
      %1670 = vmatpush1.xpose.msra.mxu0 0.0
      %1671 = vmatprep.subr.mxu0 0.0
      %1672 = vmatpush1.xpose.msra.mxu0 0.0
      %1673 = vmatprep.mubr.f32.mxu0 0.0
      %1674 = vmatmul.mubr.f32.gmra.mrb[0].mxu0 %v1605
      %v1675 = vpop.f32.mrb[0].mxu0
      %v1676 = vadd.f32 %v754, %v1675
      %v1677 = vpop.f32.mrb[0].mxu0
      %1678 = vdwg.mxu0
      %v1679 = vsel %vm886, %v1676, -inf
      %1680 = vmax.xlane.f32.xlu0 %v1679
      %v1681 = vpop.xlane.xlu0 %1680
      %v1682 = vsub.f32 %v1676, %v1681
      %v1683 = vmul.f32 %v1682, 1.442695
      %v1684 = vpow.pop %v1683
      %v1685 = vsel %vm886, %v1684, 0.0
      %1686 = vadd.xlane.f32.xlu0 %v1685
      %v1687 = vpop.xlane.xlu0 %1686
      %v1688 = vrcp.pop %v1687
      %v1689 = vmul.f32 %v1684, %v1688
      %1690 = vrot.lane.b32.xlu0 %v867, 40
      %v1691 = vpop.permute.xlu0 %1690
      %v1694 = vsel %vm886, %v1689, 0
      %1696 = vmatprep.subr.mxu0 0.0
      %1697 = vmatpush1.msra.mxu0 %v1691
      %1698 = vmatprep.subr.mxu0 0.0
      %1699 = vmatpush1.msra.mxu0 0.0
      %1700 = vmatprep.subr.mxu0 0.0
      %1701 = vmatpush1.msra.mxu0 0.0
      %1702 = vmatprep.subr.mxu0 0.0
      %1703 = vmatpush1.msra.mxu0 0.0
      %1704 = vmatprep.subr.mxu0 0.0
      %1705 = vmatpush1.msra.mxu0 0.0
      %1706 = vmatprep.subr.mxu0 0.0
      %1707 = vmatpush1.msra.mxu0 0.0
      %1708 = vmatprep.subr.mxu0 0.0
      %1709 = vmatpush1.msra.mxu0 0.0
      %1710 = vmatprep.subr.mxu0 0.0
      %1711 = vmatpush1.msra.mxu0 0.0
      %1712 = vmatprep.subr.mxu0 0.0
      %1713 = vmatpush1.msra.mxu0 0.0
      %1714 = vmatprep.subr.mxu0 0.0
      %1715 = vmatpush1.msra.mxu0 0.0
      %1716 = vmatprep.subr.mxu0 0.0
      %1717 = vmatpush1.msra.mxu0 0.0
      %1718 = vmatprep.subr.mxu0 0.0
      %1719 = vmatpush1.msra.mxu0 0.0
      %1720 = vmatprep.subr.mxu0 0.0
      %1721 = vmatpush1.msra.mxu0 0.0
      %1722 = vmatprep.subr.mxu0 0.0
      %1723 = vmatpush1.msra.mxu0 0.0
      %1724 = vmatprep.subr.mxu0 0.0
      %1725 = vmatpush1.msra.mxu0 0.0
      %1726 = vmatprep.subr.mxu0 0.0
      %1727 = vmatpush1.msra.mxu0 0.0
      %1728 = vmatprep.subr.mxu0 0.0
      %1729 = vmatpush1.msra.mxu0 0.0
      %1730 = vmatprep.subr.mxu0 0.0
      %1731 = vmatpush1.msra.mxu0 0.0
      %1732 = vmatprep.subr.mxu0 0.0
      %1733 = vmatpush1.msra.mxu0 0.0
      %1734 = vmatprep.subr.mxu0 0.0
      %1735 = vmatpush1.msra.mxu0 0.0
      %1736 = vmatprep.subr.mxu0 0.0
      %1737 = vmatpush1.msra.mxu0 0.0
      %1738 = vmatprep.subr.mxu0 0.0
      %1739 = vmatpush1.msra.mxu0 0.0
      %1740 = vmatprep.subr.mxu0 0.0
      %1741 = vmatpush1.msra.mxu0 0.0
      %1742 = vmatprep.subr.mxu0 0.0
      %1743 = vmatpush1.msra.mxu0 0.0
      %1744 = vmatprep.subr.mxu0 0.0
      %1745 = vmatpush1.msra.mxu0 0.0
      %1746 = vmatprep.subr.mxu0 0.0
      %1747 = vmatpush1.msra.mxu0 0.0
      %1748 = vmatprep.subr.mxu0 0.0
      %1749 = vmatpush1.msra.mxu0 0.0
      %1750 = vmatprep.subr.mxu0 0.0
      %1751 = vmatpush1.msra.mxu0 0.0
      %1752 = vmatprep.subr.mxu0 0.0
      %1753 = vmatpush1.msra.mxu0 0.0
      %1754 = vmatprep.subr.mxu0 0.0
      %1755 = vmatpush1.msra.mxu0 0.0
      %1756 = vmatprep.subr.mxu0 0.0
      %1757 = vmatpush1.msra.mxu0 0.0
      %1758 = vmatprep.subr.mxu0 0.0
      %1759 = vmatpush1.msra.mxu0 0.0
      %1760 = vmatprep.mubr.f32.mxu0 0.0
      %1761 = vmatmul.mubr.f32.gmra.mrb[0].mxu0 %v1694
      %v1762 = vpop.f32.mrb[0].mxu0
      %v1763 = vadd.f32 0.0, %v1762
      %v1764 = vpop.f32.mrb[0].mxu0
      %1765 = vdwg.mxu0
      %v1767 = vsel %vm886, %v1763, 0
      %1769 = vmatprep.subr.mxu0 0.0
      %1770 = vmatpush1.msra.mxu0 %v874
      %1771 = vmatprep.subr.mxu0 0.0
      %1772 = vmatpush1.msra.mxu0 0.0
      %1773 = vmatprep.subr.mxu0 0.0
      %1774 = vmatpush1.msra.mxu0 0.0
      %1775 = vmatprep.subr.mxu0 0.0
      %1776 = vmatpush1.msra.mxu0 0.0
      %1777 = vmatprep.subr.mxu0 0.0
      %1778 = vmatpush1.msra.mxu0 0.0
      %1779 = vmatprep.subr.mxu0 0.0
      %1780 = vmatpush1.msra.mxu0 0.0
      %1781 = vmatprep.subr.mxu0 0.0
      %1782 = vmatpush1.msra.mxu0 0.0
      %1783 = vmatprep.subr.mxu0 0.0
      %1784 = vmatpush1.msra.mxu0 0.0
      %1785 = vmatprep.subr.mxu0 0.0
      %1786 = vmatpush1.msra.mxu0 0.0
      %1787 = vmatprep.subr.mxu0 0.0
      %1788 = vmatpush1.msra.mxu0 0.0
      %1789 = vmatprep.subr.mxu0 0.0
      %1790 = vmatpush1.msra.mxu0 0.0
      %1791 = vmatprep.subr.mxu0 0.0
      %1792 = vmatpush1.msra.mxu0 0.0
      %1793 = vmatprep.subr.mxu0 0.0
      %1794 = vmatpush1.msra.mxu0 0.0
      %1795 = vmatprep.subr.mxu0 0.0
      %1796 = vmatpush1.msra.mxu0 0.0
      %1797 = vmatprep.subr.mxu0 0.0
      %1798 = vmatpush1.msra.mxu0 0.0
      %1799 = vmatprep.subr.mxu0 0.0
      %1800 = vmatpush1.msra.mxu0 0.0
      %1801 = vmatprep.subr.mxu0 0.0
      %1802 = vmatpush1.msra.mxu0 0.0
      %1803 = vmatprep.subr.mxu0 0.0
      %1804 = vmatpush1.msra.mxu0 0.0
      %1805 = vmatprep.subr.mxu0 0.0
      %1806 = vmatpush1.msra.mxu0 0.0
      %1807 = vmatprep.subr.mxu0 0.0
      %1808 = vmatpush1.msra.mxu0 0.0
      %1809 = vmatprep.subr.mxu0 0.0
      %1810 = vmatpush1.msra.mxu0 0.0
      %1811 = vmatprep.subr.mxu0 0.0
      %1812 = vmatpush1.msra.mxu0 0.0
      %1813 = vmatprep.subr.mxu0 0.0
      %1814 = vmatpush1.msra.mxu0 0.0
      %1815 = vmatprep.subr.mxu0 0.0
      %1816 = vmatpush1.msra.mxu0 0.0
      %1817 = vmatprep.subr.mxu0 0.0
      %1818 = vmatpush1.msra.mxu0 0.0
      %1819 = vmatprep.subr.mxu0 0.0
      %1820 = vmatpush1.msra.mxu0 0.0
      %1821 = vmatprep.subr.mxu0 0.0
      %1822 = vmatpush1.msra.mxu0 0.0
      %1823 = vmatprep.subr.mxu0 0.0
      %1824 = vmatpush1.msra.mxu0 0.0
      %1825 = vmatprep.subr.mxu0 0.0
      %1826 = vmatpush1.msra.mxu0 0.0
      %1827 = vmatprep.subr.mxu0 0.0
      %1828 = vmatpush1.msra.mxu0 0.0
      %1829 = vmatprep.subr.mxu0 0.0
      %1830 = vmatpush1.msra.mxu0 0.0
      %1831 = vmatprep.subr.mxu0 0.0
      %1832 = vmatpush1.msra.mxu0 0.0
      %1833 = vmatprep.mubr.f32.mxu0 0.0
      %1834 = vmatmul.mubr.f32.gmra.mrb[0].mxu0 %v1767
      %v1835 = vpop.f32.mrb[0].mxu0
      %v1836 = vadd.f32 0.0, %v1835
      %v1837 = vpop.f32.mrb[0].mxu0
      %1838 = vdwg.mxu0
      %v1839 = vadd.f32 %v1600, %v1836
      %v1840 = vadd.f32 %v737, %v1839
      %v1841 = vld [vmem:[%s9] sm:$0x1]
      %v1842 = vld [vmem:[%s10] sm:$0x1]
      %v1843 = vsel %vm757, %v1840, 0.0
      %1844 = vadd.xlane.f32.xlu0 %v1843
      %v1845 = vpop.xlane.xlu0 %1844
      %v1846 = vmul.f32 %v1845, %v761
      %v1847 = vsub.f32 %v1840, %v1846
      %v1848 = vmul.f32 %v1847, %v1847
      %v1849 = vsel %vm757, %v1848, 0.0
      %1850 = vadd.xlane.f32.xlu0 %v1849
      %v1851 = vpop.xlane.xlu0 %1850
      %v1852 = vmul.f32 %v1851, %v761
      %v1853 = vadd.f32 %v1852, 1e-05
      %v1854 = vrsqrt.pop %v1853
      %v1855 = vmul.f32 %v1847, %v1854
      %v1857 = vlaneseq
      %v1858 = vshrl.u32 %v1857, 7
      %v1859 = vsub.s32 0, %v1858
      %v1860 = vrot.slane %v1841, %v1859
      %v1862 = vmul.f32 %v1855, %v1860
      %v1864 = vlaneseq
      %v1865 = vshrl.u32 %v1864, 7
      %v1866 = vsub.s32 0, %v1865
      %v1867 = vrot.slane %v1842, %v1866
      %v1869 = vadd.f32 %v1862, %v1867
      %v1870 = vld [vmem:[%s11] sm:$0xff]
      %v1871 = vld [vmem:[%s11 + $0x8] sm:$0xff]
      %v1872 = vld [vmem:[%s11 + $0x10] sm:$0xff]
      %v1873 = vld [vmem:[%s11 + $0x18] sm:$0xff]
      %v1874 = vld [vmem:[%s12] sm:$0x1]
      %v1876 = vlaneseq
      %v1877 = vshrl.u32 %v1876, 7
      %v1878 = vsub.s32 0, %v1877
      %v1879 = vrot.slane %v1874, %v1878
      %v1882 = vsel %vm757, %v1869, 0
      %1884 = vmatprep.subr.mxu0 0.0
      %1885 = vmatpush1.msra.mxu0 %v1870
      %1886 = vmatprep.subr.mxu0 0.0
      %1887 = vmatpush1.msra.mxu0 %v1871
      %1888 = vmatprep.subr.mxu0 0.0
      %1889 = vmatpush1.msra.mxu0 %v1872
      %1890 = vmatprep.subr.mxu0 0.0
      %1891 = vmatpush1.msra.mxu0 %v1873
      %1892 = vmatprep.subr.mxu0 0.0
      %1893 = vmatpush1.msra.mxu0 0.0
      %1894 = vmatprep.subr.mxu0 0.0
      %1895 = vmatpush1.msra.mxu0 0.0
      %1896 = vmatprep.subr.mxu0 0.0
      %1897 = vmatpush1.msra.mxu0 0.0
      %1898 = vmatprep.subr.mxu0 0.0
      %1899 = vmatpush1.msra.mxu0 0.0
      %1900 = vmatprep.subr.mxu0 0.0
      %1901 = vmatpush1.msra.mxu0 0.0
      %1902 = vmatprep.subr.mxu0 0.0
      %1903 = vmatpush1.msra.mxu0 0.0
      %1904 = vmatprep.subr.mxu0 0.0
      %1905 = vmatpush1.msra.mxu0 0.0
      %1906 = vmatprep.subr.mxu0 0.0
      %1907 = vmatpush1.msra.mxu0 0.0
      %1908 = vmatprep.subr.mxu0 0.0
      %1909 = vmatpush1.msra.mxu0 0.0
      %1910 = vmatprep.subr.mxu0 0.0
      %1911 = vmatpush1.msra.mxu0 0.0
      %1912 = vmatprep.subr.mxu0 0.0
      %1913 = vmatpush1.msra.mxu0 0.0
      %1914 = vmatprep.subr.mxu0 0.0
      %1915 = vmatpush1.msra.mxu0 0.0
      %1916 = vmatprep.subr.mxu0 0.0
      %1917 = vmatpush1.msra.mxu0 0.0
      %1918 = vmatprep.subr.mxu0 0.0
      %1919 = vmatpush1.msra.mxu0 0.0
      %1920 = vmatprep.subr.mxu0 0.0
      %1921 = vmatpush1.msra.mxu0 0.0
      %1922 = vmatprep.subr.mxu0 0.0
      %1923 = vmatpush1.msra.mxu0 0.0
      %1924 = vmatprep.subr.mxu0 0.0
      %1925 = vmatpush1.msra.mxu0 0.0
      %1926 = vmatprep.subr.mxu0 0.0
      %1927 = vmatpush1.msra.mxu0 0.0
      %1928 = vmatprep.subr.mxu0 0.0
      %1929 = vmatpush1.msra.mxu0 0.0
      %1930 = vmatprep.subr.mxu0 0.0
      %1931 = vmatpush1.msra.mxu0 0.0
      %1932 = vmatprep.subr.mxu0 0.0
      %1933 = vmatpush1.msra.mxu0 0.0
      %1934 = vmatprep.subr.mxu0 0.0
      %1935 = vmatpush1.msra.mxu0 0.0
      %1936 = vmatprep.subr.mxu0 0.0
      %1937 = vmatpush1.msra.mxu0 0.0
      %1938 = vmatprep.subr.mxu0 0.0
      %1939 = vmatpush1.msra.mxu0 0.0
      %1940 = vmatprep.subr.mxu0 0.0
      %1941 = vmatpush1.msra.mxu0 0.0
      %1942 = vmatprep.subr.mxu0 0.0
      %1943 = vmatpush1.msra.mxu0 0.0
      %1944 = vmatprep.subr.mxu0 0.0
      %1945 = vmatpush1.msra.mxu0 0.0
      %1946 = vmatprep.subr.mxu0 0.0
      %1947 = vmatpush1.msra.mxu0 0.0
      %1948 = vmatprep.mubr.f32.mxu0 0.0
      %1949 = vmatmul.mubr.f32.gmra.mrb[0].mxu0 %v1882
      %v1950 = vpop.f32.mrb[0].mxu0
      %v1951 = vadd.f32 %v1879, %v1950
      %v1952 = vpop.f32.mrb[0].mxu0
      %1953 = vdwg.mxu0
      %v1954 = vmul.f32 %v1951, 0.35355338
      %v1955 = vld [vmem:[%s13] sm:$0xff]
      %v1956 = vld [vmem:[%s13 + $0x8] sm:$0xff]
      %v1957 = vld [vmem:[%s13 + $0x10] sm:$0xff]
      %v1958 = vld [vmem:[%s13 + $0x18] sm:$0xff]
      %v1959 = vld [vmem:[%s14] sm:$0x1]
      %v1961 = vlaneseq
      %v1962 = vshrl.u32 %v1961, 7
      %v1963 = vsub.s32 0, %v1962
      %v1964 = vrot.slane %v1959, %v1963
      %v1967 = vsel %vm757, %v738, 0
      %1969 = vmatprep.subr.mxu0 0.0
      %1970 = vmatpush1.msra.mxu0 %v1955
      %1971 = vmatprep.subr.mxu0 0.0
      %1972 = vmatpush1.msra.mxu0 %v1956
      %1973 = vmatprep.subr.mxu0 0.0
      %1974 = vmatpush1.msra.mxu0 %v1957
      %1975 = vmatprep.subr.mxu0 0.0
      %1976 = vmatpush1.msra.mxu0 %v1958
      %1977 = vmatprep.subr.mxu0 0.0
      %1978 = vmatpush1.msra.mxu0 0.0
      %1979 = vmatprep.subr.mxu0 0.0
      %1980 = vmatpush1.msra.mxu0 0.0
      %1981 = vmatprep.subr.mxu0 0.0
      %1982 = vmatpush1.msra.mxu0 0.0
      %1983 = vmatprep.subr.mxu0 0.0
      %1984 = vmatpush1.msra.mxu0 0.0
      %1985 = vmatprep.subr.mxu0 0.0
      %1986 = vmatpush1.msra.mxu0 0.0
      %1987 = vmatprep.subr.mxu0 0.0
      %1988 = vmatpush1.msra.mxu0 0.0
      %1989 = vmatprep.subr.mxu0 0.0
      %1990 = vmatpush1.msra.mxu0 0.0
      %1991 = vmatprep.subr.mxu0 0.0
      %1992 = vmatpush1.msra.mxu0 0.0
      %1993 = vmatprep.subr.mxu0 0.0
      %1994 = vmatpush1.msra.mxu0 0.0
      %1995 = vmatprep.subr.mxu0 0.0
      %1996 = vmatpush1.msra.mxu0 0.0
      %1997 = vmatprep.subr.mxu0 0.0
      %1998 = vmatpush1.msra.mxu0 0.0
      %1999 = vmatprep.subr.mxu0 0.0
      %2000 = vmatpush1.msra.mxu0 0.0
      %2001 = vmatprep.subr.mxu0 0.0
      %2002 = vmatpush1.msra.mxu0 0.0
      %2003 = vmatprep.subr.mxu0 0.0
      %2004 = vmatpush1.msra.mxu0 0.0
      %2005 = vmatprep.subr.mxu0 0.0
      %2006 = vmatpush1.msra.mxu0 0.0
      %2007 = vmatprep.subr.mxu0 0.0
      %2008 = vmatpush1.msra.mxu0 0.0
      %2009 = vmatprep.subr.mxu0 0.0
      %2010 = vmatpush1.msra.mxu0 0.0
      %2011 = vmatprep.subr.mxu0 0.0
      %2012 = vmatpush1.msra.mxu0 0.0
      %2013 = vmatprep.subr.mxu0 0.0
      %2014 = vmatpush1.msra.mxu0 0.0
      %2015 = vmatprep.subr.mxu0 0.0
      %2016 = vmatpush1.msra.mxu0 0.0
      %2017 = vmatprep.subr.mxu0 0.0
      %2018 = vmatpush1.msra.mxu0 0.0
      %2019 = vmatprep.subr.mxu0 0.0
      %2020 = vmatpush1.msra.mxu0 0.0
      %2021 = vmatprep.subr.mxu0 0.0
      %2022 = vmatpush1.msra.mxu0 0.0
      %2023 = vmatprep.subr.mxu0 0.0
      %2024 = vmatpush1.msra.mxu0 0.0
      %2025 = vmatprep.subr.mxu0 0.0
      %2026 = vmatpush1.msra.mxu0 0.0
      %2027 = vmatprep.subr.mxu0 0.0
      %2028 = vmatpush1.msra.mxu0 0.0
      %2029 = vmatprep.subr.mxu0 0.0
      %2030 = vmatpush1.msra.mxu0 0.0
      %2031 = vmatprep.subr.mxu0 0.0
      %2032 = vmatpush1.msra.mxu0 0.0
      %2033 = vmatprep.mubr.f32.mxu0 0.0
      %2034 = vmatmul.mubr.f32.gmra.mrb[0].mxu0 %v1967
      %v2035 = vpop.f32.mrb[0].mxu0
      %v2036 = vadd.f32 %v1964, %v2035
      %v2037 = vpop.f32.mrb[0].mxu0
      %2038 = vdwg.mxu0
      %v2039 = vld [vmem:[%s15] sm:$0xff]
      %v2040 = vld [vmem:[%s15 + $0x8] sm:$0xff]
      %v2041 = vld [vmem:[%s15 + $0x10] sm:$0xff]
      %v2042 = vld [vmem:[%s15 + $0x18] sm:$0xff]
      %v2043 = vld [vmem:[%s16] sm:$0x1]
      %v2045 = vlaneseq
      %v2046 = vshrl.u32 %v2045, 7
      %v2047 = vsub.s32 0, %v2046
      %v2048 = vrot.slane %v2043, %v2047
      %v2050 = vadd.f32 %v2048, 0.0
      %v2052 = vsel %vm886, %v1954, 0
      %v2055 = vsel %vm886, %v2036, 0
      %2057 = vmatprep.subr.mxu0 0.0
      %2058 = vmatpush1.xpose.msra.mxu0 %v2055
      %2059 = vmatprep.subr.mxu0 0.0
      %2060 = vmatpush1.xpose.msra.mxu0 0.0
      %2061 = vmatprep.subr.mxu0 0.0
      %2062 = vmatpush1.xpose.msra.mxu0 0.0
      %2063 = vmatprep.subr.mxu0 0.0
      %2064 = vmatpush1.xpose.msra.mxu0 0.0
      %2065 = vmatprep.subr.mxu0 0.0
      %2066 = vmatpush1.xpose.msra.mxu0 0.0
      %2067 = vmatprep.subr.mxu0 0.0
      %2068 = vmatpush1.xpose.msra.mxu0 0.0
      %2069 = vmatprep.subr.mxu0 0.0
      %2070 = vmatpush1.xpose.msra.mxu0 0.0
      %2071 = vmatprep.subr.mxu0 0.0
      %2072 = vmatpush1.xpose.msra.mxu0 0.0
      %2073 = vmatprep.subr.mxu0 0.0
      %2074 = vmatpush1.xpose.msra.mxu0 0.0
      %2075 = vmatprep.subr.mxu0 0.0
      %2076 = vmatpush1.xpose.msra.mxu0 0.0
      %2077 = vmatprep.subr.mxu0 0.0
      %2078 = vmatpush1.xpose.msra.mxu0 0.0
      %2079 = vmatprep.subr.mxu0 0.0
      %2080 = vmatpush1.xpose.msra.mxu0 0.0
      %2081 = vmatprep.subr.mxu0 0.0
      %2082 = vmatpush1.xpose.msra.mxu0 0.0
      %2083 = vmatprep.subr.mxu0 0.0
      %2084 = vmatpush1.xpose.msra.mxu0 0.0
      %2085 = vmatprep.subr.mxu0 0.0
      %2086 = vmatpush1.xpose.msra.mxu0 0.0
      %2087 = vmatprep.subr.mxu0 0.0
      %2088 = vmatpush1.xpose.msra.mxu0 0.0
      %2089 = vmatprep.subr.mxu0 0.0
      %2090 = vmatpush1.xpose.msra.mxu0 0.0
      %2091 = vmatprep.subr.mxu0 0.0
      %2092 = vmatpush1.xpose.msra.mxu0 0.0
      %2093 = vmatprep.subr.mxu0 0.0
      %2094 = vmatpush1.xpose.msra.mxu0 0.0
      %2095 = vmatprep.subr.mxu0 0.0
      %2096 = vmatpush1.xpose.msra.mxu0 0.0
      %2097 = vmatprep.subr.mxu0 0.0
      %2098 = vmatpush1.xpose.msra.mxu0 0.0
      %2099 = vmatprep.subr.mxu0 0.0
      %2100 = vmatpush1.xpose.msra.mxu0 0.0
      %2101 = vmatprep.subr.mxu0 0.0
      %2102 = vmatpush1.xpose.msra.mxu0 0.0
      %2103 = vmatprep.subr.mxu0 0.0
      %2104 = vmatpush1.xpose.msra.mxu0 0.0
      %2105 = vmatprep.subr.mxu0 0.0
      %2106 = vmatpush1.xpose.msra.mxu0 0.0
      %2107 = vmatprep.subr.mxu0 0.0
      %2108 = vmatpush1.xpose.msra.mxu0 0.0
      %2109 = vmatprep.subr.mxu0 0.0
      %2110 = vmatpush1.xpose.msra.mxu0 0.0
      %2111 = vmatprep.subr.mxu0 0.0
      %2112 = vmatpush1.xpose.msra.mxu0 0.0
      %2113 = vmatprep.subr.mxu0 0.0
      %2114 = vmatpush1.xpose.msra.mxu0 0.0
      %2115 = vmatprep.subr.mxu0 0.0
      %2116 = vmatpush1.xpose.msra.mxu0 0.0
      %2117 = vmatprep.subr.mxu0 0.0
      %2118 = vmatpush1.xpose.msra.mxu0 0.0
      %2119 = vmatprep.subr.mxu0 0.0
      %2120 = vmatpush1.xpose.msra.mxu0 0.0
      %2121 = vmatprep.mubr.f32.mxu0 0.0
      %2122 = vmatmul.mubr.f32.gmra.mrb[0].mxu0 %v2052
      %v2123 = vpop.f32.mrb[0].mxu0
      %v2124 = vadd.f32 0.0, %v2123
      %v2125 = vpop.f32.mrb[0].mxu0
      %2126 = vdwg.mxu0
      %v2127 = vsel %vm886, %v2124, -inf
      %2128 = vmax.xlane.f32.xlu0 %v2127
      %v2129 = vpop.xlane.xlu0 %2128
      %v2130 = vsub.f32 %v2124, %v2129
      %v2131 = vmul.f32 %v2130, 1.442695
      %v2132 = vpow.pop %v2131
      %v2133 = vsel %vm886, %v2132, 0.0
      %2134 = vadd.xlane.f32.xlu0 %v2133
      %v2135 = vpop.xlane.xlu0 %2134
      %v2136 = vrcp.pop %v2135
      %v2137 = vmul.f32 %v2132, %v2136
      %2138 = vrot.lane.b32.xlu0 %v2036, 96
      %v2139 = vpop.permute.xlu0 %2138
      %v2142 = vsel %vm886, %v2137, 0
      %2144 = vmatprep.subr.mxu0 0.0
      %2145 = vmatpush1.msra.mxu0 %v2139
      %2146 = vmatprep.subr.mxu0 0.0
      %2147 = vmatpush1.msra.mxu0 0.0
      %2148 = vmatprep.subr.mxu0 0.0
      %2149 = vmatpush1.msra.mxu0 0.0
      %2150 = vmatprep.subr.mxu0 0.0
      %2151 = vmatpush1.msra.mxu0 0.0
      %2152 = vmatprep.subr.mxu0 0.0
      %2153 = vmatpush1.msra.mxu0 0.0
      %2154 = vmatprep.subr.mxu0 0.0
      %2155 = vmatpush1.msra.mxu0 0.0
      %2156 = vmatprep.subr.mxu0 0.0
      %2157 = vmatpush1.msra.mxu0 0.0
      %2158 = vmatprep.subr.mxu0 0.0
      %2159 = vmatpush1.msra.mxu0 0.0
      %2160 = vmatprep.subr.mxu0 0.0
      %2161 = vmatpush1.msra.mxu0 0.0
      %2162 = vmatprep.subr.mxu0 0.0
      %2163 = vmatpush1.msra.mxu0 0.0
      %2164 = vmatprep.subr.mxu0 0.0
      %2165 = vmatpush1.msra.mxu0 0.0
      %2166 = vmatprep.subr.mxu0 0.0
      %2167 = vmatpush1.msra.mxu0 0.0
      %2168 = vmatprep.subr.mxu0 0.0
      %2169 = vmatpush1.msra.mxu0 0.0
      %2170 = vmatprep.subr.mxu0 0.0
      %2171 = vmatpush1.msra.mxu0 0.0
      %2172 = vmatprep.subr.mxu0 0.0
      %2173 = vmatpush1.msra.mxu0 0.0
      %2174 = vmatprep.subr.mxu0 0.0
      %2175 = vmatpush1.msra.mxu0 0.0
      %2176 = vmatprep.subr.mxu0 0.0
      %2177 = vmatpush1.msra.mxu0 0.0
      %2178 = vmatprep.subr.mxu0 0.0
      %2179 = vmatpush1.msra.mxu0 0.0
      %2180 = vmatprep.subr.mxu0 0.0
      %2181 = vmatpush1.msra.mxu0 0.0
      %2182 = vmatprep.subr.mxu0 0.0
      %2183 = vmatpush1.msra.mxu0 0.0
      %2184 = vmatprep.subr.mxu0 0.0
      %2185 = vmatpush1.msra.mxu0 0.0
      %2186 = vmatprep.subr.mxu0 0.0
      %2187 = vmatpush1.msra.mxu0 0.0
      %2188 = vmatprep.subr.mxu0 0.0
      %2189 = vmatpush1.msra.mxu0 0.0
      %2190 = vmatprep.subr.mxu0 0.0
      %2191 = vmatpush1.msra.mxu0 0.0
      %2192 = vmatprep.subr.mxu0 0.0
      %2193 = vmatpush1.msra.mxu0 0.0
      %2194 = vmatprep.subr.mxu0 0.0
      %2195 = vmatpush1.msra.mxu0 0.0
      %2196 = vmatprep.subr.mxu0 0.0
      %2197 = vmatpush1.msra.mxu0 0.0
      %2198 = vmatprep.subr.mxu0 0.0
      %2199 = vmatpush1.msra.mxu0 0.0
      %2200 = vmatprep.subr.mxu0 0.0
      %2201 = vmatpush1.msra.mxu0 0.0
      %2202 = vmatprep.subr.mxu0 0.0
      %2203 = vmatpush1.msra.mxu0 0.0
      %2204 = vmatprep.subr.mxu0 0.0
      %2205 = vmatpush1.msra.mxu0 0.0
      %2206 = vmatprep.subr.mxu0 0.0
      %2207 = vmatpush1.msra.mxu0 0.0
      %2208 = vmatprep.mubr.f32.mxu0 0.0
      %2209 = vmatmul.mubr.f32.gmra.mrb[0].mxu0 %v2142
      %v2210 = vpop.f32.mrb[0].mxu0
      %v2211 = vadd.f32 0.0, %v2210
      %v2212 = vpop.f32.mrb[0].mxu0
      %2213 = vdwg.mxu0
      %v2215 = vsel %vm886, %v2211, 0
      %2217 = vmatprep.subr.mxu0 0.0
      %2218 = vmatpush1.msra.mxu0 %v2039
      %2219 = vmatprep.subr.mxu0 0.0
      %2220 = vmatpush1.msra.mxu0 0.0
      %2221 = vmatprep.subr.mxu0 0.0
      %2222 = vmatpush1.msra.mxu0 0.0
      %2223 = vmatprep.subr.mxu0 0.0
      %2224 = vmatpush1.msra.mxu0 0.0
      %2225 = vmatprep.subr.mxu0 0.0
      %2226 = vmatpush1.msra.mxu0 0.0
      %2227 = vmatprep.subr.mxu0 0.0
      %2228 = vmatpush1.msra.mxu0 0.0
      %2229 = vmatprep.subr.mxu0 0.0
      %2230 = vmatpush1.msra.mxu0 0.0
      %2231 = vmatprep.subr.mxu0 0.0
      %2232 = vmatpush1.msra.mxu0 0.0
      %2233 = vmatprep.subr.mxu0 0.0
      %2234 = vmatpush1.msra.mxu0 0.0
      %2235 = vmatprep.subr.mxu0 0.0
      %2236 = vmatpush1.msra.mxu0 0.0
      %2237 = vmatprep.subr.mxu0 0.0
      %2238 = vmatpush1.msra.mxu0 0.0
      %2239 = vmatprep.subr.mxu0 0.0
      %2240 = vmatpush1.msra.mxu0 0.0
      %2241 = vmatprep.subr.mxu0 0.0
      %2242 = vmatpush1.msra.mxu0 0.0
      %2243 = vmatprep.subr.mxu0 0.0
      %2244 = vmatpush1.msra.mxu0 0.0
      %2245 = vmatprep.subr.mxu0 0.0
      %2246 = vmatpush1.msra.mxu0 0.0
      %2247 = vmatprep.subr.mxu0 0.0
      %2248 = vmatpush1.msra.mxu0 0.0
      %2249 = vmatprep.subr.mxu0 0.0
      %2250 = vmatpush1.msra.mxu0 0.0
      %2251 = vmatprep.subr.mxu0 0.0
      %2252 = vmatpush1.msra.mxu0 0.0
      %2253 = vmatprep.subr.mxu0 0.0
      %2254 = vmatpush1.msra.mxu0 0.0
      %2255 = vmatprep.subr.mxu0 0.0
      %2256 = vmatpush1.msra.mxu0 0.0
      %2257 = vmatprep.subr.mxu0 0.0
      %2258 = vmatpush1.msra.mxu0 0.0
      %2259 = vmatprep.subr.mxu0 0.0
      %2260 = vmatpush1.msra.mxu0 0.0
      %2261 = vmatprep.subr.mxu0 0.0
      %2262 = vmatpush1.msra.mxu0 0.0
      %2263 = vmatprep.subr.mxu0 0.0
      %2264 = vmatpush1.msra.mxu0 0.0
      %2265 = vmatprep.subr.mxu0 0.0
      %2266 = vmatpush1.msra.mxu0 0.0
      %2267 = vmatprep.subr.mxu0 0.0
      %2268 = vmatpush1.msra.mxu0 0.0
      %2269 = vmatprep.subr.mxu0 0.0
      %2270 = vmatpush1.msra.mxu0 0.0
      %2271 = vmatprep.subr.mxu0 0.0
      %2272 = vmatpush1.msra.mxu0 0.0
      %2273 = vmatprep.subr.mxu0 0.0
      %2274 = vmatpush1.msra.mxu0 0.0
      %2275 = vmatprep.subr.mxu0 0.0
      %2276 = vmatpush1.msra.mxu0 0.0
      %2277 = vmatprep.subr.mxu0 0.0
      %2278 = vmatpush1.msra.mxu0 0.0
      %2279 = vmatprep.subr.mxu0 0.0
      %2280 = vmatpush1.msra.mxu0 0.0
      %2281 = vmatprep.mubr.f32.mxu0 0.0
      %2282 = vmatmul.mubr.f32.gmra.mrb[0].mxu0 %v2215
      %v2283 = vpop.f32.mrb[0].mxu0
      %v2284 = vadd.f32 0.0, %v2283
      %v2285 = vpop.f32.mrb[0].mxu0
      %2286 = vdwg.mxu0
      %v2287 = vadd.f32 %v2050, %v2284
      %2288 = vrot.lane.b32.xlu0 %v1954, 120
      %v2289 = vpop.permute.xlu0 %2288
      %2290 = vrot.lane.b32.xlu0 %v2036, 120
      %v2291 = vpop.permute.xlu0 %2290
      %v2292 = vsel %vm886, %v2289, 0
      %v2294 = vsel %vm886, %v2291, 0
      %2296 = vmatprep.subr.mxu0 0.0
      %2297 = vmatpush1.xpose.msra.mxu0 %v2294
      %2298 = vmatprep.subr.mxu0 0.0
      %2299 = vmatpush1.xpose.msra.mxu0 0.0
      %2300 = vmatprep.subr.mxu0 0.0
      %2301 = vmatpush1.xpose.msra.mxu0 0.0
      %2302 = vmatprep.subr.mxu0 0.0
      %2303 = vmatpush1.xpose.msra.mxu0 0.0
      %2304 = vmatprep.subr.mxu0 0.0
      %2305 = vmatpush1.xpose.msra.mxu0 0.0
      %2306 = vmatprep.subr.mxu0 0.0
      %2307 = vmatpush1.xpose.msra.mxu0 0.0
      %2308 = vmatprep.subr.mxu0 0.0
      %2309 = vmatpush1.xpose.msra.mxu0 0.0
      %2310 = vmatprep.subr.mxu0 0.0
      %2311 = vmatpush1.xpose.msra.mxu0 0.0
      %2312 = vmatprep.subr.mxu0 0.0
      %2313 = vmatpush1.xpose.msra.mxu0 0.0
      %2314 = vmatprep.subr.mxu0 0.0
      %2315 = vmatpush1.xpose.msra.mxu0 0.0
      %2316 = vmatprep.subr.mxu0 0.0
      %2317 = vmatpush1.xpose.msra.mxu0 0.0
      %2318 = vmatprep.subr.mxu0 0.0
      %2319 = vmatpush1.xpose.msra.mxu0 0.0
      %2320 = vmatprep.subr.mxu0 0.0
      %2321 = vmatpush1.xpose.msra.mxu0 0.0
      %2322 = vmatprep.subr.mxu0 0.0
      %2323 = vmatpush1.xpose.msra.mxu0 0.0
      %2324 = vmatprep.subr.mxu0 0.0
      %2325 = vmatpush1.xpose.msra.mxu0 0.0
      %2326 = vmatprep.subr.mxu0 0.0
      %2327 = vmatpush1.xpose.msra.mxu0 0.0
      %2328 = vmatprep.subr.mxu0 0.0
      %2329 = vmatpush1.xpose.msra.mxu0 0.0
      %2330 = vmatprep.subr.mxu0 0.0
      %2331 = vmatpush1.xpose.msra.mxu0 0.0
      %2332 = vmatprep.subr.mxu0 0.0
      %2333 = vmatpush1.xpose.msra.mxu0 0.0
      %2334 = vmatprep.subr.mxu0 0.0
      %2335 = vmatpush1.xpose.msra.mxu0 0.0
      %2336 = vmatprep.subr.mxu0 0.0
      %2337 = vmatpush1.xpose.msra.mxu0 0.0
      %2338 = vmatprep.subr.mxu0 0.0
      %2339 = vmatpush1.xpose.msra.mxu0 0.0
      %2340 = vmatprep.subr.mxu0 0.0
      %2341 = vmatpush1.xpose.msra.mxu0 0.0
      %2342 = vmatprep.subr.mxu0 0.0
      %2343 = vmatpush1.xpose.msra.mxu0 0.0
      %2344 = vmatprep.subr.mxu0 0.0
      %2345 = vmatpush1.xpose.msra.mxu0 0.0
      %2346 = vmatprep.subr.mxu0 0.0
      %2347 = vmatpush1.xpose.msra.mxu0 0.0
      %2348 = vmatprep.subr.mxu0 0.0
      %2349 = vmatpush1.xpose.msra.mxu0 0.0
      %2350 = vmatprep.subr.mxu0 0.0
      %2351 = vmatpush1.xpose.msra.mxu0 0.0
      %2352 = vmatprep.subr.mxu0 0.0
      %2353 = vmatpush1.xpose.msra.mxu0 0.0
      %2354 = vmatprep.subr.mxu0 0.0
      %2355 = vmatpush1.xpose.msra.mxu0 0.0
      %2356 = vmatprep.subr.mxu0 0.0
      %2357 = vmatpush1.xpose.msra.mxu0 0.0
      %2358 = vmatprep.subr.mxu0 0.0
      %2359 = vmatpush1.xpose.msra.mxu0 0.0
      %2360 = vmatprep.mubr.f32.mxu0 0.0
      %2361 = vmatmul.mubr.f32.gmra.mrb[0].mxu0 %v2292
      %v2362 = vpop.f32.mrb[0].mxu0
      %v2363 = vadd.f32 0.0, %v2362
      %v2364 = vpop.f32.mrb[0].mxu0
      %2365 = vdwg.mxu0
      %v2366 = vsel %vm886, %v2363, -inf
      %2367 = vmax.xlane.f32.xlu0 %v2366
      %v2368 = vpop.xlane.xlu0 %2367
      %v2369 = vsub.f32 %v2363, %v2368
      %v2370 = vmul.f32 %v2369, 1.442695
      %v2371 = vpow.pop %v2370
      %v2372 = vsel %vm886, %v2371, 0.0
      %2373 = vadd.xlane.f32.xlu0 %v2372
      %v2374 = vpop.xlane.xlu0 %2373
      %v2375 = vrcp.pop %v2374
      %v2376 = vmul.f32 %v2371, %v2375
      %2377 = vrot.lane.b32.xlu0 %v2036, 88
      %v2378 = vpop.permute.xlu0 %2377
      %v2381 = vsel %vm886, %v2376, 0
      %2383 = vmatprep.subr.mxu0 0.0
      %2384 = vmatpush1.msra.mxu0 %v2378
      %2385 = vmatprep.subr.mxu0 0.0
      %2386 = vmatpush1.msra.mxu0 0.0
      %2387 = vmatprep.subr.mxu0 0.0
      %2388 = vmatpush1.msra.mxu0 0.0
      %2389 = vmatprep.subr.mxu0 0.0
      %2390 = vmatpush1.msra.mxu0 0.0
      %2391 = vmatprep.subr.mxu0 0.0
      %2392 = vmatpush1.msra.mxu0 0.0
      %2393 = vmatprep.subr.mxu0 0.0
      %2394 = vmatpush1.msra.mxu0 0.0
      %2395 = vmatprep.subr.mxu0 0.0
      %2396 = vmatpush1.msra.mxu0 0.0
      %2397 = vmatprep.subr.mxu0 0.0
      %2398 = vmatpush1.msra.mxu0 0.0
      %2399 = vmatprep.subr.mxu0 0.0
      %2400 = vmatpush1.msra.mxu0 0.0
      %2401 = vmatprep.subr.mxu0 0.0
      %2402 = vmatpush1.msra.mxu0 0.0
      %2403 = vmatprep.subr.mxu0 0.0
      %2404 = vmatpush1.msra.mxu0 0.0
      %2405 = vmatprep.subr.mxu0 0.0
      %2406 = vmatpush1.msra.mxu0 0.0
      %2407 = vmatprep.subr.mxu0 0.0
      %2408 = vmatpush1.msra.mxu0 0.0
      %2409 = vmatprep.subr.mxu0 0.0
      %2410 = vmatpush1.msra.mxu0 0.0
      %2411 = vmatprep.subr.mxu0 0.0
      %2412 = vmatpush1.msra.mxu0 0.0
      %2413 = vmatprep.subr.mxu0 0.0
      %2414 = vmatpush1.msra.mxu0 0.0
      %2415 = vmatprep.subr.mxu0 0.0
      %2416 = vmatpush1.msra.mxu0 0.0
      %2417 = vmatprep.subr.mxu0 0.0
      %2418 = vmatpush1.msra.mxu0 0.0
      %2419 = vmatprep.subr.mxu0 0.0
      %2420 = vmatpush1.msra.mxu0 0.0
      %2421 = vmatprep.subr.mxu0 0.0
      %2422 = vmatpush1.msra.mxu0 0.0
      %2423 = vmatprep.subr.mxu0 0.0
      %2424 = vmatpush1.msra.mxu0 0.0
      %2425 = vmatprep.subr.mxu0 0.0
      %2426 = vmatpush1.msra.mxu0 0.0
      %2427 = vmatprep.subr.mxu0 0.0
      %2428 = vmatpush1.msra.mxu0 0.0
      %2429 = vmatprep.subr.mxu0 0.0
      %2430 = vmatpush1.msra.mxu0 0.0
      %2431 = vmatprep.subr.mxu0 0.0
      %2432 = vmatpush1.msra.mxu0 0.0
      %2433 = vmatprep.subr.mxu0 0.0
      %2434 = vmatpush1.msra.mxu0 0.0
      %2435 = vmatprep.subr.mxu0 0.0
      %2436 = vmatpush1.msra.mxu0 0.0
      %2437 = vmatprep.subr.mxu0 0.0
      %2438 = vmatpush1.msra.mxu0 0.0
      %2439 = vmatprep.subr.mxu0 0.0
      %2440 = vmatpush1.msra.mxu0 0.0
      %2441 = vmatprep.subr.mxu0 0.0
      %2442 = vmatpush1.msra.mxu0 0.0
      %2443 = vmatprep.subr.mxu0 0.0
      %2444 = vmatpush1.msra.mxu0 0.0
      %2445 = vmatprep.subr.mxu0 0.0
      %2446 = vmatpush1.msra.mxu0 0.0
      %2447 = vmatprep.mubr.f32.mxu0 0.0
      %2448 = vmatmul.mubr.f32.gmra.mrb[0].mxu0 %v2381
      %v2449 = vpop.f32.mrb[0].mxu0
      %v2450 = vadd.f32 0.0, %v2449
      %v2451 = vpop.f32.mrb[0].mxu0
      %2452 = vdwg.mxu0
      %v2454 = vsel %vm886, %v2450, 0
      %2456 = vmatprep.subr.mxu0 0.0
      %2457 = vmatpush1.msra.mxu0 %v2040
      %2458 = vmatprep.subr.mxu0 0.0
      %2459 = vmatpush1.msra.mxu0 0.0
      %2460 = vmatprep.subr.mxu0 0.0
      %2461 = vmatpush1.msra.mxu0 0.0
      %2462 = vmatprep.subr.mxu0 0.0
      %2463 = vmatpush1.msra.mxu0 0.0
      %2464 = vmatprep.subr.mxu0 0.0
      %2465 = vmatpush1.msra.mxu0 0.0
      %2466 = vmatprep.subr.mxu0 0.0
      %2467 = vmatpush1.msra.mxu0 0.0
      %2468 = vmatprep.subr.mxu0 0.0
      %2469 = vmatpush1.msra.mxu0 0.0
      %2470 = vmatprep.subr.mxu0 0.0
      %2471 = vmatpush1.msra.mxu0 0.0
      %2472 = vmatprep.subr.mxu0 0.0
      %2473 = vmatpush1.msra.mxu0 0.0
      %2474 = vmatprep.subr.mxu0 0.0
      %2475 = vmatpush1.msra.mxu0 0.0
      %2476 = vmatprep.subr.mxu0 0.0
      %2477 = vmatpush1.msra.mxu0 0.0
      %2478 = vmatprep.subr.mxu0 0.0
      %2479 = vmatpush1.msra.mxu0 0.0
      %2480 = vmatprep.subr.mxu0 0.0
      %2481 = vmatpush1.msra.mxu0 0.0
      %2482 = vmatprep.subr.mxu0 0.0
      %2483 = vmatpush1.msra.mxu0 0.0
      %2484 = vmatprep.subr.mxu0 0.0
      %2485 = vmatpush1.msra.mxu0 0.0
      %2486 = vmatprep.subr.mxu0 0.0
      %2487 = vmatpush1.msra.mxu0 0.0
      %2488 = vmatprep.subr.mxu0 0.0
      %2489 = vmatpush1.msra.mxu0 0.0
      %2490 = vmatprep.subr.mxu0 0.0
      %2491 = vmatpush1.msra.mxu0 0.0
      %2492 = vmatprep.subr.mxu0 0.0
      %2493 = vmatpush1.msra.mxu0 0.0
      %2494 = vmatprep.subr.mxu0 0.0
      %2495 = vmatpush1.msra.mxu0 0.0
      %2496 = vmatprep.subr.mxu0 0.0
      %2497 = vmatpush1.msra.mxu0 0.0
      %2498 = vmatprep.subr.mxu0 0.0
      %2499 = vmatpush1.msra.mxu0 0.0
      %2500 = vmatprep.subr.mxu0 0.0
      %2501 = vmatpush1.msra.mxu0 0.0
      %2502 = vmatprep.subr.mxu0 0.0
      %2503 = vmatpush1.msra.mxu0 0.0
      %2504 = vmatprep.subr.mxu0 0.0
      %2505 = vmatpush1.msra.mxu0 0.0
      %2506 = vmatprep.subr.mxu0 0.0
      %2507 = vmatpush1.msra.mxu0 0.0
      %2508 = vmatprep.subr.mxu0 0.0
      %2509 = vmatpush1.msra.mxu0 0.0
      %2510 = vmatprep.subr.mxu0 0.0
      %2511 = vmatpush1.msra.mxu0 0.0
      %2512 = vmatprep.subr.mxu0 0.0
      %2513 = vmatpush1.msra.mxu0 0.0
      %2514 = vmatprep.subr.mxu0 0.0
      %2515 = vmatpush1.msra.mxu0 0.0
      %2516 = vmatprep.subr.mxu0 0.0
      %2517 = vmatpush1.msra.mxu0 0.0
      %2518 = vmatprep.subr.mxu0 0.0
      %2519 = vmatpush1.msra.mxu0 0.0
      %2520 = vmatprep.mubr.f32.mxu0 0.0
      %2521 = vmatmul.mubr.f32.gmra.mrb[0].mxu0 %v2454
      %v2522 = vpop.f32.mrb[0].mxu0
      %v2523 = vadd.f32 0.0, %v2522
      %v2524 = vpop.f32.mrb[0].mxu0
      %2525 = vdwg.mxu0
      %v2526 = vadd.f32 %v2287, %v2523
      %2527 = vrot.lane.b32.xlu0 %v1954, 112
      %v2528 = vpop.permute.xlu0 %2527
      %2529 = vrot.lane.b32.xlu0 %v2036, 112
      %v2530 = vpop.permute.xlu0 %2529
      %v2531 = vsel %vm886, %v2528, 0
      %v2533 = vsel %vm886, %v2530, 0
      %2535 = vmatprep.subr.mxu0 0.0
      %2536 = vmatpush1.xpose.msra.mxu0 %v2533
      %2537 = vmatprep.subr.mxu0 0.0
      %2538 = vmatpush1.xpose.msra.mxu0 0.0
      %2539 = vmatprep.subr.mxu0 0.0
      %2540 = vmatpush1.xpose.msra.mxu0 0.0
      %2541 = vmatprep.subr.mxu0 0.0
      %2542 = vmatpush1.xpose.msra.mxu0 0.0
      %2543 = vmatprep.subr.mxu0 0.0
      %2544 = vmatpush1.xpose.msra.mxu0 0.0
      %2545 = vmatprep.subr.mxu0 0.0
      %2546 = vmatpush1.xpose.msra.mxu0 0.0
      %2547 = vmatprep.subr.mxu0 0.0
      %2548 = vmatpush1.xpose.msra.mxu0 0.0
      %2549 = vmatprep.subr.mxu0 0.0
      %2550 = vmatpush1.xpose.msra.mxu0 0.0
      %2551 = vmatprep.subr.mxu0 0.0
      %2552 = vmatpush1.xpose.msra.mxu0 0.0
      %2553 = vmatprep.subr.mxu0 0.0
      %2554 = vmatpush1.xpose.msra.mxu0 0.0
      %2555 = vmatprep.subr.mxu0 0.0
      %2556 = vmatpush1.xpose.msra.mxu0 0.0
      %2557 = vmatprep.subr.mxu0 0.0
      %2558 = vmatpush1.xpose.msra.mxu0 0.0
      %2559 = vmatprep.subr.mxu0 0.0
      %2560 = vmatpush1.xpose.msra.mxu0 0.0
      %2561 = vmatprep.subr.mxu0 0.0
      %2562 = vmatpush1.xpose.msra.mxu0 0.0
      %2563 = vmatprep.subr.mxu0 0.0
      %2564 = vmatpush1.xpose.msra.mxu0 0.0
      %2565 = vmatprep.subr.mxu0 0.0
      %2566 = vmatpush1.xpose.msra.mxu0 0.0
      %2567 = vmatprep.subr.mxu0 0.0
      %2568 = vmatpush1.xpose.msra.mxu0 0.0
      %2569 = vmatprep.subr.mxu0 0.0
      %2570 = vmatpush1.xpose.msra.mxu0 0.0
      %2571 = vmatprep.subr.mxu0 0.0
      %2572 = vmatpush1.xpose.msra.mxu0 0.0
      %2573 = vmatprep.subr.mxu0 0.0
      %2574 = vmatpush1.xpose.msra.mxu0 0.0
      %2575 = vmatprep.subr.mxu0 0.0
      %2576 = vmatpush1.xpose.msra.mxu0 0.0
      %2577 = vmatprep.subr.mxu0 0.0
      %2578 = vmatpush1.xpose.msra.mxu0 0.0
      %2579 = vmatprep.subr.mxu0 0.0
      %2580 = vmatpush1.xpose.msra.mxu0 0.0
      %2581 = vmatprep.subr.mxu0 0.0
      %2582 = vmatpush1.xpose.msra.mxu0 0.0
      %2583 = vmatprep.subr.mxu0 0.0
      %2584 = vmatpush1.xpose.msra.mxu0 0.0
      %2585 = vmatprep.subr.mxu0 0.0
      %2586 = vmatpush1.xpose.msra.mxu0 0.0
      %2587 = vmatprep.subr.mxu0 0.0
      %2588 = vmatpush1.xpose.msra.mxu0 0.0
      %2589 = vmatprep.subr.mxu0 0.0
      %2590 = vmatpush1.xpose.msra.mxu0 0.0
      %2591 = vmatprep.subr.mxu0 0.0
      %2592 = vmatpush1.xpose.msra.mxu0 0.0
      %2593 = vmatprep.subr.mxu0 0.0
      %2594 = vmatpush1.xpose.msra.mxu0 0.0
      %2595 = vmatprep.subr.mxu0 0.0
      %2596 = vmatpush1.xpose.msra.mxu0 0.0
      %2597 = vmatprep.subr.mxu0 0.0
      %2598 = vmatpush1.xpose.msra.mxu0 0.0
      %2599 = vmatprep.mubr.f32.mxu0 0.0
      %2600 = vmatmul.mubr.f32.gmra.mrb[0].mxu0 %v2531
      %v2601 = vpop.f32.mrb[0].mxu0
      %v2602 = vadd.f32 0.0, %v2601
      %v2603 = vpop.f32.mrb[0].mxu0
      %2604 = vdwg.mxu0
      %v2605 = vsel %vm886, %v2602, -inf
      %2606 = vmax.xlane.f32.xlu0 %v2605
      %v2607 = vpop.xlane.xlu0 %2606
      %v2608 = vsub.f32 %v2602, %v2607
      %v2609 = vmul.f32 %v2608, 1.442695
      %v2610 = vpow.pop %v2609
      %v2611 = vsel %vm886, %v2610, 0.0
      %2612 = vadd.xlane.f32.xlu0 %v2611
      %v2613 = vpop.xlane.xlu0 %2612
      %v2614 = vrcp.pop %v2613
      %v2615 = vmul.f32 %v2610, %v2614
      %2616 = vrot.lane.b32.xlu0 %v2036, 80
      %v2617 = vpop.permute.xlu0 %2616
      %v2620 = vsel %vm886, %v2615, 0
      %2622 = vmatprep.subr.mxu0 0.0
      %2623 = vmatpush1.msra.mxu0 %v2617
      %2624 = vmatprep.subr.mxu0 0.0
      %2625 = vmatpush1.msra.mxu0 0.0
      %2626 = vmatprep.subr.mxu0 0.0
      %2627 = vmatpush1.msra.mxu0 0.0
      %2628 = vmatprep.subr.mxu0 0.0
      %2629 = vmatpush1.msra.mxu0 0.0
      %2630 = vmatprep.subr.mxu0 0.0
      %2631 = vmatpush1.msra.mxu0 0.0
      %2632 = vmatprep.subr.mxu0 0.0
      %2633 = vmatpush1.msra.mxu0 0.0
      %2634 = vmatprep.subr.mxu0 0.0
      %2635 = vmatpush1.msra.mxu0 0.0
      %2636 = vmatprep.subr.mxu0 0.0
      %2637 = vmatpush1.msra.mxu0 0.0
      %2638 = vmatprep.subr.mxu0 0.0
      %2639 = vmatpush1.msra.mxu0 0.0
      %2640 = vmatprep.subr.mxu0 0.0
      %2641 = vmatpush1.msra.mxu0 0.0
      %2642 = vmatprep.subr.mxu0 0.0
      %2643 = vmatpush1.msra.mxu0 0.0
      %2644 = vmatprep.subr.mxu0 0.0
      %2645 = vmatpush1.msra.mxu0 0.0
      %2646 = vmatprep.subr.mxu0 0.0
      %2647 = vmatpush1.msra.mxu0 0.0
      %2648 = vmatprep.subr.mxu0 0.0
      %2649 = vmatpush1.msra.mxu0 0.0
      %2650 = vmatprep.subr.mxu0 0.0
      %2651 = vmatpush1.msra.mxu0 0.0
      %2652 = vmatprep.subr.mxu0 0.0
      %2653 = vmatpush1.msra.mxu0 0.0
      %2654 = vmatprep.subr.mxu0 0.0
      %2655 = vmatpush1.msra.mxu0 0.0
      %2656 = vmatprep.subr.mxu0 0.0
      %2657 = vmatpush1.msra.mxu0 0.0
      %2658 = vmatprep.subr.mxu0 0.0
      %2659 = vmatpush1.msra.mxu0 0.0
      %2660 = vmatprep.subr.mxu0 0.0
      %2661 = vmatpush1.msra.mxu0 0.0
      %2662 = vmatprep.subr.mxu0 0.0
      %2663 = vmatpush1.msra.mxu0 0.0
      %2664 = vmatprep.subr.mxu0 0.0
      %2665 = vmatpush1.msra.mxu0 0.0
      %2666 = vmatprep.subr.mxu0 0.0
      %2667 = vmatpush1.msra.mxu0 0.0
      %2668 = vmatprep.subr.mxu0 0.0
      %2669 = vmatpush1.msra.mxu0 0.0
      %2670 = vmatprep.subr.mxu0 0.0
      %2671 = vmatpush1.msra.mxu0 0.0
      %2672 = vmatprep.subr.mxu0 0.0
      %2673 = vmatpush1.msra.mxu0 0.0
      %2674 = vmatprep.subr.mxu0 0.0
      %2675 = vmatpush1.msra.mxu0 0.0
      %2676 = vmatprep.subr.mxu0 0.0
      %2677 = vmatpush1.msra.mxu0 0.0
      %2678 = vmatprep.subr.mxu0 0.0
      %2679 = vmatpush1.msra.mxu0 0.0
      %2680 = vmatprep.subr.mxu0 0.0
      %2681 = vmatpush1.msra.mxu0 0.0
      %2682 = vmatprep.subr.mxu0 0.0
      %2683 = vmatpush1.msra.mxu0 0.0
      %2684 = vmatprep.subr.mxu0 0.0
      %2685 = vmatpush1.msra.mxu0 0.0
      %2686 = vmatprep.mubr.f32.mxu0 0.0
      %2687 = vmatmul.mubr.f32.gmra.mrb[0].mxu0 %v2620
      %v2688 = vpop.f32.mrb[0].mxu0
      %v2689 = vadd.f32 0.0, %v2688
      %v2690 = vpop.f32.mrb[0].mxu0
      %2691 = vdwg.mxu0
      %v2693 = vsel %vm886, %v2689, 0
      %2695 = vmatprep.subr.mxu0 0.0
      %2696 = vmatpush1.msra.mxu0 %v2041
      %2697 = vmatprep.subr.mxu0 0.0
      %2698 = vmatpush1.msra.mxu0 0.0
      %2699 = vmatprep.subr.mxu0 0.0
      %2700 = vmatpush1.msra.mxu0 0.0
      %2701 = vmatprep.subr.mxu0 0.0
      %2702 = vmatpush1.msra.mxu0 0.0
      %2703 = vmatprep.subr.mxu0 0.0
      %2704 = vmatpush1.msra.mxu0 0.0
      %2705 = vmatprep.subr.mxu0 0.0
      %2706 = vmatpush1.msra.mxu0 0.0
      %2707 = vmatprep.subr.mxu0 0.0
      %2708 = vmatpush1.msra.mxu0 0.0
      %2709 = vmatprep.subr.mxu0 0.0
      %2710 = vmatpush1.msra.mxu0 0.0
      %2711 = vmatprep.subr.mxu0 0.0
      %2712 = vmatpush1.msra.mxu0 0.0
      %2713 = vmatprep.subr.mxu0 0.0
      %2714 = vmatpush1.msra.mxu0 0.0
      %2715 = vmatprep.subr.mxu0 0.0
      %2716 = vmatpush1.msra.mxu0 0.0
      %2717 = vmatprep.subr.mxu0 0.0
      %2718 = vmatpush1.msra.mxu0 0.0
      %2719 = vmatprep.subr.mxu0 0.0
      %2720 = vmatpush1.msra.mxu0 0.0
      %2721 = vmatprep.subr.mxu0 0.0
      %2722 = vmatpush1.msra.mxu0 0.0
      %2723 = vmatprep.subr.mxu0 0.0
      %2724 = vmatpush1.msra.mxu0 0.0
      %2725 = vmatprep.subr.mxu0 0.0
      %2726 = vmatpush1.msra.mxu0 0.0
      %2727 = vmatprep.subr.mxu0 0.0
      %2728 = vmatpush1.msra.mxu0 0.0
      %2729 = vmatprep.subr.mxu0 0.0
      %2730 = vmatpush1.msra.mxu0 0.0
      %2731 = vmatprep.subr.mxu0 0.0
      %2732 = vmatpush1.msra.mxu0 0.0
      %2733 = vmatprep.subr.mxu0 0.0
      %2734 = vmatpush1.msra.mxu0 0.0
      %2735 = vmatprep.subr.mxu0 0.0
      %2736 = vmatpush1.msra.mxu0 0.0
      %2737 = vmatprep.subr.mxu0 0.0
      %2738 = vmatpush1.msra.mxu0 0.0
      %2739 = vmatprep.subr.mxu0 0.0
      %2740 = vmatpush1.msra.mxu0 0.0
      %2741 = vmatprep.subr.mxu0 0.0
      %2742 = vmatpush1.msra.mxu0 0.0
      %2743 = vmatprep.subr.mxu0 0.0
      %2744 = vmatpush1.msra.mxu0 0.0
      %2745 = vmatprep.subr.mxu0 0.0
      %2746 = vmatpush1.msra.mxu0 0.0
      %2747 = vmatprep.subr.mxu0 0.0
      %2748 = vmatpush1.msra.mxu0 0.0
      %2749 = vmatprep.subr.mxu0 0.0
      %2750 = vmatpush1.msra.mxu0 0.0
      %2751 = vmatprep.subr.mxu0 0.0
      %2752 = vmatpush1.msra.mxu0 0.0
      %2753 = vmatprep.subr.mxu0 0.0
      %2754 = vmatpush1.msra.mxu0 0.0
      %2755 = vmatprep.subr.mxu0 0.0
      %2756 = vmatpush1.msra.mxu0 0.0
      %2757 = vmatprep.subr.mxu0 0.0
      %2758 = vmatpush1.msra.mxu0 0.0
      %2759 = vmatprep.mubr.f32.mxu0 0.0
      %2760 = vmatmul.mubr.f32.gmra.mrb[0].mxu0 %v2693
      %v2761 = vpop.f32.mrb[0].mxu0
      %v2762 = vadd.f32 0.0, %v2761
      %v2763 = vpop.f32.mrb[0].mxu0
      %2764 = vdwg.mxu0
      %v2765 = vadd.f32 %v2526, %v2762
      %2766 = vrot.lane.b32.xlu0 %v1954, 104
      %v2767 = vpop.permute.xlu0 %2766
      %2768 = vrot.lane.b32.xlu0 %v2036, 104
      %v2769 = vpop.permute.xlu0 %2768
      %v2770 = vsel %vm886, %v2767, 0
      %v2772 = vsel %vm886, %v2769, 0
      %2774 = vmatprep.subr.mxu0 0.0
      %2775 = vmatpush1.xpose.msra.mxu0 %v2772
      %2776 = vmatprep.subr.mxu0 0.0
      %2777 = vmatpush1.xpose.msra.mxu0 0.0
      %2778 = vmatprep.subr.mxu0 0.0
      %2779 = vmatpush1.xpose.msra.mxu0 0.0
      %2780 = vmatprep.subr.mxu0 0.0
      %2781 = vmatpush1.xpose.msra.mxu0 0.0
      %2782 = vmatprep.subr.mxu0 0.0
      %2783 = vmatpush1.xpose.msra.mxu0 0.0
      %2784 = vmatprep.subr.mxu0 0.0
      %2785 = vmatpush1.xpose.msra.mxu0 0.0
      %2786 = vmatprep.subr.mxu0 0.0
      %2787 = vmatpush1.xpose.msra.mxu0 0.0
      %2788 = vmatprep.subr.mxu0 0.0
      %2789 = vmatpush1.xpose.msra.mxu0 0.0
      %2790 = vmatprep.subr.mxu0 0.0
      %2791 = vmatpush1.xpose.msra.mxu0 0.0
      %2792 = vmatprep.subr.mxu0 0.0
      %2793 = vmatpush1.xpose.msra.mxu0 0.0
      %2794 = vmatprep.subr.mxu0 0.0
      %2795 = vmatpush1.xpose.msra.mxu0 0.0
      %2796 = vmatprep.subr.mxu0 0.0
      %2797 = vmatpush1.xpose.msra.mxu0 0.0
      %2798 = vmatprep.subr.mxu0 0.0
      %2799 = vmatpush1.xpose.msra.mxu0 0.0
      %2800 = vmatprep.subr.mxu0 0.0
      %2801 = vmatpush1.xpose.msra.mxu0 0.0
      %2802 = vmatprep.subr.mxu0 0.0
      %2803 = vmatpush1.xpose.msra.mxu0 0.0
      %2804 = vmatprep.subr.mxu0 0.0
      %2805 = vmatpush1.xpose.msra.mxu0 0.0
      %2806 = vmatprep.subr.mxu0 0.0
      %2807 = vmatpush1.xpose.msra.mxu0 0.0
      %2808 = vmatprep.subr.mxu0 0.0
      %2809 = vmatpush1.xpose.msra.mxu0 0.0
      %2810 = vmatprep.subr.mxu0 0.0
      %2811 = vmatpush1.xpose.msra.mxu0 0.0
      %2812 = vmatprep.subr.mxu0 0.0
      %2813 = vmatpush1.xpose.msra.mxu0 0.0
      %2814 = vmatprep.subr.mxu0 0.0
      %2815 = vmatpush1.xpose.msra.mxu0 0.0
      %2816 = vmatprep.subr.mxu0 0.0
      %2817 = vmatpush1.xpose.msra.mxu0 0.0
      %2818 = vmatprep.subr.mxu0 0.0
      %2819 = vmatpush1.xpose.msra.mxu0 0.0
      %2820 = vmatprep.subr.mxu0 0.0
      %2821 = vmatpush1.xpose.msra.mxu0 0.0
      %2822 = vmatprep.subr.mxu0 0.0
      %2823 = vmatpush1.xpose.msra.mxu0 0.0
      %2824 = vmatprep.subr.mxu0 0.0
      %2825 = vmatpush1.xpose.msra.mxu0 0.0
      %2826 = vmatprep.subr.mxu0 0.0
      %2827 = vmatpush1.xpose.msra.mxu0 0.0
      %2828 = vmatprep.subr.mxu0 0.0
      %2829 = vmatpush1.xpose.msra.mxu0 0.0
      %2830 = vmatprep.subr.mxu0 0.0
      %2831 = vmatpush1.xpose.msra.mxu0 0.0
      %2832 = vmatprep.subr.mxu0 0.0
      %2833 = vmatpush1.xpose.msra.mxu0 0.0
      %2834 = vmatprep.subr.mxu0 0.0
      %2835 = vmatpush1.xpose.msra.mxu0 0.0
      %2836 = vmatprep.subr.mxu0 0.0
      %2837 = vmatpush1.xpose.msra.mxu0 0.0
      %2838 = vmatprep.mubr.f32.mxu0 0.0
      %2839 = vmatmul.mubr.f32.gmra.mrb[0].mxu0 %v2770
      %v2840 = vpop.f32.mrb[0].mxu0
      %v2841 = vadd.f32 0.0, %v2840
      %v2842 = vpop.f32.mrb[0].mxu0
      %2843 = vdwg.mxu0
      %v2844 = vsel %vm886, %v2841, -inf
      %2845 = vmax.xlane.f32.xlu0 %v2844
      %v2846 = vpop.xlane.xlu0 %2845
      %v2847 = vsub.f32 %v2841, %v2846
      %v2848 = vmul.f32 %v2847, 1.442695
      %v2849 = vpow.pop %v2848
      %v2850 = vsel %vm886, %v2849, 0.0
      %2851 = vadd.xlane.f32.xlu0 %v2850
      %v2852 = vpop.xlane.xlu0 %2851
      %v2853 = vrcp.pop %v2852
      %v2854 = vmul.f32 %v2849, %v2853
      %2855 = vrot.lane.b32.xlu0 %v2036, 72
      %v2856 = vpop.permute.xlu0 %2855
      %v2859 = vsel %vm886, %v2854, 0
      %2861 = vmatprep.subr.mxu0 0.0
      %2862 = vmatpush1.msra.mxu0 %v2856
      %2863 = vmatprep.subr.mxu0 0.0
      %2864 = vmatpush1.msra.mxu0 0.0
      %2865 = vmatprep.subr.mxu0 0.0
      %2866 = vmatpush1.msra.mxu0 0.0
      %2867 = vmatprep.subr.mxu0 0.0
      %2868 = vmatpush1.msra.mxu0 0.0
      %2869 = vmatprep.subr.mxu0 0.0
      %2870 = vmatpush1.msra.mxu0 0.0
      %2871 = vmatprep.subr.mxu0 0.0
      %2872 = vmatpush1.msra.mxu0 0.0
      %2873 = vmatprep.subr.mxu0 0.0
      %2874 = vmatpush1.msra.mxu0 0.0
      %2875 = vmatprep.subr.mxu0 0.0
      %2876 = vmatpush1.msra.mxu0 0.0
      %2877 = vmatprep.subr.mxu0 0.0
      %2878 = vmatpush1.msra.mxu0 0.0
      %2879 = vmatprep.subr.mxu0 0.0
      %2880 = vmatpush1.msra.mxu0 0.0
      %2881 = vmatprep.subr.mxu0 0.0
      %2882 = vmatpush1.msra.mxu0 0.0
      %2883 = vmatprep.subr.mxu0 0.0
      %2884 = vmatpush1.msra.mxu0 0.0
      %2885 = vmatprep.subr.mxu0 0.0
      %2886 = vmatpush1.msra.mxu0 0.0
      %2887 = vmatprep.subr.mxu0 0.0
      %2888 = vmatpush1.msra.mxu0 0.0
      %2889 = vmatprep.subr.mxu0 0.0
      %2890 = vmatpush1.msra.mxu0 0.0
      %2891 = vmatprep.subr.mxu0 0.0
      %2892 = vmatpush1.msra.mxu0 0.0
      %2893 = vmatprep.subr.mxu0 0.0
      %2894 = vmatpush1.msra.mxu0 0.0
      %2895 = vmatprep.subr.mxu0 0.0
      %2896 = vmatpush1.msra.mxu0 0.0
      %2897 = vmatprep.subr.mxu0 0.0
      %2898 = vmatpush1.msra.mxu0 0.0
      %2899 = vmatprep.subr.mxu0 0.0
      %2900 = vmatpush1.msra.mxu0 0.0
      %2901 = vmatprep.subr.mxu0 0.0
      %2902 = vmatpush1.msra.mxu0 0.0
      %2903 = vmatprep.subr.mxu0 0.0
      %2904 = vmatpush1.msra.mxu0 0.0
      %2905 = vmatprep.subr.mxu0 0.0
      %2906 = vmatpush1.msra.mxu0 0.0
      %2907 = vmatprep.subr.mxu0 0.0
      %2908 = vmatpush1.msra.mxu0 0.0
      %2909 = vmatprep.subr.mxu0 0.0
      %2910 = vmatpush1.msra.mxu0 0.0
      %2911 = vmatprep.subr.mxu0 0.0
      %2912 = vmatpush1.msra.mxu0 0.0
      %2913 = vmatprep.subr.mxu0 0.0
      %2914 = vmatpush1.msra.mxu0 0.0
      %2915 = vmatprep.subr.mxu0 0.0
      %2916 = vmatpush1.msra.mxu0 0.0
      %2917 = vmatprep.subr.mxu0 0.0
      %2918 = vmatpush1.msra.mxu0 0.0
      %2919 = vmatprep.subr.mxu0 0.0
      %2920 = vmatpush1.msra.mxu0 0.0
      %2921 = vmatprep.subr.mxu0 0.0
      %2922 = vmatpush1.msra.mxu0 0.0
      %2923 = vmatprep.subr.mxu0 0.0
      %2924 = vmatpush1.msra.mxu0 0.0
      %2925 = vmatprep.mubr.f32.mxu0 0.0
      %2926 = vmatmul.mubr.f32.gmra.mrb[0].mxu0 %v2859
      %v2927 = vpop.f32.mrb[0].mxu0
      %v2928 = vadd.f32 0.0, %v2927
      %v2929 = vpop.f32.mrb[0].mxu0
      %2930 = vdwg.mxu0
      %v2932 = vsel %vm886, %v2928, 0
      %2934 = vmatprep.subr.mxu0 0.0
      %2935 = vmatpush1.msra.mxu0 %v2042
      %2936 = vmatprep.subr.mxu0 0.0
      %2937 = vmatpush1.msra.mxu0 0.0
      %2938 = vmatprep.subr.mxu0 0.0
      %2939 = vmatpush1.msra.mxu0 0.0
      %2940 = vmatprep.subr.mxu0 0.0
      %2941 = vmatpush1.msra.mxu0 0.0
      %2942 = vmatprep.subr.mxu0 0.0
      %2943 = vmatpush1.msra.mxu0 0.0
      %2944 = vmatprep.subr.mxu0 0.0
      %2945 = vmatpush1.msra.mxu0 0.0
      %2946 = vmatprep.subr.mxu0 0.0
      %2947 = vmatpush1.msra.mxu0 0.0
      %2948 = vmatprep.subr.mxu0 0.0
      %2949 = vmatpush1.msra.mxu0 0.0
      %2950 = vmatprep.subr.mxu0 0.0
      %2951 = vmatpush1.msra.mxu0 0.0
      %2952 = vmatprep.subr.mxu0 0.0
      %2953 = vmatpush1.msra.mxu0 0.0
      %2954 = vmatprep.subr.mxu0 0.0
      %2955 = vmatpush1.msra.mxu0 0.0
      %2956 = vmatprep.subr.mxu0 0.0
      %2957 = vmatpush1.msra.mxu0 0.0
      %2958 = vmatprep.subr.mxu0 0.0
      %2959 = vmatpush1.msra.mxu0 0.0
      %2960 = vmatprep.subr.mxu0 0.0
      %2961 = vmatpush1.msra.mxu0 0.0
      %2962 = vmatprep.subr.mxu0 0.0
      %2963 = vmatpush1.msra.mxu0 0.0
      %2964 = vmatprep.subr.mxu0 0.0
      %2965 = vmatpush1.msra.mxu0 0.0
      %2966 = vmatprep.subr.mxu0 0.0
      %2967 = vmatpush1.msra.mxu0 0.0
      %2968 = vmatprep.subr.mxu0 0.0
      %2969 = vmatpush1.msra.mxu0 0.0
      %2970 = vmatprep.subr.mxu0 0.0
      %2971 = vmatpush1.msra.mxu0 0.0
      %2972 = vmatprep.subr.mxu0 0.0
      %2973 = vmatpush1.msra.mxu0 0.0
      %2974 = vmatprep.subr.mxu0 0.0
      %2975 = vmatpush1.msra.mxu0 0.0
      %2976 = vmatprep.subr.mxu0 0.0
      %2977 = vmatpush1.msra.mxu0 0.0
      %2978 = vmatprep.subr.mxu0 0.0
      %2979 = vmatpush1.msra.mxu0 0.0
      %2980 = vmatprep.subr.mxu0 0.0
      %2981 = vmatpush1.msra.mxu0 0.0
      %2982 = vmatprep.subr.mxu0 0.0
      %2983 = vmatpush1.msra.mxu0 0.0
      %2984 = vmatprep.subr.mxu0 0.0
      %2985 = vmatpush1.msra.mxu0 0.0
      %2986 = vmatprep.subr.mxu0 0.0
      %2987 = vmatpush1.msra.mxu0 0.0
      %2988 = vmatprep.subr.mxu0 0.0
      %2989 = vmatpush1.msra.mxu0 0.0
      %2990 = vmatprep.subr.mxu0 0.0
      %2991 = vmatpush1.msra.mxu0 0.0
      %2992 = vmatprep.subr.mxu0 0.0
      %2993 = vmatpush1.msra.mxu0 0.0
      %2994 = vmatprep.subr.mxu0 0.0
      %2995 = vmatpush1.msra.mxu0 0.0
      %2996 = vmatprep.subr.mxu0 0.0
      %2997 = vmatpush1.msra.mxu0 0.0
      %2998 = vmatprep.mubr.f32.mxu0 0.0
      %2999 = vmatmul.mubr.f32.gmra.mrb[0].mxu0 %v2932
      %v3000 = vpop.f32.mrb[0].mxu0
      %v3001 = vadd.f32 0.0, %v3000
      %v3002 = vpop.f32.mrb[0].mxu0
      %3003 = vdwg.mxu0
      %v3004 = vadd.f32 %v2765, %v3001
      %v3005 = vadd.f32 %v1840, %v3004
      %v3006 = vld [vmem:[%s17] sm:$0x1]
      %v3007 = vld [vmem:[%s18] sm:$0x1]
      %v3008 = vsel %vm757, %v3005, 0.0
      %3009 = vadd.xlane.f32.xlu0 %v3008
      %v3010 = vpop.xlane.xlu0 %3009
      %v3011 = vmul.f32 %v3010, %v761
      %v3012 = vsub.f32 %v3005, %v3011
      %v3013 = vmul.f32 %v3012, %v3012
      %v3014 = vsel %vm757, %v3013, 0.0
      %3015 = vadd.xlane.f32.xlu0 %v3014
      %v3016 = vpop.xlane.xlu0 %3015
      %v3017 = vmul.f32 %v3016, %v761
      %v3018 = vadd.f32 %v3017, 1e-05
      %v3019 = vrsqrt.pop %v3018
      %v3020 = vmul.f32 %v3012, %v3019
      %v3022 = vlaneseq
      %v3023 = vshrl.u32 %v3022, 7
      %v3024 = vsub.s32 0, %v3023
      %v3025 = vrot.slane %v3006, %v3024
      %v3027 = vmul.f32 %v3020, %v3025
      %v3029 = vlaneseq
      %v3030 = vshrl.u32 %v3029, 7
      %v3031 = vsub.s32 0, %v3030
      %v3032 = vrot.slane %v3007, %v3031
      %v3034 = vadd.f32 %v3027, %v3032
      %v3035 = vld [vmem:[%s19] sm:$0xff]
      %v3036 = vld [vmem:[%s19 + $0x8] sm:$0xff]
      %v3037 = vld [vmem:[%s19 + $0x10] sm:$0xff]
      %v3038 = vld [vmem:[%s19 + $0x18] sm:$0xff]
      %v3039 = vld [vmem:[%s20] sm:$0x1]
      %v3041 = vlaneseq
      %v3042 = vshrl.u32 %v3041, 7
      %v3043 = vsub.s32 0, %v3042
      %v3044 = vrot.slane %v3039, %v3043
      %v3047 = vsel %vm757, %v3034, 0
      %3049 = vmatprep.subr.mxu0 0.0
      %3050 = vmatpush1.msra.mxu0 %v3035
      %3051 = vmatprep.subr.mxu0 0.0
      %3052 = vmatpush1.msra.mxu0 %v3036
      %3053 = vmatprep.subr.mxu0 0.0
      %3054 = vmatpush1.msra.mxu0 %v3037
      %3055 = vmatprep.subr.mxu0 0.0
      %3056 = vmatpush1.msra.mxu0 %v3038
      %3057 = vmatprep.subr.mxu0 0.0
      %3058 = vmatpush1.msra.mxu0 0.0
      %3059 = vmatprep.subr.mxu0 0.0
      %3060 = vmatpush1.msra.mxu0 0.0
      %3061 = vmatprep.subr.mxu0 0.0
      %3062 = vmatpush1.msra.mxu0 0.0
      %3063 = vmatprep.subr.mxu0 0.0
      %3064 = vmatpush1.msra.mxu0 0.0
      %3065 = vmatprep.subr.mxu0 0.0
      %3066 = vmatpush1.msra.mxu0 0.0
      %3067 = vmatprep.subr.mxu0 0.0
      %3068 = vmatpush1.msra.mxu0 0.0
      %3069 = vmatprep.subr.mxu0 0.0
      %3070 = vmatpush1.msra.mxu0 0.0
      %3071 = vmatprep.subr.mxu0 0.0
      %3072 = vmatpush1.msra.mxu0 0.0
      %3073 = vmatprep.subr.mxu0 0.0
      %3074 = vmatpush1.msra.mxu0 0.0
      %3075 = vmatprep.subr.mxu0 0.0
      %3076 = vmatpush1.msra.mxu0 0.0
      %3077 = vmatprep.subr.mxu0 0.0
      %3078 = vmatpush1.msra.mxu0 0.0
      %3079 = vmatprep.subr.mxu0 0.0
      %3080 = vmatpush1.msra.mxu0 0.0
      %3081 = vmatprep.subr.mxu0 0.0
      %3082 = vmatpush1.msra.mxu0 0.0
      %3083 = vmatprep.subr.mxu0 0.0
      %3084 = vmatpush1.msra.mxu0 0.0
      %3085 = vmatprep.subr.mxu0 0.0
      %3086 = vmatpush1.msra.mxu0 0.0
      %3087 = vmatprep.subr.mxu0 0.0
      %3088 = vmatpush1.msra.mxu0 0.0
      %3089 = vmatprep.subr.mxu0 0.0
      %3090 = vmatpush1.msra.mxu0 0.0
      %3091 = vmatprep.subr.mxu0 0.0
      %3092 = vmatpush1.msra.mxu0 0.0
      %3093 = vmatprep.subr.mxu0 0.0
      %3094 = vmatpush1.msra.mxu0 0.0
      %3095 = vmatprep.subr.mxu0 0.0
      %3096 = vmatpush1.msra.mxu0 0.0
      %3097 = vmatprep.subr.mxu0 0.0
      %3098 = vmatpush1.msra.mxu0 0.0
      %3099 = vmatprep.subr.mxu0 0.0
      %3100 = vmatpush1.msra.mxu0 0.0
      %3101 = vmatprep.subr.mxu0 0.0
      %3102 = vmatpush1.msra.mxu0 0.0
      %3103 = vmatprep.subr.mxu0 0.0
      %3104 = vmatpush1.msra.mxu0 0.0
      %3105 = vmatprep.subr.mxu0 0.0
      %3106 = vmatpush1.msra.mxu0 0.0
      %3107 = vmatprep.subr.mxu0 0.0
      %3108 = vmatpush1.msra.mxu0 0.0
      %3109 = vmatprep.subr.mxu0 0.0
      %3110 = vmatpush1.msra.mxu0 0.0
      %3111 = vmatprep.subr.mxu0 0.0
      %3112 = vmatpush1.msra.mxu0 0.0
      %3113 = vmatprep.mubr.f32.mxu0 0.0
      %3114 = vmatmul.mubr.f32.gmra.mrb[0].mxu0 %v3047
      %v3115 = vpop.f32.mrb[0].mxu0
      %v3116 = vadd.f32 %v3044, %v3115
      %v3117 = vpop.f32.mrb[0].mxu0
      %3118 = vdwg.mxu0
      %v3119 = vmax.f32 %v3116, 0.0
      %v3120 = vld [vmem:[%s21] sm:$0xff]
      %v3121 = vld [vmem:[%s21 + $0x8] sm:$0xff]
      %v3122 = vld [vmem:[%s21 + $0x10] sm:$0xff]
      %v3123 = vld [vmem:[%s21 + $0x18] sm:$0xff]
      %v3124 = vld [vmem:[%s21 + $0x20] sm:$0xff]
      %v3125 = vld [vmem:[%s21 + $0x28] sm:$0xff]
      %v3126 = vld [vmem:[%s21 + $0x30] sm:$0xff]
      %v3127 = vld [vmem:[%s21 + $0x38] sm:$0xff]
      %v3128 = vld [vmem:[%s22] sm:$0x1]
      %v3130 = vlaneseq
      %v3131 = vshrl.u32 %v3130, 7
      %v3132 = vsub.s32 0, %v3131
      %v3133 = vrot.slane %v3128, %v3132
      %vm3135 = vcmask 523264
      %v3137 = vsel %vm3135, %v3119, 0
      %3139 = vmatprep.subr.mxu0 0.0
      %3140 = vmatpush1.msra.mxu0 %v3120
      %3141 = vmatprep.subr.mxu0 0.0
      %3142 = vmatpush1.msra.mxu0 %v3121
      %3143 = vmatprep.subr.mxu0 0.0
      %3144 = vmatpush1.msra.mxu0 %v3122
      %3145 = vmatprep.subr.mxu0 0.0
      %3146 = vmatpush1.msra.mxu0 %v3123
      %3147 = vmatprep.subr.mxu0 0.0
      %3148 = vmatpush1.msra.mxu0 %v3124
      %3149 = vmatprep.subr.mxu0 0.0
      %3150 = vmatpush1.msra.mxu0 %v3125
      %3151 = vmatprep.subr.mxu0 0.0
      %3152 = vmatpush1.msra.mxu0 %v3126
      %3153 = vmatprep.subr.mxu0 0.0
      %3154 = vmatpush1.msra.mxu0 %v3127
      %3155 = vmatprep.subr.mxu0 0.0
      %3156 = vmatpush1.msra.mxu0 0.0
      %3157 = vmatprep.subr.mxu0 0.0
      %3158 = vmatpush1.msra.mxu0 0.0
      %3159 = vmatprep.subr.mxu0 0.0
      %3160 = vmatpush1.msra.mxu0 0.0
      %3161 = vmatprep.subr.mxu0 0.0
      %3162 = vmatpush1.msra.mxu0 0.0
      %3163 = vmatprep.subr.mxu0 0.0
      %3164 = vmatpush1.msra.mxu0 0.0
      %3165 = vmatprep.subr.mxu0 0.0
      %3166 = vmatpush1.msra.mxu0 0.0
      %3167 = vmatprep.subr.mxu0 0.0
      %3168 = vmatpush1.msra.mxu0 0.0
      %3169 = vmatprep.subr.mxu0 0.0
      %3170 = vmatpush1.msra.mxu0 0.0
      %3171 = vmatprep.subr.mxu0 0.0
      %3172 = vmatpush1.msra.mxu0 0.0
      %3173 = vmatprep.subr.mxu0 0.0
      %3174 = vmatpush1.msra.mxu0 0.0
      %3175 = vmatprep.subr.mxu0 0.0
      %3176 = vmatpush1.msra.mxu0 0.0
      %3177 = vmatprep.subr.mxu0 0.0
      %3178 = vmatpush1.msra.mxu0 0.0
      %3179 = vmatprep.subr.mxu0 0.0
      %3180 = vmatpush1.msra.mxu0 0.0
      %3181 = vmatprep.subr.mxu0 0.0
      %3182 = vmatpush1.msra.mxu0 0.0
      %3183 = vmatprep.subr.mxu0 0.0
      %3184 = vmatpush1.msra.mxu0 0.0
      %3185 = vmatprep.subr.mxu0 0.0
      %3186 = vmatpush1.msra.mxu0 0.0
      %3187 = vmatprep.subr.mxu0 0.0
      %3188 = vmatpush1.msra.mxu0 0.0
      %3189 = vmatprep.subr.mxu0 0.0
      %3190 = vmatpush1.msra.mxu0 0.0
      %3191 = vmatprep.subr.mxu0 0.0
      %3192 = vmatpush1.msra.mxu0 0.0
      %3193 = vmatprep.subr.mxu0 0.0
      %3194 = vmatpush1.msra.mxu0 0.0
      %3195 = vmatprep.subr.mxu0 0.0
      %3196 = vmatpush1.msra.mxu0 0.0
      %3197 = vmatprep.subr.mxu0 0.0
      %3198 = vmatpush1.msra.mxu0 0.0
      %3199 = vmatprep.subr.mxu0 0.0
      %3200 = vmatpush1.msra.mxu0 0.0
      %3201 = vmatprep.subr.mxu0 0.0
      %3202 = vmatpush1.msra.mxu0 0.0
      %3203 = vmatprep.mubr.f32.mxu0 0.0
      %3204 = vmatmul.mubr.f32.gmra.mrb[0].mxu0 %v3137
      %v3205 = vpop.f32.mrb[0].mxu0
      %v3206 = vadd.f32 %v3133, %v3205
      %v3207 = vpop.f32.mrb[0].mxu0
      %3208 = vdwg.mxu0
      %v3209 = vadd.f32 %v3005, %v3206
      %3210 = vst.msk [vmem:[%s736] sm:$0xff] %vm757, %v3209
      %p3211 = scmp.lt.s32.totalorder %s34, 1
      %s3212 = scalar_select %p3211, %s34, 1
      %s3213 = smul.addr %s3212, 8
      %s3214 = scalar_lea.vmem %s23, %s3213
      // Predicated region
      $region113: #{transformer_forward.11} parent=111 // pred_check
        %p3215 = pneg %p550
      $region114: #{transformer_forward.11} parent=111 // pred_check_branch
        %3217 = sbr.rel (%p3215) target = $region116
      $region115: #{transformer_forward.11} parent=111 // pred_region
        _
      $region116: #{transformer_forward.11} parent=111 // pred_fallthru
        _
    $region112: #{transformer_forward.11} parent=5 // pred_fallthru
      _
    %p3218 = scmp.le.s32.totalorder 2, %s29
    // Predicated region
    $region117: #{transformer_forward.11} parent=5 // pred_check
      %p3219 = pneg %p3218
    $region118: #{transformer_forward.11} parent=5 // pred_check_branch
      %3221 = sbr.rel (%p3219) target = $region120
    $region119: #{transformer_forward.11} parent=5 // pred_region
      %s3222 = ssub.s32 %s29, 2
      // Predicated region
      $region121: #{transformer_forward.11} parent=119 // pred_check
        %p3223 = pneg %p556
      $region122: #{transformer_forward.11} parent=119 // pred_check_branch
        %3225 = sbr.rel (%p3223) target = $region124
      $region123: #{transformer_forward.11} parent=119 // pred_region
        %p3226 = scmp.lt.s32.totalorder %s35, 1
        %s3227 = scalar_select %p3226, %s35, 1
        %s3228 = smul.addr %s3227, 8
        %s3229 = scalar_lea.vmem %s23, %s3228
      $region124: #{transformer_forward.11} parent=119 // pred_fallthru
        _
    $region120: #{transformer_forward.11} parent=5 // pred_fallthru
      _
  $region6: #{transformer_forward.11} parent=0 // loop_footer
    %s33 = sadd.s32 1, %s29
  $region7: #{transformer_forward.11} parent=0 // loop_footer_branch
    %28 = sbr.rel target = $region3
  $region8: #{transformer_forward.11} parent=0 // loop_exit
    _

</llo_original>
